<compile_context>
chip_gen: v5e
topology: v5e:2x2
jax: 0.10.0
libtpu: 0.0.40
codegen_flags: <defaults>
</compile_context>

<pallas_src>
import jax
import jax.numpy as jnp
from jax import lax
from jax.experimental import pallas as pl
from jax.experimental.pallas import tpu as pltpu


# ----------------------------------------------------------------------------
# In-kernel helpers
# ----------------------------------------------------------------------------

def _reflect_borders(ref, H, W):
    """Fill the 1-px reflection border of `ref` (shape (H+2, W+2, C)) whose
    interior [1:H+1, 1:W+1, :] has already been written.
    Matches nn.ReflectionPad2d((1, 1, 1, 1))."""
    # top / bottom rows (interior columns only)
    ref[0:1, 1:W + 1, :] = ref[2:3, 1:W + 1, :]
    ref[H + 1:H + 2, 1:W + 1, :] = ref[H - 1:H, 1:W + 1, :]
    # left / right columns over the full height -> also fills the 4 corners
    ref[:, 0:1, :] = ref[:, 2:3, :]
    ref[:, W + 1:W + 2, :] = ref[:, W - 1:W, :]


def _conv3x3_relu(xp_ref, w_ref, b_ref, H, W):
    """3x3 VALID conv + bias + ReLU reading a padded (H+2, W+2, Cin) VMEM ref.

    Whole-image formulation: 9 shifted (H*W, Cin) x (Cin, Cout) MXU matmuls
    accumulated in f32. Returns the activation lane-packed as (H*W, Cout).
    Requires W % 8 == 0 so the (H, W, Cin) -> (H*W, Cin) reshape is layout-free.
    """
    cin = xp_ref.shape[-1]
    cout = w_ref.shape[-1]
    acc = jnp.zeros((H * W, cout), jnp.float32)
    for dy in range(3):
        for dx in range(3):
            patch = xp_ref[dy:dy + H, dx:dx + W, :]               # (H, W, Cin)
            acc = acc + jnp.dot(patch.reshape(H * W, cin),
                                w_ref[dy, dx, :, :],
                                preferred_element_type=jnp.float32)
    return jnp.maximum(acc + b_ref[...], 0.0)                     # bias bcast once


def _maxpool2x2(src_ref, Ho, Wo):
    """2x2 stride-2 max pool of a (2*Ho, 2*Wo, C) VMEM ref.
    Four strided reads + three vector maxes (no scalar loops)."""
    p00 = src_ref[pl.ds(0, Ho, stride=2), pl.ds(0, Wo, stride=2), :]
    p01 = src_ref[pl.ds(0, Ho, stride=2), pl.ds(1, Wo, stride=2), :]
    p10 = src_ref[pl.ds(1, Ho, stride=2), pl.ds(0, Wo, stride=2), :]
    p11 = src_ref[pl.ds(1, Ho, stride=2), pl.ds(1, Wo, stride=2), :]
    return jnp.maximum(jnp.maximum(p00, p01), jnp.maximum(p10, p11))


# ----------------------------------------------------------------------------
# Fused encoder kernel: one grid step == one image, everything stays in VMEM
# ----------------------------------------------------------------------------

def _encoder_kernel(x_ref,
                    w11_ref, b11_ref, w12_ref, b12_ref,
                    w21_ref, b21_ref, w22_ref, b22_ref,
                    w31_ref, b31_ref,
                    o_ref,
                    pad1, pad2, c12, pad3, pad4, c22, pad5):
    H, W = x_ref.shape[1], x_ref.shape[2]
    H2, W2 = H // 2, W // 2
    H3, W3 = H // 4, W // 4

    # --- stage 1 (H x W) ---------------------------------------------------
    # conv0 is already folded into (w11, b11); just pad the raw input.
    pad1[1:H + 1, 1:W + 1, :] = x_ref[0, :, :, :]
    _reflect_borders(pad1, H, W)

    y = _conv3x3_relu(pad1, w11_ref, b11_ref, H, W)               # (H*W, 16)
    pad2[1:H + 1, 1:W + 1, :] = y.reshape(H, W, y.shape[-1])
    _reflect_borders(pad2, H, W)

    y = _conv3x3_relu(pad2, w12_ref, b12_ref, H, W)               # (H*W, 16)
    c12[...] = y.reshape(H, W, y.shape[-1])

    # fused maxpool -> padded conv21 input
    pad3[1:H2 + 1, 1:W2 + 1, :] = _maxpool2x2(c12, H2, W2)
    _reflect_borders(pad3, H2, W2)

    # --- stage 2 (H/2 x W/2) -------------------------------------------------
    y = _conv3x3_relu(pad3, w21_ref, b21_ref, H2, W2)             # (H2*W2, 32)
    pad4[1:H2 + 1, 1:W2 + 1, :] = y.reshape(H2, W2, y.shape[-1])
    _reflect_borders(pad4, H2, W2)

    y = _conv3x3_relu(pad4, w22_ref, b22_ref, H2, W2)             # (H2*W2, 32)
    c22[...] = y.reshape(H2, W2, y.shape[-1])

    pad5[1:H3 + 1, 1:W3 + 1, :] = _maxpool2x2(c22, H3, W3)
    _reflect_borders(pad5, H3, W3)

    # --- stage 3 (H/4 x W/4): conv31 + ReLU, lane-packed output --------------
    # W3 (=4) is not a multiple of 8, so use per-output-row matmuls here to
    # avoid a sublane relayout; all other stages use the flattened path.
    cout = w31_ref.shape[-1]
    b31 = b31_ref[...]
    for h in range(H3):
        acc = jnp.zeros((W3, cout), jnp.float32)
        for dy in range(3):
            for dx in range(3):
                acc = acc + jnp.dot(pad5[h + dy, dx:dx + W3, :],
                                    w31_ref[dy, dx, :, :],
                                    preferred_element_type=jnp.float32)
        o_ref[0, h * W3:(h + 1) * W3, :] = jnp.maximum(acc + b31, 0.0)


# ----------------------------------------------------------------------------
# Wrapper
# ----------------------------------------------------------------------------

def _fold_conv0_into_conv11(w0, b0, w11, b11):
    """Exact fold of the 1x1 conv0 (3->3, no ReLU) into conv11's 3x3 weights."""
    w0m = w0[0, 0]                                                # (in=3, mid=3)
    w11f = jnp.einsum('im,hwmc->hwic', w0m, w11)                  # (3,3,3,16)
    b11f = b11 + jnp.einsum('m,hwmc->c', b0, w11)                 # (16,)
    return w11f, b11f


@jax.jit
def small_encoder_forward(x_nchw, params):
    """SmallEncoder3_16x_aux.forward(). Input/output NCHW (PyTorch-style)."""
    N, C, H, W = x_nchw.shape
    assert C == 3 and H % 4 == 0 and H >= 8 and W % 16 == 0, (C, H, W)
    x = jnp.transpose(x_nchw, (0, 2, 3, 1)).astype(jnp.float32)   # -> NHWC

    w0, b0 = params["conv0"]
    w11, b11 = _fold_conv0_into_conv11(w0, b0, *params["conv11"])
    w12, b12 = params["conv12"]
    w21, b21 = params["conv21"]
    w22, b22 = params["conv22"]
    w31, b31 = params["conv31"]

    H2, W2, H3, W3 = H // 2, W // 2, H // 4, W // 4

    def wspec(cin, cout):
        return pl.BlockSpec((3, 3, cin, cout), lambda n: (0, 0, 0, 0))

    def bspec(cout):
        return pl.BlockSpec((1, cout), lambda n: (0, 0))

    out_flat = pl.pallas_call(
        _encoder_kernel,
        out_shape=jax.ShapeDtypeStruct((N, H3 * W3, 64), jnp.float32),
        grid=(N,),
        in_specs=[
            pl.BlockSpec((1, H, W, 3), lambda n: (n, 0, 0, 0)),
            wspec(3, 16), bspec(16),
            wspec(16, 16), bspec(16),
            wspec(16, 32), bspec(32),
            wspec(32, 32), bspec(32),
            wspec(32, 64), bspec(64),
        ],
        out_specs=pl.BlockSpec((1, H3 * W3, 64), lambda n: (n, 0, 0)),
        scratch_shapes=[
            pltpu.VMEM((H + 2, W + 2, 3), jnp.float32),     # pad1: padded input
            pltpu.VMEM((H + 2, W + 2, 16), jnp.float32),    # pad2: padded conv11 out
            pltpu.VMEM((H, W, 16), jnp.float32),            # c12 : conv12 out
            pltpu.VMEM((H2 + 2, W2 + 2, 16), jnp.float32),  # pad3: padded pool1 out
            pltpu.VMEM((H2 + 2, W2 + 2, 32), jnp.float32),  # pad4: padded conv21 out
            pltpu.VMEM((H2, W2, 32), jnp.float32),          # c22 : conv22 out
            pltpu.VMEM((H3 + 2, W3 + 2, 32), jnp.float32),  # pad5: padded pool2 out
        ],
        compiler_params=pltpu.CompilerParams(
            dimension_semantics=("parallel",)),   # v7x: batch over the 2 TCs
    )(x,
      w11, b11.reshape(1, -1),
      w12, b12.reshape(1, -1),
      w21, b21.reshape(1, -1),
      w22, b22.reshape(1, -1),
      w31, b31.reshape(1, -1))

    out = out_flat.reshape(N, H3, W3, 64)
    return jnp.transpose(out, (0, 3, 1, 2))                        # -> NCHW


# ----------------------------------------------------------------------------
# Parameters (PyTorch-Conv2d-style init, HWIO weights, (Cout,) biases)
# ----------------------------------------------------------------------------

def init_params(key):
    specs = {
        "conv0":  (1, 3, 3),
        "conv11": (3, 3, 16),
        "conv12": (3, 16, 16),
        "conv21": (3, 16, 32),
        "conv22": (3, 32, 32),
        "conv31": (3, 32, 64),
        # *_aux heads are not used by forward(); omitted.
    }
    params = {}
    for name, (k, cin, cout) in specs.items():
        key, kw, kb = jax.random.split(key, 3)
        fan_in = cin * k * k
        bound = 1.0 / (fan_in ** 0.5)
        w = jax.random.uniform(kw, (k, k, cin, cout), jnp.float32, -bound, bound)
        b = jax.random.uniform(kb, (cout,), jnp.float32, -bound, bound)
        params[name] = (w, b)
    return params


# ----------------------------------------------------------------------------
# Pure-JAX reference (conv0 NOT folded -- validates the fold and the kernel)
# ----------------------------------------------------------------------------

def _ref_forward(x_nchw, params):
    def conv(x, w, b, relu):
        y = lax.conv_general_dilated(
            x, w, (1, 1), "VALID",
            dimension_numbers=("NHWC", "HWIO", "NHWC"))
        y = y + b.reshape(1, 1, 1, -1)
        return jnp.maximum(y, 0.0) if relu else y

    def pool(x):
        return lax.reduce_window(x, -jnp.inf, lax.max,
                                 (1, 2, 2, 1), (1, 2, 2, 1), "VALID")

    def pad(x):
        x = jnp.concatenate([x[:, 1:2], x, x[:, -2:-1]], axis=1)
        x = jnp.concatenate([x[:, :, 1:2], x, x[:, :, -2:-1]], axis=2)
        return x

    x = jnp.transpose(x_nchw, (0, 2, 3, 1)).astype(jnp.float32)
    y = conv(x, *params["conv0"], relu=False)
    y = conv(pad(y), *params["conv11"], relu=True)
    y = conv(pad(y), *params["conv12"], relu=True)
    y = pool(y)
    y = conv(pad(y), *params["conv21"], relu=True)
    y = conv(pad(y), *params["conv22"], relu=True)
    y = pool(y)
    y = conv(pad(y), *params["conv31"], relu=True)
    return jnp.transpose(y, (0, 3, 1, 2))


# ----------------------------------------------------------------------------
# Main
# ----------------------------------------------------------------------------

if __name__ == "__main__":
    key = jax.random.PRNGKey(0)
    key, kx = jax.random.split(key)

    N, C, H, W = 2, 3, 16, 16                 # module expects 3 input channels
    x = jax.random.normal(kx, (N, C, H, W), jnp.float32)
    params = init_params(key)

    out = jax.block_until_ready(small_encoder_forward(x, params))
    assert out.shape == (N, 64, H // 4, W // 4), out.shape

    ref = jax.block_until_ready(_ref_forward(x, params))
    if not jnp.allclose(out, ref, atol=1e-4, rtol=1e-4):
        max_err = float(jnp.max(jnp.abs(out - ref)))
        raise AssertionError(f"Pallas output mismatch (max abs err {max_err})")

    print("KERNEL_OK")
</pallas_src>

<mosaic_0001>
module attributes {stable_mosaic.version = 11 : i64} {
  func.func @_encoder_kernel(%arg0: i32, %arg1: memref<1x16x16x3xf32, #tpu.memory_space<vmem>>, %arg2: memref<3x3x3x16xf32, #tpu.memory_space<vmem>>, %arg3: memref<1x16xf32, #tpu.memory_space<vmem>>, %arg4: memref<3x3x16x16xf32, #tpu.memory_space<vmem>>, %arg5: memref<1x16xf32, #tpu.memory_space<vmem>>, %arg6: memref<3x3x16x32xf32, #tpu.memory_space<vmem>>, %arg7: memref<1x32xf32, #tpu.memory_space<vmem>>, %arg8: memref<3x3x32x32xf32, #tpu.memory_space<vmem>>, %arg9: memref<1x32xf32, #tpu.memory_space<vmem>>, %arg10: memref<3x3x32x64xf32, #tpu.memory_space<vmem>>, %arg11: memref<1x64xf32, #tpu.memory_space<vmem>>, %arg12: memref<1x16x64xf32, #tpu.memory_space<vmem>>, %arg13: memref<18x18x3xf32, #tpu.memory_space<vmem>>, %arg14: memref<18x18x16xf32, #tpu.memory_space<vmem>>, %arg15: memref<16x16x16xf32, #tpu.memory_space<vmem>>, %arg16: memref<10x10x16xf32, #tpu.memory_space<vmem>>, %arg17: memref<10x10x32xf32, #tpu.memory_space<vmem>>, %arg18: memref<8x8x32xf32, #tpu.memory_space<vmem>>, %arg19: memref<6x6x32xf32, #tpu.memory_space<vmem>>) attributes {dimension_semantics = [#tpu.dimension_semantics<parallel>], iteration_bounds = array<i64: 2>, scalar_prefetch = 0 : i64, scratch_operands = 7 : i64, tpu.core_type = #tpu.core_type<tc>, window_params = [{transform_indices = @transform_0, window_bounds = array<i64: 1, 16, 16, 3>}, {pipeline_mode = #tpu.pipeline_mode<synchronous>, transform_indices = @transform_1, window_bounds = array<i64: 3, 3, 3, 16>}, {pipeline_mode = #tpu.pipeline_mode<synchronous>, transform_indices = @transform_2, window_bounds = array<i64: 1, 16>}, {pipeline_mode = #tpu.pipeline_mode<synchronous>, transform_indices = @transform_3, window_bounds = array<i64: 3, 3, 16, 16>}, {pipeline_mode = #tpu.pipeline_mode<synchronous>, transform_indices = @transform_4, window_bounds = array<i64: 1, 16>}, {pipeline_mode = #tpu.pipeline_mode<synchronous>, transform_indices = @transform_5, window_bounds = array<i64: 3, 3, 16, 32>}, {pipeline_mode = #tpu.pipeline_mode<synchronous>, transform_indices = @transform_6, window_bounds = array<i64: 1, 32>}, {pipeline_mode = #tpu.pipeline_mode<synchronous>, transform_indices = @transform_7, window_bounds = array<i64: 3, 3, 32, 32>}, {pipeline_mode = #tpu.pipeline_mode<synchronous>, transform_indices = @transform_8, window_bounds = array<i64: 1, 32>}, {pipeline_mode = #tpu.pipeline_mode<synchronous>, transform_indices = @transform_9, window_bounds = array<i64: 3, 3, 32, 64>}, {pipeline_mode = #tpu.pipeline_mode<synchronous>, transform_indices = @transform_10, window_bounds = array<i64: 1, 64>}, {transform_indices = @transform_11, window_bounds = array<i64: 1, 16, 64>}]} {
    %c0 = arith.constant 0 : index
    %c0_0 = arith.constant 0 : index
    %c0_1 = arith.constant 0 : index
    %c0_2 = arith.constant 0 : index
    %0 = vector.load %arg1[%c0, %c0_0, %c0_1, %c0_2] : memref<1x16x16x3xf32, #tpu.memory_space<vmem>>, vector<1x16x16x3xf32>
    %1 = vector.shape_cast %0 : vector<1x16x16x3xf32> to vector<16x16x3xf32>
    %c1 = arith.constant 1 : index
    %c1_3 = arith.constant 1 : index
    %c0_4 = arith.constant 0 : index
    %2 = vector.load %arg13[%c1, %c1_3, %c0_4] : memref<18x18x3xf32, #tpu.memory_space<vmem>>, vector<16x16x3xf32>
    tpu.vector_store %arg13[%c1, %c1_3, %c0_4], %1 {strides = array<i32>} : memref<18x18x3xf32, #tpu.memory_space<vmem>>, vector<16x16x3xf32>,
    %c2 = arith.constant 2 : index
    %c1_5 = arith.constant 1 : index
    %c0_6 = arith.constant 0 : index
    %3 = vector.load %arg13[%c2, %c1_5, %c0_6] : memref<18x18x3xf32, #tpu.memory_space<vmem>>, vector<1x16x3xf32>
    %c0_7 = arith.constant 0 : index
    %c1_8 = arith.constant 1 : index
    %c0_9 = arith.constant 0 : index
    %4 = vector.load %arg13[%c0_7, %c1_8, %c0_9] : memref<18x18x3xf32, #tpu.memory_space<vmem>>, vector<1x16x3xf32>
    tpu.vector_store %arg13[%c0_7, %c1_8, %c0_9], %3 {strides = array<i32>} : memref<18x18x3xf32, #tpu.memory_space<vmem>>, vector<1x16x3xf32>,
    %c15 = arith.constant 15 : index
    %c1_10 = arith.constant 1 : index
    %c0_11 = arith.constant 0 : index
    %5 = vector.load %arg13[%c15, %c1_10, %c0_11] : memref<18x18x3xf32, #tpu.memory_space<vmem>>, vector<1x16x3xf32>
    %c17 = arith.constant 17 : index
    %c1_12 = arith.constant 1 : index
    %c0_13 = arith.constant 0 : index
    %6 = vector.load %arg13[%c17, %c1_12, %c0_13] : memref<18x18x3xf32, #tpu.memory_space<vmem>>, vector<1x16x3xf32>
    tpu.vector_store %arg13[%c17, %c1_12, %c0_13], %5 {strides = array<i32>} : memref<18x18x3xf32, #tpu.memory_space<vmem>>, vector<1x16x3xf32>,
    %c0_14 = arith.constant 0 : index
    %c2_15 = arith.constant 2 : index
    %c0_16 = arith.constant 0 : index
    %7 = vector.load %arg13[%c0_14, %c2_15, %c0_16] : memref<18x18x3xf32, #tpu.memory_space<vmem>>, vector<18x1x3xf32>
    %c0_17 = arith.constant 0 : index
    %c0_18 = arith.constant 0 : index
    %c0_19 = arith.constant 0 : index
    %8 = vector.load %arg13[%c0_17, %c0_18, %c0_19] : memref<18x18x3xf32, #tpu.memory_space<vmem>>, vector<18x1x3xf32>
    tpu.vector_store %arg13[%c0_17, %c0_18, %c0_19], %7 {strides = array<i32>} : memref<18x18x3xf32, #tpu.memory_space<vmem>>, vector<18x1x3xf32>,
    %c0_20 = arith.constant 0 : index
    %c15_21 = arith.constant 15 : index
    %c0_22 = arith.constant 0 : index
    %9 = vector.load %arg13[%c0_20, %c15_21, %c0_22] : memref<18x18x3xf32, #tpu.memory_space<vmem>>, vector<18x1x3xf32>
    %c0_23 = arith.constant 0 : index
    %c17_24 = arith.constant 17 : index
    %c0_25 = arith.constant 0 : index
    %10 = vector.load %arg13[%c0_23, %c17_24, %c0_25] : memref<18x18x3xf32, #tpu.memory_space<vmem>>, vector<18x1x3xf32>
    tpu.vector_store %arg13[%c0_23, %c17_24, %c0_25], %9 {strides = array<i32>} : memref<18x18x3xf32, #tpu.memory_space<vmem>>, vector<18x1x3xf32>,
    %cst = arith.constant 0.000000e+00 : f32
    %11 = vector.broadcast %cst : f32 to vector<256x16xf32>
    %c0_26 = arith.constant 0 : index
    %c0_27 = arith.constant 0 : index
    %c0_28 = arith.constant 0 : index
    %12 = vector.load %arg13[%c0_26, %c0_27, %c0_28] : memref<18x18x3xf32, #tpu.memory_space<vmem>>, vector<16x16x3xf32>
    %13 = vector.shape_cast %12 : vector<16x16x3xf32> to vector<256x3xf32>
    %c0_29 = arith.constant 0 : index
    %c0_30 = arith.constant 0 : index
    %c0_31 = arith.constant 0 : index
    %c0_32 = arith.constant 0 : index
    %14 = vector.load %arg2[%c0_29, %c0_30, %c0_31, %c0_32] : memref<3x3x3x16xf32, #tpu.memory_space<vmem>>, vector<1x1x3x16xf32>
    %15 = vector.shape_cast %14 : vector<1x1x3x16xf32> to vector<3x16xf32>
    %cst_33 = arith.constant dense<0.000000e+00> : vector<256x16xf32>
    %16 = tpu.matmul %13, %15, %cst_33 {dimension_numbers = #tpu.dot_dimension_numbers<[1], [0], [0], [1], [0, 0, 1, 1], [], []>} : vector<256x3xf32>, vector<3x16xf32>, vector<256x16xf32> -> vector<256x16xf32>
    %17 = arith.addf %11, %16 : vector<256x16xf32>
    %c0_34 = arith.constant 0 : index
    %c1_35 = arith.constant 1 : index
    %c0_36 = arith.constant 0 : index
    %18 = vector.load %arg13[%c0_34, %c1_35, %c0_36] : memref<18x18x3xf32, #tpu.memory_space<vmem>>, vector<16x16x3xf32>
    %19 = vector.shape_cast %18 : vector<16x16x3xf32> to vector<256x3xf32>
    %c0_37 = arith.constant 0 : index
    %c1_38 = arith.constant 1 : index
    %c0_39 = arith.constant 0 : index
    %c0_40 = arith.constant 0 : index
    %20 = vector.load %arg2[%c0_37, %c1_38, %c0_39, %c0_40] : memref<3x3x3x16xf32, #tpu.memory_space<vmem>>, vector<1x1x3x16xf32>
    %21 = vector.shape_cast %20 : vector<1x1x3x16xf32> to vector<3x16xf32>
    %cst_41 = arith.constant dense<0.000000e+00> : vector<256x16xf32>
    %22 = tpu.matmul %19, %21, %cst_41 {dimension_numbers = #tpu.dot_dimension_numbers<[1], [0], [0], [1], [0, 0, 1, 1], [], []>} : vector<256x3xf32>, vector<3x16xf32>, vector<256x16xf32> -> vector<256x16xf32>
    %23 = arith.addf %17, %22 : vector<256x16xf32>
    %c0_42 = arith.constant 0 : index
    %c2_43 = arith.constant 2 : index
    %c0_44 = arith.constant 0 : index
    %24 = vector.load %arg13[%c0_42, %c2_43, %c0_44] : memref<18x18x3xf32, #tpu.memory_space<vmem>>, vector<16x16x3xf32>
    %25 = vector.shape_cast %24 : vector<16x16x3xf32> to vector<256x3xf32>
    %c0_45 = arith.constant 0 : index
    %c2_46 = arith.constant 2 : index
    %c0_47 = arith.constant 0 : index
    %c0_48 = arith.constant 0 : index
    %26 = vector.load %arg2[%c0_45, %c2_46, %c0_47, %c0_48] : memref<3x3x3x16xf32, #tpu.memory_space<vmem>>, vector<1x1x3x16xf32>
    %27 = vector.shape_cast %26 : vector<1x1x3x16xf32> to vector<3x16xf32>
    %cst_49 = arith.constant dense<0.000000e+00> : vector<256x16xf32>
    %28 = tpu.matmul %25, %27, %cst_49 {dimension_numbers = #tpu.dot_dimension_numbers<[1], [0], [0], [1], [0, 0, 1, 1], [], []>} : vector<256x3xf32>, vector<3x16xf32>, vector<256x16xf32> -> vector<256x16xf32>
    %29 = arith.addf %23, %28 : vector<256x16xf32>
    %c1_50 = arith.constant 1 : index
    %c0_51 = arith.constant 0 : index
    %c0_52 = arith.constant 0 : index
    %30 = vector.load %arg13[%c1_50, %c0_51, %c0_52] : memref<18x18x3xf32, #tpu.memory_space<vmem>>, vector<16x16x3xf32>
    %31 = vector.shape_cast %30 : vector<16x16x3xf32> to vector<256x3xf32>
    %c1_53 = arith.constant 1 : index
    %c0_54 = arith.constant 0 : index
    %c0_55 = arith.constant 0 : index
    %c0_56 = arith.constant 0 : index
    %32 = vector.load %arg2[%c1_53, %c0_54, %c0_55, %c0_56] : memref<3x3x3x16xf32, #tpu.memory_space<vmem>>, vector<1x1x3x16xf32>
    %33 = vector.shape_cast %32 : vector<1x1x3x16xf32> to vector<3x16xf32>
    %cst_57 = arith.constant dense<0.000000e+00> : vector<256x16xf32>
    %34 = tpu.matmul %31, %33, %cst_57 {dimension_numbers = #tpu.dot_dimension_numbers<[1], [0], [0], [1], [0, 0, 1, 1], [], []>} : vector<256x3xf32>, vector<3x16xf32>, vector<256x16xf32> -> vector<256x16xf32>
    %35 = arith.addf %29, %34 : vector<256x16xf32>
    %c1_58 = arith.constant 1 : index
    %c1_59 = arith.constant 1 : index
    %c0_60 = arith.constant 0 : index
    %36 = vector.load %arg13[%c1_58, %c1_59, %c0_60] : memref<18x18x3xf32, #tpu.memory_space<vmem>>, vector<16x16x3xf32>
    %37 = vector.shape_cast %36 : vector<16x16x3xf32> to vector<256x3xf32>
    %c1_61 = arith.constant 1 : index
    %c1_62 = arith.constant 1 : index
    %c0_63 = arith.constant 0 : index
    %c0_64 = arith.constant 0 : index
    %38 = vector.load %arg2[%c1_61, %c1_62, %c0_63, %c0_64] : memref<3x3x3x16xf32, #tpu.memory_space<vmem>>, vector<1x1x3x16xf32>
    %39 = vector.shape_cast %38 : vector<1x1x3x16xf32> to vector<3x16xf32>
    %cst_65 = arith.constant dense<0.000000e+00> : vector<256x16xf32>
    %40 = tpu.matmul %37, %39, %cst_65 {dimension_numbers = #tpu.dot_dimension_numbers<[1], [0], [0], [1], [0, 0, 1, 1], [], []>} : vector<256x3xf32>, vector<3x16xf32>, vector<256x16xf32> -> vector<256x16xf32>
    %41 = arith.addf %35, %40 : vector<256x16xf32>
    %c1_66 = arith.constant 1 : index
    %c2_67 = arith.constant 2 : index
    %c0_68 = arith.constant 0 : index
    %42 = vector.load %arg13[%c1_66, %c2_67, %c0_68] : memref<18x18x3xf32, #tpu.memory_space<vmem>>, vector<16x16x3xf32>
    %43 = vector.shape_cast %42 : vector<16x16x3xf32> to vector<256x3xf32>
    %c1_69 = arith.constant 1 : index
    %c2_70 = arith.constant 2 : index
    %c0_71 = arith.constant 0 : index
    %c0_72 = arith.constant 0 : index
    %44 = vector.load %arg2[%c1_69, %c2_70, %c0_71, %c0_72] : memref<3x3x3x16xf32, #tpu.memory_space<vmem>>, vector<1x1x3x16xf32>
    %45 = vector.shape_cast %44 : vector<1x1x3x16xf32> to vector<3x16xf32>
    %cst_73 = arith.constant dense<0.000000e+00> : vector<256x16xf32>
    %46 = tpu.matmul %43, %45, %cst_73 {dimension_numbers = #tpu.dot_dimension_numbers<[1], [0], [0], [1], [0, 0, 1, 1], [], []>} : vector<256x3xf32>, vector<3x16xf32>, vector<256x16xf32> -> vector<256x16xf32>
    %47 = arith.addf %41, %46 : vector<256x16xf32>
    %c2_74 = arith.constant 2 : index
    %c0_75 = arith.constant 0 : index
    %c0_76 = arith.constant 0 : index
    %48 = vector.load %arg13[%c2_74, %c0_75, %c0_76] : memref<18x18x3xf32, #tpu.memory_space<vmem>>, vector<16x16x3xf32>
    %49 = vector.shape_cast %48 : vector<16x16x3xf32> to vector<256x3xf32>
    %c2_77 = arith.constant 2 : index
    %c0_78 = arith.constant 0 : index
    %c0_79 = arith.constant 0 : index
    %c0_80 = arith.constant 0 : index
    %50 = vector.load %arg2[%c2_77, %c0_78, %c0_79, %c0_80] : memref<3x3x3x16xf32, #tpu.memory_space<vmem>>, vector<1x1x3x16xf32>
    %51 = vector.shape_cast %50 : vector<1x1x3x16xf32> to vector<3x16xf32>
    %cst_81 = arith.constant dense<0.000000e+00> : vector<256x16xf32>
    %52 = tpu.matmul %49, %51, %cst_81 {dimension_numbers = #tpu.dot_dimension_numbers<[1], [0], [0], [1], [0, 0, 1, 1], [], []>} : vector<256x3xf32>, vector<3x16xf32>, vector<256x16xf32> -> vector<256x16xf32>
    %53 = arith.addf %47, %52 : vector<256x16xf32>
    %c2_82 = arith.constant 2 : index
    %c1_83 = arith.constant 1 : index
    %c0_84 = arith.constant 0 : index
    %54 = vector.load %arg13[%c2_82, %c1_83, %c0_84] : memref<18x18x3xf32, #tpu.memory_space<vmem>>, vector<16x16x3xf32>
    %55 = vector.shape_cast %54 : vector<16x16x3xf32> to vector<256x3xf32>
    %c2_85 = arith.constant 2 : index
    %c1_86 = arith.constant 1 : index
    %c0_87 = arith.constant 0 : index
    %c0_88 = arith.constant 0 : index
    %56 = vector.load %arg2[%c2_85, %c1_86, %c0_87, %c0_88] : memref<3x3x3x16xf32, #tpu.memory_space<vmem>>, vector<1x1x3x16xf32>
    %57 = vector.shape_cast %56 : vector<1x1x3x16xf32> to vector<3x16xf32>
    %cst_89 = arith.constant dense<0.000000e+00> : vector<256x16xf32>
    %58 = tpu.matmul %55, %57, %cst_89 {dimension_numbers = #tpu.dot_dimension_numbers<[1], [0], [0], [1], [0, 0, 1, 1], [], []>} : vector<256x3xf32>, vector<3x16xf32>, vector<256x16xf32> -> vector<256x16xf32>
    %59 = arith.addf %53, %58 : vector<256x16xf32>
    %c2_90 = arith.constant 2 : index
    %c2_91 = arith.constant 2 : index
    %c0_92 = arith.constant 0 : index
    %60 = vector.load %arg13[%c2_90, %c2_91, %c0_92] : memref<18x18x3xf32, #tpu.memory_space<vmem>>, vector<16x16x3xf32>
    %61 = vector.shape_cast %60 : vector<16x16x3xf32> to vector<256x3xf32>
    %c2_93 = arith.constant 2 : index
    %c2_94 = arith.constant 2 : index
    %c0_95 = arith.constant 0 : index
    %c0_96 = arith.constant 0 : index
    %62 = vector.load %arg2[%c2_93, %c2_94, %c0_95, %c0_96] : memref<3x3x3x16xf32, #tpu.memory_space<vmem>>, vector<1x1x3x16xf32>
    %63 = vector.shape_cast %62 : vector<1x1x3x16xf32> to vector<3x16xf32>
    %cst_97 = arith.constant dense<0.000000e+00> : vector<256x16xf32>
    %64 = tpu.matmul %61, %63, %cst_97 {dimension_numbers = #tpu.dot_dimension_numbers<[1], [0], [0], [1], [0, 0, 1, 1], [], []>} : vector<256x3xf32>, vector<3x16xf32>, vector<256x16xf32> -> vector<256x16xf32>
    %65 = arith.addf %59, %64 : vector<256x16xf32>
    %c0_98 = arith.constant 0 : index
    %c0_99 = arith.constant 0 : index
    %66 = vector.load %arg3[%c0_98, %c0_99] : memref<1x16xf32, #tpu.memory_space<vmem>>, vector<1x16xf32>
    %67 = vector.broadcast %66 : vector<1x16xf32> to vector<256x16xf32>
    %68 = arith.addf %65, %67 : vector<256x16xf32>
    %cst_100 = arith.constant 0.000000e+00 : f32
    %69 = vector.broadcast %cst_100 : f32 to vector<256x16xf32>
    %70 = arith.maximumf %68, %69 : vector<256x16xf32>
    %71 = vector.shape_cast %70 : vector<256x16xf32> to vector<16x16x16xf32>
    %c1_101 = arith.constant 1 : index
    %c1_102 = arith.constant 1 : index
    %c0_103 = arith.constant 0 : index
    %72 = vector.load %arg14[%c1_101, %c1_102, %c0_103] : memref<18x18x16xf32, #tpu.memory_space<vmem>>, vector<16x16x16xf32>
    tpu.vector_store %arg14[%c1_101, %c1_102, %c0_103], %71 {strides = array<i32>} : memref<18x18x16xf32, #tpu.memory_space<vmem>>, vector<16x16x16xf32>,
    %c2_104 = arith.constant 2 : index
    %c1_105 = arith.constant 1 : index
    %c0_106 = arith.constant 0 : index
    %73 = vector.load %arg14[%c2_104, %c1_105, %c0_106] : memref<18x18x16xf32, #tpu.memory_space<vmem>>, vector<1x16x16xf32>
    %c0_107 = arith.constant 0 : index
    %c1_108 = arith.constant 1 : index
    %c0_109 = arith.constant 0 : index
    %74 = vector.load %arg14[%c0_107, %c1_108, %c0_109] : memref<18x18x16xf32, #tpu.memory_space<vmem>>, vector<1x16x16xf32>
    tpu.vector_store %arg14[%c0_107, %c1_108, %c0_109], %73 {strides = array<i32>} : memref<18x18x16xf32, #tpu.memory_space<vmem>>, vector<1x16x16xf32>,
    %c15_110 = arith.constant 15 : index
    %c1_111 = arith.constant 1 : index
    %c0_112 = arith.constant 0 : index
    %75 = vector.load %arg14[%c15_110, %c1_111, %c0_112] : memref<18x18x16xf32, #tpu.memory_space<vmem>>, vector<1x16x16xf32>
    %c17_113 = arith.constant 17 : index
    %c1_114 = arith.constant 1 : index
    %c0_115 = arith.constant 0 : index
    %76 = vector.load %arg14[%c17_113, %c1_114, %c0_115] : memref<18x18x16xf32, #tpu.memory_space<vmem>>, vector<1x16x16xf32>
    tpu.vector_store %arg14[%c17_113, %c1_114, %c0_115], %75 {strides = array<i32>} : memref<18x18x16xf32, #tpu.memory_space<vmem>>, vector<1x16x16xf32>,
    %c0_116 = arith.constant 0 : index
    %c2_117 = arith.constant 2 : index
    %c0_118 = arith.constant 0 : index
    %77 = vector.load %arg14[%c0_116, %c2_117, %c0_118] : memref<18x18x16xf32, #tpu.memory_space<vmem>>, vector<18x1x16xf32>
    %c0_119 = arith.constant 0 : index
    %c0_120 = arith.constant 0 : index
    %c0_121 = arith.constant 0 : index
    %78 = vector.load %arg14[%c0_119, %c0_120, %c0_121] : memref<18x18x16xf32, #tpu.memory_space<vmem>>, vector<18x1x16xf32>
    tpu.vector_store %arg14[%c0_119, %c0_120, %c0_121], %77 {strides = array<i32>} : memref<18x18x16xf32, #tpu.memory_space<vmem>>, vector<18x1x16xf32>,
    %c0_122 = arith.constant 0 : index
    %c15_123 = arith.constant 15 : index
    %c0_124 = arith.constant 0 : index
    %79 = vector.load %arg14[%c0_122, %c15_123, %c0_124] : memref<18x18x16xf32, #tpu.memory_space<vmem>>, vector<18x1x16xf32>
    %c0_125 = arith.constant 0 : index
    %c17_126 = arith.constant 17 : index
    %c0_127 = arith.constant 0 : index
    %80 = vector.load %arg14[%c0_125, %c17_126, %c0_127] : memref<18x18x16xf32, #tpu.memory_space<vmem>>, vector<18x1x16xf32>
    tpu.vector_store %arg14[%c0_125, %c17_126, %c0_127], %79 {strides = array<i32>} : memref<18x18x16xf32, #tpu.memory_space<vmem>>, vector<18x1x16xf32>,
    %cst_128 = arith.constant 0.000000e+00 : f32
    %81 = vector.broadcast %cst_128 : f32 to vector<256x16xf32>
    %c0_129 = arith.constant 0 : index
    %c0_130 = arith.constant 0 : index
    %c0_131 = arith.constant 0 : index
    %82 = vector.load %arg14[%c0_129, %c0_130, %c0_131] : memref<18x18x16xf32, #tpu.memory_space<vmem>>, vector<16x16x16xf32>
    %83 = vector.shape_cast %82 : vector<16x16x16xf32> to vector<256x16xf32>
    %c0_132 = arith.constant 0 : index
    %c0_133 = arith.constant 0 : index
    %c0_134 = arith.constant 0 : index
    %c0_135 = arith.constant 0 : index
    %84 = vector.load %arg4[%c0_132, %c0_133, %c0_134, %c0_135] : memref<3x3x16x16xf32, #tpu.memory_space<vmem>>, vector<1x1x16x16xf32>
    %85 = vector.shape_cast %84 : vector<1x1x16x16xf32> to vector<16x16xf32>
    %cst_136 = arith.constant dense<0.000000e+00> : vector<256x16xf32>
    %86 = tpu.matmul %83, %85, %cst_136 {dimension_numbers = #tpu.dot_dimension_numbers<[1], [0], [0], [1], [0, 0, 1, 1], [], []>} : vector<256x16xf32>, vector<16x16xf32>, vector<256x16xf32> -> vector<256x16xf32>
    %87 = arith.addf %81, %86 : vector<256x16xf32>
    %c0_137 = arith.constant 0 : index
    %c1_138 = arith.constant 1 : index
    %c0_139 = arith.constant 0 : index
    %88 = vector.load %arg14[%c0_137, %c1_138, %c0_139] : memref<18x18x16xf32, #tpu.memory_space<vmem>>, vector<16x16x16xf32>
    %89 = vector.shape_cast %88 : vector<16x16x16xf32> to vector<256x16xf32>
    %c0_140 = arith.constant 0 : index
    %c1_141 = arith.constant 1 : index
    %c0_142 = arith.constant 0 : index
    %c0_143 = arith.constant 0 : index
    %90 = vector.load %arg4[%c0_140, %c1_141, %c0_142, %c0_143] : memref<3x3x16x16xf32, #tpu.memory_space<vmem>>, vector<1x1x16x16xf32>
    %91 = vector.shape_cast %90 : vector<1x1x16x16xf32> to vector<16x16xf32>
    %cst_144 = arith.constant dense<0.000000e+00> : vector<256x16xf32>
    %92 = tpu.matmul %89, %91, %cst_144 {dimension_numbers = #tpu.dot_dimension_numbers<[1], [0], [0], [1], [0, 0, 1, 1], [], []>} : vector<256x16xf32>, vector<16x16xf32>, vector<256x16xf32> -> vector<256x16xf32>
    %93 = arith.addf %87, %92 : vector<256x16xf32>
    %c0_145 = arith.constant 0 : index
    %c2_146 = arith.constant 2 : index
    %c0_147 = arith.constant 0 : index
    %94 = vector.load %arg14[%c0_145, %c2_146, %c0_147] : memref<18x18x16xf32, #tpu.memory_space<vmem>>, vector<16x16x16xf32>
    %95 = vector.shape_cast %94 : vector<16x16x16xf32> to vector<256x16xf32>
    %c0_148 = arith.constant 0 : index
    %c2_149 = arith.constant 2 : index
    %c0_150 = arith.constant 0 : index
    %c0_151 = arith.constant 0 : index
    %96 = vector.load %arg4[%c0_148, %c2_149, %c0_150, %c0_151] : memref<3x3x16x16xf32, #tpu.memory_space<vmem>>, vector<1x1x16x16xf32>
    %97 = vector.shape_cast %96 : vector<1x1x16x16xf32> to vector<16x16xf32>
    %cst_152 = arith.constant dense<0.000000e+00> : vector<256x16xf32>
    %98 = tpu.matmul %95, %97, %cst_152 {dimension_numbers = #tpu.dot_dimension_numbers<[1], [0], [0], [1], [0, 0, 1, 1], [], []>} : vector<256x16xf32>, vector<16x16xf32>, vector<256x16xf32> -> vector<256x16xf32>
    %99 = arith.addf %93, %98 : vector<256x16xf32>
    %c1_153 = arith.constant 1 : index
    %c0_154 = arith.constant 0 : index
    %c0_155 = arith.constant 0 : index
    %100 = vector.load %arg14[%c1_153, %c0_154, %c0_155] : memref<18x18x16xf32, #tpu.memory_space<vmem>>, vector<16x16x16xf32>
    %101 = vector.shape_cast %100 : vector<16x16x16xf32> to vector<256x16xf32>
    %c1_156 = arith.constant 1 : index
    %c0_157 = arith.constant 0 : index
    %c0_158 = arith.constant 0 : index
    %c0_159 = arith.constant 0 : index
    %102 = vector.load %arg4[%c1_156, %c0_157, %c0_158, %c0_159] : memref<3x3x16x16xf32, #tpu.memory_space<vmem>>, vector<1x1x16x16xf32>
    %103 = vector.shape_cast %102 : vector<1x1x16x16xf32> to vector<16x16xf32>
    %cst_160 = arith.constant dense<0.000000e+00> : vector<256x16xf32>
    %104 = tpu.matmul %101, %103, %cst_160 {dimension_numbers = #tpu.dot_dimension_numbers<[1], [0], [0], [1], [0, 0, 1, 1], [], []>} : vector<256x16xf32>, vector<16x16xf32>, vector<256x16xf32> -> vector<256x16xf32>
    %105 = arith.addf %99, %104 : vector<256x16xf32>
    %c1_161 = arith.constant 1 : index
    %c1_162 = arith.constant 1 : index
    %c0_163 = arith.constant 0 : index
    %106 = vector.load %arg14[%c1_161, %c1_162, %c0_163] : memref<18x18x16xf32, #tpu.memory_space<vmem>>, vector<16x16x16xf32>
    %107 = vector.shape_cast %106 : vector<16x16x16xf32> to vector<256x16xf32>
    %c1_164 = arith.constant 1 : index
    %c1_165 = arith.constant 1 : index
    %c0_166 = arith.constant 0 : index
    %c0_167 = arith.constant 0 : index
    %108 = vector.load %arg4[%c1_164, %c1_165, %c0_166, %c0_167] : memref<3x3x16x16xf32, #tpu.memory_space<vmem>>, vector<1x1x16x16xf32>
    %109 = vector.shape_cast %108 : vector<1x1x16x16xf32> to vector<16x16xf32>
    %cst_168 = arith.constant dense<0.000000e+00> : vector<256x16xf32>
    %110 = tpu.matmul %107, %109, %cst_168 {dimension_numbers = #tpu.dot_dimension_numbers<[1], [0], [0], [1], [0, 0, 1, 1], [], []>} : vector<256x16xf32>, vector<16x16xf32>, vector<256x16xf32> -> vector<256x16xf32>
    %111 = arith.addf %105, %110 : vector<256x16xf32>
    %c1_169 = arith.constant 1 : index
    %c2_170 = arith.constant 2 : index
    %c0_171 = arith.constant 0 : index
    %112 = vector.load %arg14[%c1_169, %c2_170, %c0_171] : memref<18x18x16xf32, #tpu.memory_space<vmem>>, vector<16x16x16xf32>
    %113 = vector.shape_cast %112 : vector<16x16x16xf32> to vector<256x16xf32>
    %c1_172 = arith.constant 1 : index
    %c2_173 = arith.constant 2 : index
    %c0_174 = arith.constant 0 : index
    %c0_175 = arith.constant 0 : index
    %114 = vector.load %arg4[%c1_172, %c2_173, %c0_174, %c0_175] : memref<3x3x16x16xf32, #tpu.memory_space<vmem>>, vector<1x1x16x16xf32>
    %115 = vector.shape_cast %114 : vector<1x1x16x16xf32> to vector<16x16xf32>
    %cst_176 = arith.constant dense<0.000000e+00> : vector<256x16xf32>
    %116 = tpu.matmul %113, %115, %cst_176 {dimension_numbers = #tpu.dot_dimension_numbers<[1], [0], [0], [1], [0, 0, 1, 1], [], []>} : vector<256x16xf32>, vector<16x16xf32>, vector<256x16xf32> -> vector<256x16xf32>
    %117 = arith.addf %111, %116 : vector<256x16xf32>
    %c2_177 = arith.constant 2 : index
    %c0_178 = arith.constant 0 : index
    %c0_179 = arith.constant 0 : index
    %118 = vector.load %arg14[%c2_177, %c0_178, %c0_179] : memref<18x18x16xf32, #tpu.memory_space<vmem>>, vector<16x16x16xf32>
    %119 = vector.shape_cast %118 : vector<16x16x16xf32> to vector<256x16xf32>
    %c2_180 = arith.constant 2 : index
    %c0_181 = arith.constant 0 : index
    %c0_182 = arith.constant 0 : index
    %c0_183 = arith.constant 0 : index
    %120 = vector.load %arg4[%c2_180, %c0_181, %c0_182, %c0_183] : memref<3x3x16x16xf32, #tpu.memory_space<vmem>>, vector<1x1x16x16xf32>
    %121 = vector.shape_cast %120 : vector<1x1x16x16xf32> to vector<16x16xf32>
    %cst_184 = arith.constant dense<0.000000e+00> : vector<256x16xf32>
    %122 = tpu.matmul %119, %121, %cst_184 {dimension_numbers = #tpu.dot_dimension_numbers<[1], [0], [0], [1], [0, 0, 1, 1], [], []>} : vector<256x16xf32>, vector<16x16xf32>, vector<256x16xf32> -> vector<256x16xf32>
    %123 = arith.addf %117, %122 : vector<256x16xf32>
    %c2_185 = arith.constant 2 : index
    %c1_186 = arith.constant 1 : index
    %c0_187 = arith.constant 0 : index
    %124 = vector.load %arg14[%c2_185, %c1_186, %c0_187] : memref<18x18x16xf32, #tpu.memory_space<vmem>>, vector<16x16x16xf32>
    %125 = vector.shape_cast %124 : vector<16x16x16xf32> to vector<256x16xf32>
    %c2_188 = arith.constant 2 : index
    %c1_189 = arith.constant 1 : index
    %c0_190 = arith.constant 0 : index
    %c0_191 = arith.constant 0 : index
    %126 = vector.load %arg4[%c2_188, %c1_189, %c0_190, %c0_191] : memref<3x3x16x16xf32, #tpu.memory_space<vmem>>, vector<1x1x16x16xf32>
    %127 = vector.shape_cast %126 : vector<1x1x16x16xf32> to vector<16x16xf32>
    %cst_192 = arith.constant dense<0.000000e+00> : vector<256x16xf32>
    %128 = tpu.matmul %125, %127, %cst_192 {dimension_numbers = #tpu.dot_dimension_numbers<[1], [0], [0], [1], [0, 0, 1, 1], [], []>} : vector<256x16xf32>, vector<16x16xf32>, vector<256x16xf32> -> vector<256x16xf32>
    %129 = arith.addf %123, %128 : vector<256x16xf32>
    %c2_193 = arith.constant 2 : index
    %c2_194 = arith.constant 2 : index
    %c0_195 = arith.constant 0 : index
    %130 = vector.load %arg14[%c2_193, %c2_194, %c0_195] : memref<18x18x16xf32, #tpu.memory_space<vmem>>, vector<16x16x16xf32>
    %131 = vector.shape_cast %130 : vector<16x16x16xf32> to vector<256x16xf32>
    %c2_196 = arith.constant 2 : index
    %c2_197 = arith.constant 2 : index
    %c0_198 = arith.constant 0 : index
    %c0_199 = arith.constant 0 : index
    %132 = vector.load %arg4[%c2_196, %c2_197, %c0_198, %c0_199] : memref<3x3x16x16xf32, #tpu.memory_space<vmem>>, vector<1x1x16x16xf32>
    %133 = vector.shape_cast %132 : vector<1x1x16x16xf32> to vector<16x16xf32>
    %cst_200 = arith.constant dense<0.000000e+00> : vector<256x16xf32>
    %134 = tpu.matmul %131, %133, %cst_200 {dimension_numbers = #tpu.dot_dimension_numbers<[1], [0], [0], [1], [0, 0, 1, 1], [], []>} : vector<256x16xf32>, vector<16x16xf32>, vector<256x16xf32> -> vector<256x16xf32>
    %135 = arith.addf %129, %134 : vector<256x16xf32>
    %c0_201 = arith.constant 0 : index
    %c0_202 = arith.constant 0 : index
    %136 = vector.load %arg5[%c0_201, %c0_202] : memref<1x16xf32, #tpu.memory_space<vmem>>, vector<1x16xf32>
    %137 = vector.broadcast %136 : vector<1x16xf32> to vector<256x16xf32>
    %138 = arith.addf %135, %137 : vector<256x16xf32>
    %cst_203 = arith.constant 0.000000e+00 : f32
    %139 = vector.broadcast %cst_203 : f32 to vector<256x16xf32>
    %140 = arith.maximumf %138, %139 : vector<256x16xf32>
    %141 = vector.shape_cast %140 : vector<256x16xf32> to vector<16x16x16xf32>
    %c0_204 = arith.constant 0 : index
    %c0_205 = arith.constant 0 : index
    %c0_206 = arith.constant 0 : index
    %142 = vector.load %arg15[%c0_204, %c0_205, %c0_206] : memref<16x16x16xf32, #tpu.memory_space<vmem>>, vector<16x16x16xf32>
    tpu.vector_store %arg15[%c0_204, %c0_205, %c0_206], %141 {strides = array<i32>} : memref<16x16x16xf32, #tpu.memory_space<vmem>>, vector<16x16x16xf32>,
    %c0_207 = arith.constant 0 : index
    %c0_208 = arith.constant 0 : index
    %c0_209 = arith.constant 0 : index
    %143 = tpu.strided_load %arg15[%c0_207, %c0_208, %c0_209] {strides = array<i32: 2, 2, 1>} : memref<16x16x16xf32, #tpu.memory_space<vmem>>, vector<8x8x16xf32>
    %c0_210 = arith.constant 0 : index
    %c1_211 = arith.constant 1 : index
    %c0_212 = arith.constant 0 : index
    %144 = tpu.strided_load %arg15[%c0_210, %c1_211, %c0_212] {strides = array<i32: 2, 2, 1>} : memref<16x16x16xf32, #tpu.memory_space<vmem>>, vector<8x8x16xf32>
    %c1_213 = arith.constant 1 : index
    %c0_214 = arith.constant 0 : index
    %c0_215 = arith.constant 0 : index
    %145 = tpu.strided_load %arg15[%c1_213, %c0_214, %c0_215] {strides = array<i32: 2, 2, 1>} : memref<16x16x16xf32, #tpu.memory_space<vmem>>, vector<8x8x16xf32>
    %c1_216 = arith.constant 1 : index
    %c1_217 = arith.constant 1 : index
    %c0_218 = arith.constant 0 : index
    %146 = tpu.strided_load %arg15[%c1_216, %c1_217, %c0_218] {strides = array<i32: 2, 2, 1>} : memref<16x16x16xf32, #tpu.memory_space<vmem>>, vector<8x8x16xf32>
    %147 = arith.maximumf %143, %144 : vector<8x8x16xf32>
    %148 = arith.maximumf %145, %146 : vector<8x8x16xf32>
    %149 = arith.maximumf %147, %148 : vector<8x8x16xf32>
    %c1_219 = arith.constant 1 : index
    %c1_220 = arith.constant 1 : index
    %c0_221 = arith.constant 0 : index
    %150 = vector.load %arg16[%c1_219, %c1_220, %c0_221] : memref<10x10x16xf32, #tpu.memory_space<vmem>>, vector<8x8x16xf32>
    tpu.vector_store %arg16[%c1_219, %c1_220, %c0_221], %149 {strides = array<i32>} : memref<10x10x16xf32, #tpu.memory_space<vmem>>, vector<8x8x16xf32>,
    %c2_222 = arith.constant 2 : index
    %c1_223 = arith.constant 1 : index
    %c0_224 = arith.constant 0 : index
    %151 = vector.load %arg16[%c2_222, %c1_223, %c0_224] : memref<10x10x16xf32, #tpu.memory_space<vmem>>, vector<1x8x16xf32>
    %c0_225 = arith.constant 0 : index
    %c1_226 = arith.constant 1 : index
    %c0_227 = arith.constant 0 : index
    %152 = vector.load %arg16[%c0_225, %c1_226, %c0_227] : memref<10x10x16xf32, #tpu.memory_space<vmem>>, vector<1x8x16xf32>
    tpu.vector_store %arg16[%c0_225, %c1_226, %c0_227], %151 {strides = array<i32>} : memref<10x10x16xf32, #tpu.memory_space<vmem>>, vector<1x8x16xf32>,
    %c7 = arith.constant 7 : index
    %c1_228 = arith.constant 1 : index
    %c0_229 = arith.constant 0 : index
    %153 = vector.load %arg16[%c7, %c1_228, %c0_229] : memref<10x10x16xf32, #tpu.memory_space<vmem>>, vector<1x8x16xf32>
    %c9 = arith.constant 9 : index
    %c1_230 = arith.constant 1 : index
    %c0_231 = arith.constant 0 : index
    %154 = vector.load %arg16[%c9, %c1_230, %c0_231] : memref<10x10x16xf32, #tpu.memory_space<vmem>>, vector<1x8x16xf32>
    tpu.vector_store %arg16[%c9, %c1_230, %c0_231], %153 {strides = array<i32>} : memref<10x10x16xf32, #tpu.memory_space<vmem>>, vector<1x8x16xf32>,
    %c0_232 = arith.constant 0 : index
    %c2_233 = arith.constant 2 : index
    %c0_234 = arith.constant 0 : index
    %155 = vector.load %arg16[%c0_232, %c2_233, %c0_234] : memref<10x10x16xf32, #tpu.memory_space<vmem>>, vector<10x1x16xf32>
    %c0_235 = arith.constant 0 : index
    %c0_236 = arith.constant 0 : index
    %c0_237 = arith.constant 0 : index
    %156 = vector.load %arg16[%c0_235, %c0_236, %c0_237] : memref<10x10x16xf32, #tpu.memory_space<vmem>>, vector<10x1x16xf32>
    tpu.vector_store %arg16[%c0_235, %c0_236, %c0_237], %155 {strides = array<i32>} : memref<10x10x16xf32, #tpu.memory_space<vmem>>, vector<10x1x16xf32>,
    %c0_238 = arith.constant 0 : index
    %c7_239 = arith.constant 7 : index
    %c0_240 = arith.constant 0 : index
    %157 = vector.load %arg16[%c0_238, %c7_239, %c0_240] : memref<10x10x16xf32, #tpu.memory_space<vmem>>, vector<10x1x16xf32>
    %c0_241 = arith.constant 0 : index
    %c9_242 = arith.constant 9 : index
    %c0_243 = arith.constant 0 : index
    %158 = vector.load %arg16[%c0_241, %c9_242, %c0_243] : memref<10x10x16xf32, #tpu.memory_space<vmem>>, vector<10x1x16xf32>
    tpu.vector_store %arg16[%c0_241, %c9_242, %c0_243], %157 {strides = array<i32>} : memref<10x10x16xf32, #tpu.memory_space<vmem>>, vector<10x1x16xf32>,
    %cst_244 = arith.constant 0.000000e+00 : f32
    %159 = vector.broadcast %cst_244 : f32 to vector<64x32xf32>
    %c0_245 = arith.constant 0 : index
    %c0_246 = arith.constant 0 : index
    %c0_247 = arith.constant 0 : index
    %160 = vector.load %arg16[%c0_245, %c0_246, %c0_247] : memref<10x10x16xf32, #tpu.memory_space<vmem>>, vector<8x8x16xf32>
    %161 = vector.shape_cast %160 : vector<8x8x16xf32> to vector<64x16xf32>
    %c0_248 = arith.constant 0 : index
    %c0_249 = arith.constant 0 : index
    %c0_250 = arith.constant 0 : index
    %c0_251 = arith.constant 0 : index
    %162 = vector.load %arg6[%c0_248, %c0_249, %c0_250, %c0_251] : memref<3x3x16x32xf32, #tpu.memory_space<vmem>>, vector<1x1x16x32xf32>
    %163 = vector.shape_cast %162 : vector<1x1x16x32xf32> to vector<16x32xf32>
    %cst_252 = arith.constant dense<0.000000e+00> : vector<64x32xf32>
    %164 = tpu.matmul %161, %163, %cst_252 {dimension_numbers = #tpu.dot_dimension_numbers<[1], [0], [0], [1], [0, 0, 1, 1], [], []>} : vector<64x16xf32>, vector<16x32xf32>, vector<64x32xf32> -> vector<64x32xf32>
    %165 = arith.addf %159, %164 : vector<64x32xf32>
    %c0_253 = arith.constant 0 : index
    %c1_254 = arith.constant 1 : index
    %c0_255 = arith.constant 0 : index
    %166 = vector.load %arg16[%c0_253, %c1_254, %c0_255] : memref<10x10x16xf32, #tpu.memory_space<vmem>>, vector<8x8x16xf32>
    %167 = vector.shape_cast %166 : vector<8x8x16xf32> to vector<64x16xf32>
    %c0_256 = arith.constant 0 : index
    %c1_257 = arith.constant 1 : index
    %c0_258 = arith.constant 0 : index
    %c0_259 = arith.constant 0 : index
    %168 = vector.load %arg6[%c0_256, %c1_257, %c0_258, %c0_259] : memref<3x3x16x32xf32, #tpu.memory_space<vmem>>, vector<1x1x16x32xf32>
    %169 = vector.shape_cast %168 : vector<1x1x16x32xf32> to vector<16x32xf32>
    %cst_260 = arith.constant dense<0.000000e+00> : vector<64x32xf32>
    %170 = tpu.matmul %167, %169, %cst_260 {dimension_numbers = #tpu.dot_dimension_numbers<[1], [0], [0], [1], [0, 0, 1, 1], [], []>} : vector<64x16xf32>, vector<16x32xf32>, vector<64x32xf32> -> vector<64x32xf32>
    %171 = arith.addf %165, %170 : vector<64x32xf32>
    %c0_261 = arith.constant 0 : index
    %c2_262 = arith.constant 2 : index
    %c0_263 = arith.constant 0 : index
    %172 = vector.load %arg16[%c0_261, %c2_262, %c0_263] : memref<10x10x16xf32, #tpu.memory_space<vmem>>, vector<8x8x16xf32>
    %173 = vector.shape_cast %172 : vector<8x8x16xf32> to vector<64x16xf32>
    %c0_264 = arith.constant 0 : index
    %c2_265 = arith.constant 2 : index
    %c0_266 = arith.constant 0 : index
    %c0_267 = arith.constant 0 : index
    %174 = vector.load %arg6[%c0_264, %c2_265, %c0_266, %c0_267] : memref<3x3x16x32xf32, #tpu.memory_space<vmem>>, vector<1x1x16x32xf32>
    %175 = vector.shape_cast %174 : vector<1x1x16x32xf32> to vector<16x32xf32>
    %cst_268 = arith.constant dense<0.000000e+00> : vector<64x32xf32>
    %176 = tpu.matmul %173, %175, %cst_268 {dimension_numbers = #tpu.dot_dimension_numbers<[1], [0], [0], [1], [0, 0, 1, 1], [], []>} : vector<64x16xf32>, vector<16x32xf32>, vector<64x32xf32> -> vector<64x32xf32>
    %177 = arith.addf %171, %176 : vector<64x32xf32>
    %c1_269 = arith.constant 1 : index
    %c0_270 = arith.constant 0 : index
    %c0_271 = arith.constant 0 : index
    %178 = vector.load %arg16[%c1_269, %c0_270, %c0_271] : memref<10x10x16xf32, #tpu.memory_space<vmem>>, vector<8x8x16xf32>
    %179 = vector.shape_cast %178 : vector<8x8x16xf32> to vector<64x16xf32>
    %c1_272 = arith.constant 1 : index
    %c0_273 = arith.constant 0 : index
    %c0_274 = arith.constant 0 : index
    %c0_275 = arith.constant 0 : index
    %180 = vector.load %arg6[%c1_272, %c0_273, %c0_274, %c0_275] : memref<3x3x16x32xf32, #tpu.memory_space<vmem>>, vector<1x1x16x32xf32>
    %181 = vector.shape_cast %180 : vector<1x1x16x32xf32> to vector<16x32xf32>
    %cst_276 = arith.constant dense<0.000000e+00> : vector<64x32xf32>
    %182 = tpu.matmul %179, %181, %cst_276 {dimension_numbers = #tpu.dot_dimension_numbers<[1], [0], [0], [1], [0, 0, 1, 1], [], []>} : vector<64x16xf32>, vector<16x32xf32>, vector<64x32xf32> -> vector<64x32xf32>
    %183 = arith.addf %177, %182 : vector<64x32xf32>
    %c1_277 = arith.constant 1 : index
    %c1_278 = arith.constant 1 : index
    %c0_279 = arith.constant 0 : index
    %184 = vector.load %arg16[%c1_277, %c1_278, %c0_279] : memref<10x10x16xf32, #tpu.memory_space<vmem>>, vector<8x8x16xf32>
    %185 = vector.shape_cast %184 : vector<8x8x16xf32> to vector<64x16xf32>
    %c1_280 = arith.constant 1 : index
    %c1_281 = arith.constant 1 : index
    %c0_282 = arith.constant 0 : index
    %c0_283 = arith.constant 0 : index
    %186 = vector.load %arg6[%c1_280, %c1_281, %c0_282, %c0_283] : memref<3x3x16x32xf32, #tpu.memory_space<vmem>>, vector<1x1x16x32xf32>
    %187 = vector.shape_cast %186 : vector<1x1x16x32xf32> to vector<16x32xf32>
    %cst_284 = arith.constant dense<0.000000e+00> : vector<64x32xf32>
    %188 = tpu.matmul %185, %187, %cst_284 {dimension_numbers = #tpu.dot_dimension_numbers<[1], [0], [0], [1], [0, 0, 1, 1], [], []>} : vector<64x16xf32>, vector<16x32xf32>, vector<64x32xf32> -> vector<64x32xf32>
    %189 = arith.addf %183, %188 : vector<64x32xf32>
    %c1_285 = arith.constant 1 : index
    %c2_286 = arith.constant 2 : index
    %c0_287 = arith.constant 0 : index
    %190 = vector.load %arg16[%c1_285, %c2_286, %c0_287] : memref<10x10x16xf32, #tpu.memory_space<vmem>>, vector<8x8x16xf32>
    %191 = vector.shape_cast %190 : vector<8x8x16xf32> to vector<64x16xf32>
    %c1_288 = arith.constant 1 : index
    %c2_289 = arith.constant 2 : index
    %c0_290 = arith.constant 0 : index
    %c0_291 = arith.constant 0 : index
    %192 = vector.load %arg6[%c1_288, %c2_289, %c0_290, %c0_291] : memref<3x3x16x32xf32, #tpu.memory_space<vmem>>, vector<1x1x16x32xf32>
    %193 = vector.shape_cast %192 : vector<1x1x16x32xf32> to vector<16x32xf32>
    %cst_292 = arith.constant dense<0.000000e+00> : vector<64x32xf32>
    %194 = tpu.matmul %191, %193, %cst_292 {dimension_numbers = #tpu.dot_dimension_numbers<[1], [0], [0], [1], [0, 0, 1, 1], [], []>} : vector<64x16xf32>, vector<16x32xf32>, vector<64x32xf32> -> vector<64x32xf32>
    %195 = arith.addf %189, %194 : vector<64x32xf32>
    %c2_293 = arith.constant 2 : index
    %c0_294 = arith.constant 0 : index
    %c0_295 = arith.constant 0 : index
    %196 = vector.load %arg16[%c2_293, %c0_294, %c0_295] : memref<10x10x16xf32, #tpu.memory_space<vmem>>, vector<8x8x16xf32>
    %197 = vector.shape_cast %196 : vector<8x8x16xf32> to vector<64x16xf32>
    %c2_296 = arith.constant 2 : index
    %c0_297 = arith.constant 0 : index
    %c0_298 = arith.constant 0 : index
    %c0_299 = arith.constant 0 : index
    %198 = vector.load %arg6[%c2_296, %c0_297, %c0_298, %c0_299] : memref<3x3x16x32xf32, #tpu.memory_space<vmem>>, vector<1x1x16x32xf32>
    %199 = vector.shape_cast %198 : vector<1x1x16x32xf32> to vector<16x32xf32>
    %cst_300 = arith.constant dense<0.000000e+00> : vector<64x32xf32>
    %200 = tpu.matmul %197, %199, %cst_300 {dimension_numbers = #tpu.dot_dimension_numbers<[1], [0], [0], [1], [0, 0, 1, 1], [], []>} : vector<64x16xf32>, vector<16x32xf32>, vector<64x32xf32> -> vector<64x32xf32>
    %201 = arith.addf %195, %200 : vector<64x32xf32>
    %c2_301 = arith.constant 2 : index
    %c1_302 = arith.constant 1 : index
    %c0_303 = arith.constant 0 : index
    %202 = vector.load %arg16[%c2_301, %c1_302, %c0_303] : memref<10x10x16xf32, #tpu.memory_space<vmem>>, vector<8x8x16xf32>
    %203 = vector.shape_cast %202 : vector<8x8x16xf32> to vector<64x16xf32>
    %c2_304 = arith.constant 2 : index
    %c1_305 = arith.constant 1 : index
    %c0_306 = arith.constant 0 : index
    %c0_307 = arith.constant 0 : index
    %204 = vector.load %arg6[%c2_304, %c1_305, %c0_306, %c0_307] : memref<3x3x16x32xf32, #tpu.memory_space<vmem>>, vector<1x1x16x32xf32>
    %205 = vector.shape_cast %204 : vector<1x1x16x32xf32> to vector<16x32xf32>
    %cst_308 = arith.constant dense<0.000000e+00> : vector<64x32xf32>
    %206 = tpu.matmul %203, %205, %cst_308 {dimension_numbers = #tpu.dot_dimension_numbers<[1], [0], [0], [1], [0, 0, 1, 1], [], []>} : vector<64x16xf32>, vector<16x32xf32>, vector<64x32xf32> -> vector<64x32xf32>
    %207 = arith.addf %201, %206 : vector<64x32xf32>
    %c2_309 = arith.constant 2 : index
    %c2_310 = arith.constant 2 : index
    %c0_311 = arith.constant 0 : index
    %208 = vector.load %arg16[%c2_309, %c2_310, %c0_311] : memref<10x10x16xf32, #tpu.memory_space<vmem>>, vector<8x8x16xf32>
    %209 = vector.shape_cast %208 : vector<8x8x16xf32> to vector<64x16xf32>
    %c2_312 = arith.constant 2 : index
    %c2_313 = arith.constant 2 : index
    %c0_314 = arith.constant 0 : index
    %c0_315 = arith.constant 0 : index
    %210 = vector.load %arg6[%c2_312, %c2_313, %c0_314, %c0_315] : memref<3x3x16x32xf32, #tpu.memory_space<vmem>>, vector<1x1x16x32xf32>
    %211 = vector.shape_cast %210 : vector<1x1x16x32xf32> to vector<16x32xf32>
    %cst_316 = arith.constant dense<0.000000e+00> : vector<64x32xf32>
    %212 = tpu.matmul %209, %211, %cst_316 {dimension_numbers = #tpu.dot_dimension_numbers<[1], [0], [0], [1], [0, 0, 1, 1], [], []>} : vector<64x16xf32>, vector<16x32xf32>, vector<64x32xf32> -> vector<64x32xf32>
    %213 = arith.addf %207, %212 : vector<64x32xf32>
    %c0_317 = arith.constant 0 : index
    %c0_318 = arith.constant 0 : index
    %214 = vector.load %arg7[%c0_317, %c0_318] : memref<1x32xf32, #tpu.memory_space<vmem>>, vector<1x32xf32>
    %215 = vector.broadcast %214 : vector<1x32xf32> to vector<64x32xf32>
    %216 = arith.addf %213, %215 : vector<64x32xf32>
    %cst_319 = arith.constant 0.000000e+00 : f32
    %217 = vector.broadcast %cst_319 : f32 to vector<64x32xf32>
    %218 = arith.maximumf %216, %217 : vector<64x32xf32>
    %219 = vector.shape_cast %218 : vector<64x32xf32> to vector<8x8x32xf32>
    %c1_320 = arith.constant 1 : index
    %c1_321 = arith.constant 1 : index
    %c0_322 = arith.constant 0 : index
    %220 = vector.load %arg17[%c1_320, %c1_321, %c0_322] : memref<10x10x32xf32, #tpu.memory_space<vmem>>, vector<8x8x32xf32>
    tpu.vector_store %arg17[%c1_320, %c1_321, %c0_322], %219 {strides = array<i32>} : memref<10x10x32xf32, #tpu.memory_space<vmem>>, vector<8x8x32xf32>,
    %c2_323 = arith.constant 2 : index
    %c1_324 = arith.constant 1 : index
    %c0_325 = arith.constant 0 : index
    %221 = vector.load %arg17[%c2_323, %c1_324, %c0_325] : memref<10x10x32xf32, #tpu.memory_space<vmem>>, vector<1x8x32xf32>
    %c0_326 = arith.constant 0 : index
    %c1_327 = arith.constant 1 : index
    %c0_328 = arith.constant 0 : index
    %222 = vector.load %arg17[%c0_326, %c1_327, %c0_328] : memref<10x10x32xf32, #tpu.memory_space<vmem>>, vector<1x8x32xf32>
    tpu.vector_store %arg17[%c0_326, %c1_327, %c0_328], %221 {strides = array<i32>} : memref<10x10x32xf32, #tpu.memory_space<vmem>>, vector<1x8x32xf32>,
    %c7_329 = arith.constant 7 : index
    %c1_330 = arith.constant 1 : index
    %c0_331 = arith.constant 0 : index
    %223 = vector.load %arg17[%c7_329, %c1_330, %c0_331] : memref<10x10x32xf32, #tpu.memory_space<vmem>>, vector<1x8x32xf32>
    %c9_332 = arith.constant 9 : index
    %c1_333 = arith.constant 1 : index
    %c0_334 = arith.constant 0 : index
    %224 = vector.load %arg17[%c9_332, %c1_333, %c0_334] : memref<10x10x32xf32, #tpu.memory_space<vmem>>, vector<1x8x32xf32>
    tpu.vector_store %arg17[%c9_332, %c1_333, %c0_334], %223 {strides = array<i32>} : memref<10x10x32xf32, #tpu.memory_space<vmem>>, vector<1x8x32xf32>,
    %c0_335 = arith.constant 0 : index
    %c2_336 = arith.constant 2 : index
    %c0_337 = arith.constant 0 : index
    %225 = vector.load %arg17[%c0_335, %c2_336, %c0_337] : memref<10x10x32xf32, #tpu.memory_space<vmem>>, vector<10x1x32xf32>
    %c0_338 = arith.constant 0 : index
    %c0_339 = arith.constant 0 : index
    %c0_340 = arith.constant 0 : index
    %226 = vector.load %arg17[%c0_338, %c0_339, %c0_340] : memref<10x10x32xf32, #tpu.memory_space<vmem>>, vector<10x1x32xf32>
    tpu.vector_store %arg17[%c0_338, %c0_339, %c0_340], %225 {strides = array<i32>} : memref<10x10x32xf32, #tpu.memory_space<vmem>>, vector<10x1x32xf32>,
    %c0_341 = arith.constant 0 : index
    %c7_342 = arith.constant 7 : index
    %c0_343 = arith.constant 0 : index
    %227 = vector.load %arg17[%c0_341, %c7_342, %c0_343] : memref<10x10x32xf32, #tpu.memory_space<vmem>>, vector<10x1x32xf32>
    %c0_344 = arith.constant 0 : index
    %c9_345 = arith.constant 9 : index
    %c0_346 = arith.constant 0 : index
    %228 = vector.load %arg17[%c0_344, %c9_345, %c0_346] : memref<10x10x32xf32, #tpu.memory_space<vmem>>, vector<10x1x32xf32>
    tpu.vector_store %arg17[%c0_344, %c9_345, %c0_346], %227 {strides = array<i32>} : memref<10x10x32xf32, #tpu.memory_space<vmem>>, vector<10x1x32xf32>,
    %cst_347 = arith.constant 0.000000e+00 : f32
    %229 = vector.broadcast %cst_347 : f32 to vector<64x32xf32>
    %c0_348 = arith.constant 0 : index
    %c0_349 = arith.constant 0 : index
    %c0_350 = arith.constant 0 : index
    %230 = vector.load %arg17[%c0_348, %c0_349, %c0_350] : memref<10x10x32xf32, #tpu.memory_space<vmem>>, vector<8x8x32xf32>
    %231 = vector.shape_cast %230 : vector<8x8x32xf32> to vector<64x32xf32>
    %c0_351 = arith.constant 0 : index
    %c0_352 = arith.constant 0 : index
    %c0_353 = arith.constant 0 : index
    %c0_354 = arith.constant 0 : index
    %232 = vector.load %arg8[%c0_351, %c0_352, %c0_353, %c0_354] : memref<3x3x32x32xf32, #tpu.memory_space<vmem>>, vector<1x1x32x32xf32>
    %233 = vector.shape_cast %232 : vector<1x1x32x32xf32> to vector<32x32xf32>
    %cst_355 = arith.constant dense<0.000000e+00> : vector<64x32xf32>
    %234 = tpu.matmul %231, %233, %cst_355 {dimension_numbers = #tpu.dot_dimension_numbers<[1], [0], [0], [1], [0, 0, 1, 1], [], []>} : vector<64x32xf32>, vector<32x32xf32>, vector<64x32xf32> -> vector<64x32xf32>
    %235 = arith.addf %229, %234 : vector<64x32xf32>
    %c0_356 = arith.constant 0 : index
    %c1_357 = arith.constant 1 : index
    %c0_358 = arith.constant 0 : index
    %236 = vector.load %arg17[%c0_356, %c1_357, %c0_358] : memref<10x10x32xf32, #tpu.memory_space<vmem>>, vector<8x8x32xf32>
    %237 = vector.shape_cast %236 : vector<8x8x32xf32> to vector<64x32xf32>
    %c0_359 = arith.constant 0 : index
    %c1_360 = arith.constant 1 : index
    %c0_361 = arith.constant 0 : index
    %c0_362 = arith.constant 0 : index
    %238 = vector.load %arg8[%c0_359, %c1_360, %c0_361, %c0_362] : memref<3x3x32x32xf32, #tpu.memory_space<vmem>>, vector<1x1x32x32xf32>
    %239 = vector.shape_cast %238 : vector<1x1x32x32xf32> to vector<32x32xf32>
    %cst_363 = arith.constant dense<0.000000e+00> : vector<64x32xf32>
    %240 = tpu.matmul %237, %239, %cst_363 {dimension_numbers = #tpu.dot_dimension_numbers<[1], [0], [0], [1], [0, 0, 1, 1], [], []>} : vector<64x32xf32>, vector<32x32xf32>, vector<64x32xf32> -> vector<64x32xf32>
    %241 = arith.addf %235, %240 : vector<64x32xf32>
    %c0_364 = arith.constant 0 : index
    %c2_365 = arith.constant 2 : index
    %c0_366 = arith.constant 0 : index
    %242 = vector.load %arg17[%c0_364, %c2_365, %c0_366] : memref<10x10x32xf32, #tpu.memory_space<vmem>>, vector<8x8x32xf32>
    %243 = vector.shape_cast %242 : vector<8x8x32xf32> to vector<64x32xf32>
    %c0_367 = arith.constant 0 : index
    %c2_368 = arith.constant 2 : index
    %c0_369 = arith.constant 0 : index
    %c0_370 = arith.constant 0 : index
    %244 = vector.load %arg8[%c0_367, %c2_368, %c0_369, %c0_370] : memref<3x3x32x32xf32, #tpu.memory_space<vmem>>, vector<1x1x32x32xf32>
    %245 = vector.shape_cast %244 : vector<1x1x32x32xf32> to vector<32x32xf32>
    %cst_371 = arith.constant dense<0.000000e+00> : vector<64x32xf32>
    %246 = tpu.matmul %243, %245, %cst_371 {dimension_numbers = #tpu.dot_dimension_numbers<[1], [0], [0], [1], [0, 0, 1, 1], [], []>} : vector<64x32xf32>, vector<32x32xf32>, vector<64x32xf32> -> vector<64x32xf32>
    %247 = arith.addf %241, %246 : vector<64x32xf32>
    %c1_372 = arith.constant 1 : index
    %c0_373 = arith.constant 0 : index
    %c0_374 = arith.constant 0 : index
    %248 = vector.load %arg17[%c1_372, %c0_373, %c0_374] : memref<10x10x32xf32, #tpu.memory_space<vmem>>, vector<8x8x32xf32>
    %249 = vector.shape_cast %248 : vector<8x8x32xf32> to vector<64x32xf32>
    %c1_375 = arith.constant 1 : index
    %c0_376 = arith.constant 0 : index
    %c0_377 = arith.constant 0 : index
    %c0_378 = arith.constant 0 : index
    %250 = vector.load %arg8[%c1_375, %c0_376, %c0_377, %c0_378] : memref<3x3x32x32xf32, #tpu.memory_space<vmem>>, vector<1x1x32x32xf32>
    %251 = vector.shape_cast %250 : vector<1x1x32x32xf32> to vector<32x32xf32>
    %cst_379 = arith.constant dense<0.000000e+00> : vector<64x32xf32>
    %252 = tpu.matmul %249, %251, %cst_379 {dimension_numbers = #tpu.dot_dimension_numbers<[1], [0], [0], [1], [0, 0, 1, 1], [], []>} : vector<64x32xf32>, vector<32x32xf32>, vector<64x32xf32> -> vector<64x32xf32>
    %253 = arith.addf %247, %252 : vector<64x32xf32>
    %c1_380 = arith.constant 1 : index
    %c1_381 = arith.constant 1 : index
    %c0_382 = arith.constant 0 : index
    %254 = vector.load %arg17[%c1_380, %c1_381, %c0_382] : memref<10x10x32xf32, #tpu.memory_space<vmem>>, vector<8x8x32xf32>
    %255 = vector.shape_cast %254 : vector<8x8x32xf32> to vector<64x32xf32>
    %c1_383 = arith.constant 1 : index
    %c1_384 = arith.constant 1 : index
    %c0_385 = arith.constant 0 : index
    %c0_386 = arith.constant 0 : index
    %256 = vector.load %arg8[%c1_383, %c1_384, %c0_385, %c0_386] : memref<3x3x32x32xf32, #tpu.memory_space<vmem>>, vector<1x1x32x32xf32>
    %257 = vector.shape_cast %256 : vector<1x1x32x32xf32> to vector<32x32xf32>
    %cst_387 = arith.constant dense<0.000000e+00> : vector<64x32xf32>
    %258 = tpu.matmul %255, %257, %cst_387 {dimension_numbers = #tpu.dot_dimension_numbers<[1], [0], [0], [1], [0, 0, 1, 1], [], []>} : vector<64x32xf32>, vector<32x32xf32>, vector<64x32xf32> -> vector<64x32xf32>
    %259 = arith.addf %253, %258 : vector<64x32xf32>
    %c1_388 = arith.constant 1 : index
    %c2_389 = arith.constant 2 : index
    %c0_390 = arith.constant 0 : index
    %260 = vector.load %arg17[%c1_388, %c2_389, %c0_390] : memref<10x10x32xf32, #tpu.memory_space<vmem>>, vector<8x8x32xf32>
    %261 = vector.shape_cast %260 : vector<8x8x32xf32> to vector<64x32xf32>
    %c1_391 = arith.constant 1 : index
    %c2_392 = arith.constant 2 : index
    %c0_393 = arith.constant 0 : index
    %c0_394 = arith.constant 0 : index
    %262 = vector.load %arg8[%c1_391, %c2_392, %c0_393, %c0_394] : memref<3x3x32x32xf32, #tpu.memory_space<vmem>>, vector<1x1x32x32xf32>
    %263 = vector.shape_cast %262 : vector<1x1x32x32xf32> to vector<32x32xf32>
    %cst_395 = arith.constant dense<0.000000e+00> : vector<64x32xf32>
    %264 = tpu.matmul %261, %263, %cst_395 {dimension_numbers = #tpu.dot_dimension_numbers<[1], [0], [0], [1], [0, 0, 1, 1], [], []>} : vector<64x32xf32>, vector<32x32xf32>, vector<64x32xf32> -> vector<64x32xf32>
    %265 = arith.addf %259, %264 : vector<64x32xf32>
    %c2_396 = arith.constant 2 : index
    %c0_397 = arith.constant 0 : index
    %c0_398 = arith.constant 0 : index
    %266 = vector.load %arg17[%c2_396, %c0_397, %c0_398] : memref<10x10x32xf32, #tpu.memory_space<vmem>>, vector<8x8x32xf32>
    %267 = vector.shape_cast %266 : vector<8x8x32xf32> to vector<64x32xf32>
    %c2_399 = arith.constant 2 : index
    %c0_400 = arith.constant 0 : index
    %c0_401 = arith.constant 0 : index
    %c0_402 = arith.constant 0 : index
    %268 = vector.load %arg8[%c2_399, %c0_400, %c0_401, %c0_402] : memref<3x3x32x32xf32, #tpu.memory_space<vmem>>, vector<1x1x32x32xf32>
    %269 = vector.shape_cast %268 : vector<1x1x32x32xf32> to vector<32x32xf32>
    %cst_403 = arith.constant dense<0.000000e+00> : vector<64x32xf32>
    %270 = tpu.matmul %267, %269, %cst_403 {dimension_numbers = #tpu.dot_dimension_numbers<[1], [0], [0], [1], [0, 0, 1, 1], [], []>} : vector<64x32xf32>, vector<32x32xf32>, vector<64x32xf32> -> vector<64x32xf32>
    %271 = arith.addf %265, %270 : vector<64x32xf32>
    %c2_404 = arith.constant 2 : index
    %c1_405 = arith.constant 1 : index
    %c0_406 = arith.constant 0 : index
    %272 = vector.load %arg17[%c2_404, %c1_405, %c0_406] : memref<10x10x32xf32, #tpu.memory_space<vmem>>, vector<8x8x32xf32>
    %273 = vector.shape_cast %272 : vector<8x8x32xf32> to vector<64x32xf32>
    %c2_407 = arith.constant 2 : index
    %c1_408 = arith.constant 1 : index
    %c0_409 = arith.constant 0 : index
    %c0_410 = arith.constant 0 : index
    %274 = vector.load %arg8[%c2_407, %c1_408, %c0_409, %c0_410] : memref<3x3x32x32xf32, #tpu.memory_space<vmem>>, vector<1x1x32x32xf32>
    %275 = vector.shape_cast %274 : vector<1x1x32x32xf32> to vector<32x32xf32>
    %cst_411 = arith.constant dense<0.000000e+00> : vector<64x32xf32>
    %276 = tpu.matmul %273, %275, %cst_411 {dimension_numbers = #tpu.dot_dimension_numbers<[1], [0], [0], [1], [0, 0, 1, 1], [], []>} : vector<64x32xf32>, vector<32x32xf32>, vector<64x32xf32> -> vector<64x32xf32>
    %277 = arith.addf %271, %276 : vector<64x32xf32>
    %c2_412 = arith.constant 2 : index
    %c2_413 = arith.constant 2 : index
    %c0_414 = arith.constant 0 : index
    %278 = vector.load %arg17[%c2_412, %c2_413, %c0_414] : memref<10x10x32xf32, #tpu.memory_space<vmem>>, vector<8x8x32xf32>
    %279 = vector.shape_cast %278 : vector<8x8x32xf32> to vector<64x32xf32>
    %c2_415 = arith.constant 2 : index
    %c2_416 = arith.constant 2 : index
    %c0_417 = arith.constant 0 : index
    %c0_418 = arith.constant 0 : index
    %280 = vector.load %arg8[%c2_415, %c2_416, %c0_417, %c0_418] : memref<3x3x32x32xf32, #tpu.memory_space<vmem>>, vector<1x1x32x32xf32>
    %281 = vector.shape_cast %280 : vector<1x1x32x32xf32> to vector<32x32xf32>
    %cst_419 = arith.constant dense<0.000000e+00> : vector<64x32xf32>
    %282 = tpu.matmul %279, %281, %cst_419 {dimension_numbers = #tpu.dot_dimension_numbers<[1], [0], [0], [1], [0, 0, 1, 1], [], []>} : vector<64x32xf32>, vector<32x32xf32>, vector<64x32xf32> -> vector<64x32xf32>
    %283 = arith.addf %277, %282 : vector<64x32xf32>
    %c0_420 = arith.constant 0 : index
    %c0_421 = arith.constant 0 : index
    %284 = vector.load %arg9[%c0_420, %c0_421] : memref<1x32xf32, #tpu.memory_space<vmem>>, vector<1x32xf32>
    %285 = vector.broadcast %284 : vector<1x32xf32> to vector<64x32xf32>
    %286 = arith.addf %283, %285 : vector<64x32xf32>
    %cst_422 = arith.constant 0.000000e+00 : f32
    %287 = vector.broadcast %cst_422 : f32 to vector<64x32xf32>
    %288 = arith.maximumf %286, %287 : vector<64x32xf32>
    %289 = vector.shape_cast %288 : vector<64x32xf32> to vector<8x8x32xf32>
    %c0_423 = arith.constant 0 : index
    %c0_424 = arith.constant 0 : index
    %c0_425 = arith.constant 0 : index
    %290 = vector.load %arg18[%c0_423, %c0_424, %c0_425] : memref<8x8x32xf32, #tpu.memory_space<vmem>>, vector<8x8x32xf32>
    tpu.vector_store %arg18[%c0_423, %c0_424, %c0_425], %289 {strides = array<i32>} : memref<8x8x32xf32, #tpu.memory_space<vmem>>, vector<8x8x32xf32>,
    %c0_426 = arith.constant 0 : index
    %c0_427 = arith.constant 0 : index
    %c0_428 = arith.constant 0 : index
    %291 = tpu.strided_load %arg18[%c0_426, %c0_427, %c0_428] {strides = array<i32: 2, 2, 1>} : memref<8x8x32xf32, #tpu.memory_space<vmem>>, vector<4x4x32xf32>
    %c0_429 = arith.constant 0 : index
    %c1_430 = arith.constant 1 : index
    %c0_431 = arith.constant 0 : index
    %292 = tpu.strided_load %arg18[%c0_429, %c1_430, %c0_431] {strides = array<i32: 2, 2, 1>} : memref<8x8x32xf32, #tpu.memory_space<vmem>>, vector<4x4x32xf32>
    %c1_432 = arith.constant 1 : index
    %c0_433 = arith.constant 0 : index
    %c0_434 = arith.constant 0 : index
    %293 = tpu.strided_load %arg18[%c1_432, %c0_433, %c0_434] {strides = array<i32: 2, 2, 1>} : memref<8x8x32xf32, #tpu.memory_space<vmem>>, vector<4x4x32xf32>
    %c1_435 = arith.constant 1 : index
    %c1_436 = arith.constant 1 : index
    %c0_437 = arith.constant 0 : index
    %294 = tpu.strided_load %arg18[%c1_435, %c1_436, %c0_437] {strides = array<i32: 2, 2, 1>} : memref<8x8x32xf32, #tpu.memory_space<vmem>>, vector<4x4x32xf32>
    %295 = arith.maximumf %291, %292 : vector<4x4x32xf32>
    %296 = arith.maximumf %293, %294 : vector<4x4x32xf32>
    %297 = arith.maximumf %295, %296 : vector<4x4x32xf32>
    %c1_438 = arith.constant 1 : index
    %c1_439 = arith.constant 1 : index
    %c0_440 = arith.constant 0 : index
    %298 = vector.load %arg19[%c1_438, %c1_439, %c0_440] : memref<6x6x32xf32, #tpu.memory_space<vmem>>, vector<4x4x32xf32>
    tpu.vector_store %arg19[%c1_438, %c1_439, %c0_440], %297 {strides = array<i32>} : memref<6x6x32xf32, #tpu.memory_space<vmem>>, vector<4x4x32xf32>,
    %c2_441 = arith.constant 2 : index
    %c1_442 = arith.constant 1 : index
    %c0_443 = arith.constant 0 : index
    %299 = vector.load %arg19[%c2_441, %c1_442, %c0_443] : memref<6x6x32xf32, #tpu.memory_space<vmem>>, vector<1x4x32xf32>
    %c0_444 = arith.constant 0 : index
    %c1_445 = arith.constant 1 : index
    %c0_446 = arith.constant 0 : index
    %300 = vector.load %arg19[%c0_444, %c1_445, %c0_446] : memref<6x6x32xf32, #tpu.memory_space<vmem>>, vector<1x4x32xf32>
    tpu.vector_store %arg19[%c0_444, %c1_445, %c0_446], %299 {strides = array<i32>} : memref<6x6x32xf32, #tpu.memory_space<vmem>>, vector<1x4x32xf32>,
    %c3 = arith.constant 3 : index
    %c1_447 = arith.constant 1 : index
    %c0_448 = arith.constant 0 : index
    %301 = vector.load %arg19[%c3, %c1_447, %c0_448] : memref<6x6x32xf32, #tpu.memory_space<vmem>>, vector<1x4x32xf32>
    %c5 = arith.constant 5 : index
    %c1_449 = arith.constant 1 : index
    %c0_450 = arith.constant 0 : index
    %302 = vector.load %arg19[%c5, %c1_449, %c0_450] : memref<6x6x32xf32, #tpu.memory_space<vmem>>, vector<1x4x32xf32>
    tpu.vector_store %arg19[%c5, %c1_449, %c0_450], %301 {strides = array<i32>} : memref<6x6x32xf32, #tpu.memory_space<vmem>>, vector<1x4x32xf32>,
    %c0_451 = arith.constant 0 : index
    %c2_452 = arith.constant 2 : index
    %c0_453 = arith.constant 0 : index
    %303 = vector.load %arg19[%c0_451, %c2_452, %c0_453] : memref<6x6x32xf32, #tpu.memory_space<vmem>>, vector<6x1x32xf32>
    %c0_454 = arith.constant 0 : index
    %c0_455 = arith.constant 0 : index
    %c0_456 = arith.constant 0 : index
    %304 = vector.load %arg19[%c0_454, %c0_455, %c0_456] : memref<6x6x32xf32, #tpu.memory_space<vmem>>, vector<6x1x32xf32>
    tpu.vector_store %arg19[%c0_454, %c0_455, %c0_456], %303 {strides = array<i32>} : memref<6x6x32xf32, #tpu.memory_space<vmem>>, vector<6x1x32xf32>,
    %c0_457 = arith.constant 0 : index
    %c3_458 = arith.constant 3 : index
    %c0_459 = arith.constant 0 : index
    %305 = vector.load %arg19[%c0_457, %c3_458, %c0_459] : memref<6x6x32xf32, #tpu.memory_space<vmem>>, vector<6x1x32xf32>
    %c0_460 = arith.constant 0 : index
    %c5_461 = arith.constant 5 : index
    %c0_462 = arith.constant 0 : index
    %306 = vector.load %arg19[%c0_460, %c5_461, %c0_462] : memref<6x6x32xf32, #tpu.memory_space<vmem>>, vector<6x1x32xf32>
    tpu.vector_store %arg19[%c0_460, %c5_461, %c0_462], %305 {strides = array<i32>} : memref<6x6x32xf32, #tpu.memory_space<vmem>>, vector<6x1x32xf32>,
    %c0_463 = arith.constant 0 : index
    %c0_464 = arith.constant 0 : index
    %307 = vector.load %arg11[%c0_463, %c0_464] : memref<1x64xf32, #tpu.memory_space<vmem>>, vector<1x64xf32>
    %cst_465 = arith.constant 0.000000e+00 : f32
    %308 = vector.broadcast %cst_465 : f32 to vector<4x64xf32>
    %c0_466 = arith.constant 0 : index
    %c0_467 = arith.constant 0 : index
    %c0_468 = arith.constant 0 : index
    %309 = vector.load %arg19[%c0_466, %c0_467, %c0_468] : memref<6x6x32xf32, #tpu.memory_space<vmem>>, vector<1x4x32xf32>
    %310 = vector.shape_cast %309 : vector<1x4x32xf32> to vector<4x32xf32>
    %c0_469 = arith.constant 0 : index
    %c0_470 = arith.constant 0 : index
    %c0_471 = arith.constant 0 : index
    %c0_472 = arith.constant 0 : index
    %311 = vector.load %arg10[%c0_469, %c0_470, %c0_471, %c0_472] : memref<3x3x32x64xf32, #tpu.memory_space<vmem>>, vector<1x1x32x64xf32>
    %312 = vector.shape_cast %311 : vector<1x1x32x64xf32> to vector<32x64xf32>
    %cst_473 = arith.constant dense<0.000000e+00> : vector<4x64xf32>
    %313 = tpu.matmul %310, %312, %cst_473 {dimension_numbers = #tpu.dot_dimension_numbers<[1], [0], [0], [1], [0, 0, 1, 1], [], []>} : vector<4x32xf32>, vector<32x64xf32>, vector<4x64xf32> -> vector<4x64xf32>
    %314 = arith.addf %308, %313 : vector<4x64xf32>
    %c0_474 = arith.constant 0 : index
    %c1_475 = arith.constant 1 : index
    %c0_476 = arith.constant 0 : index
    %315 = vector.load %arg19[%c0_474, %c1_475, %c0_476] : memref<6x6x32xf32, #tpu.memory_space<vmem>>, vector<1x4x32xf32>
    %316 = vector.shape_cast %315 : vector<1x4x32xf32> to vector<4x32xf32>
    %c0_477 = arith.constant 0 : index
    %c1_478 = arith.constant 1 : index
    %c0_479 = arith.constant 0 : index
    %c0_480 = arith.constant 0 : index
    %317 = vector.load %arg10[%c0_477, %c1_478, %c0_479, %c0_480] : memref<3x3x32x64xf32, #tpu.memory_space<vmem>>, vector<1x1x32x64xf32>
    %318 = vector.shape_cast %317 : vector<1x1x32x64xf32> to vector<32x64xf32>
    %cst_481 = arith.constant dense<0.000000e+00> : vector<4x64xf32>
    %319 = tpu.matmul %316, %318, %cst_481 {dimension_numbers = #tpu.dot_dimension_numbers<[1], [0], [0], [1], [0, 0, 1, 1], [], []>} : vector<4x32xf32>, vector<32x64xf32>, vector<4x64xf32> -> vector<4x64xf32>
    %320 = arith.addf %314, %319 : vector<4x64xf32>
    %c0_482 = arith.constant 0 : index
    %c2_483 = arith.constant 2 : index
    %c0_484 = arith.constant 0 : index
    %321 = vector.load %arg19[%c0_482, %c2_483, %c0_484] : memref<6x6x32xf32, #tpu.memory_space<vmem>>, vector<1x4x32xf32>
    %322 = vector.shape_cast %321 : vector<1x4x32xf32> to vector<4x32xf32>
    %c0_485 = arith.constant 0 : index
    %c2_486 = arith.constant 2 : index
    %c0_487 = arith.constant 0 : index
    %c0_488 = arith.constant 0 : index
    %323 = vector.load %arg10[%c0_485, %c2_486, %c0_487, %c0_488] : memref<3x3x32x64xf32, #tpu.memory_space<vmem>>, vector<1x1x32x64xf32>
    %324 = vector.shape_cast %323 : vector<1x1x32x64xf32> to vector<32x64xf32>
    %cst_489 = arith.constant dense<0.000000e+00> : vector<4x64xf32>
    %325 = tpu.matmul %322, %324, %cst_489 {dimension_numbers = #tpu.dot_dimension_numbers<[1], [0], [0], [1], [0, 0, 1, 1], [], []>} : vector<4x32xf32>, vector<32x64xf32>, vector<4x64xf32> -> vector<4x64xf32>
    %326 = arith.addf %320, %325 : vector<4x64xf32>
    %c1_490 = arith.constant 1 : index
    %c0_491 = arith.constant 0 : index
    %c0_492 = arith.constant 0 : index
    %327 = vector.load %arg19[%c1_490, %c0_491, %c0_492] : memref<6x6x32xf32, #tpu.memory_space<vmem>>, vector<1x4x32xf32>
    %328 = vector.shape_cast %327 : vector<1x4x32xf32> to vector<4x32xf32>
    %c1_493 = arith.constant 1 : index
    %c0_494 = arith.constant 0 : index
    %c0_495 = arith.constant 0 : index
    %c0_496 = arith.constant 0 : index
    %329 = vector.load %arg10[%c1_493, %c0_494, %c0_495, %c0_496] : memref<3x3x32x64xf32, #tpu.memory_space<vmem>>, vector<1x1x32x64xf32>
    %330 = vector.shape_cast %329 : vector<1x1x32x64xf32> to vector<32x64xf32>
    %cst_497 = arith.constant dense<0.000000e+00> : vector<4x64xf32>
    %331 = tpu.matmul %328, %330, %cst_497 {dimension_numbers = #tpu.dot_dimension_numbers<[1], [0], [0], [1], [0, 0, 1, 1], [], []>} : vector<4x32xf32>, vector<32x64xf32>, vector<4x64xf32> -> vector<4x64xf32>
    %332 = arith.addf %326, %331 : vector<4x64xf32>
    %c1_498 = arith.constant 1 : index
    %c1_499 = arith.constant 1 : index
    %c0_500 = arith.constant 0 : index
    %333 = vector.load %arg19[%c1_498, %c1_499, %c0_500] : memref<6x6x32xf32, #tpu.memory_space<vmem>>, vector<1x4x32xf32>
    %334 = vector.shape_cast %333 : vector<1x4x32xf32> to vector<4x32xf32>
    %c1_501 = arith.constant 1 : index
    %c1_502 = arith.constant 1 : index
    %c0_503 = arith.constant 0 : index
    %c0_504 = arith.constant 0 : index
    %335 = vector.load %arg10[%c1_501, %c1_502, %c0_503, %c0_504] : memref<3x3x32x64xf32, #tpu.memory_space<vmem>>, vector<1x1x32x64xf32>
    %336 = vector.shape_cast %335 : vector<1x1x32x64xf32> to vector<32x64xf32>
    %cst_505 = arith.constant dense<0.000000e+00> : vector<4x64xf32>
    %337 = tpu.matmul %334, %336, %cst_505 {dimension_numbers = #tpu.dot_dimension_numbers<[1], [0], [0], [1], [0, 0, 1, 1], [], []>} : vector<4x32xf32>, vector<32x64xf32>, vector<4x64xf32> -> vector<4x64xf32>
    %338 = arith.addf %332, %337 : vector<4x64xf32>
    %c1_506 = arith.constant 1 : index
    %c2_507 = arith.constant 2 : index
    %c0_508 = arith.constant 0 : index
    %339 = vector.load %arg19[%c1_506, %c2_507, %c0_508] : memref<6x6x32xf32, #tpu.memory_space<vmem>>, vector<1x4x32xf32>
    %340 = vector.shape_cast %339 : vector<1x4x32xf32> to vector<4x32xf32>
    %c1_509 = arith.constant 1 : index
    %c2_510 = arith.constant 2 : index
    %c0_511 = arith.constant 0 : index
    %c0_512 = arith.constant 0 : index
    %341 = vector.load %arg10[%c1_509, %c2_510, %c0_511, %c0_512] : memref<3x3x32x64xf32, #tpu.memory_space<vmem>>, vector<1x1x32x64xf32>
    %342 = vector.shape_cast %341 : vector<1x1x32x64xf32> to vector<32x64xf32>
    %cst_513 = arith.constant dense<0.000000e+00> : vector<4x64xf32>
    %343 = tpu.matmul %340, %342, %cst_513 {dimension_numbers = #tpu.dot_dimension_numbers<[1], [0], [0], [1], [0, 0, 1, 1], [], []>} : vector<4x32xf32>, vector<32x64xf32>, vector<4x64xf32> -> vector<4x64xf32>
    %344 = arith.addf %338, %343 : vector<4x64xf32>
    %c2_514 = arith.constant 2 : index
    %c0_515 = arith.constant 0 : index
    %c0_516 = arith.constant 0 : index
    %345 = vector.load %arg19[%c2_514, %c0_515, %c0_516] : memref<6x6x32xf32, #tpu.memory_space<vmem>>, vector<1x4x32xf32>
    %346 = vector.shape_cast %345 : vector<1x4x32xf32> to vector<4x32xf32>
    %c2_517 = arith.constant 2 : index
    %c0_518 = arith.constant 0 : index
    %c0_519 = arith.constant 0 : index
    %c0_520 = arith.constant 0 : index
    %347 = vector.load %arg10[%c2_517, %c0_518, %c0_519, %c0_520] : memref<3x3x32x64xf32, #tpu.memory_space<vmem>>, vector<1x1x32x64xf32>
    %348 = vector.shape_cast %347 : vector<1x1x32x64xf32> to vector<32x64xf32>
    %cst_521 = arith.constant dense<0.000000e+00> : vector<4x64xf32>
    %349 = tpu.matmul %346, %348, %cst_521 {dimension_numbers = #tpu.dot_dimension_numbers<[1], [0], [0], [1], [0, 0, 1, 1], [], []>} : vector<4x32xf32>, vector<32x64xf32>, vector<4x64xf32> -> vector<4x64xf32>
    %350 = arith.addf %344, %349 : vector<4x64xf32>
    %c2_522 = arith.constant 2 : index
    %c1_523 = arith.constant 1 : index
    %c0_524 = arith.constant 0 : index
    %351 = vector.load %arg19[%c2_522, %c1_523, %c0_524] : memref<6x6x32xf32, #tpu.memory_space<vmem>>, vector<1x4x32xf32>
    %352 = vector.shape_cast %351 : vector<1x4x32xf32> to vector<4x32xf32>
    %c2_525 = arith.constant 2 : index
    %c1_526 = arith.constant 1 : index
    %c0_527 = arith.constant 0 : index
    %c0_528 = arith.constant 0 : index
    %353 = vector.load %arg10[%c2_525, %c1_526, %c0_527, %c0_528] : memref<3x3x32x64xf32, #tpu.memory_space<vmem>>, vector<1x1x32x64xf32>
    %354 = vector.shape_cast %353 : vector<1x1x32x64xf32> to vector<32x64xf32>
    %cst_529 = arith.constant dense<0.000000e+00> : vector<4x64xf32>
    %355 = tpu.matmul %352, %354, %cst_529 {dimension_numbers = #tpu.dot_dimension_numbers<[1], [0], [0], [1], [0, 0, 1, 1], [], []>} : vector<4x32xf32>, vector<32x64xf32>, vector<4x64xf32> -> vector<4x64xf32>
    %356 = arith.addf %350, %355 : vector<4x64xf32>
    %c2_530 = arith.constant 2 : index
    %c2_531 = arith.constant 2 : index
    %c0_532 = arith.constant 0 : index
    %357 = vector.load %arg19[%c2_530, %c2_531, %c0_532] : memref<6x6x32xf32, #tpu.memory_space<vmem>>, vector<1x4x32xf32>
    %358 = vector.shape_cast %357 : vector<1x4x32xf32> to vector<4x32xf32>
    %c2_533 = arith.constant 2 : index
    %c2_534 = arith.constant 2 : index
    %c0_535 = arith.constant 0 : index
    %c0_536 = arith.constant 0 : index
    %359 = vector.load %arg10[%c2_533, %c2_534, %c0_535, %c0_536] : memref<3x3x32x64xf32, #tpu.memory_space<vmem>>, vector<1x1x32x64xf32>
    %360 = vector.shape_cast %359 : vector<1x1x32x64xf32> to vector<32x64xf32>
    %cst_537 = arith.constant dense<0.000000e+00> : vector<4x64xf32>
    %361 = tpu.matmul %358, %360, %cst_537 {dimension_numbers = #tpu.dot_dimension_numbers<[1], [0], [0], [1], [0, 0, 1, 1], [], []>} : vector<4x32xf32>, vector<32x64xf32>, vector<4x64xf32> -> vector<4x64xf32>
    %362 = arith.addf %356, %361 : vector<4x64xf32>
    %363 = vector.broadcast %307 : vector<1x64xf32> to vector<4x64xf32>
    %364 = arith.addf %362, %363 : vector<4x64xf32>
    %cst_538 = arith.constant 0.000000e+00 : f32
    %365 = vector.broadcast %cst_538 : f32 to vector<4x64xf32>
    %366 = arith.maximumf %364, %365 : vector<4x64xf32>
    %c0_539 = arith.constant 0 : index
    %c0_540 = arith.constant 0 : index
    %c0_541 = arith.constant 0 : index
    %367 = vector.load %arg12[%c0_539, %c0_540, %c0_541] : memref<1x16x64xf32, #tpu.memory_space<vmem>>, vector<1x4x64xf32>
    %368 = vector.shape_cast %367 : vector<1x4x64xf32> to vector<4x64xf32>
    %369 = vector.shape_cast %366 : vector<4x64xf32> to vector<1x4x64xf32>
    tpu.vector_store %arg12[%c0_539, %c0_540, %c0_541], %369 {strides = array<i32>} : memref<1x16x64xf32, #tpu.memory_space<vmem>>, vector<1x4x64xf32>,
    %cst_542 = arith.constant 0.000000e+00 : f32
    %370 = vector.broadcast %cst_542 : f32 to vector<4x64xf32>
    %c1_543 = arith.constant 1 : index
    %c0_544 = arith.constant 0 : index
    %c0_545 = arith.constant 0 : index
    %371 = vector.load %arg19[%c1_543, %c0_544, %c0_545] : memref<6x6x32xf32, #tpu.memory_space<vmem>>, vector<1x4x32xf32>
    %372 = vector.shape_cast %371 : vector<1x4x32xf32> to vector<4x32xf32>
    %c0_546 = arith.constant 0 : index
    %c0_547 = arith.constant 0 : index
    %c0_548 = arith.constant 0 : index
    %c0_549 = arith.constant 0 : index
    %373 = vector.load %arg10[%c0_546, %c0_547, %c0_548, %c0_549] : memref<3x3x32x64xf32, #tpu.memory_space<vmem>>, vector<1x1x32x64xf32>
    %374 = vector.shape_cast %373 : vector<1x1x32x64xf32> to vector<32x64xf32>
    %cst_550 = arith.constant dense<0.000000e+00> : vector<4x64xf32>
    %375 = tpu.matmul %372, %374, %cst_550 {dimension_numbers = #tpu.dot_dimension_numbers<[1], [0], [0], [1], [0, 0, 1, 1], [], []>} : vector<4x32xf32>, vector<32x64xf32>, vector<4x64xf32> -> vector<4x64xf32>
    %376 = arith.addf %370, %375 : vector<4x64xf32>
    %c1_551 = arith.constant 1 : index
    %c1_552 = arith.constant 1 : index
    %c0_553 = arith.constant 0 : index
    %377 = vector.load %arg19[%c1_551, %c1_552, %c0_553] : memref<6x6x32xf32, #tpu.memory_space<vmem>>, vector<1x4x32xf32>
    %378 = vector.shape_cast %377 : vector<1x4x32xf32> to vector<4x32xf32>
    %c0_554 = arith.constant 0 : index
    %c1_555 = arith.constant 1 : index
    %c0_556 = arith.constant 0 : index
    %c0_557 = arith.constant 0 : index
    %379 = vector.load %arg10[%c0_554, %c1_555, %c0_556, %c0_557] : memref<3x3x32x64xf32, #tpu.memory_space<vmem>>, vector<1x1x32x64xf32>
    %380 = vector.shape_cast %379 : vector<1x1x32x64xf32> to vector<32x64xf32>
    %cst_558 = arith.constant dense<0.000000e+00> : vector<4x64xf32>
    %381 = tpu.matmul %378, %380, %cst_558 {dimension_numbers = #tpu.dot_dimension_numbers<[1], [0], [0], [1], [0, 0, 1, 1], [], []>} : vector<4x32xf32>, vector<32x64xf32>, vector<4x64xf32> -> vector<4x64xf32>
    %382 = arith.addf %376, %381 : vector<4x64xf32>
    %c1_559 = arith.constant 1 : index
    %c2_560 = arith.constant 2 : index
    %c0_561 = arith.constant 0 : index
    %383 = vector.load %arg19[%c1_559, %c2_560, %c0_561] : memref<6x6x32xf32, #tpu.memory_space<vmem>>, vector<1x4x32xf32>
    %384 = vector.shape_cast %383 : vector<1x4x32xf32> to vector<4x32xf32>
    %c0_562 = arith.constant 0 : index
    %c2_563 = arith.constant 2 : index
    %c0_564 = arith.constant 0 : index
    %c0_565 = arith.constant 0 : index
    %385 = vector.load %arg10[%c0_562, %c2_563, %c0_564, %c0_565] : memref<3x3x32x64xf32, #tpu.memory_space<vmem>>, vector<1x1x32x64xf32>
    %386 = vector.shape_cast %385 : vector<1x1x32x64xf32> to vector<32x64xf32>
    %cst_566 = arith.constant dense<0.000000e+00> : vector<4x64xf32>
    %387 = tpu.matmul %384, %386, %cst_566 {dimension_numbers = #tpu.dot_dimension_numbers<[1], [0], [0], [1], [0, 0, 1, 1], [], []>} : vector<4x32xf32>, vector<32x64xf32>, vector<4x64xf32> -> vector<4x64xf32>
    %388 = arith.addf %382, %387 : vector<4x64xf32>
    %c2_567 = arith.constant 2 : index
    %c0_568 = arith.constant 0 : index
    %c0_569 = arith.constant 0 : index
    %389 = vector.load %arg19[%c2_567, %c0_568, %c0_569] : memref<6x6x32xf32, #tpu.memory_space<vmem>>, vector<1x4x32xf32>
    %390 = vector.shape_cast %389 : vector<1x4x32xf32> to vector<4x32xf32>
    %c1_570 = arith.constant 1 : index
    %c0_571 = arith.constant 0 : index
    %c0_572 = arith.constant 0 : index
    %c0_573 = arith.constant 0 : index
    %391 = vector.load %arg10[%c1_570, %c0_571, %c0_572, %c0_573] : memref<3x3x32x64xf32, #tpu.memory_space<vmem>>, vector<1x1x32x64xf32>
    %392 = vector.shape_cast %391 : vector<1x1x32x64xf32> to vector<32x64xf32>
    %cst_574 = arith.constant dense<0.000000e+00> : vector<4x64xf32>
    %393 = tpu.matmul %390, %392, %cst_574 {dimension_numbers = #tpu.dot_dimension_numbers<[1], [0], [0], [1], [0, 0, 1, 1], [], []>} : vector<4x32xf32>, vector<32x64xf32>, vector<4x64xf32> -> vector<4x64xf32>
    %394 = arith.addf %388, %393 : vector<4x64xf32>
    %c2_575 = arith.constant 2 : index
    %c1_576 = arith.constant 1 : index
    %c0_577 = arith.constant 0 : index
    %395 = vector.load %arg19[%c2_575, %c1_576, %c0_577] : memref<6x6x32xf32, #tpu.memory_space<vmem>>, vector<1x4x32xf32>
    %396 = vector.shape_cast %395 : vector<1x4x32xf32> to vector<4x32xf32>
    %c1_578 = arith.constant 1 : index
    %c1_579 = arith.constant 1 : index
    %c0_580 = arith.constant 0 : index
    %c0_581 = arith.constant 0 : index
    %397 = vector.load %arg10[%c1_578, %c1_579, %c0_580, %c0_581] : memref<3x3x32x64xf32, #tpu.memory_space<vmem>>, vector<1x1x32x64xf32>
    %398 = vector.shape_cast %397 : vector<1x1x32x64xf32> to vector<32x64xf32>
    %cst_582 = arith.constant dense<0.000000e+00> : vector<4x64xf32>
    %399 = tpu.matmul %396, %398, %cst_582 {dimension_numbers = #tpu.dot_dimension_numbers<[1], [0], [0], [1], [0, 0, 1, 1], [], []>} : vector<4x32xf32>, vector<32x64xf32>, vector<4x64xf32> -> vector<4x64xf32>
    %400 = arith.addf %394, %399 : vector<4x64xf32>
    %c2_583 = arith.constant 2 : index
    %c2_584 = arith.constant 2 : index
    %c0_585 = arith.constant 0 : index
    %401 = vector.load %arg19[%c2_583, %c2_584, %c0_585] : memref<6x6x32xf32, #tpu.memory_space<vmem>>, vector<1x4x32xf32>
    %402 = vector.shape_cast %401 : vector<1x4x32xf32> to vector<4x32xf32>
    %c1_586 = arith.constant 1 : index
    %c2_587 = arith.constant 2 : index
    %c0_588 = arith.constant 0 : index
    %c0_589 = arith.constant 0 : index
    %403 = vector.load %arg10[%c1_586, %c2_587, %c0_588, %c0_589] : memref<3x3x32x64xf32, #tpu.memory_space<vmem>>, vector<1x1x32x64xf32>
    %404 = vector.shape_cast %403 : vector<1x1x32x64xf32> to vector<32x64xf32>
    %cst_590 = arith.constant dense<0.000000e+00> : vector<4x64xf32>
    %405 = tpu.matmul %402, %404, %cst_590 {dimension_numbers = #tpu.dot_dimension_numbers<[1], [0], [0], [1], [0, 0, 1, 1], [], []>} : vector<4x32xf32>, vector<32x64xf32>, vector<4x64xf32> -> vector<4x64xf32>
    %406 = arith.addf %400, %405 : vector<4x64xf32>
    %c3_591 = arith.constant 3 : index
    %c0_592 = arith.constant 0 : index
    %c0_593 = arith.constant 0 : index
    %407 = vector.load %arg19[%c3_591, %c0_592, %c0_593] : memref<6x6x32xf32, #tpu.memory_space<vmem>>, vector<1x4x32xf32>
    %408 = vector.shape_cast %407 : vector<1x4x32xf32> to vector<4x32xf32>
    %c2_594 = arith.constant 2 : index
    %c0_595 = arith.constant 0 : index
    %c0_596 = arith.constant 0 : index
    %c0_597 = arith.constant 0 : index
    %409 = vector.load %arg10[%c2_594, %c0_595, %c0_596, %c0_597] : memref<3x3x32x64xf32, #tpu.memory_space<vmem>>, vector<1x1x32x64xf32>
    %410 = vector.shape_cast %409 : vector<1x1x32x64xf32> to vector<32x64xf32>
    %cst_598 = arith.constant dense<0.000000e+00> : vector<4x64xf32>
    %411 = tpu.matmul %408, %410, %cst_598 {dimension_numbers = #tpu.dot_dimension_numbers<[1], [0], [0], [1], [0, 0, 1, 1], [], []>} : vector<4x32xf32>, vector<32x64xf32>, vector<4x64xf32> -> vector<4x64xf32>
    %412 = arith.addf %406, %411 : vector<4x64xf32>
    %c3_599 = arith.constant 3 : index
    %c1_600 = arith.constant 1 : index
    %c0_601 = arith.constant 0 : index
    %413 = vector.load %arg19[%c3_599, %c1_600, %c0_601] : memref<6x6x32xf32, #tpu.memory_space<vmem>>, vector<1x4x32xf32>
    %414 = vector.shape_cast %413 : vector<1x4x32xf32> to vector<4x32xf32>
    %c2_602 = arith.constant 2 : index
    %c1_603 = arith.constant 1 : index
    %c0_604 = arith.constant 0 : index
    %c0_605 = arith.constant 0 : index
    %415 = vector.load %arg10[%c2_602, %c1_603, %c0_604, %c0_605] : memref<3x3x32x64xf32, #tpu.memory_space<vmem>>, vector<1x1x32x64xf32>
    %416 = vector.shape_cast %415 : vector<1x1x32x64xf32> to vector<32x64xf32>
    %cst_606 = arith.constant dense<0.000000e+00> : vector<4x64xf32>
    %417 = tpu.matmul %414, %416, %cst_606 {dimension_numbers = #tpu.dot_dimension_numbers<[1], [0], [0], [1], [0, 0, 1, 1], [], []>} : vector<4x32xf32>, vector<32x64xf32>, vector<4x64xf32> -> vector<4x64xf32>
    %418 = arith.addf %412, %417 : vector<4x64xf32>
    %c3_607 = arith.constant 3 : index
    %c2_608 = arith.constant 2 : index
    %c0_609 = arith.constant 0 : index
    %419 = vector.load %arg19[%c3_607, %c2_608, %c0_609] : memref<6x6x32xf32, #tpu.memory_space<vmem>>, vector<1x4x32xf32>
    %420 = vector.shape_cast %419 : vector<1x4x32xf32> to vector<4x32xf32>
    %c2_610 = arith.constant 2 : index
    %c2_611 = arith.constant 2 : index
    %c0_612 = arith.constant 0 : index
    %c0_613 = arith.constant 0 : index
    %421 = vector.load %arg10[%c2_610, %c2_611, %c0_612, %c0_613] : memref<3x3x32x64xf32, #tpu.memory_space<vmem>>, vector<1x1x32x64xf32>
    %422 = vector.shape_cast %421 : vector<1x1x32x64xf32> to vector<32x64xf32>
    %cst_614 = arith.constant dense<0.000000e+00> : vector<4x64xf32>
    %423 = tpu.matmul %420, %422, %cst_614 {dimension_numbers = #tpu.dot_dimension_numbers<[1], [0], [0], [1], [0, 0, 1, 1], [], []>} : vector<4x32xf32>, vector<32x64xf32>, vector<4x64xf32> -> vector<4x64xf32>
    %424 = arith.addf %418, %423 : vector<4x64xf32>
    %425 = vector.broadcast %307 : vector<1x64xf32> to vector<4x64xf32>
    %426 = arith.addf %424, %425 : vector<4x64xf32>
    %cst_615 = arith.constant 0.000000e+00 : f32
    %427 = vector.broadcast %cst_615 : f32 to vector<4x64xf32>
    %428 = arith.maximumf %426, %427 : vector<4x64xf32>
    %c0_616 = arith.constant 0 : index
    %c4 = arith.constant 4 : index
    %c0_617 = arith.constant 0 : index
    %429 = vector.load %arg12[%c0_616, %c4, %c0_617] : memref<1x16x64xf32, #tpu.memory_space<vmem>>, vector<1x4x64xf32>
    %430 = vector.shape_cast %429 : vector<1x4x64xf32> to vector<4x64xf32>
    %431 = vector.shape_cast %428 : vector<4x64xf32> to vector<1x4x64xf32>
    tpu.vector_store %arg12[%c0_616, %c4, %c0_617], %431 {strides = array<i32>} : memref<1x16x64xf32, #tpu.memory_space<vmem>>, vector<1x4x64xf32>,
    %cst_618 = arith.constant 0.000000e+00 : f32
    %432 = vector.broadcast %cst_618 : f32 to vector<4x64xf32>
    %c2_619 = arith.constant 2 : index
    %c0_620 = arith.constant 0 : index
    %c0_621 = arith.constant 0 : index
    %433 = vector.load %arg19[%c2_619, %c0_620, %c0_621] : memref<6x6x32xf32, #tpu.memory_space<vmem>>, vector<1x4x32xf32>
    %434 = vector.shape_cast %433 : vector<1x4x32xf32> to vector<4x32xf32>
    %c0_622 = arith.constant 0 : index
    %c0_623 = arith.constant 0 : index
    %c0_624 = arith.constant 0 : index
    %c0_625 = arith.constant 0 : index
    %435 = vector.load %arg10[%c0_622, %c0_623, %c0_624, %c0_625] : memref<3x3x32x64xf32, #tpu.memory_space<vmem>>, vector<1x1x32x64xf32>
    %436 = vector.shape_cast %435 : vector<1x1x32x64xf32> to vector<32x64xf32>
    %cst_626 = arith.constant dense<0.000000e+00> : vector<4x64xf32>
    %437 = tpu.matmul %434, %436, %cst_626 {dimension_numbers = #tpu.dot_dimension_numbers<[1], [0], [0], [1], [0, 0, 1, 1], [], []>} : vector<4x32xf32>, vector<32x64xf32>, vector<4x64xf32> -> vector<4x64xf32>
    %438 = arith.addf %432, %437 : vector<4x64xf32>
    %c2_627 = arith.constant 2 : index
    %c1_628 = arith.constant 1 : index
    %c0_629 = arith.constant 0 : index
    %439 = vector.load %arg19[%c2_627, %c1_628, %c0_629] : memref<6x6x32xf32, #tpu.memory_space<vmem>>, vector<1x4x32xf32>
    %440 = vector.shape_cast %439 : vector<1x4x32xf32> to vector<4x32xf32>
    %c0_630 = arith.constant 0 : index
    %c1_631 = arith.constant 1 : index
    %c0_632 = arith.constant 0 : index
    %c0_633 = arith.constant 0 : index
    %441 = vector.load %arg10[%c0_630, %c1_631, %c0_632, %c0_633] : memref<3x3x32x64xf32, #tpu.memory_space<vmem>>, vector<1x1x32x64xf32>
    %442 = vector.shape_cast %441 : vector<1x1x32x64xf32> to vector<32x64xf32>
    %cst_634 = arith.constant dense<0.000000e+00> : vector<4x64xf32>
    %443 = tpu.matmul %440, %442, %cst_634 {dimension_numbers = #tpu.dot_dimension_numbers<[1], [0], [0], [1], [0, 0, 1, 1], [], []>} : vector<4x32xf32>, vector<32x64xf32>, vector<4x64xf32> -> vector<4x64xf32>
    %444 = arith.addf %438, %443 : vector<4x64xf32>
    %c2_635 = arith.constant 2 : index
    %c2_636 = arith.constant 2 : index
    %c0_637 = arith.constant 0 : index
    %445 = vector.load %arg19[%c2_635, %c2_636, %c0_637] : memref<6x6x32xf32, #tpu.memory_space<vmem>>, vector<1x4x32xf32>
    %446 = vector.shape_cast %445 : vector<1x4x32xf32> to vector<4x32xf32>
    %c0_638 = arith.constant 0 : index
    %c2_639 = arith.constant 2 : index
    %c0_640 = arith.constant 0 : index
    %c0_641 = arith.constant 0 : index
    %447 = vector.load %arg10[%c0_638, %c2_639, %c0_640, %c0_641] : memref<3x3x32x64xf32, #tpu.memory_space<vmem>>, vector<1x1x32x64xf32>
    %448 = vector.shape_cast %447 : vector<1x1x32x64xf32> to vector<32x64xf32>
    %cst_642 = arith.constant dense<0.000000e+00> : vector<4x64xf32>
    %449 = tpu.matmul %446, %448, %cst_642 {dimension_numbers = #tpu.dot_dimension_numbers<[1], [0], [0], [1], [0, 0, 1, 1], [], []>} : vector<4x32xf32>, vector<32x64xf32>, vector<4x64xf32> -> vector<4x64xf32>
    %450 = arith.addf %444, %449 : vector<4x64xf32>
    %c3_643 = arith.constant 3 : index
    %c0_644 = arith.constant 0 : index
    %c0_645 = arith.constant 0 : index
    %451 = vector.load %arg19[%c3_643, %c0_644, %c0_645] : memref<6x6x32xf32, #tpu.memory_space<vmem>>, vector<1x4x32xf32>
    %452 = vector.shape_cast %451 : vector<1x4x32xf32> to vector<4x32xf32>
    %c1_646 = arith.constant 1 : index
    %c0_647 = arith.constant 0 : index
    %c0_648 = arith.constant 0 : index
    %c0_649 = arith.constant 0 : index
    %453 = vector.load %arg10[%c1_646, %c0_647, %c0_648, %c0_649] : memref<3x3x32x64xf32, #tpu.memory_space<vmem>>, vector<1x1x32x64xf32>
    %454 = vector.shape_cast %453 : vector<1x1x32x64xf32> to vector<32x64xf32>
    %cst_650 = arith.constant dense<0.000000e+00> : vector<4x64xf32>
    %455 = tpu.matmul %452, %454, %cst_650 {dimension_numbers = #tpu.dot_dimension_numbers<[1], [0], [0], [1], [0, 0, 1, 1], [], []>} : vector<4x32xf32>, vector<32x64xf32>, vector<4x64xf32> -> vector<4x64xf32>
    %456 = arith.addf %450, %455 : vector<4x64xf32>
    %c3_651 = arith.constant 3 : index
    %c1_652 = arith.constant 1 : index
    %c0_653 = arith.constant 0 : index
    %457 = vector.load %arg19[%c3_651, %c1_652, %c0_653] : memref<6x6x32xf32, #tpu.memory_space<vmem>>, vector<1x4x32xf32>
    %458 = vector.shape_cast %457 : vector<1x4x32xf32> to vector<4x32xf32>
    %c1_654 = arith.constant 1 : index
    %c1_655 = arith.constant 1 : index
    %c0_656 = arith.constant 0 : index
    %c0_657 = arith.constant 0 : index
    %459 = vector.load %arg10[%c1_654, %c1_655, %c0_656, %c0_657] : memref<3x3x32x64xf32, #tpu.memory_space<vmem>>, vector<1x1x32x64xf32>
    %460 = vector.shape_cast %459 : vector<1x1x32x64xf32> to vector<32x64xf32>
    %cst_658 = arith.constant dense<0.000000e+00> : vector<4x64xf32>
    %461 = tpu.matmul %458, %460, %cst_658 {dimension_numbers = #tpu.dot_dimension_numbers<[1], [0], [0], [1], [0, 0, 1, 1], [], []>} : vector<4x32xf32>, vector<32x64xf32>, vector<4x64xf32> -> vector<4x64xf32>
    %462 = arith.addf %456, %461 : vector<4x64xf32>
    %c3_659 = arith.constant 3 : index
    %c2_660 = arith.constant 2 : index
    %c0_661 = arith.constant 0 : index
    %463 = vector.load %arg19[%c3_659, %c2_660, %c0_661] : memref<6x6x32xf32, #tpu.memory_space<vmem>>, vector<1x4x32xf32>
    %464 = vector.shape_cast %463 : vector<1x4x32xf32> to vector<4x32xf32>
    %c1_662 = arith.constant 1 : index
    %c2_663 = arith.constant 2 : index
    %c0_664 = arith.constant 0 : index
    %c0_665 = arith.constant 0 : index
    %465 = vector.load %arg10[%c1_662, %c2_663, %c0_664, %c0_665] : memref<3x3x32x64xf32, #tpu.memory_space<vmem>>, vector<1x1x32x64xf32>
    %466 = vector.shape_cast %465 : vector<1x1x32x64xf32> to vector<32x64xf32>
    %cst_666 = arith.constant dense<0.000000e+00> : vector<4x64xf32>
    %467 = tpu.matmul %464, %466, %cst_666 {dimension_numbers = #tpu.dot_dimension_numbers<[1], [0], [0], [1], [0, 0, 1, 1], [], []>} : vector<4x32xf32>, vector<32x64xf32>, vector<4x64xf32> -> vector<4x64xf32>
    %468 = arith.addf %462, %467 : vector<4x64xf32>
    %c4_667 = arith.constant 4 : index
    %c0_668 = arith.constant 0 : index
    %c0_669 = arith.constant 0 : index
    %469 = vector.load %arg19[%c4_667, %c0_668, %c0_669] : memref<6x6x32xf32, #tpu.memory_space<vmem>>, vector<1x4x32xf32>
    %470 = vector.shape_cast %469 : vector<1x4x32xf32> to vector<4x32xf32>
    %c2_670 = arith.constant 2 : index
    %c0_671 = arith.constant 0 : index
    %c0_672 = arith.constant 0 : index
    %c0_673 = arith.constant 0 : index
    %471 = vector.load %arg10[%c2_670, %c0_671, %c0_672, %c0_673] : memref<3x3x32x64xf32, #tpu.memory_space<vmem>>, vector<1x1x32x64xf32>
    %472 = vector.shape_cast %471 : vector<1x1x32x64xf32> to vector<32x64xf32>
    %cst_674 = arith.constant dense<0.000000e+00> : vector<4x64xf32>
    %473 = tpu.matmul %470, %472, %cst_674 {dimension_numbers = #tpu.dot_dimension_numbers<[1], [0], [0], [1], [0, 0, 1, 1], [], []>} : vector<4x32xf32>, vector<32x64xf32>, vector<4x64xf32> -> vector<4x64xf32>
    %474 = arith.addf %468, %473 : vector<4x64xf32>
    %c4_675 = arith.constant 4 : index
    %c1_676 = arith.constant 1 : index
    %c0_677 = arith.constant 0 : index
    %475 = vector.load %arg19[%c4_675, %c1_676, %c0_677] : memref<6x6x32xf32, #tpu.memory_space<vmem>>, vector<1x4x32xf32>
    %476 = vector.shape_cast %475 : vector<1x4x32xf32> to vector<4x32xf32>
    %c2_678 = arith.constant 2 : index
    %c1_679 = arith.constant 1 : index
    %c0_680 = arith.constant 0 : index
    %c0_681 = arith.constant 0 : index
    %477 = vector.load %arg10[%c2_678, %c1_679, %c0_680, %c0_681] : memref<3x3x32x64xf32, #tpu.memory_space<vmem>>, vector<1x1x32x64xf32>
    %478 = vector.shape_cast %477 : vector<1x1x32x64xf32> to vector<32x64xf32>
    %cst_682 = arith.constant dense<0.000000e+00> : vector<4x64xf32>
    %479 = tpu.matmul %476, %478, %cst_682 {dimension_numbers = #tpu.dot_dimension_numbers<[1], [0], [0], [1], [0, 0, 1, 1], [], []>} : vector<4x32xf32>, vector<32x64xf32>, vector<4x64xf32> -> vector<4x64xf32>
    %480 = arith.addf %474, %479 : vector<4x64xf32>
    %c4_683 = arith.constant 4 : index
    %c2_684 = arith.constant 2 : index
    %c0_685 = arith.constant 0 : index
    %481 = vector.load %arg19[%c4_683, %c2_684, %c0_685] : memref<6x6x32xf32, #tpu.memory_space<vmem>>, vector<1x4x32xf32>
    %482 = vector.shape_cast %481 : vector<1x4x32xf32> to vector<4x32xf32>
    %c2_686 = arith.constant 2 : index
    %c2_687 = arith.constant 2 : index
    %c0_688 = arith.constant 0 : index
    %c0_689 = arith.constant 0 : index
    %483 = vector.load %arg10[%c2_686, %c2_687, %c0_688, %c0_689] : memref<3x3x32x64xf32, #tpu.memory_space<vmem>>, vector<1x1x32x64xf32>
    %484 = vector.shape_cast %483 : vector<1x1x32x64xf32> to vector<32x64xf32>
    %cst_690 = arith.constant dense<0.000000e+00> : vector<4x64xf32>
    %485 = tpu.matmul %482, %484, %cst_690 {dimension_numbers = #tpu.dot_dimension_numbers<[1], [0], [0], [1], [0, 0, 1, 1], [], []>} : vector<4x32xf32>, vector<32x64xf32>, vector<4x64xf32> -> vector<4x64xf32>
    %486 = arith.addf %480, %485 : vector<4x64xf32>
    %487 = vector.broadcast %307 : vector<1x64xf32> to vector<4x64xf32>
    %488 = arith.addf %486, %487 : vector<4x64xf32>
    %cst_691 = arith.constant 0.000000e+00 : f32
    %489 = vector.broadcast %cst_691 : f32 to vector<4x64xf32>
    %490 = arith.maximumf %488, %489 : vector<4x64xf32>
    %c0_692 = arith.constant 0 : index
    %c8 = arith.constant 8 : index
    %c0_693 = arith.constant 0 : index
    %491 = vector.load %arg12[%c0_692, %c8, %c0_693] : memref<1x16x64xf32, #tpu.memory_space<vmem>>, vector<1x4x64xf32>
    %492 = vector.shape_cast %491 : vector<1x4x64xf32> to vector<4x64xf32>
    %493 = vector.shape_cast %490 : vector<4x64xf32> to vector<1x4x64xf32>
    tpu.vector_store %arg12[%c0_692, %c8, %c0_693], %493 {strides = array<i32>} : memref<1x16x64xf32, #tpu.memory_space<vmem>>, vector<1x4x64xf32>,
    %cst_694 = arith.constant 0.000000e+00 : f32
    %494 = vector.broadcast %cst_694 : f32 to vector<4x64xf32>
    %c3_695 = arith.constant 3 : index
    %c0_696 = arith.constant 0 : index
    %c0_697 = arith.constant 0 : index
    %495 = vector.load %arg19[%c3_695, %c0_696, %c0_697] : memref<6x6x32xf32, #tpu.memory_space<vmem>>, vector<1x4x32xf32>
    %496 = vector.shape_cast %495 : vector<1x4x32xf32> to vector<4x32xf32>
    %c0_698 = arith.constant 0 : index
    %c0_699 = arith.constant 0 : index
    %c0_700 = arith.constant 0 : index
    %c0_701 = arith.constant 0 : index
    %497 = vector.load %arg10[%c0_698, %c0_699, %c0_700, %c0_701] : memref<3x3x32x64xf32, #tpu.memory_space<vmem>>, vector<1x1x32x64xf32>
    %498 = vector.shape_cast %497 : vector<1x1x32x64xf32> to vector<32x64xf32>
    %cst_702 = arith.constant dense<0.000000e+00> : vector<4x64xf32>
    %499 = tpu.matmul %496, %498, %cst_702 {dimension_numbers = #tpu.dot_dimension_numbers<[1], [0], [0], [1], [0, 0, 1, 1], [], []>} : vector<4x32xf32>, vector<32x64xf32>, vector<4x64xf32> -> vector<4x64xf32>
    %500 = arith.addf %494, %499 : vector<4x64xf32>
    %c3_703 = arith.constant 3 : index
    %c1_704 = arith.constant 1 : index
    %c0_705 = arith.constant 0 : index
    %501 = vector.load %arg19[%c3_703, %c1_704, %c0_705] : memref<6x6x32xf32, #tpu.memory_space<vmem>>, vector<1x4x32xf32>
    %502 = vector.shape_cast %501 : vector<1x4x32xf32> to vector<4x32xf32>
    %c0_706 = arith.constant 0 : index
    %c1_707 = arith.constant 1 : index
    %c0_708 = arith.constant 0 : index
    %c0_709 = arith.constant 0 : index
    %503 = vector.load %arg10[%c0_706, %c1_707, %c0_708, %c0_709] : memref<3x3x32x64xf32, #tpu.memory_space<vmem>>, vector<1x1x32x64xf32>
    %504 = vector.shape_cast %503 : vector<1x1x32x64xf32> to vector<32x64xf32>
    %cst_710 = arith.constant dense<0.000000e+00> : vector<4x64xf32>
    %505 = tpu.matmul %502, %504, %cst_710 {dimension_numbers = #tpu.dot_dimension_numbers<[1], [0], [0], [1], [0, 0, 1, 1], [], []>} : vector<4x32xf32>, vector<32x64xf32>, vector<4x64xf32> -> vector<4x64xf32>
    %506 = arith.addf %500, %505 : vector<4x64xf32>
    %c3_711 = arith.constant 3 : index
    %c2_712 = arith.constant 2 : index
    %c0_713 = arith.constant 0 : index
    %507 = vector.load %arg19[%c3_711, %c2_712, %c0_713] : memref<6x6x32xf32, #tpu.memory_space<vmem>>, vector<1x4x32xf32>
    %508 = vector.shape_cast %507 : vector<1x4x32xf32> to vector<4x32xf32>
    %c0_714 = arith.constant 0 : index
    %c2_715 = arith.constant 2 : index
    %c0_716 = arith.constant 0 : index
    %c0_717 = arith.constant 0 : index
    %509 = vector.load %arg10[%c0_714, %c2_715, %c0_716, %c0_717] : memref<3x3x32x64xf32, #tpu.memory_space<vmem>>, vector<1x1x32x64xf32>
    %510 = vector.shape_cast %509 : vector<1x1x32x64xf32> to vector<32x64xf32>
    %cst_718 = arith.constant dense<0.000000e+00> : vector<4x64xf32>
    %511 = tpu.matmul %508, %510, %cst_718 {dimension_numbers = #tpu.dot_dimension_numbers<[1], [0], [0], [1], [0, 0, 1, 1], [], []>} : vector<4x32xf32>, vector<32x64xf32>, vector<4x64xf32> -> vector<4x64xf32>
    %512 = arith.addf %506, %511 : vector<4x64xf32>
    %c4_719 = arith.constant 4 : index
    %c0_720 = arith.constant 0 : index
    %c0_721 = arith.constant 0 : index
    %513 = vector.load %arg19[%c4_719, %c0_720, %c0_721] : memref<6x6x32xf32, #tpu.memory_space<vmem>>, vector<1x4x32xf32>
    %514 = vector.shape_cast %513 : vector<1x4x32xf32> to vector<4x32xf32>
    %c1_722 = arith.constant 1 : index
    %c0_723 = arith.constant 0 : index
    %c0_724 = arith.constant 0 : index
    %c0_725 = arith.constant 0 : index
    %515 = vector.load %arg10[%c1_722, %c0_723, %c0_724, %c0_725] : memref<3x3x32x64xf32, #tpu.memory_space<vmem>>, vector<1x1x32x64xf32>
    %516 = vector.shape_cast %515 : vector<1x1x32x64xf32> to vector<32x64xf32>
    %cst_726 = arith.constant dense<0.000000e+00> : vector<4x64xf32>
    %517 = tpu.matmul %514, %516, %cst_726 {dimension_numbers = #tpu.dot_dimension_numbers<[1], [0], [0], [1], [0, 0, 1, 1], [], []>} : vector<4x32xf32>, vector<32x64xf32>, vector<4x64xf32> -> vector<4x64xf32>
    %518 = arith.addf %512, %517 : vector<4x64xf32>
    %c4_727 = arith.constant 4 : index
    %c1_728 = arith.constant 1 : index
    %c0_729 = arith.constant 0 : index
    %519 = vector.load %arg19[%c4_727, %c1_728, %c0_729] : memref<6x6x32xf32, #tpu.memory_space<vmem>>, vector<1x4x32xf32>
    %520 = vector.shape_cast %519 : vector<1x4x32xf32> to vector<4x32xf32>
    %c1_730 = arith.constant 1 : index
    %c1_731 = arith.constant 1 : index
    %c0_732 = arith.constant 0 : index
    %c0_733 = arith.constant 0 : index
    %521 = vector.load %arg10[%c1_730, %c1_731, %c0_732, %c0_733] : memref<3x3x32x64xf32, #tpu.memory_space<vmem>>, vector<1x1x32x64xf32>
    %522 = vector.shape_cast %521 : vector<1x1x32x64xf32> to vector<32x64xf32>
    %cst_734 = arith.constant dense<0.000000e+00> : vector<4x64xf32>
    %523 = tpu.matmul %520, %522, %cst_734 {dimension_numbers = #tpu.dot_dimension_numbers<[1], [0], [0], [1], [0, 0, 1, 1], [], []>} : vector<4x32xf32>, vector<32x64xf32>, vector<4x64xf32> -> vector<4x64xf32>
    %524 = arith.addf %518, %523 : vector<4x64xf32>
    %c4_735 = arith.constant 4 : index
    %c2_736 = arith.constant 2 : index
    %c0_737 = arith.constant 0 : index
    %525 = vector.load %arg19[%c4_735, %c2_736, %c0_737] : memref<6x6x32xf32, #tpu.memory_space<vmem>>, vector<1x4x32xf32>
    %526 = vector.shape_cast %525 : vector<1x4x32xf32> to vector<4x32xf32>
    %c1_738 = arith.constant 1 : index
    %c2_739 = arith.constant 2 : index
    %c0_740 = arith.constant 0 : index
    %c0_741 = arith.constant 0 : index
    %527 = vector.load %arg10[%c1_738, %c2_739, %c0_740, %c0_741] : memref<3x3x32x64xf32, #tpu.memory_space<vmem>>, vector<1x1x32x64xf32>
    %528 = vector.shape_cast %527 : vector<1x1x32x64xf32> to vector<32x64xf32>
    %cst_742 = arith.constant dense<0.000000e+00> : vector<4x64xf32>
    %529 = tpu.matmul %526, %528, %cst_742 {dimension_numbers = #tpu.dot_dimension_numbers<[1], [0], [0], [1], [0, 0, 1, 1], [], []>} : vector<4x32xf32>, vector<32x64xf32>, vector<4x64xf32> -> vector<4x64xf32>
    %530 = arith.addf %524, %529 : vector<4x64xf32>
    %c5_743 = arith.constant 5 : index
    %c0_744 = arith.constant 0 : index
    %c0_745 = arith.constant 0 : index
    %531 = vector.load %arg19[%c5_743, %c0_744, %c0_745] : memref<6x6x32xf32, #tpu.memory_space<vmem>>, vector<1x4x32xf32>
    %532 = vector.shape_cast %531 : vector<1x4x32xf32> to vector<4x32xf32>
    %c2_746 = arith.constant 2 : index
    %c0_747 = arith.constant 0 : index
    %c0_748 = arith.constant 0 : index
    %c0_749 = arith.constant 0 : index
    %533 = vector.load %arg10[%c2_746, %c0_747, %c0_748, %c0_749] : memref<3x3x32x64xf32, #tpu.memory_space<vmem>>, vector<1x1x32x64xf32>
    %534 = vector.shape_cast %533 : vector<1x1x32x64xf32> to vector<32x64xf32>
    %cst_750 = arith.constant dense<0.000000e+00> : vector<4x64xf32>
    %535 = tpu.matmul %532, %534, %cst_750 {dimension_numbers = #tpu.dot_dimension_numbers<[1], [0], [0], [1], [0, 0, 1, 1], [], []>} : vector<4x32xf32>, vector<32x64xf32>, vector<4x64xf32> -> vector<4x64xf32>
    %536 = arith.addf %530, %535 : vector<4x64xf32>
    %c5_751 = arith.constant 5 : index
    %c1_752 = arith.constant 1 : index
    %c0_753 = arith.constant 0 : index
    %537 = vector.load %arg19[%c5_751, %c1_752, %c0_753] : memref<6x6x32xf32, #tpu.memory_space<vmem>>, vector<1x4x32xf32>
    %538 = vector.shape_cast %537 : vector<1x4x32xf32> to vector<4x32xf32>
    %c2_754 = arith.constant 2 : index
    %c1_755 = arith.constant 1 : index
    %c0_756 = arith.constant 0 : index
    %c0_757 = arith.constant 0 : index
    %539 = vector.load %arg10[%c2_754, %c1_755, %c0_756, %c0_757] : memref<3x3x32x64xf32, #tpu.memory_space<vmem>>, vector<1x1x32x64xf32>
    %540 = vector.shape_cast %539 : vector<1x1x32x64xf32> to vector<32x64xf32>
    %cst_758 = arith.constant dense<0.000000e+00> : vector<4x64xf32>
    %541 = tpu.matmul %538, %540, %cst_758 {dimension_numbers = #tpu.dot_dimension_numbers<[1], [0], [0], [1], [0, 0, 1, 1], [], []>} : vector<4x32xf32>, vector<32x64xf32>, vector<4x64xf32> -> vector<4x64xf32>
    %542 = arith.addf %536, %541 : vector<4x64xf32>
    %c5_759 = arith.constant 5 : index
    %c2_760 = arith.constant 2 : index
    %c0_761 = arith.constant 0 : index
    %543 = vector.load %arg19[%c5_759, %c2_760, %c0_761] : memref<6x6x32xf32, #tpu.memory_space<vmem>>, vector<1x4x32xf32>
    %544 = vector.shape_cast %543 : vector<1x4x32xf32> to vector<4x32xf32>
    %c2_762 = arith.constant 2 : index
    %c2_763 = arith.constant 2 : index
    %c0_764 = arith.constant 0 : index
    %c0_765 = arith.constant 0 : index
    %545 = vector.load %arg10[%c2_762, %c2_763, %c0_764, %c0_765] : memref<3x3x32x64xf32, #tpu.memory_space<vmem>>, vector<1x1x32x64xf32>
    %546 = vector.shape_cast %545 : vector<1x1x32x64xf32> to vector<32x64xf32>
    %cst_766 = arith.constant dense<0.000000e+00> : vector<4x64xf32>
    %547 = tpu.matmul %544, %546, %cst_766 {dimension_numbers = #tpu.dot_dimension_numbers<[1], [0], [0], [1], [0, 0, 1, 1], [], []>} : vector<4x32xf32>, vector<32x64xf32>, vector<4x64xf32> -> vector<4x64xf32>
    %548 = arith.addf %542, %547 : vector<4x64xf32>
    %549 = vector.broadcast %307 : vector<1x64xf32> to vector<4x64xf32>
    %550 = arith.addf %548, %549 : vector<4x64xf32>
    %cst_767 = arith.constant 0.000000e+00 : f32
    %551 = vector.broadcast %cst_767 : f32 to vector<4x64xf32>
    %552 = arith.maximumf %550, %551 : vector<4x64xf32>
    %c0_768 = arith.constant 0 : index
    %c12 = arith.constant 12 : index
    %c0_769 = arith.constant 0 : index
    %553 = vector.load %arg12[%c0_768, %c12, %c0_769] : memref<1x16x64xf32, #tpu.memory_space<vmem>>, vector<1x4x64xf32>
    %554 = vector.shape_cast %553 : vector<1x4x64xf32> to vector<4x64xf32>
    %555 = vector.shape_cast %552 : vector<4x64xf32> to vector<1x4x64xf32>
    tpu.vector_store %arg12[%c0_768, %c12, %c0_769], %555 {strides = array<i32>} : memref<1x16x64xf32, #tpu.memory_space<vmem>>, vector<1x4x64xf32>,
    return
  }
  func.func @transform_0(%arg0: i32) -> (i32, i32, i32, i32) {
    %c0_i32 = arith.constant 0 : i32
    %c0_i32_0 = arith.constant 0 : i32
    %c0_i32_1 = arith.constant 0 : i32
    %c0_i32_2 = arith.constant 0 : i32
    return %arg0, %c0_i32, %c0_i32_0, %c0_i32_1 : i32, i32, i32, i32
  }
  func.func @transform_1(%arg0: i32) -> (i32, i32, i32, i32) {
    %c0_i32 = arith.constant 0 : i32
    %c0_i32_0 = arith.constant 0 : i32
    %c0_i32_1 = arith.constant 0 : i32
    %c0_i32_2 = arith.constant 0 : i32
    %c0_i32_3 = arith.constant 0 : i32
    return %c0_i32, %c0_i32_0, %c0_i32_1, %c0_i32_2 : i32, i32, i32, i32
  }
  func.func @transform_2(%arg0: i32) -> (i32, i32) {
    %c0_i32 = arith.constant 0 : i32
    %c0_i32_0 = arith.constant 0 : i32
    %c0_i32_1 = arith.constant 0 : i32
    return %c0_i32, %c0_i32_0 : i32, i32
  }
  func.func @transform_3(%arg0: i32) -> (i32, i32, i32, i32) {
    %c0_i32 = arith.constant 0 : i32
    %c0_i32_0 = arith.constant 0 : i32
    %c0_i32_1 = arith.constant 0 : i32
    %c0_i32_2 = arith.constant 0 : i32
    %c0_i32_3 = arith.constant 0 : i32
    return %c0_i32, %c0_i32_0, %c0_i32_1, %c0_i32_2 : i32, i32, i32, i32
  }
  func.func @transform_4(%arg0: i32) -> (i32, i32) {
    %c0_i32 = arith.constant 0 : i32
    %c0_i32_0 = arith.constant 0 : i32
    %c0_i32_1 = arith.constant 0 : i32
    return %c0_i32, %c0_i32_0 : i32, i32
  }
  func.func @transform_5(%arg0: i32) -> (i32, i32, i32, i32) {
    %c0_i32 = arith.constant 0 : i32
    %c0_i32_0 = arith.constant 0 : i32
    %c0_i32_1 = arith.constant 0 : i32
    %c0_i32_2 = arith.constant 0 : i32
    %c0_i32_3 = arith.constant 0 : i32
    return %c0_i32, %c0_i32_0, %c0_i32_1, %c0_i32_2 : i32, i32, i32, i32
  }
  func.func @transform_6(%arg0: i32) -> (i32, i32) {
    %c0_i32 = arith.constant 0 : i32
    %c0_i32_0 = arith.constant 0 : i32
    %c0_i32_1 = arith.constant 0 : i32
    return %c0_i32, %c0_i32_0 : i32, i32
  }
  func.func @transform_7(%arg0: i32) -> (i32, i32, i32, i32) {
    %c0_i32 = arith.constant 0 : i32
    %c0_i32_0 = arith.constant 0 : i32
    %c0_i32_1 = arith.constant 0 : i32
    %c0_i32_2 = arith.constant 0 : i32
    %c0_i32_3 = arith.constant 0 : i32
    return %c0_i32, %c0_i32_0, %c0_i32_1, %c0_i32_2 : i32, i32, i32, i32
  }
  func.func @transform_8(%arg0: i32) -> (i32, i32) {
    %c0_i32 = arith.constant 0 : i32
    %c0_i32_0 = arith.constant 0 : i32
    %c0_i32_1 = arith.constant 0 : i32
    return %c0_i32, %c0_i32_0 : i32, i32
  }
  func.func @transform_9(%arg0: i32) -> (i32, i32, i32, i32) {
    %c0_i32 = arith.constant 0 : i32
    %c0_i32_0 = arith.constant 0 : i32
    %c0_i32_1 = arith.constant 0 : i32
    %c0_i32_2 = arith.constant 0 : i32
    %c0_i32_3 = arith.constant 0 : i32
    return %c0_i32, %c0_i32_0, %c0_i32_1, %c0_i32_2 : i32, i32, i32, i32
  }
  func.func @transform_10(%arg0: i32) -> (i32, i32) {
    %c0_i32 = arith.constant 0 : i32
    %c0_i32_0 = arith.constant 0 : i32
    %c0_i32_1 = arith.constant 0 : i32
    return %c0_i32, %c0_i32_0 : i32, i32
  }
  func.func @transform_11(%arg0: i32) -> (i32, i32, i32) {
    %c0_i32 = arith.constant 0 : i32
    %c0_i32_0 = arith.constant 0 : i32
    %c0_i32_1 = arith.constant 0 : i32
    return %arg0, %c0_i32, %c0_i32_0 : i32, i32, i32
  }
}

</mosaic_0001>

<llo_original>
// kernel: small_encoder_forward.1
$region0: #{small_encoder_forward.1}
  #allocation0 [shape = 'u32[]', space=smem, size = 0x4, offset = 0x4, fixed_abs, tag = 'smem constant byte address 0x4 - core index']
  #allocation1 [shape = 'u32[72,128]{1,0:T(1,128)}', space=vmem, size = 0x9000, scoped, tag = 'internal scratch']
  #allocation2 [shape = 'f32[18,18,3]{2,1,0:T(8,128)}', space=vmem, size = 0x36000, scoped, tag = 'scratch operand']
  #allocation3 [shape = 'f32[18,18,16]{2,1,0:T(8,128)}', space=vmem, size = 0x36000, scoped, tag = 'scratch operand']
  #allocation4 [shape = 'f32[16,16,16]{2,1,0:T(8,128)}', space=vmem, size = 0x20000, scoped, tag = 'scratch operand']
  #allocation5 [shape = 'f32[10,10,16]{2,1,0:T(8,128)}', space=vmem, size = 0x14000, scoped, tag = 'scratch operand']
  #allocation6 [shape = 'f32[10,10,32]{2,1,0:T(8,128)}', space=vmem, size = 0x14000, scoped, tag = 'scratch operand']
  #allocation7 [shape = 'f32[8,8,32]{2,1,0:T(8,128)}', space=vmem, size = 0x8000, scoped, tag = 'scratch operand']
  #allocation8 [shape = 'f32[6,6,32]{2,1,0:T(8,128)}', space=vmem, size = 0x6000, scoped, tag = 'scratch operand']
  %s0 = inlined_call_operand.vmem [shape: f32[2,16,16,3], index: 0, kind: input, shape index: {}]
  %s1 = inlined_call_operand.vmem [shape: f32[3,3,3,16], index: 1, kind: input, shape index: {}]
  %s2 = inlined_call_operand.vmem [shape: f32[1,16], index: 2, kind: input, shape index: {}]
  %s3 = inlined_call_operand.hbm [shape: f32[3,3,16,16], index: 3, kind: input, shape index: {}]
  %s4 = inlined_call_operand.vmem [shape: f32[1,16], index: 4, kind: input, shape index: {}]
  %s5 = inlined_call_operand.hbm [shape: f32[3,3,16,32], index: 5, kind: input, shape index: {}]
  %s6 = inlined_call_operand.vmem [shape: f32[1,32], index: 6, kind: input, shape index: {}]
  %s7 = inlined_call_operand.vmem [shape: f32[3,3,32,32], index: 7, kind: input, shape index: {}]
  %s8 = inlined_call_operand.vmem [shape: f32[1,32], index: 8, kind: input, shape index: {}]
  %s9 = inlined_call_operand.vmem [shape: f32[3,3,32,64], index: 9, kind: input, shape index: {}]
  %s10 = inlined_call_operand.vmem [shape: f32[1,64], index: 10, kind: input, shape index: {}]
  %s11 = inlined_call_operand.hbm [shape: f32[2,16,64], index: 11, kind: output, shape index: {}]
  %s12 = sld [smem:[#allocation0]]
  $region85: #{small_encoder_forward.1} parent=0
    _
  %s14 = ssub.s32 1, %s12
  %s15 = scalar_select 0, %s14, %s12
  $region1: #{small_encoder_forward.1} parent=0
    #allocation9 [shape = 'u8[73728]{0}', space=vmem, size = 0x12000, scoped, tag = 'input window, operand 3, single buffered']
    #allocation10 [shape = 's32[2]{0}', space=sflag, size = 0x8, scoped, tag = 'scoped memory for small_encoder_forward.1']
    #allocation11 [shape = 's32[2]{0}', space=sflag, size = 0x8, scoped, tag = 'scoped memory for small_encoder_forward.1']
    #allocation12 [shape = 'u8[73728]{0}', space=vmem, size = 0x12000, scoped, tag = 'input window, operand 5, single buffered']
    #allocation13 [shape = 's32[1]{0}', space=sflag, size = 0x4, scoped, tag = 'scoped memory for small_encoder_forward.1']
    #allocation14 [shape = 'u8[16384]{0}', space=vmem, size = 0x4000, scoped, tag = 'output window, operand 0']
    %16 = vsyncpa [#allocation10], 0
    %17 = vsyncpa [#allocation13], 0
    %18 = vsyncpa [#allocation11], 0
    %s19 = scalar_lea.sflag [#allocation11], 1
    %20 = vsyncpa %s19, 0
    loop: start=0, step=1, limit=4
    $region2: #{small_encoder_forward.1} parent=1 // loop_pre_header
      _
    $region3: #{small_encoder_forward.1} parent=1 // loop_header
      %s22 = sphi 0, %s26
      %p23 = scmp.ge.s32.totalorder %s22, 4
      %s32 = sphi 0, %s34
      %s35 = sphi 0, %s32
      %s36 = sphi 0, %s35
      %s52 = sphi 0, %s36
      %s56 = sphi 0, %s56
      %s58 = sphi 0, %s56
      %s59 = sphi 0, %s58
      %s73 = sphi 0, %s59
      %s77 = sphi 0, %s77
      %s79 = sphi 0, %s77
      %s80 = sphi 0, %s79
      %s94 = sphi 0, %s80
      %s98 = sphi 0, %s98
      %s100 = sphi 0, %s98
      %s101 = sphi 0, %s100
      %s115 = sphi 0, %s101
      %s119 = sphi 0, %s119
      %s121 = sphi 0, %s119
      %s122 = sphi 0, %s121
      %s136 = sphi 0, %s122
      %s140 = sphi 0, %s140
      %s142 = sphi 0, %s140
      %s143 = sphi 0, %s142
      %s157 = sphi 0, %s143
      %s161 = sphi 0, %s161
      %s163 = sphi 0, %s161
      %s164 = sphi 0, %s163
      %s178 = sphi 0, %s164
      %s182 = sphi 0, %s182
      %s184 = sphi 0, %s182
      %s185 = sphi 0, %s184
      %s199 = sphi 0, %s185
      %s203 = sphi 0, %s203
      %s205 = sphi 0, %s203
      %s206 = sphi 0, %s205
      %s220 = sphi 0, %s206
      %s224 = sphi 0, %s224
      %s226 = sphi 0, %s224
      %s227 = sphi 0, %s226
      %s241 = sphi 0, %s227
      %s245 = sphi 0, %s245
      %s247 = sphi 0, %s245
      %s248 = sphi 0, %s247
      %s262 = sphi 0, %s248
      %s268 = sphi 0, %s270
      %s271 = sphi 0, %s268
      %s272 = sphi 0, %s271
      %s288 = sphi 0, %s272
    $region4: #{small_encoder_forward.1} parent=1 // loop_header_branch
      %25 = sbr.rel (%p23) target = $region8
    $region5: #{small_encoder_forward.1} parent=1 // loop_body
      %s27 = ssub.s32 %s22, 1
      %s28 = ssub.s32 %s22, 2
      %s29 = sadd.s32 %s22, 1
      %s30 = ssub.s32 %s22, %s29
      %p31 = scmp.eq.s32.totalorder %s30, 0
      %s33 = sadd.s32 %s32, 1
      %s34 = scalar_select %p31, %s32, %s33
      %p37 = pneg %p31
      %p38 = scmp.eq.s32.totalorder %s22, 1
      %p39 = por %p37, %p38
      %p40 = scmp.ne.s32.totalorder %s32, %s35
      %p41 = scmp.eq.s32.totalorder %s22, 0
      %p42 = por %p40, %p41
      %p43 = scmp.ne.s32.totalorder %s32, %s35
      %p44 = scmp.eq.s32.totalorder %s27, 1
      %p45 = por %p43, %p44
      %p46 = scmp.ne.s32.totalorder %s35, %s36
      %p47 = scmp.eq.s32.totalorder %s27, 0
      %p48 = por %p46, %p47
      %p49 = scmp.ne.s32.totalorder %s35, %s36
      %p50 = scmp.eq.s32.totalorder %s28, 1
      %p51 = por %p49, %p50
      %p53 = scmp.ne.s32.totalorder %s36, %s52
      %p54 = scmp.eq.s32.totalorder %s28, 0
      %p55 = por %p53, %p54
      %s57 = sadd.s32 %s56, 1
      %p60 = scmp.eq.s32.totalorder %s22, 1
      %p61 = scmp.ne.s32.totalorder %s56, %s58
      %p62 = scmp.eq.s32.totalorder %s22, 0
      %p63 = por %p61, %p62
      %p64 = scmp.ne.s32.totalorder %s56, %s58
      %p65 = scmp.eq.s32.totalorder %s27, 1
      %p66 = por %p64, %p65
      %p67 = scmp.ne.s32.totalorder %s58, %s59
      %p68 = scmp.eq.s32.totalorder %s27, 0
      %p69 = por %p67, %p68
      %p70 = scmp.ne.s32.totalorder %s58, %s59
      %p71 = scmp.eq.s32.totalorder %s28, 1
      %p72 = por %p70, %p71
      %p74 = scmp.ne.s32.totalorder %s59, %s73
      %p75 = scmp.eq.s32.totalorder %s28, 0
      %p76 = por %p74, %p75
      %s78 = sadd.s32 %s77, 1
      %p81 = scmp.eq.s32.totalorder %s22, 1
      %p82 = scmp.ne.s32.totalorder %s77, %s79
      %p83 = scmp.eq.s32.totalorder %s22, 0
      %p84 = por %p82, %p83
      %p85 = scmp.ne.s32.totalorder %s77, %s79
      %p86 = scmp.eq.s32.totalorder %s27, 1
      %p87 = por %p85, %p86
      %p88 = scmp.ne.s32.totalorder %s79, %s80
      %p89 = scmp.eq.s32.totalorder %s27, 0
      %p90 = por %p88, %p89
      %p91 = scmp.ne.s32.totalorder %s79, %s80
      %p92 = scmp.eq.s32.totalorder %s28, 1
      %p93 = por %p91, %p92
      %p95 = scmp.ne.s32.totalorder %s80, %s94
      %p96 = scmp.eq.s32.totalorder %s28, 0
      %p97 = por %p95, %p96
      %s99 = sadd.s32 %s98, 1
      %p102 = scmp.eq.s32.totalorder %s22, 1
      %p103 = scmp.ne.s32.totalorder %s98, %s100
      %p104 = scmp.eq.s32.totalorder %s22, 0
      %p105 = por %p103, %p104
      %p106 = scmp.ne.s32.totalorder %s98, %s100
      %p107 = scmp.eq.s32.totalorder %s27, 1
      %p108 = por %p106, %p107
      %p109 = scmp.ne.s32.totalorder %s100, %s101
      %p110 = scmp.eq.s32.totalorder %s27, 0
      %p111 = por %p109, %p110
      %p112 = scmp.ne.s32.totalorder %s100, %s101
      %p113 = scmp.eq.s32.totalorder %s28, 1
      %p114 = por %p112, %p113
      %p116 = scmp.ne.s32.totalorder %s101, %s115
      %p117 = scmp.eq.s32.totalorder %s28, 0
      %p118 = por %p116, %p117
      %s120 = sadd.s32 %s119, 1
      %p123 = scmp.eq.s32.totalorder %s22, 1
      %p124 = scmp.ne.s32.totalorder %s119, %s121
      %p125 = scmp.eq.s32.totalorder %s22, 0
      %p126 = por %p124, %p125
      %p127 = scmp.ne.s32.totalorder %s119, %s121
      %p128 = scmp.eq.s32.totalorder %s27, 1
      %p129 = por %p127, %p128
      %p130 = scmp.ne.s32.totalorder %s121, %s122
      %p131 = scmp.eq.s32.totalorder %s27, 0
      %p132 = por %p130, %p131
      %p133 = scmp.ne.s32.totalorder %s121, %s122
      %p134 = scmp.eq.s32.totalorder %s28, 1
      %p135 = por %p133, %p134
      %p137 = scmp.ne.s32.totalorder %s122, %s136
      %p138 = scmp.eq.s32.totalorder %s28, 0
      %p139 = por %p137, %p138
      %s141 = sadd.s32 %s140, 1
      %p144 = scmp.eq.s32.totalorder %s22, 1
      %p145 = scmp.ne.s32.totalorder %s140, %s142
      %p146 = scmp.eq.s32.totalorder %s22, 0
      %p147 = por %p145, %p146
      %p148 = scmp.ne.s32.totalorder %s140, %s142
      %p149 = scmp.eq.s32.totalorder %s27, 1
      %p150 = por %p148, %p149
      %p151 = scmp.ne.s32.totalorder %s142, %s143
      %p152 = scmp.eq.s32.totalorder %s27, 0
      %p153 = por %p151, %p152
      %p154 = scmp.ne.s32.totalorder %s142, %s143
      %p155 = scmp.eq.s32.totalorder %s28, 1
      %p156 = por %p154, %p155
      %p158 = scmp.ne.s32.totalorder %s143, %s157
      %p159 = scmp.eq.s32.totalorder %s28, 0
      %p160 = por %p158, %p159
      %s162 = sadd.s32 %s161, 1
      %p165 = scmp.eq.s32.totalorder %s22, 1
      %p166 = scmp.ne.s32.totalorder %s161, %s163
      %p167 = scmp.eq.s32.totalorder %s22, 0
      %p168 = por %p166, %p167
      %p169 = scmp.ne.s32.totalorder %s161, %s163
      %p170 = scmp.eq.s32.totalorder %s27, 1
      %p171 = por %p169, %p170
      %p172 = scmp.ne.s32.totalorder %s163, %s164
      %p173 = scmp.eq.s32.totalorder %s27, 0
      %p174 = por %p172, %p173
      %p175 = scmp.ne.s32.totalorder %s163, %s164
      %p176 = scmp.eq.s32.totalorder %s28, 1
      %p177 = por %p175, %p176
      %p179 = scmp.ne.s32.totalorder %s164, %s178
      %p180 = scmp.eq.s32.totalorder %s28, 0
      %p181 = por %p179, %p180
      %s183 = sadd.s32 %s182, 1
      %p186 = scmp.eq.s32.totalorder %s22, 1
      %p187 = scmp.ne.s32.totalorder %s182, %s184
      %p188 = scmp.eq.s32.totalorder %s22, 0
      %p189 = por %p187, %p188
      %p190 = scmp.ne.s32.totalorder %s182, %s184
      %p191 = scmp.eq.s32.totalorder %s27, 1
      %p192 = por %p190, %p191
      %p193 = scmp.ne.s32.totalorder %s184, %s185
      %p194 = scmp.eq.s32.totalorder %s27, 0
      %p195 = por %p193, %p194
      %p196 = scmp.ne.s32.totalorder %s184, %s185
      %p197 = scmp.eq.s32.totalorder %s28, 1
      %p198 = por %p196, %p197
      %p200 = scmp.ne.s32.totalorder %s185, %s199
      %p201 = scmp.eq.s32.totalorder %s28, 0
      %p202 = por %p200, %p201
      %s204 = sadd.s32 %s203, 1
      %p207 = scmp.eq.s32.totalorder %s22, 1
      %p208 = scmp.ne.s32.totalorder %s203, %s205
      %p209 = scmp.eq.s32.totalorder %s22, 0
      %p210 = por %p208, %p209
      %p211 = scmp.ne.s32.totalorder %s203, %s205
      %p212 = scmp.eq.s32.totalorder %s27, 1
      %p213 = por %p211, %p212
      %p214 = scmp.ne.s32.totalorder %s205, %s206
      %p215 = scmp.eq.s32.totalorder %s27, 0
      %p216 = por %p214, %p215
      %p217 = scmp.ne.s32.totalorder %s205, %s206
      %p218 = scmp.eq.s32.totalorder %s28, 1
      %p219 = por %p217, %p218
      %p221 = scmp.ne.s32.totalorder %s206, %s220
      %p222 = scmp.eq.s32.totalorder %s28, 0
      %p223 = por %p221, %p222
      %s225 = sadd.s32 %s224, 1
      %p228 = scmp.eq.s32.totalorder %s22, 1
      %p229 = scmp.ne.s32.totalorder %s224, %s226
      %p230 = scmp.eq.s32.totalorder %s22, 0
      %p231 = por %p229, %p230
      %p232 = scmp.ne.s32.totalorder %s224, %s226
      %p233 = scmp.eq.s32.totalorder %s27, 1
      %p234 = por %p232, %p233
      %p235 = scmp.ne.s32.totalorder %s226, %s227
      %p236 = scmp.eq.s32.totalorder %s27, 0
      %p237 = por %p235, %p236
      %p238 = scmp.ne.s32.totalorder %s226, %s227
      %p239 = scmp.eq.s32.totalorder %s28, 1
      %p240 = por %p238, %p239
      %p242 = scmp.ne.s32.totalorder %s227, %s241
      %p243 = scmp.eq.s32.totalorder %s28, 0
      %p244 = por %p242, %p243
      %s246 = sadd.s32 %s245, 1
      %p249 = scmp.eq.s32.totalorder %s22, 1
      %p250 = scmp.ne.s32.totalorder %s245, %s247
      %p251 = scmp.eq.s32.totalorder %s22, 0
      %p252 = por %p250, %p251
      %p253 = scmp.ne.s32.totalorder %s245, %s247
      %p254 = scmp.eq.s32.totalorder %s27, 1
      %p255 = por %p253, %p254
      %p256 = scmp.ne.s32.totalorder %s247, %s248
      %p257 = scmp.eq.s32.totalorder %s27, 0
      %p258 = por %p256, %p257
      %p259 = scmp.ne.s32.totalorder %s247, %s248
      %p260 = scmp.eq.s32.totalorder %s28, 1
      %p261 = por %p259, %p260
      %p263 = scmp.ne.s32.totalorder %s248, %s262
      %p264 = scmp.eq.s32.totalorder %s28, 0
      %p265 = por %p263, %p264
      %s266 = ssub.s32 %s22, %s29
      %p267 = scmp.eq.s32.totalorder %s266, 0
      %s269 = sadd.s32 %s268, 1
      %s270 = scalar_select %p267, %s268, %s269
      %p273 = pneg %p267
      %p274 = scmp.eq.s32.totalorder %s22, 1
      %p275 = por %p273, %p274
      %p276 = scmp.ne.s32.totalorder %s268, %s271
      %p277 = scmp.eq.s32.totalorder %s22, 0
      %p278 = por %p276, %p277
      %p279 = scmp.ne.s32.totalorder %s268, %s271
      %p280 = scmp.eq.s32.totalorder %s27, 1
      %p281 = por %p279, %p280
      %p282 = scmp.ne.s32.totalorder %s271, %s272
      %p283 = scmp.eq.s32.totalorder %s27, 0
      %p284 = por %p282, %p283
      %p285 = scmp.ne.s32.totalorder %s271, %s272
      %p286 = scmp.eq.s32.totalorder %s28, 1
      %p287 = por %p285, %p286
      %p289 = scmp.ne.s32.totalorder %s272, %s288
      %p290 = scmp.eq.s32.totalorder %s28, 0
      %p291 = por %p289, %p290
      %p292 = scmp.le.s32.totalorder 1, %s22
      %p293 = scmp.lt.s32.totalorder %s22, 3
      %p294 = pnand %p292, %p293
      %p295 = pneg %p294
      // Predicated region
      $region9: #{small_encoder_forward.1} parent=5 // pred_check
        _
      $region10: #{small_encoder_forward.1} parent=5 // pred_check_branch
        %297 = sbr.rel (%p294) target = $region12
      $region11: #{small_encoder_forward.1} parent=5 // pred_region
        %s298 = ssub.s32 %s22, 1
        // Predicated region
        $region13: #{small_encoder_forward.1} parent=11 // pred_check
          %p299 = pneg %p69
        $region14: #{small_encoder_forward.1} parent=11 // pred_check_branch
          %301 = sbr.rel (%p299) target = $region16
        $region15: #{small_encoder_forward.1} parent=11 // pred_region
          _
        $region16: #{small_encoder_forward.1} parent=11 // pred_fallthru
          _
        // Predicated region
        $region17: #{small_encoder_forward.1} parent=11 // pred_check
          %p302 = pneg %p90
        $region18: #{small_encoder_forward.1} parent=11 // pred_check_branch
          %304 = sbr.rel (%p302) target = $region20
        $region19: #{small_encoder_forward.1} parent=11 // pred_region
          _
        $region20: #{small_encoder_forward.1} parent=11 // pred_fallthru
          _
        // Predicated region
        $region21: #{small_encoder_forward.1} parent=11 // pred_check
          %p305 = pneg %p111
        $region22: #{small_encoder_forward.1} parent=11 // pred_check_branch
          %307 = sbr.rel (%p305) target = $region24
        $region23: #{small_encoder_forward.1} parent=11 // pred_region
          %309 = vsyncadd [#allocation10], 0
          %s310 = sshll.u32 %s3, 4
          %s311 = int_to_ptr.hbm [resolvable:$true] %s310
          %s312 = sshll.u32 [#allocation9], 4
          %s313 = int_to_ptr.vmem [resolvable:$true] %s312
          %318 = dma.hbm_to_vmem [thread:$0]  %s311, 2304, %s313, [#allocation10], 128, 128, 8
        $region24: #{small_encoder_forward.1} parent=11 // pred_fallthru
          _
        // Predicated region
        $region25: #{small_encoder_forward.1} parent=11 // pred_check
          %p319 = pneg %p132
        $region26: #{small_encoder_forward.1} parent=11 // pred_check_branch
          %321 = sbr.rel (%p319) target = $region28
        $region27: #{small_encoder_forward.1} parent=11 // pred_region
          _
        $region28: #{small_encoder_forward.1} parent=11 // pred_fallthru
          _
        // Predicated region
        $region29: #{small_encoder_forward.1} parent=11 // pred_check
          %p322 = pneg %p153
        $region30: #{small_encoder_forward.1} parent=11 // pred_check_branch
          %324 = sbr.rel (%p322) target = $region32
        $region31: #{small_encoder_forward.1} parent=11 // pred_region
          %326 = vsyncadd [#allocation13], 0
          %s327 = sshll.u32 %s5, 4
          %s328 = int_to_ptr.hbm [resolvable:$true] %s327
          %s329 = sshll.u32 [#allocation12], 4
          %s330 = int_to_ptr.vmem [resolvable:$true] %s329
          %335 = dma.hbm_to_vmem [thread:$0]  %s328, 2304, %s330, [#allocation13], 128, 128, 8
        $region32: #{small_encoder_forward.1} parent=11 // pred_fallthru
          _
        // Predicated region
        $region33: #{small_encoder_forward.1} parent=11 // pred_check
          %p336 = pneg %p174
        $region34: #{small_encoder_forward.1} parent=11 // pred_check_branch
          %338 = sbr.rel (%p336) target = $region36
        $region35: #{small_encoder_forward.1} parent=11 // pred_region
          _
        $region36: #{small_encoder_forward.1} parent=11 // pred_fallthru
          _
        // Predicated region
        $region37: #{small_encoder_forward.1} parent=11 // pred_check
          %p339 = pneg %p195
        $region38: #{small_encoder_forward.1} parent=11 // pred_check_branch
          %341 = sbr.rel (%p339) target = $region40
        $region39: #{small_encoder_forward.1} parent=11 // pred_region
          _
        $region40: #{small_encoder_forward.1} parent=11 // pred_fallthru
          _
        // Predicated region
        $region41: #{small_encoder_forward.1} parent=11 // pred_check
          %p342 = pneg %p216
        $region42: #{small_encoder_forward.1} parent=11 // pred_check_branch
          %344 = sbr.rel (%p342) target = $region44
        $region43: #{small_encoder_forward.1} parent=11 // pred_region
          _
        $region44: #{small_encoder_forward.1} parent=11 // pred_fallthru
          _
        // Predicated region
        $region45: #{small_encoder_forward.1} parent=11 // pred_check
          %p345 = pneg %p237
        $region46: #{small_encoder_forward.1} parent=11 // pred_check_branch
          %347 = sbr.rel (%p345) target = $region48
        $region47: #{small_encoder_forward.1} parent=11 // pred_region
          _
        $region48: #{small_encoder_forward.1} parent=11 // pred_fallthru
          _
        // Predicated region
        $region49: #{small_encoder_forward.1} parent=11 // pred_check
          %p348 = pneg %p258
        $region50: #{small_encoder_forward.1} parent=11 // pred_check_branch
          %350 = sbr.rel (%p348) target = $region52
        $region51: #{small_encoder_forward.1} parent=11 // pred_region
          _
        $region52: #{small_encoder_forward.1} parent=11 // pred_fallthru
          _
      $region12: #{small_encoder_forward.1} parent=5 // pred_fallthru
        _
      %p351 = scmp.lt.s32.totalorder %s22, 2
      // Predicated region
      $region53: #{small_encoder_forward.1} parent=5 // pred_check
        %p352 = pneg %p351
      $region54: #{small_encoder_forward.1} parent=5 // pred_check_branch
        %354 = sbr.rel (%p352) target = $region56
      $region55: #{small_encoder_forward.1} parent=5 // pred_region
        // Predicated region
        $region57: #{small_encoder_forward.1} parent=55 // pred_check
          %p355 = pneg %p42
        $region58: #{small_encoder_forward.1} parent=55 // pred_check_branch
          %357 = sbr.rel (%p355) target = $region60
        $region59: #{small_encoder_forward.1} parent=55 // pred_region
          %p358 = scmp.lt.s32.totalorder %s22, 1
          %s359 = scalar_select %p358, %s22, 1
          %s360 = smul.addr %s359, 32
          %s361 = smul.addr %s360, 8
          %s362 = scalar_lea.vmem %s0, %s361
        $region60: #{small_encoder_forward.1} parent=55 // pred_fallthru
          _
      $region56: #{small_encoder_forward.1} parent=5 // pred_fallthru
        _
      %p363 = scmp.le.s32.totalorder 1, %s22
      %p364 = scmp.lt.s32.totalorder %s22, 3
      %p365 = pnand %p363, %p364
      %p366 = pneg %p365
      // Predicated region
      $region61: #{small_encoder_forward.1} parent=5 // pred_check
        _
      $region62: #{small_encoder_forward.1} parent=5 // pred_check_branch
        %368 = sbr.rel (%p365) target = $region64
      $region63: #{small_encoder_forward.1} parent=5 // pred_region
        %s369 = ssub.s32 %s22, 1
        // Predicated region
        $region65: #{small_encoder_forward.1} parent=63 // pred_check
          %p370 = pneg %p111
        $region66: #{small_encoder_forward.1} parent=63 // pred_check_branch
          %372 = sbr.rel (%p370) target = $region68
        $region67: #{small_encoder_forward.1} parent=63 // pred_region
          %374 = dma.done [#allocation10], 2304
        $region68: #{small_encoder_forward.1} parent=63 // pred_fallthru
          _
        // Predicated region
        $region69: #{small_encoder_forward.1} parent=63 // pred_check
          %p375 = pneg %p153
        $region70: #{small_encoder_forward.1} parent=63 // pred_check_branch
          %377 = sbr.rel (%p375) target = $region72
        $region71: #{small_encoder_forward.1} parent=63 // pred_region
          %379 = dma.done [#allocation13], 2304
        $region72: #{small_encoder_forward.1} parent=63 // pred_fallthru
          _
        %p380 = scmp.lt.s32.totalorder %s27, 1
        %s381 = scalar_select %p380, %s27, 1
        %s382 = smul.addr %s381, 32
        %s383 = smul.addr %s382, 8
        %s384 = scalar_lea.vmem %s0, %s383
        %p385 = pneg %p48
        %p386 = pneg %p45
        %p387 = pneg %p69
        %p388 = pneg %p66
        %p389 = pneg %p90
        %p390 = pneg %p87
        %p391 = pneg %p111
        %p392 = pneg %p108
        %p393 = pneg %p132
        %p394 = pneg %p129
        %p395 = pneg %p153
        %p396 = pneg %p150
        %p397 = pneg %p174
        %p398 = pneg %p171
        %p399 = pneg %p195
        %p400 = pneg %p192
        %p401 = pneg %p216
        %p402 = pneg %p213
        %p403 = pneg %p237
        %p404 = pneg %p234
        %p405 = pneg %p258
        %p406 = pneg %p255
        %p407 = pneg %p284
        %p408 = pneg %p281
        %s409 = sand.u32 %s271, 1
        %s410 = scalar_lea.sflag [#allocation11], %s409
        %s411 = sand.u32 %s271, 1
        %s412 = smul.addr %s411, 16
        %s413 = scalar_lea.vmem [#allocation14], %s412
        %p414 = scmp.lt.s32.totalorder %s27, 1
        %s415 = scalar_select %p414, %s27, 1
        %s416 = smul.addr %s415, 32
        %s417 = smul.addr %s416, 8
        %s418 = scalar_lea.vmem %s0, %s417
        %v419 = vld [vmem:[%s418] sm:$0xff]
        %v420 = vld [vmem:[%s418 + $0x8] sm:$0xff]
        %v421 = vld [vmem:[%s418 + $0x10] sm:$0xff]
        %v422 = vld [vmem:[%s418 + $0x18] sm:$0xff]
        %v423 = vld [vmem:[%s418 + $0x20] sm:$0xff]
        %v424 = vld [vmem:[%s418 + $0x28] sm:$0xff]
        %v425 = vld [vmem:[%s418 + $0x30] sm:$0xff]
        %v426 = vld [vmem:[%s418 + $0x38] sm:$0xff]
        %v427 = vld [vmem:[%s418 + $0x40] sm:$0xff]
        %v428 = vld [vmem:[%s418 + $0x48] sm:$0xff]
        %v429 = vld [vmem:[%s418 + $0x50] sm:$0xff]
        %v430 = vld [vmem:[%s418 + $0x58] sm:$0xff]
        %v431 = vld [vmem:[%s418 + $0x60] sm:$0xff]
        %v432 = vld [vmem:[%s418 + $0x68] sm:$0xff]
        %v433 = vld [vmem:[%s418 + $0x70] sm:$0xff]
        %v434 = vld [vmem:[%s418 + $0x78] sm:$0xff]
        %v435 = vld [vmem:[%s418 + $0x80] sm:$0xff]
        %v436 = vld [vmem:[%s418 + $0x88] sm:$0xff]
        %v437 = vld [vmem:[%s418 + $0x90] sm:$0xff]
        %v438 = vld [vmem:[%s418 + $0x98] sm:$0xff]
        %v439 = vld [vmem:[%s418 + $0xa0] sm:$0xff]
        %v440 = vld [vmem:[%s418 + $0xa8] sm:$0xff]
        %v441 = vld [vmem:[%s418 + $0xb0] sm:$0xff]
        %v442 = vld [vmem:[%s418 + $0xb8] sm:$0xff]
        %v443 = vld [vmem:[%s418 + $0xc0] sm:$0xff]
        %v444 = vld [vmem:[%s418 + $0xc8] sm:$0xff]
        %v445 = vld [vmem:[%s418 + $0xd0] sm:$0xff]
        %v446 = vld [vmem:[%s418 + $0xd8] sm:$0xff]
        %v447 = vld [vmem:[%s418 + $0xe0] sm:$0xff]
        %v448 = vld [vmem:[%s418 + $0xe8] sm:$0xff]
        %v449 = vld [vmem:[%s418 + $0xf0] sm:$0xff]
        %v450 = vld [vmem:[%s418 + $0xf8] sm:$0xff]
        %s451 = scalar_lea.vmem [#allocation2], 24
        %vm452 = vcmask 23552
        %453 = vst.msk [vmem:[%s451 + $0x1] sm:$0xff] %vm452, %v419
        %454 = vst.msk [vmem:[%s451 + $0x9] sm:$0xff] %vm452, %v420
        %455 = vst.msk [vmem:[%s451 + $0x19] sm:$0xff] %vm452, %v421
        %456 = vst.msk [vmem:[%s451 + $0x21] sm:$0xff] %vm452, %v422
        %457 = vst.msk [vmem:[%s451 + $0x31] sm:$0xff] %vm452, %v423
        %458 = vst.msk [vmem:[%s451 + $0x39] sm:$0xff] %vm452, %v424
        %459 = vst.msk [vmem:[%s451 + $0x49] sm:$0xff] %vm452, %v425
        %460 = vst.msk [vmem:[%s451 + $0x51] sm:$0xff] %vm452, %v426
        %461 = vst.msk [vmem:[%s451 + $0x61] sm:$0xff] %vm452, %v427
        %462 = vst.msk [vmem:[%s451 + $0x69] sm:$0xff] %vm452, %v428
        %463 = vst.msk [vmem:[%s451 + $0x79] sm:$0xff] %vm452, %v429
        %464 = vst.msk [vmem:[%s451 + $0x81] sm:$0xff] %vm452, %v430
        %465 = vst.msk [vmem:[%s451 + $0x91] sm:$0xff] %vm452, %v431
        %466 = vst.msk [vmem:[%s451 + $0x99] sm:$0xff] %vm452, %v432
        %467 = vst.msk [vmem:[%s451 + $0xa9] sm:$0xff] %vm452, %v433
        %468 = vst.msk [vmem:[%s451 + $0xb1] sm:$0xff] %vm452, %v434
        %469 = vst.msk [vmem:[%s451 + $0xc1] sm:$0xff] %vm452, %v435
        %470 = vst.msk [vmem:[%s451 + $0xc9] sm:$0xff] %vm452, %v436
        %471 = vst.msk [vmem:[%s451 + $0xd9] sm:$0xff] %vm452, %v437
        %472 = vst.msk [vmem:[%s451 + $0xe1] sm:$0xff] %vm452, %v438
        %473 = vst.msk [vmem:[%s451 + $0xf1] sm:$0xff] %vm452, %v439
        %474 = vst.msk [vmem:[%s451 + $0xf9] sm:$0xff] %vm452, %v440
        %475 = vst.msk [vmem:[%s451 + $0x109] sm:$0xff] %vm452, %v441
        %476 = vst.msk [vmem:[%s451 + $0x111] sm:$0xff] %vm452, %v442
        %477 = vst.msk [vmem:[%s451 + $0x121] sm:$0xff] %vm452, %v443
        %478 = vst.msk [vmem:[%s451 + $0x129] sm:$0xff] %vm452, %v444
        %479 = vst.msk [vmem:[%s451 + $0x139] sm:$0xff] %vm452, %v445
        %480 = vst.msk [vmem:[%s451 + $0x141] sm:$0xff] %vm452, %v446
        %481 = vst.msk [vmem:[%s451 + $0x151] sm:$0xff] %vm452, %v447
        %482 = vst.msk [vmem:[%s451 + $0x159] sm:$0xff] %vm452, %v448
        %483 = vst.msk [vmem:[%s451 + $0x169] sm:$0xff] %vm452, %v449
        %484 = vst.msk [vmem:[%s451 + $0x171] sm:$0xff] %vm452, %v450
        %s485 = scalar_lea.vmem [#allocation2], 48
        %v486 = vld [vmem:[%s485 + $0x1] sm:$0xff]
        %v487 = vld [vmem:[%s485 + $0x9] sm:$0xff]
        %488 = vst.msk [vmem:[#allocation2 + $0x1] sm:$0xff] %vm452, %v486
        %489 = vst.msk [vmem:[#allocation2 + $0x9] sm:$0xff] %vm452, %v487
        %s490 = scalar_lea.vmem [#allocation2], 360
        %v491 = vld [vmem:[%s490 + $0x1] sm:$0xff]
        %v492 = vld [vmem:[%s490 + $0x9] sm:$0xff]
        %s493 = scalar_lea.vmem [#allocation2], 408
        %494 = vst.msk [vmem:[%s493 + $0x1] sm:$0xff] %vm452, %v491
        %495 = vst.msk [vmem:[%s493 + $0x9] sm:$0xff] %vm452, %v492
        %v496 = vld [vmem:[#allocation2 + $0x2] sm:$0x1]
        %v497 = vld [vmem:[#allocation2 + $0x1a] sm:$0x1]
        %v498 = vld [vmem:[#allocation2 + $0x32] sm:$0x1]
        %v499 = vld [vmem:[#allocation2 + $0x4a] sm:$0x1]
        %v500 = vld [vmem:[#allocation2 + $0x62] sm:$0x1]
        %v501 = vld [vmem:[#allocation2 + $0x7a] sm:$0x1]
        %v502 = vld [vmem:[#allocation2 + $0x92] sm:$0x1]
        %v503 = vld [vmem:[#allocation2 + $0xaa] sm:$0x1]
        %v504 = vld [vmem:[#allocation2 + $0xc2] sm:$0x1]
        %v505 = vld [vmem:[#allocation2 + $0xda] sm:$0x1]
        %v506 = vld [vmem:[#allocation2 + $0xf2] sm:$0x1]
        %v507 = vld [vmem:[#allocation2 + $0x10a] sm:$0x1]
        %v508 = vld [vmem:[#allocation2 + $0x122] sm:$0x1]
        %v509 = vld [vmem:[#allocation2 + $0x13a] sm:$0x1]
        %v510 = vld [vmem:[#allocation2 + $0x152] sm:$0x1]
        %v511 = vld [vmem:[#allocation2 + $0x16a] sm:$0x1]
        %v512 = vld [vmem:[#allocation2 + $0x182] sm:$0x1]
        %v513 = vld [vmem:[#allocation2 + $0x19a] sm:$0x1]
        %vm514 = vcmask 16384
        %515 = vst.msk [vmem:[#allocation2] sm:$0x1] %vm514, %v496
        %516 = vst.msk [vmem:[#allocation2 + $0x18] sm:$0x1] %vm514, %v497
        %517 = vst.msk [vmem:[#allocation2 + $0x30] sm:$0x1] %vm514, %v498
        %518 = vst.msk [vmem:[#allocation2 + $0x48] sm:$0x1] %vm514, %v499
        %519 = vst.msk [vmem:[#allocation2 + $0x60] sm:$0x1] %vm514, %v500
        %520 = vst.msk [vmem:[#allocation2 + $0x78] sm:$0x1] %vm514, %v501
        %521 = vst.msk [vmem:[#allocation2 + $0x90] sm:$0x1] %vm514, %v502
        %522 = vst.msk [vmem:[#allocation2 + $0xa8] sm:$0x1] %vm514, %v503
        %523 = vst.msk [vmem:[#allocation2 + $0xc0] sm:$0x1] %vm514, %v504
        %524 = vst.msk [vmem:[#allocation2 + $0xd8] sm:$0x1] %vm514, %v505
        %525 = vst.msk [vmem:[#allocation2 + $0xf0] sm:$0x1] %vm514, %v506
        %526 = vst.msk [vmem:[#allocation2 + $0x108] sm:$0x1] %vm514, %v507
        %527 = vst.msk [vmem:[#allocation2 + $0x120] sm:$0x1] %vm514, %v508
        %528 = vst.msk [vmem:[#allocation2 + $0x138] sm:$0x1] %vm514, %v509
        %529 = vst.msk [vmem:[#allocation2 + $0x150] sm:$0x1] %vm514, %v510
        %530 = vst.msk [vmem:[#allocation2 + $0x168] sm:$0x1] %vm514, %v511
        %531 = vst.msk [vmem:[#allocation2 + $0x180] sm:$0x1] %vm514, %v512
        %532 = vst.msk [vmem:[#allocation2 + $0x198] sm:$0x1] %vm514, %v513
        %v533 = vld [vmem:[#allocation2 + $0xf] sm:$0x1]
        %v534 = vld [vmem:[#allocation2 + $0x27] sm:$0x1]
        %v535 = vld [vmem:[#allocation2 + $0x3f] sm:$0x1]
        %v536 = vld [vmem:[#allocation2 + $0x57] sm:$0x1]
        %v537 = vld [vmem:[#allocation2 + $0x6f] sm:$0x1]
        %v538 = vld [vmem:[#allocation2 + $0x87] sm:$0x1]
        %v539 = vld [vmem:[#allocation2 + $0x9f] sm:$0x1]
        %v540 = vld [vmem:[#allocation2 + $0xb7] sm:$0x1]
        %v541 = vld [vmem:[#allocation2 + $0xcf] sm:$0x1]
        %v542 = vld [vmem:[#allocation2 + $0xe7] sm:$0x1]
        %v543 = vld [vmem:[#allocation2 + $0xff] sm:$0x1]
        %v544 = vld [vmem:[#allocation2 + $0x117] sm:$0x1]
        %v545 = vld [vmem:[#allocation2 + $0x12f] sm:$0x1]
        %v546 = vld [vmem:[#allocation2 + $0x147] sm:$0x1]
        %v547 = vld [vmem:[#allocation2 + $0x15f] sm:$0x1]
        %v548 = vld [vmem:[#allocation2 + $0x177] sm:$0x1]
        %v549 = vld [vmem:[#allocation2 + $0x18f] sm:$0x1]
        %v550 = vld [vmem:[#allocation2 + $0x1a7] sm:$0x1]
        %551 = vst.msk [vmem:[#allocation2 + $0x11] sm:$0x1] %vm514, %v533
        %552 = vst.msk [vmem:[#allocation2 + $0x29] sm:$0x1] %vm514, %v534
        %553 = vst.msk [vmem:[#allocation2 + $0x41] sm:$0x1] %vm514, %v535
        %554 = vst.msk [vmem:[#allocation2 + $0x59] sm:$0x1] %vm514, %v536
        %555 = vst.msk [vmem:[#allocation2 + $0x71] sm:$0x1] %vm514, %v537
        %556 = vst.msk [vmem:[#allocation2 + $0x89] sm:$0x1] %vm514, %v538
        %557 = vst.msk [vmem:[#allocation2 + $0xa1] sm:$0x1] %vm514, %v539
        %558 = vst.msk [vmem:[#allocation2 + $0xb9] sm:$0x1] %vm514, %v540
        %559 = vst.msk [vmem:[#allocation2 + $0xd1] sm:$0x1] %vm514, %v541
        %560 = vst.msk [vmem:[#allocation2 + $0xe9] sm:$0x1] %vm514, %v542
        %561 = vst.msk [vmem:[#allocation2 + $0x101] sm:$0x1] %vm514, %v543
        %562 = vst.msk [vmem:[#allocation2 + $0x119] sm:$0x1] %vm514, %v544
        %563 = vst.msk [vmem:[#allocation2 + $0x131] sm:$0x1] %vm514, %v545
        %564 = vst.msk [vmem:[#allocation2 + $0x149] sm:$0x1] %vm514, %v546
        %565 = vst.msk [vmem:[#allocation2 + $0x161] sm:$0x1] %vm514, %v547
        %566 = vst.msk [vmem:[#allocation2 + $0x179] sm:$0x1] %vm514, %v548
        %567 = vst.msk [vmem:[#allocation2 + $0x191] sm:$0x1] %vm514, %v549
        %568 = vst.msk [vmem:[#allocation2 + $0x1a9] sm:$0x1] %vm514, %v550
        %v569 = vld [vmem:[#allocation2] sm:$0xff]
        %v570 = vld [vmem:[#allocation2 + $0x8] sm:$0xff]
        %v571 = vld [vmem:[#allocation2 + $0x18] sm:$0xff]
        %v572 = vld [vmem:[#allocation2 + $0x20] sm:$0xff]
        %v573 = vld [vmem:[#allocation2 + $0x30] sm:$0xff]
        %v574 = vld [vmem:[#allocation2 + $0x38] sm:$0xff]
        %v575 = vld [vmem:[#allocation2 + $0x48] sm:$0xff]
        %v576 = vld [vmem:[#allocation2 + $0x50] sm:$0xff]
        %v577 = vld [vmem:[#allocation2 + $0x60] sm:$0xff]
        %v578 = vld [vmem:[#allocation2 + $0x68] sm:$0xff]
        %v579 = vld [vmem:[#allocation2 + $0x78] sm:$0xff]
        %v580 = vld [vmem:[#allocation2 + $0x80] sm:$0xff]
        %v581 = vld [vmem:[#allocation2 + $0x90] sm:$0xff]
        %v582 = vld [vmem:[#allocation2 + $0x98] sm:$0xff]
        %v583 = vld [vmem:[#allocation2 + $0xa8] sm:$0xff]
        %v584 = vld [vmem:[#allocation2 + $0xb0] sm:$0xff]
        %v585 = vld [vmem:[#allocation2 + $0xc0] sm:$0xff]
        %v586 = vld [vmem:[#allocation2 + $0xc8] sm:$0xff]
        %v587 = vld [vmem:[#allocation2 + $0xd8] sm:$0xff]
        %v588 = vld [vmem:[#allocation2 + $0xe0] sm:$0xff]
        %v589 = vld [vmem:[#allocation2 + $0xf0] sm:$0xff]
        %v590 = vld [vmem:[#allocation2 + $0xf8] sm:$0xff]
        %v591 = vld [vmem:[#allocation2 + $0x108] sm:$0xff]
        %v592 = vld [vmem:[#allocation2 + $0x110] sm:$0xff]
        %v593 = vld [vmem:[#allocation2 + $0x120] sm:$0xff]
        %v594 = vld [vmem:[#allocation2 + $0x128] sm:$0xff]
        %v595 = vld [vmem:[#allocation2 + $0x138] sm:$0xff]
        %v596 = vld [vmem:[#allocation2 + $0x140] sm:$0xff]
        %v597 = vld [vmem:[#allocation2 + $0x150] sm:$0xff]
        %v598 = vld [vmem:[#allocation2 + $0x158] sm:$0xff]
        %v599 = vld [vmem:[#allocation2 + $0x168] sm:$0xff]
        %v600 = vld [vmem:[#allocation2 + $0x170] sm:$0xff]
        %v601 = vld [vmem:[%s1] sm:$0x7]
        %v602 = vld [vmem:[#allocation2 + $0x1] sm:$0xff]
        %v603 = vld [vmem:[#allocation2 + $0x9] sm:$0xff]
        %v604 = vld [vmem:[#allocation2 + $0x19] sm:$0xff]
        %v605 = vld [vmem:[#allocation2 + $0x21] sm:$0xff]
        %v606 = vld [vmem:[#allocation2 + $0x31] sm:$0xff]
        %v607 = vld [vmem:[#allocation2 + $0x39] sm:$0xff]
        %v608 = vld [vmem:[#allocation2 + $0x49] sm:$0xff]
        %v609 = vld [vmem:[#allocation2 + $0x51] sm:$0xff]
        %v610 = vld [vmem:[#allocation2 + $0x61] sm:$0xff]
        %v611 = vld [vmem:[#allocation2 + $0x69] sm:$0xff]
        %v612 = vld [vmem:[#allocation2 + $0x79] sm:$0xff]
        %v613 = vld [vmem:[#allocation2 + $0x81] sm:$0xff]
        %v614 = vld [vmem:[#allocation2 + $0x91] sm:$0xff]
        %v615 = vld [vmem:[#allocation2 + $0x99] sm:$0xff]
        %v616 = vld [vmem:[#allocation2 + $0xa9] sm:$0xff]
        %v617 = vld [vmem:[#allocation2 + $0xb1] sm:$0xff]
        %v618 = vld [vmem:[#allocation2 + $0xc1] sm:$0xff]
        %v619 = vld [vmem:[#allocation2 + $0xc9] sm:$0xff]
        %v620 = vld [vmem:[#allocation2 + $0xd9] sm:$0xff]
        %v621 = vld [vmem:[#allocation2 + $0xe1] sm:$0xff]
        %v622 = vld [vmem:[#allocation2 + $0xf1] sm:$0xff]
        %v623 = vld [vmem:[#allocation2 + $0xf9] sm:$0xff]
        %v624 = vld [vmem:[#allocation2 + $0x109] sm:$0xff]
        %v625 = vld [vmem:[#allocation2 + $0x111] sm:$0xff]
        %v626 = vld [vmem:[#allocation2 + $0x121] sm:$0xff]
        %v627 = vld [vmem:[#allocation2 + $0x129] sm:$0xff]
        %v628 = vld [vmem:[#allocation2 + $0x139] sm:$0xff]
        %v629 = vld [vmem:[#allocation2 + $0x141] sm:$0xff]
        %v630 = vld [vmem:[#allocation2 + $0x151] sm:$0xff]
        %v631 = vld [vmem:[#allocation2 + $0x159] sm:$0xff]
        %v632 = vld [vmem:[#allocation2 + $0x169] sm:$0xff]
        %v633 = vld [vmem:[#allocation2 + $0x171] sm:$0xff]
        %s634 = scalar_lea.vmem %s1, 4
        %v635 = vld [vmem:[%s634] sm:$0x7]
        %v637 = vsel %vm452, %v602, 0
        %v640 = vsel %vm452, %v603, 0
        %v643 = vsel %vm452, %v604, 0
        %v646 = vsel %vm452, %v605, 0
        %v649 = vsel %vm452, %v606, 0
        %v652 = vsel %vm452, %v607, 0
        %v655 = vsel %vm452, %v608, 0
        %v658 = vsel %vm452, %v609, 0
        %v661 = vsel %vm452, %v610, 0
        %v664 = vsel %vm452, %v611, 0
        %v667 = vsel %vm452, %v612, 0
        %v670 = vsel %vm452, %v613, 0
        %v673 = vsel %vm452, %v614, 0
        %v676 = vsel %vm452, %v615, 0
        %v679 = vsel %vm452, %v616, 0
        %v682 = vsel %vm452, %v617, 0
        %v685 = vsel %vm452, %v618, 0
        %v688 = vsel %vm452, %v619, 0
        %v691 = vsel %vm452, %v620, 0
        %v694 = vsel %vm452, %v621, 0
        %v697 = vsel %vm452, %v622, 0
        %v700 = vsel %vm452, %v623, 0
        %v703 = vsel %vm452, %v624, 0
        %v706 = vsel %vm452, %v625, 0
        %v709 = vsel %vm452, %v626, 0
        %v712 = vsel %vm452, %v627, 0
        %v715 = vsel %vm452, %v628, 0
        %v718 = vsel %vm452, %v629, 0
        %v721 = vsel %vm452, %v630, 0
        %v724 = vsel %vm452, %v631, 0
        %v727 = vsel %vm452, %v632, 0
        %v730 = vsel %vm452, %v633, 0
        %vm732 = vcmask 1042432
        %v734 = vsel %vm732, %v635, 0
        %736 = vmatpush.msra.mxu0 0.0
        %737 = vmatpush.msra.mxu0 0.0
        %738 = vmatpush.msra.mxu0 0.0
        %739 = vmatpush.msra.mxu0 0.0
        %740 = vmatpush.msra.mxu0 0.0
        %741 = vmatpush.msra.mxu0 0.0
        %742 = vmatpush.msra.mxu0 0.0
        %743 = vmatpush.msra.mxu0 0.0
        %744 = vmatpush.msra.mxu0 0.0
        %745 = vmatpush.msra.mxu0 0.0
        %746 = vmatpush.msra.mxu0 0.0
        %747 = vmatpush.msra.mxu0 0.0
        %748 = vmatpush.msra.mxu0 0.0
        %749 = vmatpush.msra.mxu0 0.0
        %750 = vmatpush.msra.mxu0 0.0
        %751 = vmatpush.msra.mxu0 %v734
        %752 = vmatmul.f32.gmra.mxu0 %v637
        %v753 = vpop.f32.mrf.mxu0
        %v754 = vadd.f32 0.0, %v753
        %755 = vmatmul.f32.gmra.mxu0 %v640
        %v756 = vpop.f32.mrf.mxu0
        %v757 = vadd.f32 0.0, %v756
        %758 = vmatmul.f32.gmra.mxu0 %v643
        %v759 = vpop.f32.mrf.mxu0
        %v760 = vadd.f32 0.0, %v759
        %761 = vmatmul.f32.gmra.mxu0 %v646
        %v762 = vpop.f32.mrf.mxu0
        %v763 = vadd.f32 0.0, %v762
        %764 = vmatmul.f32.gmra.mxu0 %v649
        %v765 = vpop.f32.mrf.mxu0
        %v766 = vadd.f32 0.0, %v765
        %767 = vmatmul.f32.gmra.mxu0 %v652
        %v768 = vpop.f32.mrf.mxu0
        %v769 = vadd.f32 0.0, %v768
        %770 = vmatmul.f32.gmra.mxu0 %v655
        %v771 = vpop.f32.mrf.mxu0
        %v772 = vadd.f32 0.0, %v771
        %773 = vmatmul.f32.gmra.mxu0 %v658
        %v774 = vpop.f32.mrf.mxu0
        %v775 = vadd.f32 0.0, %v774
        %776 = vmatmul.f32.gmra.mxu0 %v661
        %v777 = vpop.f32.mrf.mxu0
        %v778 = vadd.f32 0.0, %v777
        %779 = vmatmul.f32.gmra.mxu0 %v664
        %v780 = vpop.f32.mrf.mxu0
        %v781 = vadd.f32 0.0, %v780
        %782 = vmatmul.f32.gmra.mxu0 %v667
        %v783 = vpop.f32.mrf.mxu0
        %v784 = vadd.f32 0.0, %v783
        %785 = vmatmul.f32.gmra.mxu0 %v670
        %v786 = vpop.f32.mrf.mxu0
        %v787 = vadd.f32 0.0, %v786
        %788 = vmatmul.f32.gmra.mxu0 %v673
        %v789 = vpop.f32.mrf.mxu0
        %v790 = vadd.f32 0.0, %v789
        %791 = vmatmul.f32.gmra.mxu0 %v676
        %v792 = vpop.f32.mrf.mxu0
        %v793 = vadd.f32 0.0, %v792
        %794 = vmatmul.f32.gmra.mxu0 %v679
        %v795 = vpop.f32.mrf.mxu0
        %v796 = vadd.f32 0.0, %v795
        %797 = vmatmul.f32.gmra.mxu0 %v682
        %v798 = vpop.f32.mrf.mxu0
        %v799 = vadd.f32 0.0, %v798
        %800 = vmatmul.f32.gmra.mxu0 %v685
        %v801 = vpop.f32.mrf.mxu0
        %v802 = vadd.f32 0.0, %v801
        %803 = vmatmul.f32.gmra.mxu0 %v688
        %v804 = vpop.f32.mrf.mxu0
        %v805 = vadd.f32 0.0, %v804
        %806 = vmatmul.f32.gmra.mxu0 %v691
        %v807 = vpop.f32.mrf.mxu0
        %v808 = vadd.f32 0.0, %v807
        %809 = vmatmul.f32.gmra.mxu0 %v694
        %v810 = vpop.f32.mrf.mxu0
        %v811 = vadd.f32 0.0, %v810
        %812 = vmatmul.f32.gmra.mxu0 %v697
        %v813 = vpop.f32.mrf.mxu0
        %v814 = vadd.f32 0.0, %v813
        %815 = vmatmul.f32.gmra.mxu0 %v700
        %v816 = vpop.f32.mrf.mxu0
        %v817 = vadd.f32 0.0, %v816
        %818 = vmatmul.f32.gmra.mxu0 %v703
        %v819 = vpop.f32.mrf.mxu0
        %v820 = vadd.f32 0.0, %v819
        %821 = vmatmul.f32.gmra.mxu0 %v706
        %v822 = vpop.f32.mrf.mxu0
        %v823 = vadd.f32 0.0, %v822
        %824 = vmatmul.f32.gmra.mxu0 %v709
        %v825 = vpop.f32.mrf.mxu0
        %v826 = vadd.f32 0.0, %v825
        %827 = vmatmul.f32.gmra.mxu0 %v712
        %v828 = vpop.f32.mrf.mxu0
        %v829 = vadd.f32 0.0, %v828
        %830 = vmatmul.f32.gmra.mxu0 %v715
        %v831 = vpop.f32.mrf.mxu0
        %v832 = vadd.f32 0.0, %v831
        %833 = vmatmul.f32.gmra.mxu0 %v718
        %v834 = vpop.f32.mrf.mxu0
        %v835 = vadd.f32 0.0, %v834
        %836 = vmatmul.f32.gmra.mxu0 %v721
        %v837 = vpop.f32.mrf.mxu0
        %v838 = vadd.f32 0.0, %v837
        %839 = vmatmul.f32.gmra.mxu0 %v724
        %v840 = vpop.f32.mrf.mxu0
        %v841 = vadd.f32 0.0, %v840
        %842 = vmatmul.f32.gmra.mxu0 %v727
        %v843 = vpop.f32.mrf.mxu0
        %v844 = vadd.f32 0.0, %v843
        %845 = vmatmul.f32.gmra.mxu0 %v730
        %v846 = vpop.f32.mrf.mxu0
        %v847 = vadd.f32 0.0, %v846
        %848 = vdwg.mxu0
        %v850 = vsel %vm452, %v569, 0
        %v853 = vsel %vm452, %v570, 0
        %v856 = vsel %vm452, %v571, 0
        %v859 = vsel %vm452, %v572, 0
        %v862 = vsel %vm452, %v573, 0
        %v865 = vsel %vm452, %v574, 0
        %v868 = vsel %vm452, %v575, 0
        %v871 = vsel %vm452, %v576, 0
        %v874 = vsel %vm452, %v577, 0
        %v877 = vsel %vm452, %v578, 0
        %v880 = vsel %vm452, %v579, 0
        %v883 = vsel %vm452, %v580, 0
        %v886 = vsel %vm452, %v581, 0
        %v889 = vsel %vm452, %v582, 0
        %v892 = vsel %vm452, %v583, 0
        %v895 = vsel %vm452, %v584, 0
        %v898 = vsel %vm452, %v585, 0
        %v901 = vsel %vm452, %v586, 0
        %v904 = vsel %vm452, %v587, 0
        %v907 = vsel %vm452, %v588, 0
        %v910 = vsel %vm452, %v589, 0
        %v913 = vsel %vm452, %v590, 0
        %v916 = vsel %vm452, %v591, 0
        %v919 = vsel %vm452, %v592, 0
        %v922 = vsel %vm452, %v593, 0
        %v925 = vsel %vm452, %v594, 0
        %v928 = vsel %vm452, %v595, 0
        %v931 = vsel %vm452, %v596, 0
        %v934 = vsel %vm452, %v597, 0
        %v937 = vsel %vm452, %v598, 0
        %v940 = vsel %vm452, %v599, 0
        %v943 = vsel %vm452, %v600, 0
        %v946 = vsel %vm732, %v601, 0
        %948 = vmatpush.msra.mxu0 0.0
        %949 = vmatpush.msra.mxu0 0.0
        %950 = vmatpush.msra.mxu0 0.0
        %951 = vmatpush.msra.mxu0 0.0
        %952 = vmatpush.msra.mxu0 0.0
        %953 = vmatpush.msra.mxu0 0.0
        %954 = vmatpush.msra.mxu0 0.0
        %955 = vmatpush.msra.mxu0 0.0
        %956 = vmatpush.msra.mxu0 0.0
        %957 = vmatpush.msra.mxu0 0.0
        %958 = vmatpush.msra.mxu0 0.0
        %959 = vmatpush.msra.mxu0 0.0
        %960 = vmatpush.msra.mxu0 0.0
        %961 = vmatpush.msra.mxu0 0.0
        %962 = vmatpush.msra.mxu0 0.0
        %963 = vmatpush.msra.mxu0 %v946
        %964 = vmatmul.f32.gmra.mxu0 %v850
        %v965 = vpop.f32.mrf.mxu0
        %v966 = vadd.f32 %v754, %v965
        %967 = vmatmul.f32.gmra.mxu0 %v853
        %v968 = vpop.f32.mrf.mxu0
        %v969 = vadd.f32 %v757, %v968
        %970 = vmatmul.f32.gmra.mxu0 %v856
        %v971 = vpop.f32.mrf.mxu0
        %v972 = vadd.f32 %v760, %v971
        %973 = vmatmul.f32.gmra.mxu0 %v859
        %v974 = vpop.f32.mrf.mxu0
        %v975 = vadd.f32 %v763, %v974
        %976 = vmatmul.f32.gmra.mxu0 %v862
        %v977 = vpop.f32.mrf.mxu0
        %v978 = vadd.f32 %v766, %v977
        %979 = vmatmul.f32.gmra.mxu0 %v865
        %v980 = vpop.f32.mrf.mxu0
        %v981 = vadd.f32 %v769, %v980
        %982 = vmatmul.f32.gmra.mxu0 %v868
        %v983 = vpop.f32.mrf.mxu0
        %v984 = vadd.f32 %v772, %v983
        %985 = vmatmul.f32.gmra.mxu0 %v871
        %v986 = vpop.f32.mrf.mxu0
        %v987 = vadd.f32 %v775, %v986
        %988 = vmatmul.f32.gmra.mxu0 %v874
        %v989 = vpop.f32.mrf.mxu0
        %v990 = vadd.f32 %v778, %v989
        %991 = vmatmul.f32.gmra.mxu0 %v877
        %v992 = vpop.f32.mrf.mxu0
        %v993 = vadd.f32 %v781, %v992
        %994 = vmatmul.f32.gmra.mxu0 %v880
        %v995 = vpop.f32.mrf.mxu0
        %v996 = vadd.f32 %v784, %v995
        %997 = vmatmul.f32.gmra.mxu0 %v883
        %v998 = vpop.f32.mrf.mxu0
        %v999 = vadd.f32 %v787, %v998
        %1000 = vmatmul.f32.gmra.mxu0 %v886
        %v1001 = vpop.f32.mrf.mxu0
        %v1002 = vadd.f32 %v790, %v1001
        %1003 = vmatmul.f32.gmra.mxu0 %v889
        %v1004 = vpop.f32.mrf.mxu0
        %v1005 = vadd.f32 %v793, %v1004
        %1006 = vmatmul.f32.gmra.mxu0 %v892
        %v1007 = vpop.f32.mrf.mxu0
        %v1008 = vadd.f32 %v796, %v1007
        %1009 = vmatmul.f32.gmra.mxu0 %v895
        %v1010 = vpop.f32.mrf.mxu0
        %v1011 = vadd.f32 %v799, %v1010
        %1012 = vmatmul.f32.gmra.mxu0 %v898
        %v1013 = vpop.f32.mrf.mxu0
        %v1014 = vadd.f32 %v802, %v1013
        %1015 = vmatmul.f32.gmra.mxu0 %v901
        %v1016 = vpop.f32.mrf.mxu0
        %v1017 = vadd.f32 %v805, %v1016
        %1018 = vmatmul.f32.gmra.mxu0 %v904
        %v1019 = vpop.f32.mrf.mxu0
        %v1020 = vadd.f32 %v808, %v1019
        %1021 = vmatmul.f32.gmra.mxu0 %v907
        %v1022 = vpop.f32.mrf.mxu0
        %v1023 = vadd.f32 %v811, %v1022
        %1024 = vmatmul.f32.gmra.mxu0 %v910
        %v1025 = vpop.f32.mrf.mxu0
        %v1026 = vadd.f32 %v814, %v1025
        %1027 = vmatmul.f32.gmra.mxu0 %v913
        %v1028 = vpop.f32.mrf.mxu0
        %v1029 = vadd.f32 %v817, %v1028
        %1030 = vmatmul.f32.gmra.mxu0 %v916
        %v1031 = vpop.f32.mrf.mxu0
        %v1032 = vadd.f32 %v820, %v1031
        %1033 = vmatmul.f32.gmra.mxu0 %v919
        %v1034 = vpop.f32.mrf.mxu0
        %v1035 = vadd.f32 %v823, %v1034
        %1036 = vmatmul.f32.gmra.mxu0 %v922
        %v1037 = vpop.f32.mrf.mxu0
        %v1038 = vadd.f32 %v826, %v1037
        %1039 = vmatmul.f32.gmra.mxu0 %v925
        %v1040 = vpop.f32.mrf.mxu0
        %v1041 = vadd.f32 %v829, %v1040
        %1042 = vmatmul.f32.gmra.mxu0 %v928
        %v1043 = vpop.f32.mrf.mxu0
        %v1044 = vadd.f32 %v832, %v1043
        %1045 = vmatmul.f32.gmra.mxu0 %v931
        %v1046 = vpop.f32.mrf.mxu0
        %v1047 = vadd.f32 %v835, %v1046
        %1048 = vmatmul.f32.gmra.mxu0 %v934
        %v1049 = vpop.f32.mrf.mxu0
        %v1050 = vadd.f32 %v838, %v1049
        %1051 = vmatmul.f32.gmra.mxu0 %v937
        %v1052 = vpop.f32.mrf.mxu0
        %v1053 = vadd.f32 %v841, %v1052
        %1054 = vmatmul.f32.gmra.mxu0 %v940
        %v1055 = vpop.f32.mrf.mxu0
        %v1056 = vadd.f32 %v844, %v1055
        %1057 = vmatmul.f32.gmra.mxu0 %v943
        %v1058 = vpop.f32.mrf.mxu0
        %v1059 = vadd.f32 %v847, %v1058
        %1060 = vdwg.mxu0
        %v1061 = vld [vmem:[#allocation2 + $0x2] sm:$0xff]
        %v1062 = vld [vmem:[#allocation2 + $0xa] sm:$0xff]
        %v1063 = vld [vmem:[#allocation2 + $0x1a] sm:$0xff]
        %v1064 = vld [vmem:[#allocation2 + $0x22] sm:$0xff]
        %v1065 = vld [vmem:[#allocation2 + $0x32] sm:$0xff]
        %v1066 = vld [vmem:[#allocation2 + $0x3a] sm:$0xff]
        %v1067 = vld [vmem:[#allocation2 + $0x4a] sm:$0xff]
        %v1068 = vld [vmem:[#allocation2 + $0x52] sm:$0xff]
        %v1069 = vld [vmem:[#allocation2 + $0x62] sm:$0xff]
        %v1070 = vld [vmem:[#allocation2 + $0x6a] sm:$0xff]
        %v1071 = vld [vmem:[#allocation2 + $0x7a] sm:$0xff]
        %v1072 = vld [vmem:[#allocation2 + $0x82] sm:$0xff]
        %v1073 = vld [vmem:[#allocation2 + $0x92] sm:$0xff]
        %v1074 = vld [vmem:[#allocation2 + $0x9a] sm:$0xff]
        %v1075 = vld [vmem:[#allocation2 + $0xaa] sm:$0xff]
        %v1076 = vld [vmem:[#allocation2 + $0xb2] sm:$0xff]
        %v1077 = vld [vmem:[#allocation2 + $0xc2] sm:$0xff]
        %v1078 = vld [vmem:[#allocation2 + $0xca] sm:$0xff]
        %v1079 = vld [vmem:[#allocation2 + $0xda] sm:$0xff]
        %v1080 = vld [vmem:[#allocation2 + $0xe2] sm:$0xff]
        %v1081 = vld [vmem:[#allocation2 + $0xf2] sm:$0xff]
        %v1082 = vld [vmem:[#allocation2 + $0xfa] sm:$0xff]
        %v1083 = vld [vmem:[#allocation2 + $0x10a] sm:$0xff]
        %v1084 = vld [vmem:[#allocation2 + $0x112] sm:$0xff]
        %v1085 = vld [vmem:[#allocation2 + $0x122] sm:$0xff]
        %v1086 = vld [vmem:[#allocation2 + $0x12a] sm:$0xff]
        %v1087 = vld [vmem:[#allocation2 + $0x13a] sm:$0xff]
        %v1088 = vld [vmem:[#allocation2 + $0x142] sm:$0xff]
        %v1089 = vld [vmem:[#allocation2 + $0x152] sm:$0xff]
        %v1090 = vld [vmem:[#allocation2 + $0x15a] sm:$0xff]
        %v1091 = vld [vmem:[#allocation2 + $0x16a] sm:$0xff]
        %v1092 = vld [vmem:[#allocation2 + $0x172] sm:$0xff]
        %s1093 = scalar_lea.vmem %s1, 8
        %v1094 = vld [vmem:[%s1093] sm:$0x7]
        %v1096 = vsel %vm452, %v1061, 0
        %v1099 = vsel %vm452, %v1062, 0
        %v1102 = vsel %vm452, %v1063, 0
        %v1105 = vsel %vm452, %v1064, 0
        %v1108 = vsel %vm452, %v1065, 0
        %v1111 = vsel %vm452, %v1066, 0
        %v1114 = vsel %vm452, %v1067, 0
        %v1117 = vsel %vm452, %v1068, 0
        %v1120 = vsel %vm452, %v1069, 0
        %v1123 = vsel %vm452, %v1070, 0
        %v1126 = vsel %vm452, %v1071, 0
        %v1129 = vsel %vm452, %v1072, 0
        %v1132 = vsel %vm452, %v1073, 0
        %v1135 = vsel %vm452, %v1074, 0
        %v1138 = vsel %vm452, %v1075, 0
        %v1141 = vsel %vm452, %v1076, 0
        %v1144 = vsel %vm452, %v1077, 0
        %v1147 = vsel %vm452, %v1078, 0
        %v1150 = vsel %vm452, %v1079, 0
        %v1153 = vsel %vm452, %v1080, 0
        %v1156 = vsel %vm452, %v1081, 0
        %v1159 = vsel %vm452, %v1082, 0
        %v1162 = vsel %vm452, %v1083, 0
        %v1165 = vsel %vm452, %v1084, 0
        %v1168 = vsel %vm452, %v1085, 0
        %v1171 = vsel %vm452, %v1086, 0
        %v1174 = vsel %vm452, %v1087, 0
        %v1177 = vsel %vm452, %v1088, 0
        %v1180 = vsel %vm452, %v1089, 0
        %v1183 = vsel %vm452, %v1090, 0
        %v1186 = vsel %vm452, %v1091, 0
        %v1189 = vsel %vm452, %v1092, 0
        %v1192 = vsel %vm732, %v1094, 0
        %1194 = vmatpush.msra.mxu0 0.0
        %1195 = vmatpush.msra.mxu0 0.0
        %1196 = vmatpush.msra.mxu0 0.0
        %1197 = vmatpush.msra.mxu0 0.0
        %1198 = vmatpush.msra.mxu0 0.0
        %1199 = vmatpush.msra.mxu0 0.0
        %1200 = vmatpush.msra.mxu0 0.0
        %1201 = vmatpush.msra.mxu0 0.0
        %1202 = vmatpush.msra.mxu0 0.0
        %1203 = vmatpush.msra.mxu0 0.0
        %1204 = vmatpush.msra.mxu0 0.0
        %1205 = vmatpush.msra.mxu0 0.0
        %1206 = vmatpush.msra.mxu0 0.0
        %1207 = vmatpush.msra.mxu0 0.0
        %1208 = vmatpush.msra.mxu0 0.0
        %1209 = vmatpush.msra.mxu0 %v1192
        %1210 = vmatmul.f32.gmra.mxu0 %v1096
        %v1211 = vpop.f32.mrf.mxu0
        %v1212 = vadd.f32 0.0, %v1211
        %1213 = vmatmul.f32.gmra.mxu0 %v1099
        %v1214 = vpop.f32.mrf.mxu0
        %v1215 = vadd.f32 0.0, %v1214
        %1216 = vmatmul.f32.gmra.mxu0 %v1102
        %v1217 = vpop.f32.mrf.mxu0
        %v1218 = vadd.f32 0.0, %v1217
        %1219 = vmatmul.f32.gmra.mxu0 %v1105
        %v1220 = vpop.f32.mrf.mxu0
        %v1221 = vadd.f32 0.0, %v1220
        %1222 = vmatmul.f32.gmra.mxu0 %v1108
        %v1223 = vpop.f32.mrf.mxu0
        %v1224 = vadd.f32 0.0, %v1223
        %1225 = vmatmul.f32.gmra.mxu0 %v1111
        %v1226 = vpop.f32.mrf.mxu0
        %v1227 = vadd.f32 0.0, %v1226
        %1228 = vmatmul.f32.gmra.mxu0 %v1114
        %v1229 = vpop.f32.mrf.mxu0
        %v1230 = vadd.f32 0.0, %v1229
        %1231 = vmatmul.f32.gmra.mxu0 %v1117
        %v1232 = vpop.f32.mrf.mxu0
        %v1233 = vadd.f32 0.0, %v1232
        %1234 = vmatmul.f32.gmra.mxu0 %v1120
        %v1235 = vpop.f32.mrf.mxu0
        %v1236 = vadd.f32 0.0, %v1235
        %1237 = vmatmul.f32.gmra.mxu0 %v1123
        %v1238 = vpop.f32.mrf.mxu0
        %v1239 = vadd.f32 0.0, %v1238
        %1240 = vmatmul.f32.gmra.mxu0 %v1126
        %v1241 = vpop.f32.mrf.mxu0
        %v1242 = vadd.f32 0.0, %v1241
        %1243 = vmatmul.f32.gmra.mxu0 %v1129
        %v1244 = vpop.f32.mrf.mxu0
        %v1245 = vadd.f32 0.0, %v1244
        %1246 = vmatmul.f32.gmra.mxu0 %v1132
        %v1247 = vpop.f32.mrf.mxu0
        %v1248 = vadd.f32 0.0, %v1247
        %1249 = vmatmul.f32.gmra.mxu0 %v1135
        %v1250 = vpop.f32.mrf.mxu0
        %v1251 = vadd.f32 0.0, %v1250
        %1252 = vmatmul.f32.gmra.mxu0 %v1138
        %v1253 = vpop.f32.mrf.mxu0
        %v1254 = vadd.f32 0.0, %v1253
        %1255 = vmatmul.f32.gmra.mxu0 %v1141
        %v1256 = vpop.f32.mrf.mxu0
        %v1257 = vadd.f32 0.0, %v1256
        %1258 = vmatmul.f32.gmra.mxu0 %v1144
        %v1259 = vpop.f32.mrf.mxu0
        %v1260 = vadd.f32 0.0, %v1259
        %1261 = vmatmul.f32.gmra.mxu0 %v1147
        %v1262 = vpop.f32.mrf.mxu0
        %v1263 = vadd.f32 0.0, %v1262
        %1264 = vmatmul.f32.gmra.mxu0 %v1150
        %v1265 = vpop.f32.mrf.mxu0
        %v1266 = vadd.f32 0.0, %v1265
        %1267 = vmatmul.f32.gmra.mxu0 %v1153
        %v1268 = vpop.f32.mrf.mxu0
        %v1269 = vadd.f32 0.0, %v1268
        %1270 = vmatmul.f32.gmra.mxu0 %v1156
        %v1271 = vpop.f32.mrf.mxu0
        %v1272 = vadd.f32 0.0, %v1271
        %1273 = vmatmul.f32.gmra.mxu0 %v1159
        %v1274 = vpop.f32.mrf.mxu0
        %v1275 = vadd.f32 0.0, %v1274
        %1276 = vmatmul.f32.gmra.mxu0 %v1162
        %v1277 = vpop.f32.mrf.mxu0
        %v1278 = vadd.f32 0.0, %v1277
        %1279 = vmatmul.f32.gmra.mxu0 %v1165
        %v1280 = vpop.f32.mrf.mxu0
        %v1281 = vadd.f32 0.0, %v1280
        %1282 = vmatmul.f32.gmra.mxu0 %v1168
        %v1283 = vpop.f32.mrf.mxu0
        %v1284 = vadd.f32 0.0, %v1283
        %1285 = vmatmul.f32.gmra.mxu0 %v1171
        %v1286 = vpop.f32.mrf.mxu0
        %v1287 = vadd.f32 0.0, %v1286
        %1288 = vmatmul.f32.gmra.mxu0 %v1174
        %v1289 = vpop.f32.mrf.mxu0
        %v1290 = vadd.f32 0.0, %v1289
        %1291 = vmatmul.f32.gmra.mxu0 %v1177
        %v1292 = vpop.f32.mrf.mxu0
        %v1293 = vadd.f32 0.0, %v1292
        %1294 = vmatmul.f32.gmra.mxu0 %v1180
        %v1295 = vpop.f32.mrf.mxu0
        %v1296 = vadd.f32 0.0, %v1295
        %1297 = vmatmul.f32.gmra.mxu0 %v1183
        %v1298 = vpop.f32.mrf.mxu0
        %v1299 = vadd.f32 0.0, %v1298
        %1300 = vmatmul.f32.gmra.mxu0 %v1186
        %v1301 = vpop.f32.mrf.mxu0
        %v1302 = vadd.f32 0.0, %v1301
        %1303 = vmatmul.f32.gmra.mxu0 %v1189
        %v1304 = vpop.f32.mrf.mxu0
        %v1305 = vadd.f32 0.0, %v1304
        %1306 = vdwg.mxu0
        %v1307 = vadd.f32 %v966, %v1212
        %v1308 = vadd.f32 %v969, %v1215
        %v1309 = vadd.f32 %v972, %v1218
        %v1310 = vadd.f32 %v975, %v1221
        %v1311 = vadd.f32 %v978, %v1224
        %v1312 = vadd.f32 %v981, %v1227
        %v1313 = vadd.f32 %v984, %v1230
        %v1314 = vadd.f32 %v987, %v1233
        %v1315 = vadd.f32 %v990, %v1236
        %v1316 = vadd.f32 %v993, %v1239
        %v1317 = vadd.f32 %v996, %v1242
        %v1318 = vadd.f32 %v999, %v1245
        %v1319 = vadd.f32 %v1002, %v1248
        %v1320 = vadd.f32 %v1005, %v1251
        %v1321 = vadd.f32 %v1008, %v1254
        %v1322 = vadd.f32 %v1011, %v1257
        %v1323 = vadd.f32 %v1014, %v1260
        %v1324 = vadd.f32 %v1017, %v1263
        %v1325 = vadd.f32 %v1020, %v1266
        %v1326 = vadd.f32 %v1023, %v1269
        %v1327 = vadd.f32 %v1026, %v1272
        %v1328 = vadd.f32 %v1029, %v1275
        %v1329 = vadd.f32 %v1032, %v1278
        %v1330 = vadd.f32 %v1035, %v1281
        %v1331 = vadd.f32 %v1038, %v1284
        %v1332 = vadd.f32 %v1041, %v1287
        %v1333 = vadd.f32 %v1044, %v1290
        %v1334 = vadd.f32 %v1047, %v1293
        %v1335 = vadd.f32 %v1050, %v1296
        %v1336 = vadd.f32 %v1053, %v1299
        %v1337 = vadd.f32 %v1056, %v1302
        %v1338 = vadd.f32 %v1059, %v1305
        %v1339 = vld [vmem:[%s451] sm:$0xff]
        %v1340 = vld [vmem:[%s451 + $0x8] sm:$0xff]
        %v1341 = vld [vmem:[%s451 + $0x18] sm:$0xff]
        %v1342 = vld [vmem:[%s451 + $0x20] sm:$0xff]
        %v1343 = vld [vmem:[%s451 + $0x30] sm:$0xff]
        %v1344 = vld [vmem:[%s451 + $0x38] sm:$0xff]
        %v1345 = vld [vmem:[%s451 + $0x48] sm:$0xff]
        %v1346 = vld [vmem:[%s451 + $0x50] sm:$0xff]
        %v1347 = vld [vmem:[%s451 + $0x60] sm:$0xff]
        %v1348 = vld [vmem:[%s451 + $0x68] sm:$0xff]
        %v1349 = vld [vmem:[%s451 + $0x78] sm:$0xff]
        %v1350 = vld [vmem:[%s451 + $0x80] sm:$0xff]
        %v1351 = vld [vmem:[%s451 + $0x90] sm:$0xff]
        %v1352 = vld [vmem:[%s451 + $0x98] sm:$0xff]
        %v1353 = vld [vmem:[%s451 + $0xa8] sm:$0xff]
        %v1354 = vld [vmem:[%s451 + $0xb0] sm:$0xff]
        %v1355 = vld [vmem:[%s451 + $0xc0] sm:$0xff]
        %v1356 = vld [vmem:[%s451 + $0xc8] sm:$0xff]
        %v1357 = vld [vmem:[%s451 + $0xd8] sm:$0xff]
        %v1358 = vld [vmem:[%s451 + $0xe0] sm:$0xff]
        %v1359 = vld [vmem:[%s451 + $0xf0] sm:$0xff]
        %v1360 = vld [vmem:[%s451 + $0xf8] sm:$0xff]
        %v1361 = vld [vmem:[%s451 + $0x108] sm:$0xff]
        %v1362 = vld [vmem:[%s451 + $0x110] sm:$0xff]
        %v1363 = vld [vmem:[%s451 + $0x120] sm:$0xff]
        %v1364 = vld [vmem:[%s451 + $0x128] sm:$0xff]
        %v1365 = vld [vmem:[%s451 + $0x138] sm:$0xff]
        %v1366 = vld [vmem:[%s451 + $0x140] sm:$0xff]
        %v1367 = vld [vmem:[%s451 + $0x150] sm:$0xff]
        %v1368 = vld [vmem:[%s451 + $0x158] sm:$0xff]
        %v1369 = vld [vmem:[%s451 + $0x168] sm:$0xff]
        %v1370 = vld [vmem:[%s451 + $0x170] sm:$0xff]
        %s1371 = scalar_lea.vmem %s1, 12
        %v1372 = vld [vmem:[%s1371] sm:$0x7]
        %v1374 = vsel %vm452, %v1339, 0
        %v1377 = vsel %vm452, %v1340, 0
        %v1380 = vsel %vm452, %v1341, 0
        %v1383 = vsel %vm452, %v1342, 0
        %v1386 = vsel %vm452, %v1343, 0
        %v1389 = vsel %vm452, %v1344, 0
        %v1392 = vsel %vm452, %v1345, 0
        %v1395 = vsel %vm452, %v1346, 0
        %v1398 = vsel %vm452, %v1347, 0
        %v1401 = vsel %vm452, %v1348, 0
        %v1404 = vsel %vm452, %v1349, 0
        %v1407 = vsel %vm452, %v1350, 0
        %v1410 = vsel %vm452, %v1351, 0
        %v1413 = vsel %vm452, %v1352, 0
        %v1416 = vsel %vm452, %v1353, 0
        %v1419 = vsel %vm452, %v1354, 0
        %v1422 = vsel %vm452, %v1355, 0
        %v1425 = vsel %vm452, %v1356, 0
        %v1428 = vsel %vm452, %v1357, 0
        %v1431 = vsel %vm452, %v1358, 0
        %v1434 = vsel %vm452, %v1359, 0
        %v1437 = vsel %vm452, %v1360, 0
        %v1440 = vsel %vm452, %v1361, 0
        %v1443 = vsel %vm452, %v1362, 0
        %v1446 = vsel %vm452, %v1363, 0
        %v1449 = vsel %vm452, %v1364, 0
        %v1452 = vsel %vm452, %v1365, 0
        %v1455 = vsel %vm452, %v1366, 0
        %v1458 = vsel %vm452, %v1367, 0
        %v1461 = vsel %vm452, %v1368, 0
        %v1464 = vsel %vm452, %v1369, 0
        %v1467 = vsel %vm452, %v1370, 0
        %v1470 = vsel %vm732, %v1372, 0
        %1472 = vmatpush.msra.mxu0 0.0
        %1473 = vmatpush.msra.mxu0 0.0
        %1474 = vmatpush.msra.mxu0 0.0
        %1475 = vmatpush.msra.mxu0 0.0
        %1476 = vmatpush.msra.mxu0 0.0
        %1477 = vmatpush.msra.mxu0 0.0
        %1478 = vmatpush.msra.mxu0 0.0
        %1479 = vmatpush.msra.mxu0 0.0
        %1480 = vmatpush.msra.mxu0 0.0
        %1481 = vmatpush.msra.mxu0 0.0
        %1482 = vmatpush.msra.mxu0 0.0
        %1483 = vmatpush.msra.mxu0 0.0
        %1484 = vmatpush.msra.mxu0 0.0
        %1485 = vmatpush.msra.mxu0 0.0
        %1486 = vmatpush.msra.mxu0 0.0
        %1487 = vmatpush.msra.mxu0 %v1470
        %1488 = vmatmul.f32.gmra.mxu0 %v1374
        %v1489 = vpop.f32.mrf.mxu0
        %v1490 = vadd.f32 0.0, %v1489
        %1491 = vmatmul.f32.gmra.mxu0 %v1377
        %v1492 = vpop.f32.mrf.mxu0
        %v1493 = vadd.f32 0.0, %v1492
        %1494 = vmatmul.f32.gmra.mxu0 %v1380
        %v1495 = vpop.f32.mrf.mxu0
        %v1496 = vadd.f32 0.0, %v1495
        %1497 = vmatmul.f32.gmra.mxu0 %v1383
        %v1498 = vpop.f32.mrf.mxu0
        %v1499 = vadd.f32 0.0, %v1498
        %1500 = vmatmul.f32.gmra.mxu0 %v1386
        %v1501 = vpop.f32.mrf.mxu0
        %v1502 = vadd.f32 0.0, %v1501
        %1503 = vmatmul.f32.gmra.mxu0 %v1389
        %v1504 = vpop.f32.mrf.mxu0
        %v1505 = vadd.f32 0.0, %v1504
        %1506 = vmatmul.f32.gmra.mxu0 %v1392
        %v1507 = vpop.f32.mrf.mxu0
        %v1508 = vadd.f32 0.0, %v1507
        %1509 = vmatmul.f32.gmra.mxu0 %v1395
        %v1510 = vpop.f32.mrf.mxu0
        %v1511 = vadd.f32 0.0, %v1510
        %1512 = vmatmul.f32.gmra.mxu0 %v1398
        %v1513 = vpop.f32.mrf.mxu0
        %v1514 = vadd.f32 0.0, %v1513
        %1515 = vmatmul.f32.gmra.mxu0 %v1401
        %v1516 = vpop.f32.mrf.mxu0
        %v1517 = vadd.f32 0.0, %v1516
        %1518 = vmatmul.f32.gmra.mxu0 %v1404
        %v1519 = vpop.f32.mrf.mxu0
        %v1520 = vadd.f32 0.0, %v1519
        %1521 = vmatmul.f32.gmra.mxu0 %v1407
        %v1522 = vpop.f32.mrf.mxu0
        %v1523 = vadd.f32 0.0, %v1522
        %1524 = vmatmul.f32.gmra.mxu0 %v1410
        %v1525 = vpop.f32.mrf.mxu0
        %v1526 = vadd.f32 0.0, %v1525
        %1527 = vmatmul.f32.gmra.mxu0 %v1413
        %v1528 = vpop.f32.mrf.mxu0
        %v1529 = vadd.f32 0.0, %v1528
        %1530 = vmatmul.f32.gmra.mxu0 %v1416
        %v1531 = vpop.f32.mrf.mxu0
        %v1532 = vadd.f32 0.0, %v1531
        %1533 = vmatmul.f32.gmra.mxu0 %v1419
        %v1534 = vpop.f32.mrf.mxu0
        %v1535 = vadd.f32 0.0, %v1534
        %1536 = vmatmul.f32.gmra.mxu0 %v1422
        %v1537 = vpop.f32.mrf.mxu0
        %v1538 = vadd.f32 0.0, %v1537
        %1539 = vmatmul.f32.gmra.mxu0 %v1425
        %v1540 = vpop.f32.mrf.mxu0
        %v1541 = vadd.f32 0.0, %v1540
        %1542 = vmatmul.f32.gmra.mxu0 %v1428
        %v1543 = vpop.f32.mrf.mxu0
        %v1544 = vadd.f32 0.0, %v1543
        %1545 = vmatmul.f32.gmra.mxu0 %v1431
        %v1546 = vpop.f32.mrf.mxu0
        %v1547 = vadd.f32 0.0, %v1546
        %1548 = vmatmul.f32.gmra.mxu0 %v1434
        %v1549 = vpop.f32.mrf.mxu0
        %v1550 = vadd.f32 0.0, %v1549
        %1551 = vmatmul.f32.gmra.mxu0 %v1437
        %v1552 = vpop.f32.mrf.mxu0
        %v1553 = vadd.f32 0.0, %v1552
        %1554 = vmatmul.f32.gmra.mxu0 %v1440
        %v1555 = vpop.f32.mrf.mxu0
        %v1556 = vadd.f32 0.0, %v1555
        %1557 = vmatmul.f32.gmra.mxu0 %v1443
        %v1558 = vpop.f32.mrf.mxu0
        %v1559 = vadd.f32 0.0, %v1558
        %1560 = vmatmul.f32.gmra.mxu0 %v1446
        %v1561 = vpop.f32.mrf.mxu0
        %v1562 = vadd.f32 0.0, %v1561
        %1563 = vmatmul.f32.gmra.mxu0 %v1449
        %v1564 = vpop.f32.mrf.mxu0
        %v1565 = vadd.f32 0.0, %v1564
        %1566 = vmatmul.f32.gmra.mxu0 %v1452
        %v1567 = vpop.f32.mrf.mxu0
        %v1568 = vadd.f32 0.0, %v1567
        %1569 = vmatmul.f32.gmra.mxu0 %v1455
        %v1570 = vpop.f32.mrf.mxu0
        %v1571 = vadd.f32 0.0, %v1570
        %1572 = vmatmul.f32.gmra.mxu0 %v1458
        %v1573 = vpop.f32.mrf.mxu0
        %v1574 = vadd.f32 0.0, %v1573
        %1575 = vmatmul.f32.gmra.mxu0 %v1461
        %v1576 = vpop.f32.mrf.mxu0
        %v1577 = vadd.f32 0.0, %v1576
        %1578 = vmatmul.f32.gmra.mxu0 %v1464
        %v1579 = vpop.f32.mrf.mxu0
        %v1580 = vadd.f32 0.0, %v1579
        %1581 = vmatmul.f32.gmra.mxu0 %v1467
        %v1582 = vpop.f32.mrf.mxu0
        %v1583 = vadd.f32 0.0, %v1582
        %1584 = vdwg.mxu0
        %v1585 = vadd.f32 %v1307, %v1490
        %v1586 = vadd.f32 %v1308, %v1493
        %v1587 = vadd.f32 %v1309, %v1496
        %v1588 = vadd.f32 %v1310, %v1499
        %v1589 = vadd.f32 %v1311, %v1502
        %v1590 = vadd.f32 %v1312, %v1505
        %v1591 = vadd.f32 %v1313, %v1508
        %v1592 = vadd.f32 %v1314, %v1511
        %v1593 = vadd.f32 %v1315, %v1514
        %v1594 = vadd.f32 %v1316, %v1517
        %v1595 = vadd.f32 %v1317, %v1520
        %v1596 = vadd.f32 %v1318, %v1523
        %v1597 = vadd.f32 %v1319, %v1526
        %v1598 = vadd.f32 %v1320, %v1529
        %v1599 = vadd.f32 %v1321, %v1532
        %v1600 = vadd.f32 %v1322, %v1535
        %v1601 = vadd.f32 %v1323, %v1538
        %v1602 = vadd.f32 %v1324, %v1541
        %v1603 = vadd.f32 %v1325, %v1544
        %v1604 = vadd.f32 %v1326, %v1547
        %v1605 = vadd.f32 %v1327, %v1550
        %v1606 = vadd.f32 %v1328, %v1553
        %v1607 = vadd.f32 %v1329, %v1556
        %v1608 = vadd.f32 %v1330, %v1559
        %v1609 = vadd.f32 %v1331, %v1562
        %v1610 = vadd.f32 %v1332, %v1565
        %v1611 = vadd.f32 %v1333, %v1568
        %v1612 = vadd.f32 %v1334, %v1571
        %v1613 = vadd.f32 %v1335, %v1574
        %v1614 = vadd.f32 %v1336, %v1577
        %v1615 = vadd.f32 %v1337, %v1580
        %v1616 = vadd.f32 %v1338, %v1583
        %v1617 = vld [vmem:[%s451 + $0x1] sm:$0xff]
        %v1618 = vld [vmem:[%s451 + $0x9] sm:$0xff]
        %v1619 = vld [vmem:[%s451 + $0x19] sm:$0xff]
        %v1620 = vld [vmem:[%s451 + $0x21] sm:$0xff]
        %v1621 = vld [vmem:[%s451 + $0x31] sm:$0xff]
        %v1622 = vld [vmem:[%s451 + $0x39] sm:$0xff]
        %v1623 = vld [vmem:[%s451 + $0x49] sm:$0xff]
        %v1624 = vld [vmem:[%s451 + $0x51] sm:$0xff]
        %v1625 = vld [vmem:[%s451 + $0x61] sm:$0xff]
        %v1626 = vld [vmem:[%s451 + $0x69] sm:$0xff]
        %v1627 = vld [vmem:[%s451 + $0x79] sm:$0xff]
        %v1628 = vld [vmem:[%s451 + $0x81] sm:$0xff]
        %v1629 = vld [vmem:[%s451 + $0x91] sm:$0xff]
        %v1630 = vld [vmem:[%s451 + $0x99] sm:$0xff]
        %v1631 = vld [vmem:[%s451 + $0xa9] sm:$0xff]
        %v1632 = vld [vmem:[%s451 + $0xb1] sm:$0xff]
        %v1633 = vld [vmem:[%s451 + $0xc1] sm:$0xff]
        %v1634 = vld [vmem:[%s451 + $0xc9] sm:$0xff]
        %v1635 = vld [vmem:[%s451 + $0xd9] sm:$0xff]
        %v1636 = vld [vmem:[%s451 + $0xe1] sm:$0xff]
        %v1637 = vld [vmem:[%s451 + $0xf1] sm:$0xff]
        %v1638 = vld [vmem:[%s451 + $0xf9] sm:$0xff]
        %v1639 = vld [vmem:[%s451 + $0x109] sm:$0xff]
        %v1640 = vld [vmem:[%s451 + $0x111] sm:$0xff]
        %v1641 = vld [vmem:[%s451 + $0x121] sm:$0xff]
        %v1642 = vld [vmem:[%s451 + $0x129] sm:$0xff]
        %v1643 = vld [vmem:[%s451 + $0x139] sm:$0xff]
        %v1644 = vld [vmem:[%s451 + $0x141] sm:$0xff]
        %v1645 = vld [vmem:[%s451 + $0x151] sm:$0xff]
        %v1646 = vld [vmem:[%s451 + $0x159] sm:$0xff]
        %v1647 = vld [vmem:[%s451 + $0x169] sm:$0xff]
        %v1648 = vld [vmem:[%s451 + $0x171] sm:$0xff]
        %s1649 = scalar_lea.vmem %s1, 16
        %v1650 = vld [vmem:[%s1649] sm:$0x7]
        %v1652 = vsel %vm452, %v1617, 0
        %v1655 = vsel %vm452, %v1618, 0
        %v1658 = vsel %vm452, %v1619, 0
        %v1661 = vsel %vm452, %v1620, 0
        %v1664 = vsel %vm452, %v1621, 0
        %v1667 = vsel %vm452, %v1622, 0
        %v1670 = vsel %vm452, %v1623, 0
        %v1673 = vsel %vm452, %v1624, 0
        %v1676 = vsel %vm452, %v1625, 0
        %v1679 = vsel %vm452, %v1626, 0
        %v1682 = vsel %vm452, %v1627, 0
        %v1685 = vsel %vm452, %v1628, 0
        %v1688 = vsel %vm452, %v1629, 0
        %v1691 = vsel %vm452, %v1630, 0
        %v1694 = vsel %vm452, %v1631, 0
        %v1697 = vsel %vm452, %v1632, 0
        %v1700 = vsel %vm452, %v1633, 0
        %v1703 = vsel %vm452, %v1634, 0
        %v1706 = vsel %vm452, %v1635, 0
        %v1709 = vsel %vm452, %v1636, 0
        %v1712 = vsel %vm452, %v1637, 0
        %v1715 = vsel %vm452, %v1638, 0
        %v1718 = vsel %vm452, %v1639, 0
        %v1721 = vsel %vm452, %v1640, 0
        %v1724 = vsel %vm452, %v1641, 0
        %v1727 = vsel %vm452, %v1642, 0
        %v1730 = vsel %vm452, %v1643, 0
        %v1733 = vsel %vm452, %v1644, 0
        %v1736 = vsel %vm452, %v1645, 0
        %v1739 = vsel %vm452, %v1646, 0
        %v1742 = vsel %vm452, %v1647, 0
        %v1745 = vsel %vm452, %v1648, 0
        %v1748 = vsel %vm732, %v1650, 0
        %1750 = vmatpush.msra.mxu0 0.0
        %1751 = vmatpush.msra.mxu0 0.0
        %1752 = vmatpush.msra.mxu0 0.0
        %1753 = vmatpush.msra.mxu0 0.0
        %1754 = vmatpush.msra.mxu0 0.0
        %1755 = vmatpush.msra.mxu0 0.0
        %1756 = vmatpush.msra.mxu0 0.0
        %1757 = vmatpush.msra.mxu0 0.0
        %1758 = vmatpush.msra.mxu0 0.0
        %1759 = vmatpush.msra.mxu0 0.0
        %1760 = vmatpush.msra.mxu0 0.0
        %1761 = vmatpush.msra.mxu0 0.0
        %1762 = vmatpush.msra.mxu0 0.0
        %1763 = vmatpush.msra.mxu0 0.0
        %1764 = vmatpush.msra.mxu0 0.0
        %1765 = vmatpush.msra.mxu0 %v1748
        %1766 = vmatmul.f32.gmra.mxu0 %v1652
        %v1767 = vpop.f32.mrf.mxu0
        %v1768 = vadd.f32 0.0, %v1767
        %1769 = vmatmul.f32.gmra.mxu0 %v1655
        %v1770 = vpop.f32.mrf.mxu0
        %v1771 = vadd.f32 0.0, %v1770
        %1772 = vmatmul.f32.gmra.mxu0 %v1658
        %v1773 = vpop.f32.mrf.mxu0
        %v1774 = vadd.f32 0.0, %v1773
        %1775 = vmatmul.f32.gmra.mxu0 %v1661
        %v1776 = vpop.f32.mrf.mxu0
        %v1777 = vadd.f32 0.0, %v1776
        %1778 = vmatmul.f32.gmra.mxu0 %v1664
        %v1779 = vpop.f32.mrf.mxu0
        %v1780 = vadd.f32 0.0, %v1779
        %1781 = vmatmul.f32.gmra.mxu0 %v1667
        %v1782 = vpop.f32.mrf.mxu0
        %v1783 = vadd.f32 0.0, %v1782
        %1784 = vmatmul.f32.gmra.mxu0 %v1670
        %v1785 = vpop.f32.mrf.mxu0
        %v1786 = vadd.f32 0.0, %v1785
        %1787 = vmatmul.f32.gmra.mxu0 %v1673
        %v1788 = vpop.f32.mrf.mxu0
        %v1789 = vadd.f32 0.0, %v1788
        %1790 = vmatmul.f32.gmra.mxu0 %v1676
        %v1791 = vpop.f32.mrf.mxu0
        %v1792 = vadd.f32 0.0, %v1791
        %1793 = vmatmul.f32.gmra.mxu0 %v1679
        %v1794 = vpop.f32.mrf.mxu0
        %v1795 = vadd.f32 0.0, %v1794
        %1796 = vmatmul.f32.gmra.mxu0 %v1682
        %v1797 = vpop.f32.mrf.mxu0
        %v1798 = vadd.f32 0.0, %v1797
        %1799 = vmatmul.f32.gmra.mxu0 %v1685
        %v1800 = vpop.f32.mrf.mxu0
        %v1801 = vadd.f32 0.0, %v1800
        %1802 = vmatmul.f32.gmra.mxu0 %v1688
        %v1803 = vpop.f32.mrf.mxu0
        %v1804 = vadd.f32 0.0, %v1803
        %1805 = vmatmul.f32.gmra.mxu0 %v1691
        %v1806 = vpop.f32.mrf.mxu0
        %v1807 = vadd.f32 0.0, %v1806
        %1808 = vmatmul.f32.gmra.mxu0 %v1694
        %v1809 = vpop.f32.mrf.mxu0
        %v1810 = vadd.f32 0.0, %v1809
        %1811 = vmatmul.f32.gmra.mxu0 %v1697
        %v1812 = vpop.f32.mrf.mxu0
        %v1813 = vadd.f32 0.0, %v1812
        %1814 = vmatmul.f32.gmra.mxu0 %v1700
        %v1815 = vpop.f32.mrf.mxu0
        %v1816 = vadd.f32 0.0, %v1815
        %1817 = vmatmul.f32.gmra.mxu0 %v1703
        %v1818 = vpop.f32.mrf.mxu0
        %v1819 = vadd.f32 0.0, %v1818
        %1820 = vmatmul.f32.gmra.mxu0 %v1706
        %v1821 = vpop.f32.mrf.mxu0
        %v1822 = vadd.f32 0.0, %v1821
        %1823 = vmatmul.f32.gmra.mxu0 %v1709
        %v1824 = vpop.f32.mrf.mxu0
        %v1825 = vadd.f32 0.0, %v1824
        %1826 = vmatmul.f32.gmra.mxu0 %v1712
        %v1827 = vpop.f32.mrf.mxu0
        %v1828 = vadd.f32 0.0, %v1827
        %1829 = vmatmul.f32.gmra.mxu0 %v1715
        %v1830 = vpop.f32.mrf.mxu0
        %v1831 = vadd.f32 0.0, %v1830
        %1832 = vmatmul.f32.gmra.mxu0 %v1718
        %v1833 = vpop.f32.mrf.mxu0
        %v1834 = vadd.f32 0.0, %v1833
        %1835 = vmatmul.f32.gmra.mxu0 %v1721
        %v1836 = vpop.f32.mrf.mxu0
        %v1837 = vadd.f32 0.0, %v1836
        %1838 = vmatmul.f32.gmra.mxu0 %v1724
        %v1839 = vpop.f32.mrf.mxu0
        %v1840 = vadd.f32 0.0, %v1839
        %1841 = vmatmul.f32.gmra.mxu0 %v1727
        %v1842 = vpop.f32.mrf.mxu0
        %v1843 = vadd.f32 0.0, %v1842
        %1844 = vmatmul.f32.gmra.mxu0 %v1730
        %v1845 = vpop.f32.mrf.mxu0
        %v1846 = vadd.f32 0.0, %v1845
        %1847 = vmatmul.f32.gmra.mxu0 %v1733
        %v1848 = vpop.f32.mrf.mxu0
        %v1849 = vadd.f32 0.0, %v1848
        %1850 = vmatmul.f32.gmra.mxu0 %v1736
        %v1851 = vpop.f32.mrf.mxu0
        %v1852 = vadd.f32 0.0, %v1851
        %1853 = vmatmul.f32.gmra.mxu0 %v1739
        %v1854 = vpop.f32.mrf.mxu0
        %v1855 = vadd.f32 0.0, %v1854
        %1856 = vmatmul.f32.gmra.mxu0 %v1742
        %v1857 = vpop.f32.mrf.mxu0
        %v1858 = vadd.f32 0.0, %v1857
        %1859 = vmatmul.f32.gmra.mxu0 %v1745
        %v1860 = vpop.f32.mrf.mxu0
        %v1861 = vadd.f32 0.0, %v1860
        %1862 = vdwg.mxu0
        %v1863 = vadd.f32 %v1585, %v1768
        %v1864 = vadd.f32 %v1586, %v1771
        %v1865 = vadd.f32 %v1587, %v1774
        %v1866 = vadd.f32 %v1588, %v1777
        %v1867 = vadd.f32 %v1589, %v1780
        %v1868 = vadd.f32 %v1590, %v1783
        %v1869 = vadd.f32 %v1591, %v1786
        %v1870 = vadd.f32 %v1592, %v1789
        %v1871 = vadd.f32 %v1593, %v1792
        %v1872 = vadd.f32 %v1594, %v1795
        %v1873 = vadd.f32 %v1595, %v1798
        %v1874 = vadd.f32 %v1596, %v1801
        %v1875 = vadd.f32 %v1597, %v1804
        %v1876 = vadd.f32 %v1598, %v1807
        %v1877 = vadd.f32 %v1599, %v1810
        %v1878 = vadd.f32 %v1600, %v1813
        %v1879 = vadd.f32 %v1601, %v1816
        %v1880 = vadd.f32 %v1602, %v1819
        %v1881 = vadd.f32 %v1603, %v1822
        %v1882 = vadd.f32 %v1604, %v1825
        %v1883 = vadd.f32 %v1605, %v1828
        %v1884 = vadd.f32 %v1606, %v1831
        %v1885 = vadd.f32 %v1607, %v1834
        %v1886 = vadd.f32 %v1608, %v1837
        %v1887 = vadd.f32 %v1609, %v1840
        %v1888 = vadd.f32 %v1610, %v1843
        %v1889 = vadd.f32 %v1611, %v1846
        %v1890 = vadd.f32 %v1612, %v1849
        %v1891 = vadd.f32 %v1613, %v1852
        %v1892 = vadd.f32 %v1614, %v1855
        %v1893 = vadd.f32 %v1615, %v1858
        %v1894 = vadd.f32 %v1616, %v1861
        %v1895 = vld [vmem:[%s451 + $0x2] sm:$0xff]
        %v1896 = vld [vmem:[%s451 + $0xa] sm:$0xff]
        %v1897 = vld [vmem:[%s451 + $0x1a] sm:$0xff]
        %v1898 = vld [vmem:[%s451 + $0x22] sm:$0xff]
        %v1899 = vld [vmem:[%s451 + $0x32] sm:$0xff]
        %v1900 = vld [vmem:[%s451 + $0x3a] sm:$0xff]
        %v1901 = vld [vmem:[%s451 + $0x4a] sm:$0xff]
        %v1902 = vld [vmem:[%s451 + $0x52] sm:$0xff]
        %v1903 = vld [vmem:[%s451 + $0x62] sm:$0xff]
        %v1904 = vld [vmem:[%s451 + $0x6a] sm:$0xff]
        %v1905 = vld [vmem:[%s451 + $0x7a] sm:$0xff]
        %v1906 = vld [vmem:[%s451 + $0x82] sm:$0xff]
        %v1907 = vld [vmem:[%s451 + $0x92] sm:$0xff]
        %v1908 = vld [vmem:[%s451 + $0x9a] sm:$0xff]
        %v1909 = vld [vmem:[%s451 + $0xaa] sm:$0xff]
        %v1910 = vld [vmem:[%s451 + $0xb2] sm:$0xff]
        %v1911 = vld [vmem:[%s451 + $0xc2] sm:$0xff]
        %v1912 = vld [vmem:[%s451 + $0xca] sm:$0xff]
        %v1913 = vld [vmem:[%s451 + $0xda] sm:$0xff]
        %v1914 = vld [vmem:[%s451 + $0xe2] sm:$0xff]
        %v1915 = vld [vmem:[%s451 + $0xf2] sm:$0xff]
        %v1916 = vld [vmem:[%s451 + $0xfa] sm:$0xff]
        %v1917 = vld [vmem:[%s451 + $0x10a] sm:$0xff]
        %v1918 = vld [vmem:[%s451 + $0x112] sm:$0xff]
        %v1919 = vld [vmem:[%s451 + $0x122] sm:$0xff]
        %v1920 = vld [vmem:[%s451 + $0x12a] sm:$0xff]
        %v1921 = vld [vmem:[%s451 + $0x13a] sm:$0xff]
        %v1922 = vld [vmem:[%s451 + $0x142] sm:$0xff]
        %v1923 = vld [vmem:[%s451 + $0x152] sm:$0xff]
        %v1924 = vld [vmem:[%s451 + $0x15a] sm:$0xff]
        %v1925 = vld [vmem:[%s451 + $0x16a] sm:$0xff]
        %v1926 = vld [vmem:[%s451 + $0x172] sm:$0xff]
        %s1927 = scalar_lea.vmem %s1, 20
        %v1928 = vld [vmem:[%s1927] sm:$0x7]
        %v1930 = vsel %vm452, %v1895, 0
        %v1933 = vsel %vm452, %v1896, 0
        %v1936 = vsel %vm452, %v1897, 0
        %v1939 = vsel %vm452, %v1898, 0
        %v1942 = vsel %vm452, %v1899, 0
        %v1945 = vsel %vm452, %v1900, 0
        %v1948 = vsel %vm452, %v1901, 0
        %v1951 = vsel %vm452, %v1902, 0
        %v1954 = vsel %vm452, %v1903, 0
        %v1957 = vsel %vm452, %v1904, 0
        %v1960 = vsel %vm452, %v1905, 0
        %v1963 = vsel %vm452, %v1906, 0
        %v1966 = vsel %vm452, %v1907, 0
        %v1969 = vsel %vm452, %v1908, 0
        %v1972 = vsel %vm452, %v1909, 0
        %v1975 = vsel %vm452, %v1910, 0
        %v1978 = vsel %vm452, %v1911, 0
        %v1981 = vsel %vm452, %v1912, 0
        %v1984 = vsel %vm452, %v1913, 0
        %v1987 = vsel %vm452, %v1914, 0
        %v1990 = vsel %vm452, %v1915, 0
        %v1993 = vsel %vm452, %v1916, 0
        %v1996 = vsel %vm452, %v1917, 0
        %v1999 = vsel %vm452, %v1918, 0
        %v2002 = vsel %vm452, %v1919, 0
        %v2005 = vsel %vm452, %v1920, 0
        %v2008 = vsel %vm452, %v1921, 0
        %v2011 = vsel %vm452, %v1922, 0
        %v2014 = vsel %vm452, %v1923, 0
        %v2017 = vsel %vm452, %v1924, 0
        %v2020 = vsel %vm452, %v1925, 0
        %v2023 = vsel %vm452, %v1926, 0
        %v2026 = vsel %vm732, %v1928, 0
        %2028 = vmatpush.msra.mxu0 0.0
        %2029 = vmatpush.msra.mxu0 0.0
        %2030 = vmatpush.msra.mxu0 0.0
        %2031 = vmatpush.msra.mxu0 0.0
        %2032 = vmatpush.msra.mxu0 0.0
        %2033 = vmatpush.msra.mxu0 0.0
        %2034 = vmatpush.msra.mxu0 0.0
        %2035 = vmatpush.msra.mxu0 0.0
        %2036 = vmatpush.msra.mxu0 0.0
        %2037 = vmatpush.msra.mxu0 0.0
        %2038 = vmatpush.msra.mxu0 0.0
        %2039 = vmatpush.msra.mxu0 0.0
        %2040 = vmatpush.msra.mxu0 0.0
        %2041 = vmatpush.msra.mxu0 0.0
        %2042 = vmatpush.msra.mxu0 0.0
        %2043 = vmatpush.msra.mxu0 %v2026
        %2044 = vmatmul.f32.gmra.mxu0 %v1930
        %v2045 = vpop.f32.mrf.mxu0
        %v2046 = vadd.f32 0.0, %v2045
        %2047 = vmatmul.f32.gmra.mxu0 %v1933
        %v2048 = vpop.f32.mrf.mxu0
        %v2049 = vadd.f32 0.0, %v2048
        %2050 = vmatmul.f32.gmra.mxu0 %v1936
        %v2051 = vpop.f32.mrf.mxu0
        %v2052 = vadd.f32 0.0, %v2051
        %2053 = vmatmul.f32.gmra.mxu0 %v1939
        %v2054 = vpop.f32.mrf.mxu0
        %v2055 = vadd.f32 0.0, %v2054
        %2056 = vmatmul.f32.gmra.mxu0 %v1942
        %v2057 = vpop.f32.mrf.mxu0
        %v2058 = vadd.f32 0.0, %v2057
        %2059 = vmatmul.f32.gmra.mxu0 %v1945
        %v2060 = vpop.f32.mrf.mxu0
        %v2061 = vadd.f32 0.0, %v2060
        %2062 = vmatmul.f32.gmra.mxu0 %v1948
        %v2063 = vpop.f32.mrf.mxu0
        %v2064 = vadd.f32 0.0, %v2063
        %2065 = vmatmul.f32.gmra.mxu0 %v1951
        %v2066 = vpop.f32.mrf.mxu0
        %v2067 = vadd.f32 0.0, %v2066
        %2068 = vmatmul.f32.gmra.mxu0 %v1954
        %v2069 = vpop.f32.mrf.mxu0
        %v2070 = vadd.f32 0.0, %v2069
        %2071 = vmatmul.f32.gmra.mxu0 %v1957
        %v2072 = vpop.f32.mrf.mxu0
        %v2073 = vadd.f32 0.0, %v2072
        %2074 = vmatmul.f32.gmra.mxu0 %v1960
        %v2075 = vpop.f32.mrf.mxu0
        %v2076 = vadd.f32 0.0, %v2075
        %2077 = vmatmul.f32.gmra.mxu0 %v1963
        %v2078 = vpop.f32.mrf.mxu0
        %v2079 = vadd.f32 0.0, %v2078
        %2080 = vmatmul.f32.gmra.mxu0 %v1966
        %v2081 = vpop.f32.mrf.mxu0
        %v2082 = vadd.f32 0.0, %v2081
        %2083 = vmatmul.f32.gmra.mxu0 %v1969
        %v2084 = vpop.f32.mrf.mxu0
        %v2085 = vadd.f32 0.0, %v2084
        %2086 = vmatmul.f32.gmra.mxu0 %v1972
        %v2087 = vpop.f32.mrf.mxu0
        %v2088 = vadd.f32 0.0, %v2087
        %2089 = vmatmul.f32.gmra.mxu0 %v1975
        %v2090 = vpop.f32.mrf.mxu0
        %v2091 = vadd.f32 0.0, %v2090
        %2092 = vmatmul.f32.gmra.mxu0 %v1978
        %v2093 = vpop.f32.mrf.mxu0
        %v2094 = vadd.f32 0.0, %v2093
        %2095 = vmatmul.f32.gmra.mxu0 %v1981
        %v2096 = vpop.f32.mrf.mxu0
        %v2097 = vadd.f32 0.0, %v2096
        %2098 = vmatmul.f32.gmra.mxu0 %v1984
        %v2099 = vpop.f32.mrf.mxu0
        %v2100 = vadd.f32 0.0, %v2099
        %2101 = vmatmul.f32.gmra.mxu0 %v1987
        %v2102 = vpop.f32.mrf.mxu0
        %v2103 = vadd.f32 0.0, %v2102
        %2104 = vmatmul.f32.gmra.mxu0 %v1990
        %v2105 = vpop.f32.mrf.mxu0
        %v2106 = vadd.f32 0.0, %v2105
        %2107 = vmatmul.f32.gmra.mxu0 %v1993
        %v2108 = vpop.f32.mrf.mxu0
        %v2109 = vadd.f32 0.0, %v2108
        %2110 = vmatmul.f32.gmra.mxu0 %v1996
        %v2111 = vpop.f32.mrf.mxu0
        %v2112 = vadd.f32 0.0, %v2111
        %2113 = vmatmul.f32.gmra.mxu0 %v1999
        %v2114 = vpop.f32.mrf.mxu0
        %v2115 = vadd.f32 0.0, %v2114
        %2116 = vmatmul.f32.gmra.mxu0 %v2002
        %v2117 = vpop.f32.mrf.mxu0
        %v2118 = vadd.f32 0.0, %v2117
        %2119 = vmatmul.f32.gmra.mxu0 %v2005
        %v2120 = vpop.f32.mrf.mxu0
        %v2121 = vadd.f32 0.0, %v2120
        %2122 = vmatmul.f32.gmra.mxu0 %v2008
        %v2123 = vpop.f32.mrf.mxu0
        %v2124 = vadd.f32 0.0, %v2123
        %2125 = vmatmul.f32.gmra.mxu0 %v2011
        %v2126 = vpop.f32.mrf.mxu0
        %v2127 = vadd.f32 0.0, %v2126
        %2128 = vmatmul.f32.gmra.mxu0 %v2014
        %v2129 = vpop.f32.mrf.mxu0
        %v2130 = vadd.f32 0.0, %v2129
        %2131 = vmatmul.f32.gmra.mxu0 %v2017
        %v2132 = vpop.f32.mrf.mxu0
        %v2133 = vadd.f32 0.0, %v2132
        %2134 = vmatmul.f32.gmra.mxu0 %v2020
        %v2135 = vpop.f32.mrf.mxu0
        %v2136 = vadd.f32 0.0, %v2135
        %2137 = vmatmul.f32.gmra.mxu0 %v2023
        %v2138 = vpop.f32.mrf.mxu0
        %v2139 = vadd.f32 0.0, %v2138
        %2140 = vdwg.mxu0
        %v2141 = vadd.f32 %v1863, %v2046
        %v2142 = vadd.f32 %v1864, %v2049
        %v2143 = vadd.f32 %v1865, %v2052
        %v2144 = vadd.f32 %v1866, %v2055
        %v2145 = vadd.f32 %v1867, %v2058
        %v2146 = vadd.f32 %v1868, %v2061
        %v2147 = vadd.f32 %v1869, %v2064
        %v2148 = vadd.f32 %v1870, %v2067
        %v2149 = vadd.f32 %v1871, %v2070
        %v2150 = vadd.f32 %v1872, %v2073
        %v2151 = vadd.f32 %v1873, %v2076
        %v2152 = vadd.f32 %v1874, %v2079
        %v2153 = vadd.f32 %v1875, %v2082
        %v2154 = vadd.f32 %v1876, %v2085
        %v2155 = vadd.f32 %v1877, %v2088
        %v2156 = vadd.f32 %v1878, %v2091
        %v2157 = vadd.f32 %v1879, %v2094
        %v2158 = vadd.f32 %v1880, %v2097
        %v2159 = vadd.f32 %v1881, %v2100
        %v2160 = vadd.f32 %v1882, %v2103
        %v2161 = vadd.f32 %v1883, %v2106
        %v2162 = vadd.f32 %v1884, %v2109
        %v2163 = vadd.f32 %v1885, %v2112
        %v2164 = vadd.f32 %v1886, %v2115
        %v2165 = vadd.f32 %v1887, %v2118
        %v2166 = vadd.f32 %v1888, %v2121
        %v2167 = vadd.f32 %v1889, %v2124
        %v2168 = vadd.f32 %v1890, %v2127
        %v2169 = vadd.f32 %v1891, %v2130
        %v2170 = vadd.f32 %v1892, %v2133
        %v2171 = vadd.f32 %v1893, %v2136
        %v2172 = vadd.f32 %v1894, %v2139
        %v2173 = vld [vmem:[%s485] sm:$0xff]
        %v2174 = vld [vmem:[%s485 + $0x8] sm:$0xff]
        %v2175 = vld [vmem:[%s485 + $0x18] sm:$0xff]
        %v2176 = vld [vmem:[%s485 + $0x20] sm:$0xff]
        %v2177 = vld [vmem:[%s485 + $0x30] sm:$0xff]
        %v2178 = vld [vmem:[%s485 + $0x38] sm:$0xff]
        %v2179 = vld [vmem:[%s485 + $0x48] sm:$0xff]
        %v2180 = vld [vmem:[%s485 + $0x50] sm:$0xff]
        %v2181 = vld [vmem:[%s485 + $0x60] sm:$0xff]
        %v2182 = vld [vmem:[%s485 + $0x68] sm:$0xff]
        %v2183 = vld [vmem:[%s485 + $0x78] sm:$0xff]
        %v2184 = vld [vmem:[%s485 + $0x80] sm:$0xff]
        %v2185 = vld [vmem:[%s485 + $0x90] sm:$0xff]
        %v2186 = vld [vmem:[%s485 + $0x98] sm:$0xff]
        %v2187 = vld [vmem:[%s485 + $0xa8] sm:$0xff]
        %v2188 = vld [vmem:[%s485 + $0xb0] sm:$0xff]
        %v2189 = vld [vmem:[%s485 + $0xc0] sm:$0xff]
        %v2190 = vld [vmem:[%s485 + $0xc8] sm:$0xff]
        %v2191 = vld [vmem:[%s485 + $0xd8] sm:$0xff]
        %v2192 = vld [vmem:[%s485 + $0xe0] sm:$0xff]
        %v2193 = vld [vmem:[%s485 + $0xf0] sm:$0xff]
        %v2194 = vld [vmem:[%s485 + $0xf8] sm:$0xff]
        %v2195 = vld [vmem:[%s485 + $0x108] sm:$0xff]
        %v2196 = vld [vmem:[%s485 + $0x110] sm:$0xff]
        %v2197 = vld [vmem:[%s485 + $0x120] sm:$0xff]
        %v2198 = vld [vmem:[%s485 + $0x128] sm:$0xff]
        %v2199 = vld [vmem:[%s485 + $0x138] sm:$0xff]
        %v2200 = vld [vmem:[%s485 + $0x140] sm:$0xff]
        %v2201 = vld [vmem:[%s485 + $0x150] sm:$0xff]
        %v2202 = vld [vmem:[%s485 + $0x158] sm:$0xff]
        %v2203 = vld [vmem:[%s485 + $0x168] sm:$0xff]
        %v2204 = vld [vmem:[%s485 + $0x170] sm:$0xff]
        %s2205 = scalar_lea.vmem %s1, 24
        %v2206 = vld [vmem:[%s2205] sm:$0x7]
        %v2208 = vsel %vm452, %v2173, 0
        %v2211 = vsel %vm452, %v2174, 0
        %v2214 = vsel %vm452, %v2175, 0
        %v2217 = vsel %vm452, %v2176, 0
        %v2220 = vsel %vm452, %v2177, 0
        %v2223 = vsel %vm452, %v2178, 0
        %v2226 = vsel %vm452, %v2179, 0
        %v2229 = vsel %vm452, %v2180, 0
        %v2232 = vsel %vm452, %v2181, 0
        %v2235 = vsel %vm452, %v2182, 0
        %v2238 = vsel %vm452, %v2183, 0
        %v2241 = vsel %vm452, %v2184, 0
        %v2244 = vsel %vm452, %v2185, 0
        %v2247 = vsel %vm452, %v2186, 0
        %v2250 = vsel %vm452, %v2187, 0
        %v2253 = vsel %vm452, %v2188, 0
        %v2256 = vsel %vm452, %v2189, 0
        %v2259 = vsel %vm452, %v2190, 0
        %v2262 = vsel %vm452, %v2191, 0
        %v2265 = vsel %vm452, %v2192, 0
        %v2268 = vsel %vm452, %v2193, 0
        %v2271 = vsel %vm452, %v2194, 0
        %v2274 = vsel %vm452, %v2195, 0
        %v2277 = vsel %vm452, %v2196, 0
        %v2280 = vsel %vm452, %v2197, 0
        %v2283 = vsel %vm452, %v2198, 0
        %v2286 = vsel %vm452, %v2199, 0
        %v2289 = vsel %vm452, %v2200, 0
        %v2292 = vsel %vm452, %v2201, 0
        %v2295 = vsel %vm452, %v2202, 0
        %v2298 = vsel %vm452, %v2203, 0
        %v2301 = vsel %vm452, %v2204, 0
        %v2304 = vsel %vm732, %v2206, 0
        %2306 = vmatpush.msra.mxu0 0.0
        %2307 = vmatpush.msra.mxu0 0.0
        %2308 = vmatpush.msra.mxu0 0.0
        %2309 = vmatpush.msra.mxu0 0.0
        %2310 = vmatpush.msra.mxu0 0.0
        %2311 = vmatpush.msra.mxu0 0.0
        %2312 = vmatpush.msra.mxu0 0.0
        %2313 = vmatpush.msra.mxu0 0.0
        %2314 = vmatpush.msra.mxu0 0.0
        %2315 = vmatpush.msra.mxu0 0.0
        %2316 = vmatpush.msra.mxu0 0.0
        %2317 = vmatpush.msra.mxu0 0.0
        %2318 = vmatpush.msra.mxu0 0.0
        %2319 = vmatpush.msra.mxu0 0.0
        %2320 = vmatpush.msra.mxu0 0.0
        %2321 = vmatpush.msra.mxu0 %v2304
        %2322 = vmatmul.f32.gmra.mxu0 %v2208
        %v2323 = vpop.f32.mrf.mxu0
        %v2324 = vadd.f32 0.0, %v2323
        %2325 = vmatmul.f32.gmra.mxu0 %v2211
        %v2326 = vpop.f32.mrf.mxu0
        %v2327 = vadd.f32 0.0, %v2326
        %2328 = vmatmul.f32.gmra.mxu0 %v2214
        %v2329 = vpop.f32.mrf.mxu0
        %v2330 = vadd.f32 0.0, %v2329
        %2331 = vmatmul.f32.gmra.mxu0 %v2217
        %v2332 = vpop.f32.mrf.mxu0
        %v2333 = vadd.f32 0.0, %v2332
        %2334 = vmatmul.f32.gmra.mxu0 %v2220
        %v2335 = vpop.f32.mrf.mxu0
        %v2336 = vadd.f32 0.0, %v2335
        %2337 = vmatmul.f32.gmra.mxu0 %v2223
        %v2338 = vpop.f32.mrf.mxu0
        %v2339 = vadd.f32 0.0, %v2338
        %2340 = vmatmul.f32.gmra.mxu0 %v2226
        %v2341 = vpop.f32.mrf.mxu0
        %v2342 = vadd.f32 0.0, %v2341
        %2343 = vmatmul.f32.gmra.mxu0 %v2229
        %v2344 = vpop.f32.mrf.mxu0
        %v2345 = vadd.f32 0.0, %v2344
        %2346 = vmatmul.f32.gmra.mxu0 %v2232
        %v2347 = vpop.f32.mrf.mxu0
        %v2348 = vadd.f32 0.0, %v2347
        %2349 = vmatmul.f32.gmra.mxu0 %v2235
        %v2350 = vpop.f32.mrf.mxu0
        %v2351 = vadd.f32 0.0, %v2350
        %2352 = vmatmul.f32.gmra.mxu0 %v2238
        %v2353 = vpop.f32.mrf.mxu0
        %v2354 = vadd.f32 0.0, %v2353
        %2355 = vmatmul.f32.gmra.mxu0 %v2241
        %v2356 = vpop.f32.mrf.mxu0
        %v2357 = vadd.f32 0.0, %v2356
        %2358 = vmatmul.f32.gmra.mxu0 %v2244
        %v2359 = vpop.f32.mrf.mxu0
        %v2360 = vadd.f32 0.0, %v2359
        %2361 = vmatmul.f32.gmra.mxu0 %v2247
        %v2362 = vpop.f32.mrf.mxu0
        %v2363 = vadd.f32 0.0, %v2362
        %2364 = vmatmul.f32.gmra.mxu0 %v2250
        %v2365 = vpop.f32.mrf.mxu0
        %v2366 = vadd.f32 0.0, %v2365
        %2367 = vmatmul.f32.gmra.mxu0 %v2253
        %v2368 = vpop.f32.mrf.mxu0
        %v2369 = vadd.f32 0.0, %v2368
        %2370 = vmatmul.f32.gmra.mxu0 %v2256
        %v2371 = vpop.f32.mrf.mxu0
        %v2372 = vadd.f32 0.0, %v2371
        %2373 = vmatmul.f32.gmra.mxu0 %v2259
        %v2374 = vpop.f32.mrf.mxu0
        %v2375 = vadd.f32 0.0, %v2374
        %2376 = vmatmul.f32.gmra.mxu0 %v2262
        %v2377 = vpop.f32.mrf.mxu0
        %v2378 = vadd.f32 0.0, %v2377
        %2379 = vmatmul.f32.gmra.mxu0 %v2265
        %v2380 = vpop.f32.mrf.mxu0
        %v2381 = vadd.f32 0.0, %v2380
        %2382 = vmatmul.f32.gmra.mxu0 %v2268
        %v2383 = vpop.f32.mrf.mxu0
        %v2384 = vadd.f32 0.0, %v2383
        %2385 = vmatmul.f32.gmra.mxu0 %v2271
        %v2386 = vpop.f32.mrf.mxu0
        %v2387 = vadd.f32 0.0, %v2386
        %2388 = vmatmul.f32.gmra.mxu0 %v2274
        %v2389 = vpop.f32.mrf.mxu0
        %v2390 = vadd.f32 0.0, %v2389
        %2391 = vmatmul.f32.gmra.mxu0 %v2277
        %v2392 = vpop.f32.mrf.mxu0
        %v2393 = vadd.f32 0.0, %v2392
        %2394 = vmatmul.f32.gmra.mxu0 %v2280
        %v2395 = vpop.f32.mrf.mxu0
        %v2396 = vadd.f32 0.0, %v2395
        %2397 = vmatmul.f32.gmra.mxu0 %v2283
        %v2398 = vpop.f32.mrf.mxu0
        %v2399 = vadd.f32 0.0, %v2398
        %2400 = vmatmul.f32.gmra.mxu0 %v2286
        %v2401 = vpop.f32.mrf.mxu0
        %v2402 = vadd.f32 0.0, %v2401
        %2403 = vmatmul.f32.gmra.mxu0 %v2289
        %v2404 = vpop.f32.mrf.mxu0
        %v2405 = vadd.f32 0.0, %v2404
        %2406 = vmatmul.f32.gmra.mxu0 %v2292
        %v2407 = vpop.f32.mrf.mxu0
        %v2408 = vadd.f32 0.0, %v2407
        %2409 = vmatmul.f32.gmra.mxu0 %v2295
        %v2410 = vpop.f32.mrf.mxu0
        %v2411 = vadd.f32 0.0, %v2410
        %2412 = vmatmul.f32.gmra.mxu0 %v2298
        %v2413 = vpop.f32.mrf.mxu0
        %v2414 = vadd.f32 0.0, %v2413
        %2415 = vmatmul.f32.gmra.mxu0 %v2301
        %v2416 = vpop.f32.mrf.mxu0
        %v2417 = vadd.f32 0.0, %v2416
        %2418 = vdwg.mxu0
        %v2419 = vadd.f32 %v2141, %v2324
        %v2420 = vadd.f32 %v2142, %v2327
        %v2421 = vadd.f32 %v2143, %v2330
        %v2422 = vadd.f32 %v2144, %v2333
        %v2423 = vadd.f32 %v2145, %v2336
        %v2424 = vadd.f32 %v2146, %v2339
        %v2425 = vadd.f32 %v2147, %v2342
        %v2426 = vadd.f32 %v2148, %v2345
        %v2427 = vadd.f32 %v2149, %v2348
        %v2428 = vadd.f32 %v2150, %v2351
        %v2429 = vadd.f32 %v2151, %v2354
        %v2430 = vadd.f32 %v2152, %v2357
        %v2431 = vadd.f32 %v2153, %v2360
        %v2432 = vadd.f32 %v2154, %v2363
        %v2433 = vadd.f32 %v2155, %v2366
        %v2434 = vadd.f32 %v2156, %v2369
        %v2435 = vadd.f32 %v2157, %v2372
        %v2436 = vadd.f32 %v2158, %v2375
        %v2437 = vadd.f32 %v2159, %v2378
        %v2438 = vadd.f32 %v2160, %v2381
        %v2439 = vadd.f32 %v2161, %v2384
        %v2440 = vadd.f32 %v2162, %v2387
        %v2441 = vadd.f32 %v2163, %v2390
        %v2442 = vadd.f32 %v2164, %v2393
        %v2443 = vadd.f32 %v2165, %v2396
        %v2444 = vadd.f32 %v2166, %v2399
        %v2445 = vadd.f32 %v2167, %v2402
        %v2446 = vadd.f32 %v2168, %v2405
        %v2447 = vadd.f32 %v2169, %v2408
        %v2448 = vadd.f32 %v2170, %v2411
        %v2449 = vadd.f32 %v2171, %v2414
        %v2450 = vadd.f32 %v2172, %v2417
        %v2451 = vld [vmem:[%s485 + $0x1] sm:$0xff]
        %v2452 = vld [vmem:[%s485 + $0x9] sm:$0xff]
        %v2453 = vld [vmem:[%s485 + $0x19] sm:$0xff]
        %v2454 = vld [vmem:[%s485 + $0x21] sm:$0xff]
        %v2455 = vld [vmem:[%s485 + $0x31] sm:$0xff]
        %v2456 = vld [vmem:[%s485 + $0x39] sm:$0xff]
        %v2457 = vld [vmem:[%s485 + $0x49] sm:$0xff]
        %v2458 = vld [vmem:[%s485 + $0x51] sm:$0xff]
        %v2459 = vld [vmem:[%s485 + $0x61] sm:$0xff]
        %v2460 = vld [vmem:[%s485 + $0x69] sm:$0xff]
        %v2461 = vld [vmem:[%s485 + $0x79] sm:$0xff]
        %v2462 = vld [vmem:[%s485 + $0x81] sm:$0xff]
        %v2463 = vld [vmem:[%s485 + $0x91] sm:$0xff]
        %v2464 = vld [vmem:[%s485 + $0x99] sm:$0xff]
        %v2465 = vld [vmem:[%s485 + $0xa9] sm:$0xff]
        %v2466 = vld [vmem:[%s485 + $0xb1] sm:$0xff]
        %v2467 = vld [vmem:[%s485 + $0xc1] sm:$0xff]
        %v2468 = vld [vmem:[%s485 + $0xc9] sm:$0xff]
        %v2469 = vld [vmem:[%s485 + $0xd9] sm:$0xff]
        %v2470 = vld [vmem:[%s485 + $0xe1] sm:$0xff]
        %v2471 = vld [vmem:[%s485 + $0xf1] sm:$0xff]
        %v2472 = vld [vmem:[%s485 + $0xf9] sm:$0xff]
        %v2473 = vld [vmem:[%s485 + $0x109] sm:$0xff]
        %v2474 = vld [vmem:[%s485 + $0x111] sm:$0xff]
        %v2475 = vld [vmem:[%s485 + $0x121] sm:$0xff]
        %v2476 = vld [vmem:[%s485 + $0x129] sm:$0xff]
        %v2477 = vld [vmem:[%s485 + $0x139] sm:$0xff]
        %v2478 = vld [vmem:[%s485 + $0x141] sm:$0xff]
        %v2479 = vld [vmem:[%s485 + $0x151] sm:$0xff]
        %v2480 = vld [vmem:[%s485 + $0x159] sm:$0xff]
        %v2481 = vld [vmem:[%s485 + $0x169] sm:$0xff]
        %v2482 = vld [vmem:[%s485 + $0x171] sm:$0xff]
        %s2483 = scalar_lea.vmem %s1, 28
        %v2484 = vld [vmem:[%s2483] sm:$0x7]
        %v2486 = vsel %vm452, %v2451, 0
        %v2489 = vsel %vm452, %v2452, 0
        %v2492 = vsel %vm452, %v2453, 0
        %v2495 = vsel %vm452, %v2454, 0
        %v2498 = vsel %vm452, %v2455, 0
        %v2501 = vsel %vm452, %v2456, 0
        %v2504 = vsel %vm452, %v2457, 0
        %v2507 = vsel %vm452, %v2458, 0
        %v2510 = vsel %vm452, %v2459, 0
        %v2513 = vsel %vm452, %v2460, 0
        %v2516 = vsel %vm452, %v2461, 0
        %v2519 = vsel %vm452, %v2462, 0
        %v2522 = vsel %vm452, %v2463, 0
        %v2525 = vsel %vm452, %v2464, 0
        %v2528 = vsel %vm452, %v2465, 0
        %v2531 = vsel %vm452, %v2466, 0
        %v2534 = vsel %vm452, %v2467, 0
        %v2537 = vsel %vm452, %v2468, 0
        %v2540 = vsel %vm452, %v2469, 0
        %v2543 = vsel %vm452, %v2470, 0
        %v2546 = vsel %vm452, %v2471, 0
        %v2549 = vsel %vm452, %v2472, 0
        %v2552 = vsel %vm452, %v2473, 0
        %v2555 = vsel %vm452, %v2474, 0
        %v2558 = vsel %vm452, %v2475, 0
        %v2561 = vsel %vm452, %v2476, 0
        %v2564 = vsel %vm452, %v2477, 0
        %v2567 = vsel %vm452, %v2478, 0
        %v2570 = vsel %vm452, %v2479, 0
        %v2573 = vsel %vm452, %v2480, 0
        %v2576 = vsel %vm452, %v2481, 0
        %v2579 = vsel %vm452, %v2482, 0
        %v2582 = vsel %vm732, %v2484, 0
        %2584 = vmatpush.msra.mxu0 0.0
        %2585 = vmatpush.msra.mxu0 0.0
        %2586 = vmatpush.msra.mxu0 0.0
        %2587 = vmatpush.msra.mxu0 0.0
        %2588 = vmatpush.msra.mxu0 0.0
        %2589 = vmatpush.msra.mxu0 0.0
        %2590 = vmatpush.msra.mxu0 0.0
        %2591 = vmatpush.msra.mxu0 0.0
        %2592 = vmatpush.msra.mxu0 0.0
        %2593 = vmatpush.msra.mxu0 0.0
        %2594 = vmatpush.msra.mxu0 0.0
        %2595 = vmatpush.msra.mxu0 0.0
        %2596 = vmatpush.msra.mxu0 0.0
        %2597 = vmatpush.msra.mxu0 0.0
        %2598 = vmatpush.msra.mxu0 0.0
        %2599 = vmatpush.msra.mxu0 %v2582
        %2600 = vmatmul.f32.gmra.mxu0 %v2486
        %v2601 = vpop.f32.mrf.mxu0
        %v2602 = vadd.f32 0.0, %v2601
        %2603 = vmatmul.f32.gmra.mxu0 %v2489
        %v2604 = vpop.f32.mrf.mxu0
        %v2605 = vadd.f32 0.0, %v2604
        %2606 = vmatmul.f32.gmra.mxu0 %v2492
        %v2607 = vpop.f32.mrf.mxu0
        %v2608 = vadd.f32 0.0, %v2607
        %2609 = vmatmul.f32.gmra.mxu0 %v2495
        %v2610 = vpop.f32.mrf.mxu0
        %v2611 = vadd.f32 0.0, %v2610
        %2612 = vmatmul.f32.gmra.mxu0 %v2498
        %v2613 = vpop.f32.mrf.mxu0
        %v2614 = vadd.f32 0.0, %v2613
        %2615 = vmatmul.f32.gmra.mxu0 %v2501
        %v2616 = vpop.f32.mrf.mxu0
        %v2617 = vadd.f32 0.0, %v2616
        %2618 = vmatmul.f32.gmra.mxu0 %v2504
        %v2619 = vpop.f32.mrf.mxu0
        %v2620 = vadd.f32 0.0, %v2619
        %2621 = vmatmul.f32.gmra.mxu0 %v2507
        %v2622 = vpop.f32.mrf.mxu0
        %v2623 = vadd.f32 0.0, %v2622
        %2624 = vmatmul.f32.gmra.mxu0 %v2510
        %v2625 = vpop.f32.mrf.mxu0
        %v2626 = vadd.f32 0.0, %v2625
        %2627 = vmatmul.f32.gmra.mxu0 %v2513
        %v2628 = vpop.f32.mrf.mxu0
        %v2629 = vadd.f32 0.0, %v2628
        %2630 = vmatmul.f32.gmra.mxu0 %v2516
        %v2631 = vpop.f32.mrf.mxu0
        %v2632 = vadd.f32 0.0, %v2631
        %2633 = vmatmul.f32.gmra.mxu0 %v2519
        %v2634 = vpop.f32.mrf.mxu0
        %v2635 = vadd.f32 0.0, %v2634
        %2636 = vmatmul.f32.gmra.mxu0 %v2522
        %v2637 = vpop.f32.mrf.mxu0
        %v2638 = vadd.f32 0.0, %v2637
        %2639 = vmatmul.f32.gmra.mxu0 %v2525
        %v2640 = vpop.f32.mrf.mxu0
        %v2641 = vadd.f32 0.0, %v2640
        %2642 = vmatmul.f32.gmra.mxu0 %v2528
        %v2643 = vpop.f32.mrf.mxu0
        %v2644 = vadd.f32 0.0, %v2643
        %2645 = vmatmul.f32.gmra.mxu0 %v2531
        %v2646 = vpop.f32.mrf.mxu0
        %v2647 = vadd.f32 0.0, %v2646
        %2648 = vmatmul.f32.gmra.mxu0 %v2534
        %v2649 = vpop.f32.mrf.mxu0
        %v2650 = vadd.f32 0.0, %v2649
        %2651 = vmatmul.f32.gmra.mxu0 %v2537
        %v2652 = vpop.f32.mrf.mxu0
        %v2653 = vadd.f32 0.0, %v2652
        %2654 = vmatmul.f32.gmra.mxu0 %v2540
        %v2655 = vpop.f32.mrf.mxu0
        %v2656 = vadd.f32 0.0, %v2655
        %2657 = vmatmul.f32.gmra.mxu0 %v2543
        %v2658 = vpop.f32.mrf.mxu0
        %v2659 = vadd.f32 0.0, %v2658
        %2660 = vmatmul.f32.gmra.mxu0 %v2546
        %v2661 = vpop.f32.mrf.mxu0
        %v2662 = vadd.f32 0.0, %v2661
        %2663 = vmatmul.f32.gmra.mxu0 %v2549
        %v2664 = vpop.f32.mrf.mxu0
        %v2665 = vadd.f32 0.0, %v2664
        %2666 = vmatmul.f32.gmra.mxu0 %v2552
        %v2667 = vpop.f32.mrf.mxu0
        %v2668 = vadd.f32 0.0, %v2667
        %2669 = vmatmul.f32.gmra.mxu0 %v2555
        %v2670 = vpop.f32.mrf.mxu0
        %v2671 = vadd.f32 0.0, %v2670
        %2672 = vmatmul.f32.gmra.mxu0 %v2558
        %v2673 = vpop.f32.mrf.mxu0
        %v2674 = vadd.f32 0.0, %v2673
        %2675 = vmatmul.f32.gmra.mxu0 %v2561
        %v2676 = vpop.f32.mrf.mxu0
        %v2677 = vadd.f32 0.0, %v2676
        %2678 = vmatmul.f32.gmra.mxu0 %v2564
        %v2679 = vpop.f32.mrf.mxu0
        %v2680 = vadd.f32 0.0, %v2679
        %2681 = vmatmul.f32.gmra.mxu0 %v2567
        %v2682 = vpop.f32.mrf.mxu0
        %v2683 = vadd.f32 0.0, %v2682
        %2684 = vmatmul.f32.gmra.mxu0 %v2570
        %v2685 = vpop.f32.mrf.mxu0
        %v2686 = vadd.f32 0.0, %v2685
        %2687 = vmatmul.f32.gmra.mxu0 %v2573
        %v2688 = vpop.f32.mrf.mxu0
        %v2689 = vadd.f32 0.0, %v2688
        %2690 = vmatmul.f32.gmra.mxu0 %v2576
        %v2691 = vpop.f32.mrf.mxu0
        %v2692 = vadd.f32 0.0, %v2691
        %2693 = vmatmul.f32.gmra.mxu0 %v2579
        %v2694 = vpop.f32.mrf.mxu0
        %v2695 = vadd.f32 0.0, %v2694
        %2696 = vdwg.mxu0
        %v2697 = vadd.f32 %v2419, %v2602
        %v2698 = vadd.f32 %v2420, %v2605
        %v2699 = vadd.f32 %v2421, %v2608
        %v2700 = vadd.f32 %v2422, %v2611
        %v2701 = vadd.f32 %v2423, %v2614
        %v2702 = vadd.f32 %v2424, %v2617
        %v2703 = vadd.f32 %v2425, %v2620
        %v2704 = vadd.f32 %v2426, %v2623
        %v2705 = vadd.f32 %v2427, %v2626
        %v2706 = vadd.f32 %v2428, %v2629
        %v2707 = vadd.f32 %v2429, %v2632
        %v2708 = vadd.f32 %v2430, %v2635
        %v2709 = vadd.f32 %v2431, %v2638
        %v2710 = vadd.f32 %v2432, %v2641
        %v2711 = vadd.f32 %v2433, %v2644
        %v2712 = vadd.f32 %v2434, %v2647
        %v2713 = vadd.f32 %v2435, %v2650
        %v2714 = vadd.f32 %v2436, %v2653
        %v2715 = vadd.f32 %v2437, %v2656
        %v2716 = vadd.f32 %v2438, %v2659
        %v2717 = vadd.f32 %v2439, %v2662
        %v2718 = vadd.f32 %v2440, %v2665
        %v2719 = vadd.f32 %v2441, %v2668
        %v2720 = vadd.f32 %v2442, %v2671
        %v2721 = vadd.f32 %v2443, %v2674
        %v2722 = vadd.f32 %v2444, %v2677
        %v2723 = vadd.f32 %v2445, %v2680
        %v2724 = vadd.f32 %v2446, %v2683
        %v2725 = vadd.f32 %v2447, %v2686
        %v2726 = vadd.f32 %v2448, %v2689
        %v2727 = vadd.f32 %v2449, %v2692
        %v2728 = vadd.f32 %v2450, %v2695
        %v2729 = vld [vmem:[%s485 + $0x2] sm:$0xff]
        %v2730 = vld [vmem:[%s485 + $0xa] sm:$0xff]
        %v2731 = vld [vmem:[%s485 + $0x1a] sm:$0xff]
        %v2732 = vld [vmem:[%s485 + $0x22] sm:$0xff]
        %v2733 = vld [vmem:[%s485 + $0x32] sm:$0xff]
        %v2734 = vld [vmem:[%s485 + $0x3a] sm:$0xff]
        %v2735 = vld [vmem:[%s485 + $0x4a] sm:$0xff]
        %v2736 = vld [vmem:[%s485 + $0x52] sm:$0xff]
        %v2737 = vld [vmem:[%s485 + $0x62] sm:$0xff]
        %v2738 = vld [vmem:[%s485 + $0x6a] sm:$0xff]
        %v2739 = vld [vmem:[%s485 + $0x7a] sm:$0xff]
        %v2740 = vld [vmem:[%s485 + $0x82] sm:$0xff]
        %v2741 = vld [vmem:[%s485 + $0x92] sm:$0xff]
        %v2742 = vld [vmem:[%s485 + $0x9a] sm:$0xff]
        %v2743 = vld [vmem:[%s485 + $0xaa] sm:$0xff]
        %v2744 = vld [vmem:[%s485 + $0xb2] sm:$0xff]
        %v2745 = vld [vmem:[%s485 + $0xc2] sm:$0xff]
        %v2746 = vld [vmem:[%s485 + $0xca] sm:$0xff]
        %v2747 = vld [vmem:[%s485 + $0xda] sm:$0xff]
        %v2748 = vld [vmem:[%s485 + $0xe2] sm:$0xff]
        %v2749 = vld [vmem:[%s485 + $0xf2] sm:$0xff]
        %v2750 = vld [vmem:[%s485 + $0xfa] sm:$0xff]
        %v2751 = vld [vmem:[%s485 + $0x10a] sm:$0xff]
        %v2752 = vld [vmem:[%s485 + $0x112] sm:$0xff]
        %v2753 = vld [vmem:[%s485 + $0x122] sm:$0xff]
        %v2754 = vld [vmem:[%s485 + $0x12a] sm:$0xff]
        %v2755 = vld [vmem:[%s485 + $0x13a] sm:$0xff]
        %v2756 = vld [vmem:[%s485 + $0x142] sm:$0xff]
        %v2757 = vld [vmem:[%s485 + $0x152] sm:$0xff]
        %v2758 = vld [vmem:[%s485 + $0x15a] sm:$0xff]
        %v2759 = vld [vmem:[%s485 + $0x16a] sm:$0xff]
        %v2760 = vld [vmem:[%s485 + $0x172] sm:$0xff]
        %s2761 = scalar_lea.vmem %s1, 32
        %v2762 = vld [vmem:[%s2761] sm:$0x7]
        %v2764 = vsel %vm452, %v2729, 0
        %v2767 = vsel %vm452, %v2730, 0
        %v2770 = vsel %vm452, %v2731, 0
        %v2773 = vsel %vm452, %v2732, 0
        %v2776 = vsel %vm452, %v2733, 0
        %v2779 = vsel %vm452, %v2734, 0
        %v2782 = vsel %vm452, %v2735, 0
        %v2785 = vsel %vm452, %v2736, 0
        %v2788 = vsel %vm452, %v2737, 0
        %v2791 = vsel %vm452, %v2738, 0
        %v2794 = vsel %vm452, %v2739, 0
        %v2797 = vsel %vm452, %v2740, 0
        %v2800 = vsel %vm452, %v2741, 0
        %v2803 = vsel %vm452, %v2742, 0
        %v2806 = vsel %vm452, %v2743, 0
        %v2809 = vsel %vm452, %v2744, 0
        %v2812 = vsel %vm452, %v2745, 0
        %v2815 = vsel %vm452, %v2746, 0
        %v2818 = vsel %vm452, %v2747, 0
        %v2821 = vsel %vm452, %v2748, 0
        %v2824 = vsel %vm452, %v2749, 0
        %v2827 = vsel %vm452, %v2750, 0
        %v2830 = vsel %vm452, %v2751, 0
        %v2833 = vsel %vm452, %v2752, 0
        %v2836 = vsel %vm452, %v2753, 0
        %v2839 = vsel %vm452, %v2754, 0
        %v2842 = vsel %vm452, %v2755, 0
        %v2845 = vsel %vm452, %v2756, 0
        %v2848 = vsel %vm452, %v2757, 0
        %v2851 = vsel %vm452, %v2758, 0
        %v2854 = vsel %vm452, %v2759, 0
        %v2857 = vsel %vm452, %v2760, 0
        %v2860 = vsel %vm732, %v2762, 0
        %2862 = vmatpush.msra.mxu0 0.0
        %2863 = vmatpush.msra.mxu0 0.0
        %2864 = vmatpush.msra.mxu0 0.0
        %2865 = vmatpush.msra.mxu0 0.0
        %2866 = vmatpush.msra.mxu0 0.0
        %2867 = vmatpush.msra.mxu0 0.0
        %2868 = vmatpush.msra.mxu0 0.0
        %2869 = vmatpush.msra.mxu0 0.0
        %2870 = vmatpush.msra.mxu0 0.0
        %2871 = vmatpush.msra.mxu0 0.0
        %2872 = vmatpush.msra.mxu0 0.0
        %2873 = vmatpush.msra.mxu0 0.0
        %2874 = vmatpush.msra.mxu0 0.0
        %2875 = vmatpush.msra.mxu0 0.0
        %2876 = vmatpush.msra.mxu0 0.0
        %2877 = vmatpush.msra.mxu0 %v2860
        %2878 = vmatmul.f32.gmra.mxu0 %v2764
        %v2879 = vpop.f32.mrf.mxu0
        %v2880 = vadd.f32 0.0, %v2879
        %2881 = vmatmul.f32.gmra.mxu0 %v2767
        %v2882 = vpop.f32.mrf.mxu0
        %v2883 = vadd.f32 0.0, %v2882
        %2884 = vmatmul.f32.gmra.mxu0 %v2770
        %v2885 = vpop.f32.mrf.mxu0
        %v2886 = vadd.f32 0.0, %v2885
        %2887 = vmatmul.f32.gmra.mxu0 %v2773
        %v2888 = vpop.f32.mrf.mxu0
        %v2889 = vadd.f32 0.0, %v2888
        %2890 = vmatmul.f32.gmra.mxu0 %v2776
        %v2891 = vpop.f32.mrf.mxu0
        %v2892 = vadd.f32 0.0, %v2891
        %2893 = vmatmul.f32.gmra.mxu0 %v2779
        %v2894 = vpop.f32.mrf.mxu0
        %v2895 = vadd.f32 0.0, %v2894
        %2896 = vmatmul.f32.gmra.mxu0 %v2782
        %v2897 = vpop.f32.mrf.mxu0
        %v2898 = vadd.f32 0.0, %v2897
        %2899 = vmatmul.f32.gmra.mxu0 %v2785
        %v2900 = vpop.f32.mrf.mxu0
        %v2901 = vadd.f32 0.0, %v2900
        %2902 = vmatmul.f32.gmra.mxu0 %v2788
        %v2903 = vpop.f32.mrf.mxu0
        %v2904 = vadd.f32 0.0, %v2903
        %2905 = vmatmul.f32.gmra.mxu0 %v2791
        %v2906 = vpop.f32.mrf.mxu0
        %v2907 = vadd.f32 0.0, %v2906
        %2908 = vmatmul.f32.gmra.mxu0 %v2794
        %v2909 = vpop.f32.mrf.mxu0
        %v2910 = vadd.f32 0.0, %v2909
        %2911 = vmatmul.f32.gmra.mxu0 %v2797
        %v2912 = vpop.f32.mrf.mxu0
        %v2913 = vadd.f32 0.0, %v2912
        %2914 = vmatmul.f32.gmra.mxu0 %v2800
        %v2915 = vpop.f32.mrf.mxu0
        %v2916 = vadd.f32 0.0, %v2915
        %2917 = vmatmul.f32.gmra.mxu0 %v2803
        %v2918 = vpop.f32.mrf.mxu0
        %v2919 = vadd.f32 0.0, %v2918
        %2920 = vmatmul.f32.gmra.mxu0 %v2806
        %v2921 = vpop.f32.mrf.mxu0
        %v2922 = vadd.f32 0.0, %v2921
        %2923 = vmatmul.f32.gmra.mxu0 %v2809
        %v2924 = vpop.f32.mrf.mxu0
        %v2925 = vadd.f32 0.0, %v2924
        %2926 = vmatmul.f32.gmra.mxu0 %v2812
        %v2927 = vpop.f32.mrf.mxu0
        %v2928 = vadd.f32 0.0, %v2927
        %2929 = vmatmul.f32.gmra.mxu0 %v2815
        %v2930 = vpop.f32.mrf.mxu0
        %v2931 = vadd.f32 0.0, %v2930
        %2932 = vmatmul.f32.gmra.mxu0 %v2818
        %v2933 = vpop.f32.mrf.mxu0
        %v2934 = vadd.f32 0.0, %v2933
        %2935 = vmatmul.f32.gmra.mxu0 %v2821
        %v2936 = vpop.f32.mrf.mxu0
        %v2937 = vadd.f32 0.0, %v2936
        %2938 = vmatmul.f32.gmra.mxu0 %v2824
        %v2939 = vpop.f32.mrf.mxu0
        %v2940 = vadd.f32 0.0, %v2939
        %2941 = vmatmul.f32.gmra.mxu0 %v2827
        %v2942 = vpop.f32.mrf.mxu0
        %v2943 = vadd.f32 0.0, %v2942
        %2944 = vmatmul.f32.gmra.mxu0 %v2830
        %v2945 = vpop.f32.mrf.mxu0
        %v2946 = vadd.f32 0.0, %v2945
        %2947 = vmatmul.f32.gmra.mxu0 %v2833
        %v2948 = vpop.f32.mrf.mxu0
        %v2949 = vadd.f32 0.0, %v2948
        %2950 = vmatmul.f32.gmra.mxu0 %v2836
        %v2951 = vpop.f32.mrf.mxu0
        %v2952 = vadd.f32 0.0, %v2951
        %2953 = vmatmul.f32.gmra.mxu0 %v2839
        %v2954 = vpop.f32.mrf.mxu0
        %v2955 = vadd.f32 0.0, %v2954
        %2956 = vmatmul.f32.gmra.mxu0 %v2842
        %v2957 = vpop.f32.mrf.mxu0
        %v2958 = vadd.f32 0.0, %v2957
        %2959 = vmatmul.f32.gmra.mxu0 %v2845
        %v2960 = vpop.f32.mrf.mxu0
        %v2961 = vadd.f32 0.0, %v2960
        %2962 = vmatmul.f32.gmra.mxu0 %v2848
        %v2963 = vpop.f32.mrf.mxu0
        %v2964 = vadd.f32 0.0, %v2963
        %2965 = vmatmul.f32.gmra.mxu0 %v2851
        %v2966 = vpop.f32.mrf.mxu0
        %v2967 = vadd.f32 0.0, %v2966
        %2968 = vmatmul.f32.gmra.mxu0 %v2854
        %v2969 = vpop.f32.mrf.mxu0
        %v2970 = vadd.f32 0.0, %v2969
        %2971 = vmatmul.f32.gmra.mxu0 %v2857
        %v2972 = vpop.f32.mrf.mxu0
        %v2973 = vadd.f32 0.0, %v2972
        %2974 = vdwg.mxu0
        %v2975 = vadd.f32 %v2697, %v2880
        %v2976 = vadd.f32 %v2698, %v2883
        %v2977 = vadd.f32 %v2699, %v2886
        %v2978 = vadd.f32 %v2700, %v2889
        %v2979 = vadd.f32 %v2701, %v2892
        %v2980 = vadd.f32 %v2702, %v2895
        %v2981 = vadd.f32 %v2703, %v2898
        %v2982 = vadd.f32 %v2704, %v2901
        %v2983 = vadd.f32 %v2705, %v2904
        %v2984 = vadd.f32 %v2706, %v2907
        %v2985 = vadd.f32 %v2707, %v2910
        %v2986 = vadd.f32 %v2708, %v2913
        %v2987 = vadd.f32 %v2709, %v2916
        %v2988 = vadd.f32 %v2710, %v2919
        %v2989 = vadd.f32 %v2711, %v2922
        %v2990 = vadd.f32 %v2712, %v2925
        %v2991 = vadd.f32 %v2713, %v2928
        %v2992 = vadd.f32 %v2714, %v2931
        %v2993 = vadd.f32 %v2715, %v2934
        %v2994 = vadd.f32 %v2716, %v2937
        %v2995 = vadd.f32 %v2717, %v2940
        %v2996 = vadd.f32 %v2718, %v2943
        %v2997 = vadd.f32 %v2719, %v2946
        %v2998 = vadd.f32 %v2720, %v2949
        %v2999 = vadd.f32 %v2721, %v2952
        %v3000 = vadd.f32 %v2722, %v2955
        %v3001 = vadd.f32 %v2723, %v2958
        %v3002 = vadd.f32 %v2724, %v2961
        %v3003 = vadd.f32 %v2725, %v2964
        %v3004 = vadd.f32 %v2726, %v2967
        %v3005 = vadd.f32 %v2727, %v2970
        %v3006 = vadd.f32 %v2728, %v2973
        %v3007 = vld [vmem:[%s2] sm:$0x1]
        %v3009 = vperm.slane %v3007, 0
        %v3011 = vadd.f32 %v2975, %v3009
        %v3012 = vadd.f32 %v2976, %v3009
        %v3013 = vadd.f32 %v2977, %v3009
        %v3014 = vadd.f32 %v2978, %v3009
        %v3015 = vadd.f32 %v2979, %v3009
        %v3016 = vadd.f32 %v2980, %v3009
        %v3017 = vadd.f32 %v2981, %v3009
        %v3018 = vadd.f32 %v2982, %v3009
        %v3019 = vadd.f32 %v2983, %v3009
        %v3020 = vadd.f32 %v2984, %v3009
        %v3021 = vadd.f32 %v2985, %v3009
        %v3022 = vadd.f32 %v2986, %v3009
        %v3023 = vadd.f32 %v2987, %v3009
        %v3024 = vadd.f32 %v2988, %v3009
        %v3025 = vadd.f32 %v2989, %v3009
        %v3026 = vadd.f32 %v2990, %v3009
        %v3027 = vadd.f32 %v2991, %v3009
        %v3028 = vadd.f32 %v2992, %v3009
        %v3029 = vadd.f32 %v2993, %v3009
        %v3030 = vadd.f32 %v2994, %v3009
        %v3031 = vadd.f32 %v2995, %v3009
        %v3032 = vadd.f32 %v2996, %v3009
        %v3033 = vadd.f32 %v2997, %v3009
        %v3034 = vadd.f32 %v2998, %v3009
        %v3035 = vadd.f32 %v2999, %v3009
        %v3036 = vadd.f32 %v3000, %v3009
        %v3037 = vadd.f32 %v3001, %v3009
        %v3038 = vadd.f32 %v3002, %v3009
        %v3039 = vadd.f32 %v3003, %v3009
        %v3040 = vadd.f32 %v3004, %v3009
        %v3041 = vadd.f32 %v3005, %v3009
        %v3042 = vadd.f32 %v3006, %v3009
        %v3043 = vmax.f32 %v3011, 0.0
        %v3044 = vmax.f32 %v3012, 0.0
        %v3045 = vmax.f32 %v3013, 0.0
        %v3046 = vmax.f32 %v3014, 0.0
        %v3047 = vmax.f32 %v3015, 0.0
        %v3048 = vmax.f32 %v3016, 0.0
        %v3049 = vmax.f32 %v3017, 0.0
        %v3050 = vmax.f32 %v3018, 0.0
        %v3051 = vmax.f32 %v3019, 0.0
        %v3052 = vmax.f32 %v3020, 0.0
        %v3053 = vmax.f32 %v3021, 0.0
        %v3054 = vmax.f32 %v3022, 0.0
        %v3055 = vmax.f32 %v3023, 0.0
        %v3056 = vmax.f32 %v3024, 0.0
        %v3057 = vmax.f32 %v3025, 0.0
        %v3058 = vmax.f32 %v3026, 0.0
        %v3059 = vmax.f32 %v3027, 0.0
        %v3060 = vmax.f32 %v3028, 0.0
        %v3061 = vmax.f32 %v3029, 0.0
        %v3062 = vmax.f32 %v3030, 0.0
        %v3063 = vmax.f32 %v3031, 0.0
        %v3064 = vmax.f32 %v3032, 0.0
        %v3065 = vmax.f32 %v3033, 0.0
        %v3066 = vmax.f32 %v3034, 0.0
        %v3067 = vmax.f32 %v3035, 0.0
        %v3068 = vmax.f32 %v3036, 0.0
        %v3069 = vmax.f32 %v3037, 0.0
        %v3070 = vmax.f32 %v3038, 0.0
        %v3071 = vmax.f32 %v3039, 0.0
        %v3072 = vmax.f32 %v3040, 0.0
        %v3073 = vmax.f32 %v3041, 0.0
        %v3074 = vmax.f32 %v3042, 0.0
        %s3075 = scalar_lea.vmem [#allocation3], 24
        %vm3076 = vcmask 130048
        %3077 = vst.msk [vmem:[%s3075 + $0x1] sm:$0xff] %vm3076, %v3043
        %3078 = vst.msk [vmem:[%s3075 + $0x9] sm:$0xff] %vm3076, %v3044
        %3079 = vst.msk [vmem:[%s3075 + $0x19] sm:$0xff] %vm3076, %v3045
        %3080 = vst.msk [vmem:[%s3075 + $0x21] sm:$0xff] %vm3076, %v3046
        %3081 = vst.msk [vmem:[%s3075 + $0x31] sm:$0xff] %vm3076, %v3047
        %3082 = vst.msk [vmem:[%s3075 + $0x39] sm:$0xff] %vm3076, %v3048
        %3083 = vst.msk [vmem:[%s3075 + $0x49] sm:$0xff] %vm3076, %v3049
        %3084 = vst.msk [vmem:[%s3075 + $0x51] sm:$0xff] %vm3076, %v3050
        %3085 = vst.msk [vmem:[%s3075 + $0x61] sm:$0xff] %vm3076, %v3051
        %3086 = vst.msk [vmem:[%s3075 + $0x69] sm:$0xff] %vm3076, %v3052
        %3087 = vst.msk [vmem:[%s3075 + $0x79] sm:$0xff] %vm3076, %v3053
        %3088 = vst.msk [vmem:[%s3075 + $0x81] sm:$0xff] %vm3076, %v3054
        %3089 = vst.msk [vmem:[%s3075 + $0x91] sm:$0xff] %vm3076, %v3055
        %3090 = vst.msk [vmem:[%s3075 + $0x99] sm:$0xff] %vm3076, %v3056
        %3091 = vst.msk [vmem:[%s3075 + $0xa9] sm:$0xff] %vm3076, %v3057
        %3092 = vst.msk [vmem:[%s3075 + $0xb1] sm:$0xff] %vm3076, %v3058
        %3093 = vst.msk [vmem:[%s3075 + $0xc1] sm:$0xff] %vm3076, %v3059
        %3094 = vst.msk [vmem:[%s3075 + $0xc9] sm:$0xff] %vm3076, %v3060
        %3095 = vst.msk [vmem:[%s3075 + $0xd9] sm:$0xff] %vm3076, %v3061
        %3096 = vst.msk [vmem:[%s3075 + $0xe1] sm:$0xff] %vm3076, %v3062
        %3097 = vst.msk [vmem:[%s3075 + $0xf1] sm:$0xff] %vm3076, %v3063
        %3098 = vst.msk [vmem:[%s3075 + $0xf9] sm:$0xff] %vm3076, %v3064
        %3099 = vst.msk [vmem:[%s3075 + $0x109] sm:$0xff] %vm3076, %v3065
        %3100 = vst.msk [vmem:[%s3075 + $0x111] sm:$0xff] %vm3076, %v3066
        %3101 = vst.msk [vmem:[%s3075 + $0x121] sm:$0xff] %vm3076, %v3067
        %3102 = vst.msk [vmem:[%s3075 + $0x129] sm:$0xff] %vm3076, %v3068
        %3103 = vst.msk [vmem:[%s3075 + $0x139] sm:$0xff] %vm3076, %v3069
        %3104 = vst.msk [vmem:[%s3075 + $0x141] sm:$0xff] %vm3076, %v3070
        %3105 = vst.msk [vmem:[%s3075 + $0x151] sm:$0xff] %vm3076, %v3071
        %3106 = vst.msk [vmem:[%s3075 + $0x159] sm:$0xff] %vm3076, %v3072
        %3107 = vst.msk [vmem:[%s3075 + $0x169] sm:$0xff] %vm3076, %v3073
        %3108 = vst.msk [vmem:[%s3075 + $0x171] sm:$0xff] %vm3076, %v3074
        %s3109 = scalar_lea.vmem [#allocation3], 48
        %v3110 = vld [vmem:[%s3109 + $0x1] sm:$0xff]
        %v3111 = vld [vmem:[%s3109 + $0x9] sm:$0xff]
        %3112 = vst.msk [vmem:[#allocation3 + $0x1] sm:$0xff] %vm3076, %v3110
        %3113 = vst.msk [vmem:[#allocation3 + $0x9] sm:$0xff] %vm3076, %v3111
        %s3114 = scalar_lea.vmem [#allocation3], 360
        %v3115 = vld [vmem:[%s3114 + $0x1] sm:$0xff]
        %v3116 = vld [vmem:[%s3114 + $0x9] sm:$0xff]
        %s3117 = scalar_lea.vmem [#allocation3], 408
        %3118 = vst.msk [vmem:[%s3117 + $0x1] sm:$0xff] %vm3076, %v3115
        %3119 = vst.msk [vmem:[%s3117 + $0x9] sm:$0xff] %vm3076, %v3116
        %v3120 = vld [vmem:[#allocation3 + $0x2] sm:$0x1]
        %v3121 = vld [vmem:[#allocation3 + $0x1a] sm:$0x1]
        %v3122 = vld [vmem:[#allocation3 + $0x32] sm:$0x1]
        %v3123 = vld [vmem:[#allocation3 + $0x4a] sm:$0x1]
        %v3124 = vld [vmem:[#allocation3 + $0x62] sm:$0x1]
        %v3125 = vld [vmem:[#allocation3 + $0x7a] sm:$0x1]
        %v3126 = vld [vmem:[#allocation3 + $0x92] sm:$0x1]
        %v3127 = vld [vmem:[#allocation3 + $0xaa] sm:$0x1]
        %v3128 = vld [vmem:[#allocation3 + $0xc2] sm:$0x1]
        %v3129 = vld [vmem:[#allocation3 + $0xda] sm:$0x1]
        %v3130 = vld [vmem:[#allocation3 + $0xf2] sm:$0x1]
        %v3131 = vld [vmem:[#allocation3 + $0x10a] sm:$0x1]
        %v3132 = vld [vmem:[#allocation3 + $0x122] sm:$0x1]
        %v3133 = vld [vmem:[#allocation3 + $0x13a] sm:$0x1]
        %v3134 = vld [vmem:[#allocation3 + $0x152] sm:$0x1]
        %v3135 = vld [vmem:[#allocation3 + $0x16a] sm:$0x1]
        %v3136 = vld [vmem:[#allocation3 + $0x182] sm:$0x1]
        %v3137 = vld [vmem:[#allocation3 + $0x19a] sm:$0x1]
        %vm3138 = vcmask 122880
        %3139 = vst.msk [vmem:[#allocation3] sm:$0x1] %vm3138, %v3120
        %3140 = vst.msk [vmem:[#allocation3 + $0x18] sm:$0x1] %vm3138, %v3121
        %3141 = vst.msk [vmem:[#allocation3 + $0x30] sm:$0x1] %vm3138, %v3122
        %3142 = vst.msk [vmem:[#allocation3 + $0x48] sm:$0x1] %vm3138, %v3123
        %3143 = vst.msk [vmem:[#allocation3 + $0x60] sm:$0x1] %vm3138, %v3124
        %3144 = vst.msk [vmem:[#allocation3 + $0x78] sm:$0x1] %vm3138, %v3125
        %3145 = vst.msk [vmem:[#allocation3 + $0x90] sm:$0x1] %vm3138, %v3126
        %3146 = vst.msk [vmem:[#allocation3 + $0xa8] sm:$0x1] %vm3138, %v3127
        %3147 = vst.msk [vmem:[#allocation3 + $0xc0] sm:$0x1] %vm3138, %v3128
        %3148 = vst.msk [vmem:[#allocation3 + $0xd8] sm:$0x1] %vm3138, %v3129
        %3149 = vst.msk [vmem:[#allocation3 + $0xf0] sm:$0x1] %vm3138, %v3130
        %3150 = vst.msk [vmem:[#allocation3 + $0x108] sm:$0x1] %vm3138, %v3131
        %3151 = vst.msk [vmem:[#allocation3 + $0x120] sm:$0x1] %vm3138, %v3132
        %3152 = vst.msk [vmem:[#allocation3 + $0x138] sm:$0x1] %vm3138, %v3133
        %3153 = vst.msk [vmem:[#allocation3 + $0x150] sm:$0x1] %vm3138, %v3134
        %3154 = vst.msk [vmem:[#allocation3 + $0x168] sm:$0x1] %vm3138, %v3135
        %3155 = vst.msk [vmem:[#allocation3 + $0x180] sm:$0x1] %vm3138, %v3136
        %3156 = vst.msk [vmem:[#allocation3 + $0x198] sm:$0x1] %vm3138, %v3137
        %v3157 = vld [vmem:[#allocation3 + $0xf] sm:$0x1]
        %v3158 = vld [vmem:[#allocation3 + $0x27] sm:$0x1]
        %v3159 = vld [vmem:[#allocation3 + $0x3f] sm:$0x1]
        %v3160 = vld [vmem:[#allocation3 + $0x57] sm:$0x1]
        %v3161 = vld [vmem:[#allocation3 + $0x6f] sm:$0x1]
        %v3162 = vld [vmem:[#allocation3 + $0x87] sm:$0x1]
        %v3163 = vld [vmem:[#allocation3 + $0x9f] sm:$0x1]
        %v3164 = vld [vmem:[#allocation3 + $0xb7] sm:$0x1]
        %v3165 = vld [vmem:[#allocation3 + $0xcf] sm:$0x1]
        %v3166 = vld [vmem:[#allocation3 + $0xe7] sm:$0x1]
        %v3167 = vld [vmem:[#allocation3 + $0xff] sm:$0x1]
        %v3168 = vld [vmem:[#allocation3 + $0x117] sm:$0x1]
        %v3169 = vld [vmem:[#allocation3 + $0x12f] sm:$0x1]
        %v3170 = vld [vmem:[#allocation3 + $0x147] sm:$0x1]
        %v3171 = vld [vmem:[#allocation3 + $0x15f] sm:$0x1]
        %v3172 = vld [vmem:[#allocation3 + $0x177] sm:$0x1]
        %v3173 = vld [vmem:[#allocation3 + $0x18f] sm:$0x1]
        %v3174 = vld [vmem:[#allocation3 + $0x1a7] sm:$0x1]
        %3175 = vst.msk [vmem:[#allocation3 + $0x11] sm:$0x1] %vm3138, %v3157
        %3176 = vst.msk [vmem:[#allocation3 + $0x29] sm:$0x1] %vm3138, %v3158
        %3177 = vst.msk [vmem:[#allocation3 + $0x41] sm:$0x1] %vm3138, %v3159
        %3178 = vst.msk [vmem:[#allocation3 + $0x59] sm:$0x1] %vm3138, %v3160
        %3179 = vst.msk [vmem:[#allocation3 + $0x71] sm:$0x1] %vm3138, %v3161
        %3180 = vst.msk [vmem:[#allocation3 + $0x89] sm:$0x1] %vm3138, %v3162
        %3181 = vst.msk [vmem:[#allocation3 + $0xa1] sm:$0x1] %vm3138, %v3163
        %3182 = vst.msk [vmem:[#allocation3 + $0xb9] sm:$0x1] %vm3138, %v3164
        %3183 = vst.msk [vmem:[#allocation3 + $0xd1] sm:$0x1] %vm3138, %v3165
        %3184 = vst.msk [vmem:[#allocation3 + $0xe9] sm:$0x1] %vm3138, %v3166
        %3185 = vst.msk [vmem:[#allocation3 + $0x101] sm:$0x1] %vm3138, %v3167
        %3186 = vst.msk [vmem:[#allocation3 + $0x119] sm:$0x1] %vm3138, %v3168
        %3187 = vst.msk [vmem:[#allocation3 + $0x131] sm:$0x1] %vm3138, %v3169
        %3188 = vst.msk [vmem:[#allocation3 + $0x149] sm:$0x1] %vm3138, %v3170
        %3189 = vst.msk [vmem:[#allocation3 + $0x161] sm:$0x1] %vm3138, %v3171
        %3190 = vst.msk [vmem:[#allocation3 + $0x179] sm:$0x1] %vm3138, %v3172
        %3191 = vst.msk [vmem:[#allocation3 + $0x191] sm:$0x1] %vm3138, %v3173
        %3192 = vst.msk [vmem:[#allocation3 + $0x1a9] sm:$0x1] %vm3138, %v3174
        %v3193 = vld [vmem:[#allocation3] sm:$0xff]
        %v3194 = vld [vmem:[#allocation3 + $0x8] sm:$0xff]
        %v3195 = vld [vmem:[#allocation3 + $0x18] sm:$0xff]
        %v3196 = vld [vmem:[#allocation3 + $0x20] sm:$0xff]
        %v3197 = vld [vmem:[#allocation3 + $0x30] sm:$0xff]
        %v3198 = vld [vmem:[#allocation3 + $0x38] sm:$0xff]
        %v3199 = vld [vmem:[#allocation3 + $0x48] sm:$0xff]
        %v3200 = vld [vmem:[#allocation3 + $0x50] sm:$0xff]
        %v3201 = vld [vmem:[#allocation3 + $0x60] sm:$0xff]
        %v3202 = vld [vmem:[#allocation3 + $0x68] sm:$0xff]
        %v3203 = vld [vmem:[#allocation3 + $0x78] sm:$0xff]
        %v3204 = vld [vmem:[#allocation3 + $0x80] sm:$0xff]
        %v3205 = vld [vmem:[#allocation3 + $0x90] sm:$0xff]
        %v3206 = vld [vmem:[#allocation3 + $0x98] sm:$0xff]
        %v3207 = vld [vmem:[#allocation3 + $0xa8] sm:$0xff]
        %v3208 = vld [vmem:[#allocation3 + $0xb0] sm:$0xff]
        %v3209 = vld [vmem:[#allocation3 + $0xc0] sm:$0xff]
        %v3210 = vld [vmem:[#allocation3 + $0xc8] sm:$0xff]
        %v3211 = vld [vmem:[#allocation3 + $0xd8] sm:$0xff]
        %v3212 = vld [vmem:[#allocation3 + $0xe0] sm:$0xff]
        %v3213 = vld [vmem:[#allocation3 + $0xf0] sm:$0xff]
        %v3214 = vld [vmem:[#allocation3 + $0xf8] sm:$0xff]
        %v3215 = vld [vmem:[#allocation3 + $0x108] sm:$0xff]
        %v3216 = vld [vmem:[#allocation3 + $0x110] sm:$0xff]
        %v3217 = vld [vmem:[#allocation3 + $0x120] sm:$0xff]
        %v3218 = vld [vmem:[#allocation3 + $0x128] sm:$0xff]
        %v3219 = vld [vmem:[#allocation3 + $0x138] sm:$0xff]
        %v3220 = vld [vmem:[#allocation3 + $0x140] sm:$0xff]
        %v3221 = vld [vmem:[#allocation3 + $0x150] sm:$0xff]
        %v3222 = vld [vmem:[#allocation3 + $0x158] sm:$0xff]
        %v3223 = vld [vmem:[#allocation3 + $0x168] sm:$0xff]
        %v3224 = vld [vmem:[#allocation3 + $0x170] sm:$0xff]
        %v3225 = vld [vmem:[#allocation9] sm:$0xff]
        %v3226 = vld [vmem:[#allocation9 + $0x8] sm:$0xff]
        %v3227 = vld [vmem:[#allocation3 + $0x1] sm:$0xff]
        %v3228 = vld [vmem:[#allocation3 + $0x9] sm:$0xff]
        %v3229 = vld [vmem:[#allocation3 + $0x19] sm:$0xff]
        %v3230 = vld [vmem:[#allocation3 + $0x21] sm:$0xff]
        %v3231 = vld [vmem:[#allocation3 + $0x31] sm:$0xff]
        %v3232 = vld [vmem:[#allocation3 + $0x39] sm:$0xff]
        %v3233 = vld [vmem:[#allocation3 + $0x49] sm:$0xff]
        %v3234 = vld [vmem:[#allocation3 + $0x51] sm:$0xff]
        %v3235 = vld [vmem:[#allocation3 + $0x61] sm:$0xff]
        %v3236 = vld [vmem:[#allocation3 + $0x69] sm:$0xff]
        %v3237 = vld [vmem:[#allocation3 + $0x79] sm:$0xff]
        %v3238 = vld [vmem:[#allocation3 + $0x81] sm:$0xff]
        %v3239 = vld [vmem:[#allocation3 + $0x91] sm:$0xff]
        %v3240 = vld [vmem:[#allocation3 + $0x99] sm:$0xff]
        %v3241 = vld [vmem:[#allocation3 + $0xa9] sm:$0xff]
        %v3242 = vld [vmem:[#allocation3 + $0xb1] sm:$0xff]
        %v3243 = vld [vmem:[#allocation3 + $0xc1] sm:$0xff]
        %v3244 = vld [vmem:[#allocation3 + $0xc9] sm:$0xff]
        %v3245 = vld [vmem:[#allocation3 + $0xd9] sm:$0xff]
        %v3246 = vld [vmem:[#allocation3 + $0xe1] sm:$0xff]
        %v3247 = vld [vmem:[#allocation3 + $0xf1] sm:$0xff]
        %v3248 = vld [vmem:[#allocation3 + $0xf9] sm:$0xff]
        %v3249 = vld [vmem:[#allocation3 + $0x109] sm:$0xff]
        %v3250 = vld [vmem:[#allocation3 + $0x111] sm:$0xff]
        %v3251 = vld [vmem:[#allocation3 + $0x121] sm:$0xff]
        %v3252 = vld [vmem:[#allocation3 + $0x129] sm:$0xff]
        %v3253 = vld [vmem:[#allocation3 + $0x139] sm:$0xff]
        %v3254 = vld [vmem:[#allocation3 + $0x141] sm:$0xff]
        %v3255 = vld [vmem:[#allocation3 + $0x151] sm:$0xff]
        %v3256 = vld [vmem:[#allocation3 + $0x159] sm:$0xff]
        %v3257 = vld [vmem:[#allocation3 + $0x169] sm:$0xff]
        %v3258 = vld [vmem:[#allocation3 + $0x171] sm:$0xff]
        %s3259 = scalar_lea.vmem [#allocation9], 16
        %v3260 = vld [vmem:[%s3259] sm:$0xff]
        %v3261 = vld [vmem:[%s3259 + $0x8] sm:$0xff]
        %v3263 = vsel %vm3076, %v3227, 0
        %v3266 = vsel %vm3076, %v3228, 0
        %v3269 = vsel %vm3076, %v3229, 0
        %v3272 = vsel %vm3076, %v3230, 0
        %v3275 = vsel %vm3076, %v3231, 0
        %v3278 = vsel %vm3076, %v3232, 0
        %v3281 = vsel %vm3076, %v3233, 0
        %v3284 = vsel %vm3076, %v3234, 0
        %v3287 = vsel %vm3076, %v3235, 0
        %v3290 = vsel %vm3076, %v3236, 0
        %v3293 = vsel %vm3076, %v3237, 0
        %v3296 = vsel %vm3076, %v3238, 0
        %v3299 = vsel %vm3076, %v3239, 0
        %v3302 = vsel %vm3076, %v3240, 0
        %v3305 = vsel %vm3076, %v3241, 0
        %v3308 = vsel %vm3076, %v3242, 0
        %v3311 = vsel %vm3076, %v3243, 0
        %v3314 = vsel %vm3076, %v3244, 0
        %v3317 = vsel %vm3076, %v3245, 0
        %v3320 = vsel %vm3076, %v3246, 0
        %v3323 = vsel %vm3076, %v3247, 0
        %v3326 = vsel %vm3076, %v3248, 0
        %v3329 = vsel %vm3076, %v3249, 0
        %v3332 = vsel %vm3076, %v3250, 0
        %v3335 = vsel %vm3076, %v3251, 0
        %v3338 = vsel %vm3076, %v3252, 0
        %v3341 = vsel %vm3076, %v3253, 0
        %v3344 = vsel %vm3076, %v3254, 0
        %v3347 = vsel %vm3076, %v3255, 0
        %v3350 = vsel %vm3076, %v3256, 0
        %v3353 = vsel %vm3076, %v3257, 0
        %v3356 = vsel %vm3076, %v3258, 0
        %3358 = vmatpush.msra.mxu0 0.0
        %3359 = vmatpush.msra.mxu0 0.0
        %3360 = vmatpush.msra.mxu0 0.0
        %3361 = vmatpush.msra.mxu0 0.0
        %3362 = vmatpush.msra.mxu0 0.0
        %3363 = vmatpush.msra.mxu0 0.0
        %3364 = vmatpush.msra.mxu0 0.0
        %3365 = vmatpush.msra.mxu0 0.0
        %3366 = vmatpush.msra.mxu0 0.0
        %3367 = vmatpush.msra.mxu0 0.0
        %3368 = vmatpush.msra.mxu0 0.0
        %3369 = vmatpush.msra.mxu0 0.0
        %3370 = vmatpush.msra.mxu0 0.0
        %3371 = vmatpush.msra.mxu0 0.0
        %3372 = vmatpush.msra.mxu0 %v3261
        %3373 = vmatpush.msra.mxu0 %v3260
        %3374 = vmatmul.f32.gmra.mxu0 %v3263
        %v3375 = vpop.f32.mrf.mxu0
        %v3376 = vadd.f32 0.0, %v3375
        %3377 = vmatmul.f32.gmra.mxu0 %v3266
        %v3378 = vpop.f32.mrf.mxu0
        %v3379 = vadd.f32 0.0, %v3378
        %3380 = vmatmul.f32.gmra.mxu0 %v3269
        %v3381 = vpop.f32.mrf.mxu0
        %v3382 = vadd.f32 0.0, %v3381
        %3383 = vmatmul.f32.gmra.mxu0 %v3272
        %v3384 = vpop.f32.mrf.mxu0
        %v3385 = vadd.f32 0.0, %v3384
        %3386 = vmatmul.f32.gmra.mxu0 %v3275
        %v3387 = vpop.f32.mrf.mxu0
        %v3388 = vadd.f32 0.0, %v3387
        %3389 = vmatmul.f32.gmra.mxu0 %v3278
        %v3390 = vpop.f32.mrf.mxu0
        %v3391 = vadd.f32 0.0, %v3390
        %3392 = vmatmul.f32.gmra.mxu0 %v3281
        %v3393 = vpop.f32.mrf.mxu0
        %v3394 = vadd.f32 0.0, %v3393
        %3395 = vmatmul.f32.gmra.mxu0 %v3284
        %v3396 = vpop.f32.mrf.mxu0
        %v3397 = vadd.f32 0.0, %v3396
        %3398 = vmatmul.f32.gmra.mxu0 %v3287
        %v3399 = vpop.f32.mrf.mxu0
        %v3400 = vadd.f32 0.0, %v3399
        %3401 = vmatmul.f32.gmra.mxu0 %v3290
        %v3402 = vpop.f32.mrf.mxu0
        %v3403 = vadd.f32 0.0, %v3402
        %3404 = vmatmul.f32.gmra.mxu0 %v3293
        %v3405 = vpop.f32.mrf.mxu0
        %v3406 = vadd.f32 0.0, %v3405
        %3407 = vmatmul.f32.gmra.mxu0 %v3296
        %v3408 = vpop.f32.mrf.mxu0
        %v3409 = vadd.f32 0.0, %v3408
        %3410 = vmatmul.f32.gmra.mxu0 %v3299
        %v3411 = vpop.f32.mrf.mxu0
        %v3412 = vadd.f32 0.0, %v3411
        %3413 = vmatmul.f32.gmra.mxu0 %v3302
        %v3414 = vpop.f32.mrf.mxu0
        %v3415 = vadd.f32 0.0, %v3414
        %3416 = vmatmul.f32.gmra.mxu0 %v3305
        %v3417 = vpop.f32.mrf.mxu0
        %v3418 = vadd.f32 0.0, %v3417
        %3419 = vmatmul.f32.gmra.mxu0 %v3308
        %v3420 = vpop.f32.mrf.mxu0
        %v3421 = vadd.f32 0.0, %v3420
        %3422 = vmatmul.f32.gmra.mxu0 %v3311
        %v3423 = vpop.f32.mrf.mxu0
        %v3424 = vadd.f32 0.0, %v3423
        %3425 = vmatmul.f32.gmra.mxu0 %v3314
        %v3426 = vpop.f32.mrf.mxu0
        %v3427 = vadd.f32 0.0, %v3426
        %3428 = vmatmul.f32.gmra.mxu0 %v3317
        %v3429 = vpop.f32.mrf.mxu0
        %v3430 = vadd.f32 0.0, %v3429
        %3431 = vmatmul.f32.gmra.mxu0 %v3320
        %v3432 = vpop.f32.mrf.mxu0
        %v3433 = vadd.f32 0.0, %v3432
        %3434 = vmatmul.f32.gmra.mxu0 %v3323
        %v3435 = vpop.f32.mrf.mxu0
        %v3436 = vadd.f32 0.0, %v3435
        %3437 = vmatmul.f32.gmra.mxu0 %v3326
        %v3438 = vpop.f32.mrf.mxu0
        %v3439 = vadd.f32 0.0, %v3438
        %3440 = vmatmul.f32.gmra.mxu0 %v3329
        %v3441 = vpop.f32.mrf.mxu0
        %v3442 = vadd.f32 0.0, %v3441
        %3443 = vmatmul.f32.gmra.mxu0 %v3332
        %v3444 = vpop.f32.mrf.mxu0
        %v3445 = vadd.f32 0.0, %v3444
        %3446 = vmatmul.f32.gmra.mxu0 %v3335
        %v3447 = vpop.f32.mrf.mxu0
        %v3448 = vadd.f32 0.0, %v3447
        %3449 = vmatmul.f32.gmra.mxu0 %v3338
        %v3450 = vpop.f32.mrf.mxu0
        %v3451 = vadd.f32 0.0, %v3450
        %3452 = vmatmul.f32.gmra.mxu0 %v3341
        %v3453 = vpop.f32.mrf.mxu0
        %v3454 = vadd.f32 0.0, %v3453
        %3455 = vmatmul.f32.gmra.mxu0 %v3344
        %v3456 = vpop.f32.mrf.mxu0
        %v3457 = vadd.f32 0.0, %v3456
        %3458 = vmatmul.f32.gmra.mxu0 %v3347
        %v3459 = vpop.f32.mrf.mxu0
        %v3460 = vadd.f32 0.0, %v3459
        %3461 = vmatmul.f32.gmra.mxu0 %v3350
        %v3462 = vpop.f32.mrf.mxu0
        %v3463 = vadd.f32 0.0, %v3462
        %3464 = vmatmul.f32.gmra.mxu0 %v3353
        %v3465 = vpop.f32.mrf.mxu0
        %v3466 = vadd.f32 0.0, %v3465
        %3467 = vmatmul.f32.gmra.mxu0 %v3356
        %v3468 = vpop.f32.mrf.mxu0
        %v3469 = vadd.f32 0.0, %v3468
        %3470 = vdwg.mxu0
        %v3472 = vsel %vm3076, %v3193, 0
        %v3475 = vsel %vm3076, %v3194, 0
        %v3478 = vsel %vm3076, %v3195, 0
        %v3481 = vsel %vm3076, %v3196, 0
        %v3484 = vsel %vm3076, %v3197, 0
        %v3487 = vsel %vm3076, %v3198, 0
        %v3490 = vsel %vm3076, %v3199, 0
        %v3493 = vsel %vm3076, %v3200, 0
        %v3496 = vsel %vm3076, %v3201, 0
        %v3499 = vsel %vm3076, %v3202, 0
        %v3502 = vsel %vm3076, %v3203, 0
        %v3505 = vsel %vm3076, %v3204, 0
        %v3508 = vsel %vm3076, %v3205, 0
        %v3511 = vsel %vm3076, %v3206, 0
        %v3514 = vsel %vm3076, %v3207, 0
        %v3517 = vsel %vm3076, %v3208, 0
        %v3520 = vsel %vm3076, %v3209, 0
        %v3523 = vsel %vm3076, %v3210, 0
        %v3526 = vsel %vm3076, %v3211, 0
        %v3529 = vsel %vm3076, %v3212, 0
        %v3532 = vsel %vm3076, %v3213, 0
        %v3535 = vsel %vm3076, %v3214, 0
        %v3538 = vsel %vm3076, %v3215, 0
        %v3541 = vsel %vm3076, %v3216, 0
        %v3544 = vsel %vm3076, %v3217, 0
        %v3547 = vsel %vm3076, %v3218, 0
        %v3550 = vsel %vm3076, %v3219, 0
        %v3553 = vsel %vm3076, %v3220, 0
        %v3556 = vsel %vm3076, %v3221, 0
        %v3559 = vsel %vm3076, %v3222, 0
        %v3562 = vsel %vm3076, %v3223, 0
        %v3565 = vsel %vm3076, %v3224, 0
        %3567 = vmatpush.msra.mxu0 0.0
        %3568 = vmatpush.msra.mxu0 0.0
        %3569 = vmatpush.msra.mxu0 0.0
        %3570 = vmatpush.msra.mxu0 0.0
        %3571 = vmatpush.msra.mxu0 0.0
        %3572 = vmatpush.msra.mxu0 0.0
        %3573 = vmatpush.msra.mxu0 0.0
        %3574 = vmatpush.msra.mxu0 0.0
        %3575 = vmatpush.msra.mxu0 0.0
        %3576 = vmatpush.msra.mxu0 0.0
        %3577 = vmatpush.msra.mxu0 0.0
        %3578 = vmatpush.msra.mxu0 0.0
        %3579 = vmatpush.msra.mxu0 0.0
        %3580 = vmatpush.msra.mxu0 0.0
        %3581 = vmatpush.msra.mxu0 %v3226
        %3582 = vmatpush.msra.mxu0 %v3225
        %3583 = vmatmul.f32.gmra.mxu0 %v3472
        %v3584 = vpop.f32.mrf.mxu0
        %v3585 = vadd.f32 %v3376, %v3584
        %3586 = vmatmul.f32.gmra.mxu0 %v3475
        %v3587 = vpop.f32.mrf.mxu0
        %v3588 = vadd.f32 %v3379, %v3587
        %3589 = vmatmul.f32.gmra.mxu0 %v3478
        %v3590 = vpop.f32.mrf.mxu0
        %v3591 = vadd.f32 %v3382, %v3590
        %3592 = vmatmul.f32.gmra.mxu0 %v3481
        %v3593 = vpop.f32.mrf.mxu0
        %v3594 = vadd.f32 %v3385, %v3593
        %3595 = vmatmul.f32.gmra.mxu0 %v3484
        %v3596 = vpop.f32.mrf.mxu0
        %v3597 = vadd.f32 %v3388, %v3596
        %3598 = vmatmul.f32.gmra.mxu0 %v3487
        %v3599 = vpop.f32.mrf.mxu0
        %v3600 = vadd.f32 %v3391, %v3599
        %3601 = vmatmul.f32.gmra.mxu0 %v3490
        %v3602 = vpop.f32.mrf.mxu0
        %v3603 = vadd.f32 %v3394, %v3602
        %3604 = vmatmul.f32.gmra.mxu0 %v3493
        %v3605 = vpop.f32.mrf.mxu0
        %v3606 = vadd.f32 %v3397, %v3605
        %3607 = vmatmul.f32.gmra.mxu0 %v3496
        %v3608 = vpop.f32.mrf.mxu0
        %v3609 = vadd.f32 %v3400, %v3608
        %3610 = vmatmul.f32.gmra.mxu0 %v3499
        %v3611 = vpop.f32.mrf.mxu0
        %v3612 = vadd.f32 %v3403, %v3611
        %3613 = vmatmul.f32.gmra.mxu0 %v3502
        %v3614 = vpop.f32.mrf.mxu0
        %v3615 = vadd.f32 %v3406, %v3614
        %3616 = vmatmul.f32.gmra.mxu0 %v3505
        %v3617 = vpop.f32.mrf.mxu0
        %v3618 = vadd.f32 %v3409, %v3617
        %3619 = vmatmul.f32.gmra.mxu0 %v3508
        %v3620 = vpop.f32.mrf.mxu0
        %v3621 = vadd.f32 %v3412, %v3620
        %3622 = vmatmul.f32.gmra.mxu0 %v3511
        %v3623 = vpop.f32.mrf.mxu0
        %v3624 = vadd.f32 %v3415, %v3623
        %3625 = vmatmul.f32.gmra.mxu0 %v3514
        %v3626 = vpop.f32.mrf.mxu0
        %v3627 = vadd.f32 %v3418, %v3626
        %3628 = vmatmul.f32.gmra.mxu0 %v3517
        %v3629 = vpop.f32.mrf.mxu0
        %v3630 = vadd.f32 %v3421, %v3629
        %3631 = vmatmul.f32.gmra.mxu0 %v3520
        %v3632 = vpop.f32.mrf.mxu0
        %v3633 = vadd.f32 %v3424, %v3632
        %3634 = vmatmul.f32.gmra.mxu0 %v3523
        %v3635 = vpop.f32.mrf.mxu0
        %v3636 = vadd.f32 %v3427, %v3635
        %3637 = vmatmul.f32.gmra.mxu0 %v3526
        %v3638 = vpop.f32.mrf.mxu0
        %v3639 = vadd.f32 %v3430, %v3638
        %3640 = vmatmul.f32.gmra.mxu0 %v3529
        %v3641 = vpop.f32.mrf.mxu0
        %v3642 = vadd.f32 %v3433, %v3641
        %3643 = vmatmul.f32.gmra.mxu0 %v3532
        %v3644 = vpop.f32.mrf.mxu0
        %v3645 = vadd.f32 %v3436, %v3644
        %3646 = vmatmul.f32.gmra.mxu0 %v3535
        %v3647 = vpop.f32.mrf.mxu0
        %v3648 = vadd.f32 %v3439, %v3647
        %3649 = vmatmul.f32.gmra.mxu0 %v3538
        %v3650 = vpop.f32.mrf.mxu0
        %v3651 = vadd.f32 %v3442, %v3650
        %3652 = vmatmul.f32.gmra.mxu0 %v3541
        %v3653 = vpop.f32.mrf.mxu0
        %v3654 = vadd.f32 %v3445, %v3653
        %3655 = vmatmul.f32.gmra.mxu0 %v3544
        %v3656 = vpop.f32.mrf.mxu0
        %v3657 = vadd.f32 %v3448, %v3656
        %3658 = vmatmul.f32.gmra.mxu0 %v3547
        %v3659 = vpop.f32.mrf.mxu0
        %v3660 = vadd.f32 %v3451, %v3659
        %3661 = vmatmul.f32.gmra.mxu0 %v3550
        %v3662 = vpop.f32.mrf.mxu0
        %v3663 = vadd.f32 %v3454, %v3662
        %3664 = vmatmul.f32.gmra.mxu0 %v3553
        %v3665 = vpop.f32.mrf.mxu0
        %v3666 = vadd.f32 %v3457, %v3665
        %3667 = vmatmul.f32.gmra.mxu0 %v3556
        %v3668 = vpop.f32.mrf.mxu0
        %v3669 = vadd.f32 %v3460, %v3668
        %3670 = vmatmul.f32.gmra.mxu0 %v3559
        %v3671 = vpop.f32.mrf.mxu0
        %v3672 = vadd.f32 %v3463, %v3671
        %3673 = vmatmul.f32.gmra.mxu0 %v3562
        %v3674 = vpop.f32.mrf.mxu0
        %v3675 = vadd.f32 %v3466, %v3674
        %3676 = vmatmul.f32.gmra.mxu0 %v3565
        %v3677 = vpop.f32.mrf.mxu0
        %v3678 = vadd.f32 %v3469, %v3677
        %3679 = vdwg.mxu0
        %v3680 = vld [vmem:[#allocation3 + $0x2] sm:$0xff]
        %v3681 = vld [vmem:[#allocation3 + $0xa] sm:$0xff]
        %v3682 = vld [vmem:[#allocation3 + $0x1a] sm:$0xff]
        %v3683 = vld [vmem:[#allocation3 + $0x22] sm:$0xff]
        %v3684 = vld [vmem:[#allocation3 + $0x32] sm:$0xff]
        %v3685 = vld [vmem:[#allocation3 + $0x3a] sm:$0xff]
        %v3686 = vld [vmem:[#allocation3 + $0x4a] sm:$0xff]
        %v3687 = vld [vmem:[#allocation3 + $0x52] sm:$0xff]
        %v3688 = vld [vmem:[#allocation3 + $0x62] sm:$0xff]
        %v3689 = vld [vmem:[#allocation3 + $0x6a] sm:$0xff]
        %v3690 = vld [vmem:[#allocation3 + $0x7a] sm:$0xff]
        %v3691 = vld [vmem:[#allocation3 + $0x82] sm:$0xff]
        %v3692 = vld [vmem:[#allocation3 + $0x92] sm:$0xff]
        %v3693 = vld [vmem:[#allocation3 + $0x9a] sm:$0xff]
        %v3694 = vld [vmem:[#allocation3 + $0xaa] sm:$0xff]
        %v3695 = vld [vmem:[#allocation3 + $0xb2] sm:$0xff]
        %v3696 = vld [vmem:[#allocation3 + $0xc2] sm:$0xff]
        %v3697 = vld [vmem:[#allocation3 + $0xca] sm:$0xff]
        %v3698 = vld [vmem:[#allocation3 + $0xda] sm:$0xff]
        %v3699 = vld [vmem:[#allocation3 + $0xe2] sm:$0xff]
        %v3700 = vld [vmem:[#allocation3 + $0xf2] sm:$0xff]
        %v3701 = vld [vmem:[#allocation3 + $0xfa] sm:$0xff]
        %v3702 = vld [vmem:[#allocation3 + $0x10a] sm:$0xff]
        %v3703 = vld [vmem:[#allocation3 + $0x112] sm:$0xff]
        %v3704 = vld [vmem:[#allocation3 + $0x122] sm:$0xff]
        %v3705 = vld [vmem:[#allocation3 + $0x12a] sm:$0xff]
        %v3706 = vld [vmem:[#allocation3 + $0x13a] sm:$0xff]
        %v3707 = vld [vmem:[#allocation3 + $0x142] sm:$0xff]
        %v3708 = vld [vmem:[#allocation3 + $0x152] sm:$0xff]
        %v3709 = vld [vmem:[#allocation3 + $0x15a] sm:$0xff]
        %v3710 = vld [vmem:[#allocation3 + $0x16a] sm:$0xff]
        %v3711 = vld [vmem:[#allocation3 + $0x172] sm:$0xff]
        %s3712 = scalar_lea.vmem [#allocation9], 32
        %v3713 = vld [vmem:[%s3712] sm:$0xff]
        %v3714 = vld [vmem:[%s3712 + $0x8] sm:$0xff]
        %v3716 = vsel %vm3076, %v3680, 0
        %v3719 = vsel %vm3076, %v3681, 0
        %v3722 = vsel %vm3076, %v3682, 0
        %v3725 = vsel %vm3076, %v3683, 0
        %v3728 = vsel %vm3076, %v3684, 0
        %v3731 = vsel %vm3076, %v3685, 0
        %v3734 = vsel %vm3076, %v3686, 0
        %v3737 = vsel %vm3076, %v3687, 0
        %v3740 = vsel %vm3076, %v3688, 0
        %v3743 = vsel %vm3076, %v3689, 0
        %v3746 = vsel %vm3076, %v3690, 0
        %v3749 = vsel %vm3076, %v3691, 0
        %v3752 = vsel %vm3076, %v3692, 0
        %v3755 = vsel %vm3076, %v3693, 0
        %v3758 = vsel %vm3076, %v3694, 0
        %v3761 = vsel %vm3076, %v3695, 0
        %v3764 = vsel %vm3076, %v3696, 0
        %v3767 = vsel %vm3076, %v3697, 0
        %v3770 = vsel %vm3076, %v3698, 0
        %v3773 = vsel %vm3076, %v3699, 0
        %v3776 = vsel %vm3076, %v3700, 0
        %v3779 = vsel %vm3076, %v3701, 0
        %v3782 = vsel %vm3076, %v3702, 0
        %v3785 = vsel %vm3076, %v3703, 0
        %v3788 = vsel %vm3076, %v3704, 0
        %v3791 = vsel %vm3076, %v3705, 0
        %v3794 = vsel %vm3076, %v3706, 0
        %v3797 = vsel %vm3076, %v3707, 0
        %v3800 = vsel %vm3076, %v3708, 0
        %v3803 = vsel %vm3076, %v3709, 0
        %v3806 = vsel %vm3076, %v3710, 0
        %v3809 = vsel %vm3076, %v3711, 0
        %3811 = vmatpush.msra.mxu0 0.0
        %3812 = vmatpush.msra.mxu0 0.0
        %3813 = vmatpush.msra.mxu0 0.0
        %3814 = vmatpush.msra.mxu0 0.0
        %3815 = vmatpush.msra.mxu0 0.0
        %3816 = vmatpush.msra.mxu0 0.0
        %3817 = vmatpush.msra.mxu0 0.0
        %3818 = vmatpush.msra.mxu0 0.0
        %3819 = vmatpush.msra.mxu0 0.0
        %3820 = vmatpush.msra.mxu0 0.0
        %3821 = vmatpush.msra.mxu0 0.0
        %3822 = vmatpush.msra.mxu0 0.0
        %3823 = vmatpush.msra.mxu0 0.0
        %3824 = vmatpush.msra.mxu0 0.0
        %3825 = vmatpush.msra.mxu0 %v3714
        %3826 = vmatpush.msra.mxu0 %v3713
        %3827 = vmatmul.f32.gmra.mxu0 %v3716
        %v3828 = vpop.f32.mrf.mxu0
        %v3829 = vadd.f32 0.0, %v3828
        %3830 = vmatmul.f32.gmra.mxu0 %v3719
        %v3831 = vpop.f32.mrf.mxu0
        %v3832 = vadd.f32 0.0, %v3831
        %3833 = vmatmul.f32.gmra.mxu0 %v3722
        %v3834 = vpop.f32.mrf.mxu0
        %v3835 = vadd.f32 0.0, %v3834
        %3836 = vmatmul.f32.gmra.mxu0 %v3725
        %v3837 = vpop.f32.mrf.mxu0
        %v3838 = vadd.f32 0.0, %v3837
        %3839 = vmatmul.f32.gmra.mxu0 %v3728
        %v3840 = vpop.f32.mrf.mxu0
        %v3841 = vadd.f32 0.0, %v3840
        %3842 = vmatmul.f32.gmra.mxu0 %v3731
        %v3843 = vpop.f32.mrf.mxu0
        %v3844 = vadd.f32 0.0, %v3843
        %3845 = vmatmul.f32.gmra.mxu0 %v3734
        %v3846 = vpop.f32.mrf.mxu0
        %v3847 = vadd.f32 0.0, %v3846
        %3848 = vmatmul.f32.gmra.mxu0 %v3737
        %v3849 = vpop.f32.mrf.mxu0
        %v3850 = vadd.f32 0.0, %v3849
        %3851 = vmatmul.f32.gmra.mxu0 %v3740
        %v3852 = vpop.f32.mrf.mxu0
        %v3853 = vadd.f32 0.0, %v3852
        %3854 = vmatmul.f32.gmra.mxu0 %v3743
        %v3855 = vpop.f32.mrf.mxu0
        %v3856 = vadd.f32 0.0, %v3855
        %3857 = vmatmul.f32.gmra.mxu0 %v3746
        %v3858 = vpop.f32.mrf.mxu0
        %v3859 = vadd.f32 0.0, %v3858
        %3860 = vmatmul.f32.gmra.mxu0 %v3749
        %v3861 = vpop.f32.mrf.mxu0
        %v3862 = vadd.f32 0.0, %v3861
        %3863 = vmatmul.f32.gmra.mxu0 %v3752
        %v3864 = vpop.f32.mrf.mxu0
        %v3865 = vadd.f32 0.0, %v3864
        %3866 = vmatmul.f32.gmra.mxu0 %v3755
        %v3867 = vpop.f32.mrf.mxu0
        %v3868 = vadd.f32 0.0, %v3867
        %3869 = vmatmul.f32.gmra.mxu0 %v3758
        %v3870 = vpop.f32.mrf.mxu0
        %v3871 = vadd.f32 0.0, %v3870
        %3872 = vmatmul.f32.gmra.mxu0 %v3761
        %v3873 = vpop.f32.mrf.mxu0
        %v3874 = vadd.f32 0.0, %v3873
        %3875 = vmatmul.f32.gmra.mxu0 %v3764
        %v3876 = vpop.f32.mrf.mxu0
        %v3877 = vadd.f32 0.0, %v3876
        %3878 = vmatmul.f32.gmra.mxu0 %v3767
        %v3879 = vpop.f32.mrf.mxu0
        %v3880 = vadd.f32 0.0, %v3879
        %3881 = vmatmul.f32.gmra.mxu0 %v3770
        %v3882 = vpop.f32.mrf.mxu0
        %v3883 = vadd.f32 0.0, %v3882
        %3884 = vmatmul.f32.gmra.mxu0 %v3773
        %v3885 = vpop.f32.mrf.mxu0
        %v3886 = vadd.f32 0.0, %v3885
        %3887 = vmatmul.f32.gmra.mxu0 %v3776
        %v3888 = vpop.f32.mrf.mxu0
        %v3889 = vadd.f32 0.0, %v3888
        %3890 = vmatmul.f32.gmra.mxu0 %v3779
        %v3891 = vpop.f32.mrf.mxu0
        %v3892 = vadd.f32 0.0, %v3891
        %3893 = vmatmul.f32.gmra.mxu0 %v3782
        %v3894 = vpop.f32.mrf.mxu0
        %v3895 = vadd.f32 0.0, %v3894
        %3896 = vmatmul.f32.gmra.mxu0 %v3785
        %v3897 = vpop.f32.mrf.mxu0
        %v3898 = vadd.f32 0.0, %v3897
        %3899 = vmatmul.f32.gmra.mxu0 %v3788
        %v3900 = vpop.f32.mrf.mxu0
        %v3901 = vadd.f32 0.0, %v3900
        %3902 = vmatmul.f32.gmra.mxu0 %v3791
        %v3903 = vpop.f32.mrf.mxu0
        %v3904 = vadd.f32 0.0, %v3903
        %3905 = vmatmul.f32.gmra.mxu0 %v3794
        %v3906 = vpop.f32.mrf.mxu0
        %v3907 = vadd.f32 0.0, %v3906
        %3908 = vmatmul.f32.gmra.mxu0 %v3797
        %v3909 = vpop.f32.mrf.mxu0
        %v3910 = vadd.f32 0.0, %v3909
        %3911 = vmatmul.f32.gmra.mxu0 %v3800
        %v3912 = vpop.f32.mrf.mxu0
        %v3913 = vadd.f32 0.0, %v3912
        %3914 = vmatmul.f32.gmra.mxu0 %v3803
        %v3915 = vpop.f32.mrf.mxu0
        %v3916 = vadd.f32 0.0, %v3915
        %3917 = vmatmul.f32.gmra.mxu0 %v3806
        %v3918 = vpop.f32.mrf.mxu0
        %v3919 = vadd.f32 0.0, %v3918
        %3920 = vmatmul.f32.gmra.mxu0 %v3809
        %v3921 = vpop.f32.mrf.mxu0
        %v3922 = vadd.f32 0.0, %v3921
        %3923 = vdwg.mxu0
        %v3924 = vadd.f32 %v3585, %v3829
        %v3925 = vadd.f32 %v3588, %v3832
        %v3926 = vadd.f32 %v3591, %v3835
        %v3927 = vadd.f32 %v3594, %v3838
        %v3928 = vadd.f32 %v3597, %v3841
        %v3929 = vadd.f32 %v3600, %v3844
        %v3930 = vadd.f32 %v3603, %v3847
        %v3931 = vadd.f32 %v3606, %v3850
        %v3932 = vadd.f32 %v3609, %v3853
        %v3933 = vadd.f32 %v3612, %v3856
        %v3934 = vadd.f32 %v3615, %v3859
        %v3935 = vadd.f32 %v3618, %v3862
        %v3936 = vadd.f32 %v3621, %v3865
        %v3937 = vadd.f32 %v3624, %v3868
        %v3938 = vadd.f32 %v3627, %v3871
        %v3939 = vadd.f32 %v3630, %v3874
        %v3940 = vadd.f32 %v3633, %v3877
        %v3941 = vadd.f32 %v3636, %v3880
        %v3942 = vadd.f32 %v3639, %v3883
        %v3943 = vadd.f32 %v3642, %v3886
        %v3944 = vadd.f32 %v3645, %v3889
        %v3945 = vadd.f32 %v3648, %v3892
        %v3946 = vadd.f32 %v3651, %v3895
        %v3947 = vadd.f32 %v3654, %v3898
        %v3948 = vadd.f32 %v3657, %v3901
        %v3949 = vadd.f32 %v3660, %v3904
        %v3950 = vadd.f32 %v3663, %v3907
        %v3951 = vadd.f32 %v3666, %v3910
        %v3952 = vadd.f32 %v3669, %v3913
        %v3953 = vadd.f32 %v3672, %v3916
        %v3954 = vadd.f32 %v3675, %v3919
        %v3955 = vadd.f32 %v3678, %v3922
        %v3956 = vld [vmem:[%s3075] sm:$0xff]
        %v3957 = vld [vmem:[%s3075 + $0x8] sm:$0xff]
        %v3958 = vld [vmem:[%s3075 + $0x18] sm:$0xff]
        %v3959 = vld [vmem:[%s3075 + $0x20] sm:$0xff]
        %v3960 = vld [vmem:[%s3075 + $0x30] sm:$0xff]
        %v3961 = vld [vmem:[%s3075 + $0x38] sm:$0xff]
        %v3962 = vld [vmem:[%s3075 + $0x48] sm:$0xff]
        %v3963 = vld [vmem:[%s3075 + $0x50] sm:$0xff]
        %v3964 = vld [vmem:[%s3075 + $0x60] sm:$0xff]
        %v3965 = vld [vmem:[%s3075 + $0x68] sm:$0xff]
        %v3966 = vld [vmem:[%s3075 + $0x78] sm:$0xff]
        %v3967 = vld [vmem:[%s3075 + $0x80] sm:$0xff]
        %v3968 = vld [vmem:[%s3075 + $0x90] sm:$0xff]
        %v3969 = vld [vmem:[%s3075 + $0x98] sm:$0xff]
        %v3970 = vld [vmem:[%s3075 + $0xa8] sm:$0xff]
        %v3971 = vld [vmem:[%s3075 + $0xb0] sm:$0xff]
        %v3972 = vld [vmem:[%s3075 + $0xc0] sm:$0xff]
        %v3973 = vld [vmem:[%s3075 + $0xc8] sm:$0xff]
        %v3974 = vld [vmem:[%s3075 + $0xd8] sm:$0xff]
        %v3975 = vld [vmem:[%s3075 + $0xe0] sm:$0xff]
        %v3976 = vld [vmem:[%s3075 + $0xf0] sm:$0xff]
        %v3977 = vld [vmem:[%s3075 + $0xf8] sm:$0xff]
        %v3978 = vld [vmem:[%s3075 + $0x108] sm:$0xff]
        %v3979 = vld [vmem:[%s3075 + $0x110] sm:$0xff]
        %v3980 = vld [vmem:[%s3075 + $0x120] sm:$0xff]
        %v3981 = vld [vmem:[%s3075 + $0x128] sm:$0xff]
        %v3982 = vld [vmem:[%s3075 + $0x138] sm:$0xff]
        %v3983 = vld [vmem:[%s3075 + $0x140] sm:$0xff]
        %v3984 = vld [vmem:[%s3075 + $0x150] sm:$0xff]
        %v3985 = vld [vmem:[%s3075 + $0x158] sm:$0xff]
        %v3986 = vld [vmem:[%s3075 + $0x168] sm:$0xff]
        %v3987 = vld [vmem:[%s3075 + $0x170] sm:$0xff]
        %s3988 = scalar_lea.vmem [#allocation9], 48
        %v3989 = vld [vmem:[%s3988] sm:$0xff]
        %v3990 = vld [vmem:[%s3988 + $0x8] sm:$0xff]
        %v3992 = vsel %vm3076, %v3956, 0
        %v3995 = vsel %vm3076, %v3957, 0
        %v3998 = vsel %vm3076, %v3958, 0
        %v4001 = vsel %vm3076, %v3959, 0
        %v4004 = vsel %vm3076, %v3960, 0
        %v4007 = vsel %vm3076, %v3961, 0
        %v4010 = vsel %vm3076, %v3962, 0
        %v4013 = vsel %vm3076, %v3963, 0
        %v4016 = vsel %vm3076, %v3964, 0
        %v4019 = vsel %vm3076, %v3965, 0
        %v4022 = vsel %vm3076, %v3966, 0
        %v4025 = vsel %vm3076, %v3967, 0
        %v4028 = vsel %vm3076, %v3968, 0
        %v4031 = vsel %vm3076, %v3969, 0
        %v4034 = vsel %vm3076, %v3970, 0
        %v4037 = vsel %vm3076, %v3971, 0
        %v4040 = vsel %vm3076, %v3972, 0
        %v4043 = vsel %vm3076, %v3973, 0
        %v4046 = vsel %vm3076, %v3974, 0
        %v4049 = vsel %vm3076, %v3975, 0
        %v4052 = vsel %vm3076, %v3976, 0
        %v4055 = vsel %vm3076, %v3977, 0
        %v4058 = vsel %vm3076, %v3978, 0
        %v4061 = vsel %vm3076, %v3979, 0
        %v4064 = vsel %vm3076, %v3980, 0
        %v4067 = vsel %vm3076, %v3981, 0
        %v4070 = vsel %vm3076, %v3982, 0
        %v4073 = vsel %vm3076, %v3983, 0
        %v4076 = vsel %vm3076, %v3984, 0
        %v4079 = vsel %vm3076, %v3985, 0
        %v4082 = vsel %vm3076, %v3986, 0
        %v4085 = vsel %vm3076, %v3987, 0
        %4087 = vmatpush.msra.mxu0 0.0
        %4088 = vmatpush.msra.mxu0 0.0
        %4089 = vmatpush.msra.mxu0 0.0
        %4090 = vmatpush.msra.mxu0 0.0
        %4091 = vmatpush.msra.mxu0 0.0
        %4092 = vmatpush.msra.mxu0 0.0
        %4093 = vmatpush.msra.mxu0 0.0
        %4094 = vmatpush.msra.mxu0 0.0
        %4095 = vmatpush.msra.mxu0 0.0
        %4096 = vmatpush.msra.mxu0 0.0
        %4097 = vmatpush.msra.mxu0 0.0
        %4098 = vmatpush.msra.mxu0 0.0
        %4099 = vmatpush.msra.mxu0 0.0
        %4100 = vmatpush.msra.mxu0 0.0
        %4101 = vmatpush.msra.mxu0 %v3990
        %4102 = vmatpush.msra.mxu0 %v3989
        %4103 = vmatmul.f32.gmra.mxu0 %v3992
        %v4104 = vpop.f32.mrf.mxu0
        %v4105 = vadd.f32 0.0, %v4104
        %4106 = vmatmul.f32.gmra.mxu0 %v3995
        %v4107 = vpop.f32.mrf.mxu0
        %v4108 = vadd.f32 0.0, %v4107
        %4109 = vmatmul.f32.gmra.mxu0 %v3998
        %v4110 = vpop.f32.mrf.mxu0
        %v4111 = vadd.f32 0.0, %v4110
        %4112 = vmatmul.f32.gmra.mxu0 %v4001
        %v4113 = vpop.f32.mrf.mxu0
        %v4114 = vadd.f32 0.0, %v4113
        %4115 = vmatmul.f32.gmra.mxu0 %v4004
        %v4116 = vpop.f32.mrf.mxu0
        %v4117 = vadd.f32 0.0, %v4116
        %4118 = vmatmul.f32.gmra.mxu0 %v4007
        %v4119 = vpop.f32.mrf.mxu0
        %v4120 = vadd.f32 0.0, %v4119
        %4121 = vmatmul.f32.gmra.mxu0 %v4010
        %v4122 = vpop.f32.mrf.mxu0
        %v4123 = vadd.f32 0.0, %v4122
        %4124 = vmatmul.f32.gmra.mxu0 %v4013
        %v4125 = vpop.f32.mrf.mxu0
        %v4126 = vadd.f32 0.0, %v4125
        %4127 = vmatmul.f32.gmra.mxu0 %v4016
        %v4128 = vpop.f32.mrf.mxu0
        %v4129 = vadd.f32 0.0, %v4128
        %4130 = vmatmul.f32.gmra.mxu0 %v4019
        %v4131 = vpop.f32.mrf.mxu0
        %v4132 = vadd.f32 0.0, %v4131
        %4133 = vmatmul.f32.gmra.mxu0 %v4022
        %v4134 = vpop.f32.mrf.mxu0
        %v4135 = vadd.f32 0.0, %v4134
        %4136 = vmatmul.f32.gmra.mxu0 %v4025
        %v4137 = vpop.f32.mrf.mxu0
        %v4138 = vadd.f32 0.0, %v4137
        %4139 = vmatmul.f32.gmra.mxu0 %v4028
        %v4140 = vpop.f32.mrf.mxu0
        %v4141 = vadd.f32 0.0, %v4140
        %4142 = vmatmul.f32.gmra.mxu0 %v4031
        %v4143 = vpop.f32.mrf.mxu0
        %v4144 = vadd.f32 0.0, %v4143
        %4145 = vmatmul.f32.gmra.mxu0 %v4034
        %v4146 = vpop.f32.mrf.mxu0
        %v4147 = vadd.f32 0.0, %v4146
        %4148 = vmatmul.f32.gmra.mxu0 %v4037
        %v4149 = vpop.f32.mrf.mxu0
        %v4150 = vadd.f32 0.0, %v4149
        %4151 = vmatmul.f32.gmra.mxu0 %v4040
        %v4152 = vpop.f32.mrf.mxu0
        %v4153 = vadd.f32 0.0, %v4152
        %4154 = vmatmul.f32.gmra.mxu0 %v4043
        %v4155 = vpop.f32.mrf.mxu0
        %v4156 = vadd.f32 0.0, %v4155
        %4157 = vmatmul.f32.gmra.mxu0 %v4046
        %v4158 = vpop.f32.mrf.mxu0
        %v4159 = vadd.f32 0.0, %v4158
        %4160 = vmatmul.f32.gmra.mxu0 %v4049
        %v4161 = vpop.f32.mrf.mxu0
        %v4162 = vadd.f32 0.0, %v4161
        %4163 = vmatmul.f32.gmra.mxu0 %v4052
        %v4164 = vpop.f32.mrf.mxu0
        %v4165 = vadd.f32 0.0, %v4164
        %4166 = vmatmul.f32.gmra.mxu0 %v4055
        %v4167 = vpop.f32.mrf.mxu0
        %v4168 = vadd.f32 0.0, %v4167
        %4169 = vmatmul.f32.gmra.mxu0 %v4058
        %v4170 = vpop.f32.mrf.mxu0
        %v4171 = vadd.f32 0.0, %v4170
        %4172 = vmatmul.f32.gmra.mxu0 %v4061
        %v4173 = vpop.f32.mrf.mxu0
        %v4174 = vadd.f32 0.0, %v4173
        %4175 = vmatmul.f32.gmra.mxu0 %v4064
        %v4176 = vpop.f32.mrf.mxu0
        %v4177 = vadd.f32 0.0, %v4176
        %4178 = vmatmul.f32.gmra.mxu0 %v4067
        %v4179 = vpop.f32.mrf.mxu0
        %v4180 = vadd.f32 0.0, %v4179
        %4181 = vmatmul.f32.gmra.mxu0 %v4070
        %v4182 = vpop.f32.mrf.mxu0
        %v4183 = vadd.f32 0.0, %v4182
        %4184 = vmatmul.f32.gmra.mxu0 %v4073
        %v4185 = vpop.f32.mrf.mxu0
        %v4186 = vadd.f32 0.0, %v4185
        %4187 = vmatmul.f32.gmra.mxu0 %v4076
        %v4188 = vpop.f32.mrf.mxu0
        %v4189 = vadd.f32 0.0, %v4188
        %4190 = vmatmul.f32.gmra.mxu0 %v4079
        %v4191 = vpop.f32.mrf.mxu0
        %v4192 = vadd.f32 0.0, %v4191
        %4193 = vmatmul.f32.gmra.mxu0 %v4082
        %v4194 = vpop.f32.mrf.mxu0
        %v4195 = vadd.f32 0.0, %v4194
        %4196 = vmatmul.f32.gmra.mxu0 %v4085
        %v4197 = vpop.f32.mrf.mxu0
        %v4198 = vadd.f32 0.0, %v4197
        %4199 = vdwg.mxu0
        %v4200 = vadd.f32 %v3924, %v4105
        %v4201 = vadd.f32 %v3925, %v4108
        %v4202 = vadd.f32 %v3926, %v4111
        %v4203 = vadd.f32 %v3927, %v4114
        %v4204 = vadd.f32 %v3928, %v4117
        %v4205 = vadd.f32 %v3929, %v4120
        %v4206 = vadd.f32 %v3930, %v4123
        %v4207 = vadd.f32 %v3931, %v4126
        %v4208 = vadd.f32 %v3932, %v4129
        %v4209 = vadd.f32 %v3933, %v4132
        %v4210 = vadd.f32 %v3934, %v4135
        %v4211 = vadd.f32 %v3935, %v4138
        %v4212 = vadd.f32 %v3936, %v4141
        %v4213 = vadd.f32 %v3937, %v4144
        %v4214 = vadd.f32 %v3938, %v4147
        %v4215 = vadd.f32 %v3939, %v4150
        %v4216 = vadd.f32 %v3940, %v4153
        %v4217 = vadd.f32 %v3941, %v4156
        %v4218 = vadd.f32 %v3942, %v4159
        %v4219 = vadd.f32 %v3943, %v4162
        %v4220 = vadd.f32 %v3944, %v4165
        %v4221 = vadd.f32 %v3945, %v4168
        %v4222 = vadd.f32 %v3946, %v4171
        %v4223 = vadd.f32 %v3947, %v4174
        %v4224 = vadd.f32 %v3948, %v4177
        %v4225 = vadd.f32 %v3949, %v4180
        %v4226 = vadd.f32 %v3950, %v4183
        %v4227 = vadd.f32 %v3951, %v4186
        %v4228 = vadd.f32 %v3952, %v4189
        %v4229 = vadd.f32 %v3953, %v4192
        %v4230 = vadd.f32 %v3954, %v4195
        %v4231 = vadd.f32 %v3955, %v4198
        %v4232 = vld [vmem:[%s3075 + $0x1] sm:$0xff]
        %v4233 = vld [vmem:[%s3075 + $0x9] sm:$0xff]
        %v4234 = vld [vmem:[%s3075 + $0x19] sm:$0xff]
        %v4235 = vld [vmem:[%s3075 + $0x21] sm:$0xff]
        %v4236 = vld [vmem:[%s3075 + $0x31] sm:$0xff]
        %v4237 = vld [vmem:[%s3075 + $0x39] sm:$0xff]
        %v4238 = vld [vmem:[%s3075 + $0x49] sm:$0xff]
        %v4239 = vld [vmem:[%s3075 + $0x51] sm:$0xff]
        %v4240 = vld [vmem:[%s3075 + $0x61] sm:$0xff]
        %v4241 = vld [vmem:[%s3075 + $0x69] sm:$0xff]
        %v4242 = vld [vmem:[%s3075 + $0x79] sm:$0xff]
        %v4243 = vld [vmem:[%s3075 + $0x81] sm:$0xff]
        %v4244 = vld [vmem:[%s3075 + $0x91] sm:$0xff]
        %v4245 = vld [vmem:[%s3075 + $0x99] sm:$0xff]
        %v4246 = vld [vmem:[%s3075 + $0xa9] sm:$0xff]
        %v4247 = vld [vmem:[%s3075 + $0xb1] sm:$0xff]
        %v4248 = vld [vmem:[%s3075 + $0xc1] sm:$0xff]
        %v4249 = vld [vmem:[%s3075 + $0xc9] sm:$0xff]
        %v4250 = vld [vmem:[%s3075 + $0xd9] sm:$0xff]
        %v4251 = vld [vmem:[%s3075 + $0xe1] sm:$0xff]
        %v4252 = vld [vmem:[%s3075 + $0xf1] sm:$0xff]
        %v4253 = vld [vmem:[%s3075 + $0xf9] sm:$0xff]
        %v4254 = vld [vmem:[%s3075 + $0x109] sm:$0xff]
        %v4255 = vld [vmem:[%s3075 + $0x111] sm:$0xff]
        %v4256 = vld [vmem:[%s3075 + $0x121] sm:$0xff]
        %v4257 = vld [vmem:[%s3075 + $0x129] sm:$0xff]
        %v4258 = vld [vmem:[%s3075 + $0x139] sm:$0xff]
        %v4259 = vld [vmem:[%s3075 + $0x141] sm:$0xff]
        %v4260 = vld [vmem:[%s3075 + $0x151] sm:$0xff]
        %v4261 = vld [vmem:[%s3075 + $0x159] sm:$0xff]
        %v4262 = vld [vmem:[%s3075 + $0x169] sm:$0xff]
        %v4263 = vld [vmem:[%s3075 + $0x171] sm:$0xff]
        %s4264 = scalar_lea.vmem [#allocation9], 64
        %v4265 = vld [vmem:[%s4264] sm:$0xff]
        %v4266 = vld [vmem:[%s4264 + $0x8] sm:$0xff]
        %v4268 = vsel %vm3076, %v4232, 0
        %v4271 = vsel %vm3076, %v4233, 0
        %v4274 = vsel %vm3076, %v4234, 0
        %v4277 = vsel %vm3076, %v4235, 0
        %v4280 = vsel %vm3076, %v4236, 0
        %v4283 = vsel %vm3076, %v4237, 0
        %v4286 = vsel %vm3076, %v4238, 0
        %v4289 = vsel %vm3076, %v4239, 0
        %v4292 = vsel %vm3076, %v4240, 0
        %v4295 = vsel %vm3076, %v4241, 0
        %v4298 = vsel %vm3076, %v4242, 0
        %v4301 = vsel %vm3076, %v4243, 0
        %v4304 = vsel %vm3076, %v4244, 0
        %v4307 = vsel %vm3076, %v4245, 0
        %v4310 = vsel %vm3076, %v4246, 0
        %v4313 = vsel %vm3076, %v4247, 0
        %v4316 = vsel %vm3076, %v4248, 0
        %v4319 = vsel %vm3076, %v4249, 0
        %v4322 = vsel %vm3076, %v4250, 0
        %v4325 = vsel %vm3076, %v4251, 0
        %v4328 = vsel %vm3076, %v4252, 0
        %v4331 = vsel %vm3076, %v4253, 0
        %v4334 = vsel %vm3076, %v4254, 0
        %v4337 = vsel %vm3076, %v4255, 0
        %v4340 = vsel %vm3076, %v4256, 0
        %v4343 = vsel %vm3076, %v4257, 0
        %v4346 = vsel %vm3076, %v4258, 0
        %v4349 = vsel %vm3076, %v4259, 0
        %v4352 = vsel %vm3076, %v4260, 0
        %v4355 = vsel %vm3076, %v4261, 0
        %v4358 = vsel %vm3076, %v4262, 0
        %v4361 = vsel %vm3076, %v4263, 0
        %4363 = vmatpush.msra.mxu0 0.0
        %4364 = vmatpush.msra.mxu0 0.0
        %4365 = vmatpush.msra.mxu0 0.0
        %4366 = vmatpush.msra.mxu0 0.0
        %4367 = vmatpush.msra.mxu0 0.0
        %4368 = vmatpush.msra.mxu0 0.0
        %4369 = vmatpush.msra.mxu0 0.0
        %4370 = vmatpush.msra.mxu0 0.0
        %4371 = vmatpush.msra.mxu0 0.0
        %4372 = vmatpush.msra.mxu0 0.0
        %4373 = vmatpush.msra.mxu0 0.0
        %4374 = vmatpush.msra.mxu0 0.0
        %4375 = vmatpush.msra.mxu0 0.0
        %4376 = vmatpush.msra.mxu0 0.0
        %4377 = vmatpush.msra.mxu0 %v4266
        %4378 = vmatpush.msra.mxu0 %v4265
        %4379 = vmatmul.f32.gmra.mxu0 %v4268
        %v4380 = vpop.f32.mrf.mxu0
        %v4381 = vadd.f32 0.0, %v4380
        %4382 = vmatmul.f32.gmra.mxu0 %v4271
        %v4383 = vpop.f32.mrf.mxu0
        %v4384 = vadd.f32 0.0, %v4383
        %4385 = vmatmul.f32.gmra.mxu0 %v4274
        %v4386 = vpop.f32.mrf.mxu0
        %v4387 = vadd.f32 0.0, %v4386
        %4388 = vmatmul.f32.gmra.mxu0 %v4277
        %v4389 = vpop.f32.mrf.mxu0
        %v4390 = vadd.f32 0.0, %v4389
        %4391 = vmatmul.f32.gmra.mxu0 %v4280
        %v4392 = vpop.f32.mrf.mxu0
        %v4393 = vadd.f32 0.0, %v4392
        %4394 = vmatmul.f32.gmra.mxu0 %v4283
        %v4395 = vpop.f32.mrf.mxu0
        %v4396 = vadd.f32 0.0, %v4395
        %4397 = vmatmul.f32.gmra.mxu0 %v4286
        %v4398 = vpop.f32.mrf.mxu0
        %v4399 = vadd.f32 0.0, %v4398
        %4400 = vmatmul.f32.gmra.mxu0 %v4289
        %v4401 = vpop.f32.mrf.mxu0
        %v4402 = vadd.f32 0.0, %v4401
        %4403 = vmatmul.f32.gmra.mxu0 %v4292
        %v4404 = vpop.f32.mrf.mxu0
        %v4405 = vadd.f32 0.0, %v4404
        %4406 = vmatmul.f32.gmra.mxu0 %v4295
        %v4407 = vpop.f32.mrf.mxu0
        %v4408 = vadd.f32 0.0, %v4407
        %4409 = vmatmul.f32.gmra.mxu0 %v4298
        %v4410 = vpop.f32.mrf.mxu0
        %v4411 = vadd.f32 0.0, %v4410
        %4412 = vmatmul.f32.gmra.mxu0 %v4301
        %v4413 = vpop.f32.mrf.mxu0
        %v4414 = vadd.f32 0.0, %v4413
        %4415 = vmatmul.f32.gmra.mxu0 %v4304
        %v4416 = vpop.f32.mrf.mxu0
        %v4417 = vadd.f32 0.0, %v4416
        %4418 = vmatmul.f32.gmra.mxu0 %v4307
        %v4419 = vpop.f32.mrf.mxu0
        %v4420 = vadd.f32 0.0, %v4419
        %4421 = vmatmul.f32.gmra.mxu0 %v4310
        %v4422 = vpop.f32.mrf.mxu0
        %v4423 = vadd.f32 0.0, %v4422
        %4424 = vmatmul.f32.gmra.mxu0 %v4313
        %v4425 = vpop.f32.mrf.mxu0
        %v4426 = vadd.f32 0.0, %v4425
        %4427 = vmatmul.f32.gmra.mxu0 %v4316
        %v4428 = vpop.f32.mrf.mxu0
        %v4429 = vadd.f32 0.0, %v4428
        %4430 = vmatmul.f32.gmra.mxu0 %v4319
        %v4431 = vpop.f32.mrf.mxu0
        %v4432 = vadd.f32 0.0, %v4431
        %4433 = vmatmul.f32.gmra.mxu0 %v4322
        %v4434 = vpop.f32.mrf.mxu0
        %v4435 = vadd.f32 0.0, %v4434
        %4436 = vmatmul.f32.gmra.mxu0 %v4325
        %v4437 = vpop.f32.mrf.mxu0
        %v4438 = vadd.f32 0.0, %v4437
        %4439 = vmatmul.f32.gmra.mxu0 %v4328
        %v4440 = vpop.f32.mrf.mxu0
        %v4441 = vadd.f32 0.0, %v4440
        %4442 = vmatmul.f32.gmra.mxu0 %v4331
        %v4443 = vpop.f32.mrf.mxu0
        %v4444 = vadd.f32 0.0, %v4443
        %4445 = vmatmul.f32.gmra.mxu0 %v4334
        %v4446 = vpop.f32.mrf.mxu0
        %v4447 = vadd.f32 0.0, %v4446
        %4448 = vmatmul.f32.gmra.mxu0 %v4337
        %v4449 = vpop.f32.mrf.mxu0
        %v4450 = vadd.f32 0.0, %v4449
        %4451 = vmatmul.f32.gmra.mxu0 %v4340
        %v4452 = vpop.f32.mrf.mxu0
        %v4453 = vadd.f32 0.0, %v4452
        %4454 = vmatmul.f32.gmra.mxu0 %v4343
        %v4455 = vpop.f32.mrf.mxu0
        %v4456 = vadd.f32 0.0, %v4455
        %4457 = vmatmul.f32.gmra.mxu0 %v4346
        %v4458 = vpop.f32.mrf.mxu0
        %v4459 = vadd.f32 0.0, %v4458
        %4460 = vmatmul.f32.gmra.mxu0 %v4349
        %v4461 = vpop.f32.mrf.mxu0
        %v4462 = vadd.f32 0.0, %v4461
        %4463 = vmatmul.f32.gmra.mxu0 %v4352
        %v4464 = vpop.f32.mrf.mxu0
        %v4465 = vadd.f32 0.0, %v4464
        %4466 = vmatmul.f32.gmra.mxu0 %v4355
        %v4467 = vpop.f32.mrf.mxu0
        %v4468 = vadd.f32 0.0, %v4467
        %4469 = vmatmul.f32.gmra.mxu0 %v4358
        %v4470 = vpop.f32.mrf.mxu0
        %v4471 = vadd.f32 0.0, %v4470
        %4472 = vmatmul.f32.gmra.mxu0 %v4361
        %v4473 = vpop.f32.mrf.mxu0
        %v4474 = vadd.f32 0.0, %v4473
        %4475 = vdwg.mxu0
        %v4476 = vadd.f32 %v4200, %v4381
        %v4477 = vadd.f32 %v4201, %v4384
        %v4478 = vadd.f32 %v4202, %v4387
        %v4479 = vadd.f32 %v4203, %v4390
        %v4480 = vadd.f32 %v4204, %v4393
        %v4481 = vadd.f32 %v4205, %v4396
        %v4482 = vadd.f32 %v4206, %v4399
        %v4483 = vadd.f32 %v4207, %v4402
        %v4484 = vadd.f32 %v4208, %v4405
        %v4485 = vadd.f32 %v4209, %v4408
        %v4486 = vadd.f32 %v4210, %v4411
        %v4487 = vadd.f32 %v4211, %v4414
        %v4488 = vadd.f32 %v4212, %v4417
        %v4489 = vadd.f32 %v4213, %v4420
        %v4490 = vadd.f32 %v4214, %v4423
        %v4491 = vadd.f32 %v4215, %v4426
        %v4492 = vadd.f32 %v4216, %v4429
        %v4493 = vadd.f32 %v4217, %v4432
        %v4494 = vadd.f32 %v4218, %v4435
        %v4495 = vadd.f32 %v4219, %v4438
        %v4496 = vadd.f32 %v4220, %v4441
        %v4497 = vadd.f32 %v4221, %v4444
        %v4498 = vadd.f32 %v4222, %v4447
        %v4499 = vadd.f32 %v4223, %v4450
        %v4500 = vadd.f32 %v4224, %v4453
        %v4501 = vadd.f32 %v4225, %v4456
        %v4502 = vadd.f32 %v4226, %v4459
        %v4503 = vadd.f32 %v4227, %v4462
        %v4504 = vadd.f32 %v4228, %v4465
        %v4505 = vadd.f32 %v4229, %v4468
        %v4506 = vadd.f32 %v4230, %v4471
        %v4507 = vadd.f32 %v4231, %v4474
        %v4508 = vld [vmem:[%s3075 + $0x2] sm:$0xff]
        %v4509 = vld [vmem:[%s3075 + $0xa] sm:$0xff]
        %v4510 = vld [vmem:[%s3075 + $0x1a] sm:$0xff]
        %v4511 = vld [vmem:[%s3075 + $0x22] sm:$0xff]
        %v4512 = vld [vmem:[%s3075 + $0x32] sm:$0xff]
        %v4513 = vld [vmem:[%s3075 + $0x3a] sm:$0xff]
        %v4514 = vld [vmem:[%s3075 + $0x4a] sm:$0xff]
        %v4515 = vld [vmem:[%s3075 + $0x52] sm:$0xff]
        %v4516 = vld [vmem:[%s3075 + $0x62] sm:$0xff]
        %v4517 = vld [vmem:[%s3075 + $0x6a] sm:$0xff]
        %v4518 = vld [vmem:[%s3075 + $0x7a] sm:$0xff]
        %v4519 = vld [vmem:[%s3075 + $0x82] sm:$0xff]
        %v4520 = vld [vmem:[%s3075 + $0x92] sm:$0xff]
        %v4521 = vld [vmem:[%s3075 + $0x9a] sm:$0xff]
        %v4522 = vld [vmem:[%s3075 + $0xaa] sm:$0xff]
        %v4523 = vld [vmem:[%s3075 + $0xb2] sm:$0xff]
        %v4524 = vld [vmem:[%s3075 + $0xc2] sm:$0xff]
        %v4525 = vld [vmem:[%s3075 + $0xca] sm:$0xff]
        %v4526 = vld [vmem:[%s3075 + $0xda] sm:$0xff]
        %v4527 = vld [vmem:[%s3075 + $0xe2] sm:$0xff]
        %v4528 = vld [vmem:[%s3075 + $0xf2] sm:$0xff]
        %v4529 = vld [vmem:[%s3075 + $0xfa] sm:$0xff]
        %v4530 = vld [vmem:[%s3075 + $0x10a] sm:$0xff]
        %v4531 = vld [vmem:[%s3075 + $0x112] sm:$0xff]
        %v4532 = vld [vmem:[%s3075 + $0x122] sm:$0xff]
        %v4533 = vld [vmem:[%s3075 + $0x12a] sm:$0xff]
        %v4534 = vld [vmem:[%s3075 + $0x13a] sm:$0xff]
        %v4535 = vld [vmem:[%s3075 + $0x142] sm:$0xff]
        %v4536 = vld [vmem:[%s3075 + $0x152] sm:$0xff]
        %v4537 = vld [vmem:[%s3075 + $0x15a] sm:$0xff]
        %v4538 = vld [vmem:[%s3075 + $0x16a] sm:$0xff]
        %v4539 = vld [vmem:[%s3075 + $0x172] sm:$0xff]
        %s4540 = scalar_lea.vmem [#allocation9], 80
        %v4541 = vld [vmem:[%s4540] sm:$0xff]
        %v4542 = vld [vmem:[%s4540 + $0x8] sm:$0xff]
        %v4544 = vsel %vm3076, %v4508, 0
        %v4547 = vsel %vm3076, %v4509, 0
        %v4550 = vsel %vm3076, %v4510, 0
        %v4553 = vsel %vm3076, %v4511, 0
        %v4556 = vsel %vm3076, %v4512, 0
        %v4559 = vsel %vm3076, %v4513, 0
        %v4562 = vsel %vm3076, %v4514, 0
        %v4565 = vsel %vm3076, %v4515, 0
        %v4568 = vsel %vm3076, %v4516, 0
        %v4571 = vsel %vm3076, %v4517, 0
        %v4574 = vsel %vm3076, %v4518, 0
        %v4577 = vsel %vm3076, %v4519, 0
        %v4580 = vsel %vm3076, %v4520, 0
        %v4583 = vsel %vm3076, %v4521, 0
        %v4586 = vsel %vm3076, %v4522, 0
        %v4589 = vsel %vm3076, %v4523, 0
        %v4592 = vsel %vm3076, %v4524, 0
        %v4595 = vsel %vm3076, %v4525, 0
        %v4598 = vsel %vm3076, %v4526, 0
        %v4601 = vsel %vm3076, %v4527, 0
        %v4604 = vsel %vm3076, %v4528, 0
        %v4607 = vsel %vm3076, %v4529, 0
        %v4610 = vsel %vm3076, %v4530, 0
        %v4613 = vsel %vm3076, %v4531, 0
        %v4616 = vsel %vm3076, %v4532, 0
        %v4619 = vsel %vm3076, %v4533, 0
        %v4622 = vsel %vm3076, %v4534, 0
        %v4625 = vsel %vm3076, %v4535, 0
        %v4628 = vsel %vm3076, %v4536, 0
        %v4631 = vsel %vm3076, %v4537, 0
        %v4634 = vsel %vm3076, %v4538, 0
        %v4637 = vsel %vm3076, %v4539, 0
        %4639 = vmatpush.msra.mxu0 0.0
        %4640 = vmatpush.msra.mxu0 0.0
        %4641 = vmatpush.msra.mxu0 0.0
        %4642 = vmatpush.msra.mxu0 0.0
        %4643 = vmatpush.msra.mxu0 0.0
        %4644 = vmatpush.msra.mxu0 0.0
        %4645 = vmatpush.msra.mxu0 0.0
        %4646 = vmatpush.msra.mxu0 0.0
        %4647 = vmatpush.msra.mxu0 0.0
        %4648 = vmatpush.msra.mxu0 0.0
        %4649 = vmatpush.msra.mxu0 0.0
        %4650 = vmatpush.msra.mxu0 0.0
        %4651 = vmatpush.msra.mxu0 0.0
        %4652 = vmatpush.msra.mxu0 0.0
        %4653 = vmatpush.msra.mxu0 %v4542
        %4654 = vmatpush.msra.mxu0 %v4541
        %4655 = vmatmul.f32.gmra.mxu0 %v4544
        %v4656 = vpop.f32.mrf.mxu0
        %v4657 = vadd.f32 0.0, %v4656
        %4658 = vmatmul.f32.gmra.mxu0 %v4547
        %v4659 = vpop.f32.mrf.mxu0
        %v4660 = vadd.f32 0.0, %v4659
        %4661 = vmatmul.f32.gmra.mxu0 %v4550
        %v4662 = vpop.f32.mrf.mxu0
        %v4663 = vadd.f32 0.0, %v4662
        %4664 = vmatmul.f32.gmra.mxu0 %v4553
        %v4665 = vpop.f32.mrf.mxu0
        %v4666 = vadd.f32 0.0, %v4665
        %4667 = vmatmul.f32.gmra.mxu0 %v4556
        %v4668 = vpop.f32.mrf.mxu0
        %v4669 = vadd.f32 0.0, %v4668
        %4670 = vmatmul.f32.gmra.mxu0 %v4559
        %v4671 = vpop.f32.mrf.mxu0
        %v4672 = vadd.f32 0.0, %v4671
        %4673 = vmatmul.f32.gmra.mxu0 %v4562
        %v4674 = vpop.f32.mrf.mxu0
        %v4675 = vadd.f32 0.0, %v4674
        %4676 = vmatmul.f32.gmra.mxu0 %v4565
        %v4677 = vpop.f32.mrf.mxu0
        %v4678 = vadd.f32 0.0, %v4677
        %4679 = vmatmul.f32.gmra.mxu0 %v4568
        %v4680 = vpop.f32.mrf.mxu0
        %v4681 = vadd.f32 0.0, %v4680
        %4682 = vmatmul.f32.gmra.mxu0 %v4571
        %v4683 = vpop.f32.mrf.mxu0
        %v4684 = vadd.f32 0.0, %v4683
        %4685 = vmatmul.f32.gmra.mxu0 %v4574
        %v4686 = vpop.f32.mrf.mxu0
        %v4687 = vadd.f32 0.0, %v4686
        %4688 = vmatmul.f32.gmra.mxu0 %v4577
        %v4689 = vpop.f32.mrf.mxu0
        %v4690 = vadd.f32 0.0, %v4689
        %4691 = vmatmul.f32.gmra.mxu0 %v4580
        %v4692 = vpop.f32.mrf.mxu0
        %v4693 = vadd.f32 0.0, %v4692
        %4694 = vmatmul.f32.gmra.mxu0 %v4583
        %v4695 = vpop.f32.mrf.mxu0
        %v4696 = vadd.f32 0.0, %v4695
        %4697 = vmatmul.f32.gmra.mxu0 %v4586
        %v4698 = vpop.f32.mrf.mxu0
        %v4699 = vadd.f32 0.0, %v4698
        %4700 = vmatmul.f32.gmra.mxu0 %v4589
        %v4701 = vpop.f32.mrf.mxu0
        %v4702 = vadd.f32 0.0, %v4701
        %4703 = vmatmul.f32.gmra.mxu0 %v4592
        %v4704 = vpop.f32.mrf.mxu0
        %v4705 = vadd.f32 0.0, %v4704
        %4706 = vmatmul.f32.gmra.mxu0 %v4595
        %v4707 = vpop.f32.mrf.mxu0
        %v4708 = vadd.f32 0.0, %v4707
        %4709 = vmatmul.f32.gmra.mxu0 %v4598
        %v4710 = vpop.f32.mrf.mxu0
        %v4711 = vadd.f32 0.0, %v4710
        %4712 = vmatmul.f32.gmra.mxu0 %v4601
        %v4713 = vpop.f32.mrf.mxu0
        %v4714 = vadd.f32 0.0, %v4713
        %4715 = vmatmul.f32.gmra.mxu0 %v4604
        %v4716 = vpop.f32.mrf.mxu0
        %v4717 = vadd.f32 0.0, %v4716
        %4718 = vmatmul.f32.gmra.mxu0 %v4607
        %v4719 = vpop.f32.mrf.mxu0
        %v4720 = vadd.f32 0.0, %v4719
        %4721 = vmatmul.f32.gmra.mxu0 %v4610
        %v4722 = vpop.f32.mrf.mxu0
        %v4723 = vadd.f32 0.0, %v4722
        %4724 = vmatmul.f32.gmra.mxu0 %v4613
        %v4725 = vpop.f32.mrf.mxu0
        %v4726 = vadd.f32 0.0, %v4725
        %4727 = vmatmul.f32.gmra.mxu0 %v4616
        %v4728 = vpop.f32.mrf.mxu0
        %v4729 = vadd.f32 0.0, %v4728
        %4730 = vmatmul.f32.gmra.mxu0 %v4619
        %v4731 = vpop.f32.mrf.mxu0
        %v4732 = vadd.f32 0.0, %v4731
        %4733 = vmatmul.f32.gmra.mxu0 %v4622
        %v4734 = vpop.f32.mrf.mxu0
        %v4735 = vadd.f32 0.0, %v4734
        %4736 = vmatmul.f32.gmra.mxu0 %v4625
        %v4737 = vpop.f32.mrf.mxu0
        %v4738 = vadd.f32 0.0, %v4737
        %4739 = vmatmul.f32.gmra.mxu0 %v4628
        %v4740 = vpop.f32.mrf.mxu0
        %v4741 = vadd.f32 0.0, %v4740
        %4742 = vmatmul.f32.gmra.mxu0 %v4631
        %v4743 = vpop.f32.mrf.mxu0
        %v4744 = vadd.f32 0.0, %v4743
        %4745 = vmatmul.f32.gmra.mxu0 %v4634
        %v4746 = vpop.f32.mrf.mxu0
        %v4747 = vadd.f32 0.0, %v4746
        %4748 = vmatmul.f32.gmra.mxu0 %v4637
        %v4749 = vpop.f32.mrf.mxu0
        %v4750 = vadd.f32 0.0, %v4749
        %4751 = vdwg.mxu0
        %v4752 = vadd.f32 %v4476, %v4657
        %v4753 = vadd.f32 %v4477, %v4660
        %v4754 = vadd.f32 %v4478, %v4663
        %v4755 = vadd.f32 %v4479, %v4666
        %v4756 = vadd.f32 %v4480, %v4669
        %v4757 = vadd.f32 %v4481, %v4672
        %v4758 = vadd.f32 %v4482, %v4675
        %v4759 = vadd.f32 %v4483, %v4678
        %v4760 = vadd.f32 %v4484, %v4681
        %v4761 = vadd.f32 %v4485, %v4684
        %v4762 = vadd.f32 %v4486, %v4687
        %v4763 = vadd.f32 %v4487, %v4690
        %v4764 = vadd.f32 %v4488, %v4693
        %v4765 = vadd.f32 %v4489, %v4696
        %v4766 = vadd.f32 %v4490, %v4699
        %v4767 = vadd.f32 %v4491, %v4702
        %v4768 = vadd.f32 %v4492, %v4705
        %v4769 = vadd.f32 %v4493, %v4708
        %v4770 = vadd.f32 %v4494, %v4711
        %v4771 = vadd.f32 %v4495, %v4714
        %v4772 = vadd.f32 %v4496, %v4717
        %v4773 = vadd.f32 %v4497, %v4720
        %v4774 = vadd.f32 %v4498, %v4723
        %v4775 = vadd.f32 %v4499, %v4726
        %v4776 = vadd.f32 %v4500, %v4729
        %v4777 = vadd.f32 %v4501, %v4732
        %v4778 = vadd.f32 %v4502, %v4735
        %v4779 = vadd.f32 %v4503, %v4738
        %v4780 = vadd.f32 %v4504, %v4741
        %v4781 = vadd.f32 %v4505, %v4744
        %v4782 = vadd.f32 %v4506, %v4747
        %v4783 = vadd.f32 %v4507, %v4750
        %v4784 = vld [vmem:[%s3109] sm:$0xff]
        %v4785 = vld [vmem:[%s3109 + $0x8] sm:$0xff]
        %v4786 = vld [vmem:[%s3109 + $0x18] sm:$0xff]
        %v4787 = vld [vmem:[%s3109 + $0x20] sm:$0xff]
        %v4788 = vld [vmem:[%s3109 + $0x30] sm:$0xff]
        %v4789 = vld [vmem:[%s3109 + $0x38] sm:$0xff]
        %v4790 = vld [vmem:[%s3109 + $0x48] sm:$0xff]
        %v4791 = vld [vmem:[%s3109 + $0x50] sm:$0xff]
        %v4792 = vld [vmem:[%s3109 + $0x60] sm:$0xff]
        %v4793 = vld [vmem:[%s3109 + $0x68] sm:$0xff]
        %v4794 = vld [vmem:[%s3109 + $0x78] sm:$0xff]
        %v4795 = vld [vmem:[%s3109 + $0x80] sm:$0xff]
        %v4796 = vld [vmem:[%s3109 + $0x90] sm:$0xff]
        %v4797 = vld [vmem:[%s3109 + $0x98] sm:$0xff]
        %v4798 = vld [vmem:[%s3109 + $0xa8] sm:$0xff]
        %v4799 = vld [vmem:[%s3109 + $0xb0] sm:$0xff]
        %v4800 = vld [vmem:[%s3109 + $0xc0] sm:$0xff]
        %v4801 = vld [vmem:[%s3109 + $0xc8] sm:$0xff]
        %v4802 = vld [vmem:[%s3109 + $0xd8] sm:$0xff]
        %v4803 = vld [vmem:[%s3109 + $0xe0] sm:$0xff]
        %v4804 = vld [vmem:[%s3109 + $0xf0] sm:$0xff]
        %v4805 = vld [vmem:[%s3109 + $0xf8] sm:$0xff]
        %v4806 = vld [vmem:[%s3109 + $0x108] sm:$0xff]
        %v4807 = vld [vmem:[%s3109 + $0x110] sm:$0xff]
        %v4808 = vld [vmem:[%s3109 + $0x120] sm:$0xff]
        %v4809 = vld [vmem:[%s3109 + $0x128] sm:$0xff]
        %v4810 = vld [vmem:[%s3109 + $0x138] sm:$0xff]
        %v4811 = vld [vmem:[%s3109 + $0x140] sm:$0xff]
        %v4812 = vld [vmem:[%s3109 + $0x150] sm:$0xff]
        %v4813 = vld [vmem:[%s3109 + $0x158] sm:$0xff]
        %v4814 = vld [vmem:[%s3109 + $0x168] sm:$0xff]
        %v4815 = vld [vmem:[%s3109 + $0x170] sm:$0xff]
        %s4816 = scalar_lea.vmem [#allocation9], 96
        %v4817 = vld [vmem:[%s4816] sm:$0xff]
        %v4818 = vld [vmem:[%s4816 + $0x8] sm:$0xff]
        %v4820 = vsel %vm3076, %v4784, 0
        %v4823 = vsel %vm3076, %v4785, 0
        %v4826 = vsel %vm3076, %v4786, 0
        %v4829 = vsel %vm3076, %v4787, 0
        %v4832 = vsel %vm3076, %v4788, 0
        %v4835 = vsel %vm3076, %v4789, 0
        %v4838 = vsel %vm3076, %v4790, 0
        %v4841 = vsel %vm3076, %v4791, 0
        %v4844 = vsel %vm3076, %v4792, 0
        %v4847 = vsel %vm3076, %v4793, 0
        %v4850 = vsel %vm3076, %v4794, 0
        %v4853 = vsel %vm3076, %v4795, 0
        %v4856 = vsel %vm3076, %v4796, 0
        %v4859 = vsel %vm3076, %v4797, 0
        %v4862 = vsel %vm3076, %v4798, 0
        %v4865 = vsel %vm3076, %v4799, 0
        %v4868 = vsel %vm3076, %v4800, 0
        %v4871 = vsel %vm3076, %v4801, 0
        %v4874 = vsel %vm3076, %v4802, 0
        %v4877 = vsel %vm3076, %v4803, 0
        %v4880 = vsel %vm3076, %v4804, 0
        %v4883 = vsel %vm3076, %v4805, 0
        %v4886 = vsel %vm3076, %v4806, 0
        %v4889 = vsel %vm3076, %v4807, 0
        %v4892 = vsel %vm3076, %v4808, 0
        %v4895 = vsel %vm3076, %v4809, 0
        %v4898 = vsel %vm3076, %v4810, 0
        %v4901 = vsel %vm3076, %v4811, 0
        %v4904 = vsel %vm3076, %v4812, 0
        %v4907 = vsel %vm3076, %v4813, 0
        %v4910 = vsel %vm3076, %v4814, 0
        %v4913 = vsel %vm3076, %v4815, 0
        %4915 = vmatpush.msra.mxu0 0.0
        %4916 = vmatpush.msra.mxu0 0.0
        %4917 = vmatpush.msra.mxu0 0.0
        %4918 = vmatpush.msra.mxu0 0.0
        %4919 = vmatpush.msra.mxu0 0.0
        %4920 = vmatpush.msra.mxu0 0.0
        %4921 = vmatpush.msra.mxu0 0.0
        %4922 = vmatpush.msra.mxu0 0.0
        %4923 = vmatpush.msra.mxu0 0.0
        %4924 = vmatpush.msra.mxu0 0.0
        %4925 = vmatpush.msra.mxu0 0.0
        %4926 = vmatpush.msra.mxu0 0.0
        %4927 = vmatpush.msra.mxu0 0.0
        %4928 = vmatpush.msra.mxu0 0.0
        %4929 = vmatpush.msra.mxu0 %v4818
        %4930 = vmatpush.msra.mxu0 %v4817
        %4931 = vmatmul.f32.gmra.mxu0 %v4820
        %v4932 = vpop.f32.mrf.mxu0
        %v4933 = vadd.f32 0.0, %v4932
        %4934 = vmatmul.f32.gmra.mxu0 %v4823
        %v4935 = vpop.f32.mrf.mxu0
        %v4936 = vadd.f32 0.0, %v4935
        %4937 = vmatmul.f32.gmra.mxu0 %v4826
        %v4938 = vpop.f32.mrf.mxu0
        %v4939 = vadd.f32 0.0, %v4938
        %4940 = vmatmul.f32.gmra.mxu0 %v4829
        %v4941 = vpop.f32.mrf.mxu0
        %v4942 = vadd.f32 0.0, %v4941
        %4943 = vmatmul.f32.gmra.mxu0 %v4832
        %v4944 = vpop.f32.mrf.mxu0
        %v4945 = vadd.f32 0.0, %v4944
        %4946 = vmatmul.f32.gmra.mxu0 %v4835
        %v4947 = vpop.f32.mrf.mxu0
        %v4948 = vadd.f32 0.0, %v4947
        %4949 = vmatmul.f32.gmra.mxu0 %v4838
        %v4950 = vpop.f32.mrf.mxu0
        %v4951 = vadd.f32 0.0, %v4950
        %4952 = vmatmul.f32.gmra.mxu0 %v4841
        %v4953 = vpop.f32.mrf.mxu0
        %v4954 = vadd.f32 0.0, %v4953
        %4955 = vmatmul.f32.gmra.mxu0 %v4844
        %v4956 = vpop.f32.mrf.mxu0
        %v4957 = vadd.f32 0.0, %v4956
        %4958 = vmatmul.f32.gmra.mxu0 %v4847
        %v4959 = vpop.f32.mrf.mxu0
        %v4960 = vadd.f32 0.0, %v4959
        %4961 = vmatmul.f32.gmra.mxu0 %v4850
        %v4962 = vpop.f32.mrf.mxu0
        %v4963 = vadd.f32 0.0, %v4962
        %4964 = vmatmul.f32.gmra.mxu0 %v4853
        %v4965 = vpop.f32.mrf.mxu0
        %v4966 = vadd.f32 0.0, %v4965
        %4967 = vmatmul.f32.gmra.mxu0 %v4856
        %v4968 = vpop.f32.mrf.mxu0
        %v4969 = vadd.f32 0.0, %v4968
        %4970 = vmatmul.f32.gmra.mxu0 %v4859
        %v4971 = vpop.f32.mrf.mxu0
        %v4972 = vadd.f32 0.0, %v4971
        %4973 = vmatmul.f32.gmra.mxu0 %v4862
        %v4974 = vpop.f32.mrf.mxu0
        %v4975 = vadd.f32 0.0, %v4974
        %4976 = vmatmul.f32.gmra.mxu0 %v4865
        %v4977 = vpop.f32.mrf.mxu0
        %v4978 = vadd.f32 0.0, %v4977
        %4979 = vmatmul.f32.gmra.mxu0 %v4868
        %v4980 = vpop.f32.mrf.mxu0
        %v4981 = vadd.f32 0.0, %v4980
        %4982 = vmatmul.f32.gmra.mxu0 %v4871
        %v4983 = vpop.f32.mrf.mxu0
        %v4984 = vadd.f32 0.0, %v4983
        %4985 = vmatmul.f32.gmra.mxu0 %v4874
        %v4986 = vpop.f32.mrf.mxu0
        %v4987 = vadd.f32 0.0, %v4986
        %4988 = vmatmul.f32.gmra.mxu0 %v4877
        %v4989 = vpop.f32.mrf.mxu0
        %v4990 = vadd.f32 0.0, %v4989
        %4991 = vmatmul.f32.gmra.mxu0 %v4880
        %v4992 = vpop.f32.mrf.mxu0
        %v4993 = vadd.f32 0.0, %v4992
        %4994 = vmatmul.f32.gmra.mxu0 %v4883
        %v4995 = vpop.f32.mrf.mxu0
        %v4996 = vadd.f32 0.0, %v4995
        %4997 = vmatmul.f32.gmra.mxu0 %v4886
        %v4998 = vpop.f32.mrf.mxu0
        %v4999 = vadd.f32 0.0, %v4998
        %5000 = vmatmul.f32.gmra.mxu0 %v4889
        %v5001 = vpop.f32.mrf.mxu0
        %v5002 = vadd.f32 0.0, %v5001
        %5003 = vmatmul.f32.gmra.mxu0 %v4892
        %v5004 = vpop.f32.mrf.mxu0
        %v5005 = vadd.f32 0.0, %v5004
        %5006 = vmatmul.f32.gmra.mxu0 %v4895
        %v5007 = vpop.f32.mrf.mxu0
        %v5008 = vadd.f32 0.0, %v5007
        %5009 = vmatmul.f32.gmra.mxu0 %v4898
        %v5010 = vpop.f32.mrf.mxu0
        %v5011 = vadd.f32 0.0, %v5010
        %5012 = vmatmul.f32.gmra.mxu0 %v4901
        %v5013 = vpop.f32.mrf.mxu0
        %v5014 = vadd.f32 0.0, %v5013
        %5015 = vmatmul.f32.gmra.mxu0 %v4904
        %v5016 = vpop.f32.mrf.mxu0
        %v5017 = vadd.f32 0.0, %v5016
        %5018 = vmatmul.f32.gmra.mxu0 %v4907
        %v5019 = vpop.f32.mrf.mxu0
        %v5020 = vadd.f32 0.0, %v5019
        %5021 = vmatmul.f32.gmra.mxu0 %v4910
        %v5022 = vpop.f32.mrf.mxu0
        %v5023 = vadd.f32 0.0, %v5022
        %5024 = vmatmul.f32.gmra.mxu0 %v4913
        %v5025 = vpop.f32.mrf.mxu0
        %v5026 = vadd.f32 0.0, %v5025
        %5027 = vdwg.mxu0
        %v5028 = vadd.f32 %v4752, %v4933
        %v5029 = vadd.f32 %v4753, %v4936
        %v5030 = vadd.f32 %v4754, %v4939
        %v5031 = vadd.f32 %v4755, %v4942
        %v5032 = vadd.f32 %v4756, %v4945
        %v5033 = vadd.f32 %v4757, %v4948
        %v5034 = vadd.f32 %v4758, %v4951
        %v5035 = vadd.f32 %v4759, %v4954
        %v5036 = vadd.f32 %v4760, %v4957
        %v5037 = vadd.f32 %v4761, %v4960
        %v5038 = vadd.f32 %v4762, %v4963
        %v5039 = vadd.f32 %v4763, %v4966
        %v5040 = vadd.f32 %v4764, %v4969
        %v5041 = vadd.f32 %v4765, %v4972
        %v5042 = vadd.f32 %v4766, %v4975
        %v5043 = vadd.f32 %v4767, %v4978
        %v5044 = vadd.f32 %v4768, %v4981
        %v5045 = vadd.f32 %v4769, %v4984
        %v5046 = vadd.f32 %v4770, %v4987
        %v5047 = vadd.f32 %v4771, %v4990
        %v5048 = vadd.f32 %v4772, %v4993
        %v5049 = vadd.f32 %v4773, %v4996
        %v5050 = vadd.f32 %v4774, %v4999
        %v5051 = vadd.f32 %v4775, %v5002
        %v5052 = vadd.f32 %v4776, %v5005
        %v5053 = vadd.f32 %v4777, %v5008
        %v5054 = vadd.f32 %v4778, %v5011
        %v5055 = vadd.f32 %v4779, %v5014
        %v5056 = vadd.f32 %v4780, %v5017
        %v5057 = vadd.f32 %v4781, %v5020
        %v5058 = vadd.f32 %v4782, %v5023
        %v5059 = vadd.f32 %v4783, %v5026
        %v5060 = vld [vmem:[%s3109 + $0x1] sm:$0xff]
        %v5061 = vld [vmem:[%s3109 + $0x9] sm:$0xff]
        %v5062 = vld [vmem:[%s3109 + $0x19] sm:$0xff]
        %v5063 = vld [vmem:[%s3109 + $0x21] sm:$0xff]
        %v5064 = vld [vmem:[%s3109 + $0x31] sm:$0xff]
        %v5065 = vld [vmem:[%s3109 + $0x39] sm:$0xff]
        %v5066 = vld [vmem:[%s3109 + $0x49] sm:$0xff]
        %v5067 = vld [vmem:[%s3109 + $0x51] sm:$0xff]
        %v5068 = vld [vmem:[%s3109 + $0x61] sm:$0xff]
        %v5069 = vld [vmem:[%s3109 + $0x69] sm:$0xff]
        %v5070 = vld [vmem:[%s3109 + $0x79] sm:$0xff]
        %v5071 = vld [vmem:[%s3109 + $0x81] sm:$0xff]
        %v5072 = vld [vmem:[%s3109 + $0x91] sm:$0xff]
        %v5073 = vld [vmem:[%s3109 + $0x99] sm:$0xff]
        %v5074 = vld [vmem:[%s3109 + $0xa9] sm:$0xff]
        %v5075 = vld [vmem:[%s3109 + $0xb1] sm:$0xff]
        %v5076 = vld [vmem:[%s3109 + $0xc1] sm:$0xff]
        %v5077 = vld [vmem:[%s3109 + $0xc9] sm:$0xff]
        %v5078 = vld [vmem:[%s3109 + $0xd9] sm:$0xff]
        %v5079 = vld [vmem:[%s3109 + $0xe1] sm:$0xff]
        %v5080 = vld [vmem:[%s3109 + $0xf1] sm:$0xff]
        %v5081 = vld [vmem:[%s3109 + $0xf9] sm:$0xff]
        %v5082 = vld [vmem:[%s3109 + $0x109] sm:$0xff]
        %v5083 = vld [vmem:[%s3109 + $0x111] sm:$0xff]
        %v5084 = vld [vmem:[%s3109 + $0x121] sm:$0xff]
        %v5085 = vld [vmem:[%s3109 + $0x129] sm:$0xff]
        %v5086 = vld [vmem:[%s3109 + $0x139] sm:$0xff]
        %v5087 = vld [vmem:[%s3109 + $0x141] sm:$0xff]
        %v5088 = vld [vmem:[%s3109 + $0x151] sm:$0xff]
        %v5089 = vld [vmem:[%s3109 + $0x159] sm:$0xff]
        %v5090 = vld [vmem:[%s3109 + $0x169] sm:$0xff]
        %v5091 = vld [vmem:[%s3109 + $0x171] sm:$0xff]
        %s5092 = scalar_lea.vmem [#allocation9], 112
        %v5093 = vld [vmem:[%s5092] sm:$0xff]
        %v5094 = vld [vmem:[%s5092 + $0x8] sm:$0xff]
        %v5096 = vsel %vm3076, %v5060, 0
        %v5099 = vsel %vm3076, %v5061, 0
        %v5102 = vsel %vm3076, %v5062, 0
        %v5105 = vsel %vm3076, %v5063, 0
        %v5108 = vsel %vm3076, %v5064, 0
        %v5111 = vsel %vm3076, %v5065, 0
        %v5114 = vsel %vm3076, %v5066, 0
        %v5117 = vsel %vm3076, %v5067, 0
        %v5120 = vsel %vm3076, %v5068, 0
        %v5123 = vsel %vm3076, %v5069, 0
        %v5126 = vsel %vm3076, %v5070, 0
        %v5129 = vsel %vm3076, %v5071, 0
        %v5132 = vsel %vm3076, %v5072, 0
        %v5135 = vsel %vm3076, %v5073, 0
        %v5138 = vsel %vm3076, %v5074, 0
        %v5141 = vsel %vm3076, %v5075, 0
        %v5144 = vsel %vm3076, %v5076, 0
        %v5147 = vsel %vm3076, %v5077, 0
        %v5150 = vsel %vm3076, %v5078, 0
        %v5153 = vsel %vm3076, %v5079, 0
        %v5156 = vsel %vm3076, %v5080, 0
        %v5159 = vsel %vm3076, %v5081, 0
        %v5162 = vsel %vm3076, %v5082, 0
        %v5165 = vsel %vm3076, %v5083, 0
        %v5168 = vsel %vm3076, %v5084, 0
        %v5171 = vsel %vm3076, %v5085, 0
        %v5174 = vsel %vm3076, %v5086, 0
        %v5177 = vsel %vm3076, %v5087, 0
        %v5180 = vsel %vm3076, %v5088, 0
        %v5183 = vsel %vm3076, %v5089, 0
        %v5186 = vsel %vm3076, %v5090, 0
        %v5189 = vsel %vm3076, %v5091, 0
        %5191 = vmatpush.msra.mxu0 0.0
        %5192 = vmatpush.msra.mxu0 0.0
        %5193 = vmatpush.msra.mxu0 0.0
        %5194 = vmatpush.msra.mxu0 0.0
        %5195 = vmatpush.msra.mxu0 0.0
        %5196 = vmatpush.msra.mxu0 0.0
        %5197 = vmatpush.msra.mxu0 0.0
        %5198 = vmatpush.msra.mxu0 0.0
        %5199 = vmatpush.msra.mxu0 0.0
        %5200 = vmatpush.msra.mxu0 0.0
        %5201 = vmatpush.msra.mxu0 0.0
        %5202 = vmatpush.msra.mxu0 0.0
        %5203 = vmatpush.msra.mxu0 0.0
        %5204 = vmatpush.msra.mxu0 0.0
        %5205 = vmatpush.msra.mxu0 %v5094
        %5206 = vmatpush.msra.mxu0 %v5093
        %5207 = vmatmul.f32.gmra.mxu0 %v5096
        %v5208 = vpop.f32.mrf.mxu0
        %v5209 = vadd.f32 0.0, %v5208
        %5210 = vmatmul.f32.gmra.mxu0 %v5099
        %v5211 = vpop.f32.mrf.mxu0
        %v5212 = vadd.f32 0.0, %v5211
        %5213 = vmatmul.f32.gmra.mxu0 %v5102
        %v5214 = vpop.f32.mrf.mxu0
        %v5215 = vadd.f32 0.0, %v5214
        %5216 = vmatmul.f32.gmra.mxu0 %v5105
        %v5217 = vpop.f32.mrf.mxu0
        %v5218 = vadd.f32 0.0, %v5217
        %5219 = vmatmul.f32.gmra.mxu0 %v5108
        %v5220 = vpop.f32.mrf.mxu0
        %v5221 = vadd.f32 0.0, %v5220
        %5222 = vmatmul.f32.gmra.mxu0 %v5111
        %v5223 = vpop.f32.mrf.mxu0
        %v5224 = vadd.f32 0.0, %v5223
        %5225 = vmatmul.f32.gmra.mxu0 %v5114
        %v5226 = vpop.f32.mrf.mxu0
        %v5227 = vadd.f32 0.0, %v5226
        %5228 = vmatmul.f32.gmra.mxu0 %v5117
        %v5229 = vpop.f32.mrf.mxu0
        %v5230 = vadd.f32 0.0, %v5229
        %5231 = vmatmul.f32.gmra.mxu0 %v5120
        %v5232 = vpop.f32.mrf.mxu0
        %v5233 = vadd.f32 0.0, %v5232
        %5234 = vmatmul.f32.gmra.mxu0 %v5123
        %v5235 = vpop.f32.mrf.mxu0
        %v5236 = vadd.f32 0.0, %v5235
        %5237 = vmatmul.f32.gmra.mxu0 %v5126
        %v5238 = vpop.f32.mrf.mxu0
        %v5239 = vadd.f32 0.0, %v5238
        %5240 = vmatmul.f32.gmra.mxu0 %v5129
        %v5241 = vpop.f32.mrf.mxu0
        %v5242 = vadd.f32 0.0, %v5241
        %5243 = vmatmul.f32.gmra.mxu0 %v5132
        %v5244 = vpop.f32.mrf.mxu0
        %v5245 = vadd.f32 0.0, %v5244
        %5246 = vmatmul.f32.gmra.mxu0 %v5135
        %v5247 = vpop.f32.mrf.mxu0
        %v5248 = vadd.f32 0.0, %v5247
        %5249 = vmatmul.f32.gmra.mxu0 %v5138
        %v5250 = vpop.f32.mrf.mxu0
        %v5251 = vadd.f32 0.0, %v5250
        %5252 = vmatmul.f32.gmra.mxu0 %v5141
        %v5253 = vpop.f32.mrf.mxu0
        %v5254 = vadd.f32 0.0, %v5253
        %5255 = vmatmul.f32.gmra.mxu0 %v5144
        %v5256 = vpop.f32.mrf.mxu0
        %v5257 = vadd.f32 0.0, %v5256
        %5258 = vmatmul.f32.gmra.mxu0 %v5147
        %v5259 = vpop.f32.mrf.mxu0
        %v5260 = vadd.f32 0.0, %v5259
        %5261 = vmatmul.f32.gmra.mxu0 %v5150
        %v5262 = vpop.f32.mrf.mxu0
        %v5263 = vadd.f32 0.0, %v5262
        %5264 = vmatmul.f32.gmra.mxu0 %v5153
        %v5265 = vpop.f32.mrf.mxu0
        %v5266 = vadd.f32 0.0, %v5265
        %5267 = vmatmul.f32.gmra.mxu0 %v5156
        %v5268 = vpop.f32.mrf.mxu0
        %v5269 = vadd.f32 0.0, %v5268
        %5270 = vmatmul.f32.gmra.mxu0 %v5159
        %v5271 = vpop.f32.mrf.mxu0
        %v5272 = vadd.f32 0.0, %v5271
        %5273 = vmatmul.f32.gmra.mxu0 %v5162
        %v5274 = vpop.f32.mrf.mxu0
        %v5275 = vadd.f32 0.0, %v5274
        %5276 = vmatmul.f32.gmra.mxu0 %v5165
        %v5277 = vpop.f32.mrf.mxu0
        %v5278 = vadd.f32 0.0, %v5277
        %5279 = vmatmul.f32.gmra.mxu0 %v5168
        %v5280 = vpop.f32.mrf.mxu0
        %v5281 = vadd.f32 0.0, %v5280
        %5282 = vmatmul.f32.gmra.mxu0 %v5171
        %v5283 = vpop.f32.mrf.mxu0
        %v5284 = vadd.f32 0.0, %v5283
        %5285 = vmatmul.f32.gmra.mxu0 %v5174
        %v5286 = vpop.f32.mrf.mxu0
        %v5287 = vadd.f32 0.0, %v5286
        %5288 = vmatmul.f32.gmra.mxu0 %v5177
        %v5289 = vpop.f32.mrf.mxu0
        %v5290 = vadd.f32 0.0, %v5289
        %5291 = vmatmul.f32.gmra.mxu0 %v5180
        %v5292 = vpop.f32.mrf.mxu0
        %v5293 = vadd.f32 0.0, %v5292
        %5294 = vmatmul.f32.gmra.mxu0 %v5183
        %v5295 = vpop.f32.mrf.mxu0
        %v5296 = vadd.f32 0.0, %v5295
        %5297 = vmatmul.f32.gmra.mxu0 %v5186
        %v5298 = vpop.f32.mrf.mxu0
        %v5299 = vadd.f32 0.0, %v5298
        %5300 = vmatmul.f32.gmra.mxu0 %v5189
        %v5301 = vpop.f32.mrf.mxu0
        %v5302 = vadd.f32 0.0, %v5301
        %5303 = vdwg.mxu0
        %v5304 = vadd.f32 %v5028, %v5209
        %v5305 = vadd.f32 %v5029, %v5212
        %v5306 = vadd.f32 %v5030, %v5215
        %v5307 = vadd.f32 %v5031, %v5218
        %v5308 = vadd.f32 %v5032, %v5221
        %v5309 = vadd.f32 %v5033, %v5224
        %v5310 = vadd.f32 %v5034, %v5227
        %v5311 = vadd.f32 %v5035, %v5230
        %v5312 = vadd.f32 %v5036, %v5233
        %v5313 = vadd.f32 %v5037, %v5236
        %v5314 = vadd.f32 %v5038, %v5239
        %v5315 = vadd.f32 %v5039, %v5242
        %v5316 = vadd.f32 %v5040, %v5245
        %v5317 = vadd.f32 %v5041, %v5248
        %v5318 = vadd.f32 %v5042, %v5251
        %v5319 = vadd.f32 %v5043, %v5254
        %v5320 = vadd.f32 %v5044, %v5257
        %v5321 = vadd.f32 %v5045, %v5260
        %v5322 = vadd.f32 %v5046, %v5263
        %v5323 = vadd.f32 %v5047, %v5266
        %v5324 = vadd.f32 %v5048, %v5269
        %v5325 = vadd.f32 %v5049, %v5272
        %v5326 = vadd.f32 %v5050, %v5275
        %v5327 = vadd.f32 %v5051, %v5278
        %v5328 = vadd.f32 %v5052, %v5281
        %v5329 = vadd.f32 %v5053, %v5284
        %v5330 = vadd.f32 %v5054, %v5287
        %v5331 = vadd.f32 %v5055, %v5290
        %v5332 = vadd.f32 %v5056, %v5293
        %v5333 = vadd.f32 %v5057, %v5296
        %v5334 = vadd.f32 %v5058, %v5299
        %v5335 = vadd.f32 %v5059, %v5302
        %v5336 = vld [vmem:[%s3109 + $0x2] sm:$0xff]
        %v5337 = vld [vmem:[%s3109 + $0xa] sm:$0xff]
        %v5338 = vld [vmem:[%s3109 + $0x1a] sm:$0xff]
        %v5339 = vld [vmem:[%s3109 + $0x22] sm:$0xff]
        %v5340 = vld [vmem:[%s3109 + $0x32] sm:$0xff]
        %v5341 = vld [vmem:[%s3109 + $0x3a] sm:$0xff]
        %v5342 = vld [vmem:[%s3109 + $0x4a] sm:$0xff]
        %v5343 = vld [vmem:[%s3109 + $0x52] sm:$0xff]
        %v5344 = vld [vmem:[%s3109 + $0x62] sm:$0xff]
        %v5345 = vld [vmem:[%s3109 + $0x6a] sm:$0xff]
        %v5346 = vld [vmem:[%s3109 + $0x7a] sm:$0xff]
        %v5347 = vld [vmem:[%s3109 + $0x82] sm:$0xff]
        %v5348 = vld [vmem:[%s3109 + $0x92] sm:$0xff]
        %v5349 = vld [vmem:[%s3109 + $0x9a] sm:$0xff]
        %v5350 = vld [vmem:[%s3109 + $0xaa] sm:$0xff]
        %v5351 = vld [vmem:[%s3109 + $0xb2] sm:$0xff]
        %v5352 = vld [vmem:[%s3109 + $0xc2] sm:$0xff]
        %v5353 = vld [vmem:[%s3109 + $0xca] sm:$0xff]
        %v5354 = vld [vmem:[%s3109 + $0xda] sm:$0xff]
        %v5355 = vld [vmem:[%s3109 + $0xe2] sm:$0xff]
        %v5356 = vld [vmem:[%s3109 + $0xf2] sm:$0xff]
        %v5357 = vld [vmem:[%s3109 + $0xfa] sm:$0xff]
        %v5358 = vld [vmem:[%s3109 + $0x10a] sm:$0xff]
        %v5359 = vld [vmem:[%s3109 + $0x112] sm:$0xff]
        %v5360 = vld [vmem:[%s3109 + $0x122] sm:$0xff]
        %v5361 = vld [vmem:[%s3109 + $0x12a] sm:$0xff]
        %v5362 = vld [vmem:[%s3109 + $0x13a] sm:$0xff]
        %v5363 = vld [vmem:[%s3109 + $0x142] sm:$0xff]
        %v5364 = vld [vmem:[%s3109 + $0x152] sm:$0xff]
        %v5365 = vld [vmem:[%s3109 + $0x15a] sm:$0xff]
        %v5366 = vld [vmem:[%s3109 + $0x16a] sm:$0xff]
        %v5367 = vld [vmem:[%s3109 + $0x172] sm:$0xff]
        %s5368 = scalar_lea.vmem [#allocation9], 128
        %v5369 = vld [vmem:[%s5368] sm:$0xff]
        %v5370 = vld [vmem:[%s5368 + $0x8] sm:$0xff]
        %v5372 = vsel %vm3076, %v5336, 0
        %v5375 = vsel %vm3076, %v5337, 0
        %v5378 = vsel %vm3076, %v5338, 0
        %v5381 = vsel %vm3076, %v5339, 0
        %v5384 = vsel %vm3076, %v5340, 0
        %v5387 = vsel %vm3076, %v5341, 0
        %v5390 = vsel %vm3076, %v5342, 0
        %v5393 = vsel %vm3076, %v5343, 0
        %v5396 = vsel %vm3076, %v5344, 0
        %v5399 = vsel %vm3076, %v5345, 0
        %v5402 = vsel %vm3076, %v5346, 0
        %v5405 = vsel %vm3076, %v5347, 0
        %v5408 = vsel %vm3076, %v5348, 0
        %v5411 = vsel %vm3076, %v5349, 0
        %v5414 = vsel %vm3076, %v5350, 0
        %v5417 = vsel %vm3076, %v5351, 0
        %v5420 = vsel %vm3076, %v5352, 0
        %v5423 = vsel %vm3076, %v5353, 0
        %v5426 = vsel %vm3076, %v5354, 0
        %v5429 = vsel %vm3076, %v5355, 0
        %v5432 = vsel %vm3076, %v5356, 0
        %v5435 = vsel %vm3076, %v5357, 0
        %v5438 = vsel %vm3076, %v5358, 0
        %v5441 = vsel %vm3076, %v5359, 0
        %v5444 = vsel %vm3076, %v5360, 0
        %v5447 = vsel %vm3076, %v5361, 0
        %v5450 = vsel %vm3076, %v5362, 0
        %v5453 = vsel %vm3076, %v5363, 0
        %v5456 = vsel %vm3076, %v5364, 0
        %v5459 = vsel %vm3076, %v5365, 0
        %v5462 = vsel %vm3076, %v5366, 0
        %v5465 = vsel %vm3076, %v5367, 0
        %5467 = vmatpush.msra.mxu0 0.0
        %5468 = vmatpush.msra.mxu0 0.0
        %5469 = vmatpush.msra.mxu0 0.0
        %5470 = vmatpush.msra.mxu0 0.0
        %5471 = vmatpush.msra.mxu0 0.0
        %5472 = vmatpush.msra.mxu0 0.0
        %5473 = vmatpush.msra.mxu0 0.0
        %5474 = vmatpush.msra.mxu0 0.0
        %5475 = vmatpush.msra.mxu0 0.0
        %5476 = vmatpush.msra.mxu0 0.0
        %5477 = vmatpush.msra.mxu0 0.0
        %5478 = vmatpush.msra.mxu0 0.0
        %5479 = vmatpush.msra.mxu0 0.0
        %5480 = vmatpush.msra.mxu0 0.0
        %5481 = vmatpush.msra.mxu0 %v5370
        %5482 = vmatpush.msra.mxu0 %v5369
        %5483 = vmatmul.f32.gmra.mxu0 %v5372
        %v5484 = vpop.f32.mrf.mxu0
        %v5485 = vadd.f32 0.0, %v5484
        %5486 = vmatmul.f32.gmra.mxu0 %v5375
        %v5487 = vpop.f32.mrf.mxu0
        %v5488 = vadd.f32 0.0, %v5487
        %5489 = vmatmul.f32.gmra.mxu0 %v5378
        %v5490 = vpop.f32.mrf.mxu0
        %v5491 = vadd.f32 0.0, %v5490
        %5492 = vmatmul.f32.gmra.mxu0 %v5381
        %v5493 = vpop.f32.mrf.mxu0
        %v5494 = vadd.f32 0.0, %v5493
        %5495 = vmatmul.f32.gmra.mxu0 %v5384
        %v5496 = vpop.f32.mrf.mxu0
        %v5497 = vadd.f32 0.0, %v5496
        %5498 = vmatmul.f32.gmra.mxu0 %v5387
        %v5499 = vpop.f32.mrf.mxu0
        %v5500 = vadd.f32 0.0, %v5499
        %5501 = vmatmul.f32.gmra.mxu0 %v5390
        %v5502 = vpop.f32.mrf.mxu0
        %v5503 = vadd.f32 0.0, %v5502
        %5504 = vmatmul.f32.gmra.mxu0 %v5393
        %v5505 = vpop.f32.mrf.mxu0
        %v5506 = vadd.f32 0.0, %v5505
        %5507 = vmatmul.f32.gmra.mxu0 %v5396
        %v5508 = vpop.f32.mrf.mxu0
        %v5509 = vadd.f32 0.0, %v5508
        %5510 = vmatmul.f32.gmra.mxu0 %v5399
        %v5511 = vpop.f32.mrf.mxu0
        %v5512 = vadd.f32 0.0, %v5511
        %5513 = vmatmul.f32.gmra.mxu0 %v5402
        %v5514 = vpop.f32.mrf.mxu0
        %v5515 = vadd.f32 0.0, %v5514
        %5516 = vmatmul.f32.gmra.mxu0 %v5405
        %v5517 = vpop.f32.mrf.mxu0
        %v5518 = vadd.f32 0.0, %v5517
        %5519 = vmatmul.f32.gmra.mxu0 %v5408
        %v5520 = vpop.f32.mrf.mxu0
        %v5521 = vadd.f32 0.0, %v5520
        %5522 = vmatmul.f32.gmra.mxu0 %v5411
        %v5523 = vpop.f32.mrf.mxu0
        %v5524 = vadd.f32 0.0, %v5523
        %5525 = vmatmul.f32.gmra.mxu0 %v5414
        %v5526 = vpop.f32.mrf.mxu0
        %v5527 = vadd.f32 0.0, %v5526
        %5528 = vmatmul.f32.gmra.mxu0 %v5417
        %v5529 = vpop.f32.mrf.mxu0
        %v5530 = vadd.f32 0.0, %v5529
        %5531 = vmatmul.f32.gmra.mxu0 %v5420
        %v5532 = vpop.f32.mrf.mxu0
        %v5533 = vadd.f32 0.0, %v5532
        %5534 = vmatmul.f32.gmra.mxu0 %v5423
        %v5535 = vpop.f32.mrf.mxu0
        %v5536 = vadd.f32 0.0, %v5535
        %5537 = vmatmul.f32.gmra.mxu0 %v5426
        %v5538 = vpop.f32.mrf.mxu0
        %v5539 = vadd.f32 0.0, %v5538
        %5540 = vmatmul.f32.gmra.mxu0 %v5429
        %v5541 = vpop.f32.mrf.mxu0
        %v5542 = vadd.f32 0.0, %v5541
        %5543 = vmatmul.f32.gmra.mxu0 %v5432
        %v5544 = vpop.f32.mrf.mxu0
        %v5545 = vadd.f32 0.0, %v5544
        %5546 = vmatmul.f32.gmra.mxu0 %v5435
        %v5547 = vpop.f32.mrf.mxu0
        %v5548 = vadd.f32 0.0, %v5547
        %5549 = vmatmul.f32.gmra.mxu0 %v5438
        %v5550 = vpop.f32.mrf.mxu0
        %v5551 = vadd.f32 0.0, %v5550
        %5552 = vmatmul.f32.gmra.mxu0 %v5441
        %v5553 = vpop.f32.mrf.mxu0
        %v5554 = vadd.f32 0.0, %v5553
        %5555 = vmatmul.f32.gmra.mxu0 %v5444
        %v5556 = vpop.f32.mrf.mxu0
        %v5557 = vadd.f32 0.0, %v5556
        %5558 = vmatmul.f32.gmra.mxu0 %v5447
        %v5559 = vpop.f32.mrf.mxu0
        %v5560 = vadd.f32 0.0, %v5559
        %5561 = vmatmul.f32.gmra.mxu0 %v5450
        %v5562 = vpop.f32.mrf.mxu0
        %v5563 = vadd.f32 0.0, %v5562
        %5564 = vmatmul.f32.gmra.mxu0 %v5453
        %v5565 = vpop.f32.mrf.mxu0
        %v5566 = vadd.f32 0.0, %v5565
        %5567 = vmatmul.f32.gmra.mxu0 %v5456
        %v5568 = vpop.f32.mrf.mxu0
        %v5569 = vadd.f32 0.0, %v5568
        %5570 = vmatmul.f32.gmra.mxu0 %v5459
        %v5571 = vpop.f32.mrf.mxu0
        %v5572 = vadd.f32 0.0, %v5571
        %5573 = vmatmul.f32.gmra.mxu0 %v5462
        %v5574 = vpop.f32.mrf.mxu0
        %v5575 = vadd.f32 0.0, %v5574
        %5576 = vmatmul.f32.gmra.mxu0 %v5465
        %v5577 = vpop.f32.mrf.mxu0
        %v5578 = vadd.f32 0.0, %v5577
        %5579 = vdwg.mxu0
        %v5580 = vadd.f32 %v5304, %v5485
        %v5581 = vadd.f32 %v5305, %v5488
        %v5582 = vadd.f32 %v5306, %v5491
        %v5583 = vadd.f32 %v5307, %v5494
        %v5584 = vadd.f32 %v5308, %v5497
        %v5585 = vadd.f32 %v5309, %v5500
        %v5586 = vadd.f32 %v5310, %v5503
        %v5587 = vadd.f32 %v5311, %v5506
        %v5588 = vadd.f32 %v5312, %v5509
        %v5589 = vadd.f32 %v5313, %v5512
        %v5590 = vadd.f32 %v5314, %v5515
        %v5591 = vadd.f32 %v5315, %v5518
        %v5592 = vadd.f32 %v5316, %v5521
        %v5593 = vadd.f32 %v5317, %v5524
        %v5594 = vadd.f32 %v5318, %v5527
        %v5595 = vadd.f32 %v5319, %v5530
        %v5596 = vadd.f32 %v5320, %v5533
        %v5597 = vadd.f32 %v5321, %v5536
        %v5598 = vadd.f32 %v5322, %v5539
        %v5599 = vadd.f32 %v5323, %v5542
        %v5600 = vadd.f32 %v5324, %v5545
        %v5601 = vadd.f32 %v5325, %v5548
        %v5602 = vadd.f32 %v5326, %v5551
        %v5603 = vadd.f32 %v5327, %v5554
        %v5604 = vadd.f32 %v5328, %v5557
        %v5605 = vadd.f32 %v5329, %v5560
        %v5606 = vadd.f32 %v5330, %v5563
        %v5607 = vadd.f32 %v5331, %v5566
        %v5608 = vadd.f32 %v5332, %v5569
        %v5609 = vadd.f32 %v5333, %v5572
        %v5610 = vadd.f32 %v5334, %v5575
        %v5611 = vadd.f32 %v5335, %v5578
        %v5612 = vld [vmem:[%s4] sm:$0x1]
        %v5614 = vperm.slane %v5612, 0
        %v5616 = vadd.f32 %v5580, %v5614
        %v5617 = vadd.f32 %v5581, %v5614
        %v5618 = vadd.f32 %v5582, %v5614
        %v5619 = vadd.f32 %v5583, %v5614
        %v5620 = vadd.f32 %v5584, %v5614
        %v5621 = vadd.f32 %v5585, %v5614
        %v5622 = vadd.f32 %v5586, %v5614
        %v5623 = vadd.f32 %v5587, %v5614
        %v5624 = vadd.f32 %v5588, %v5614
        %v5625 = vadd.f32 %v5589, %v5614
        %v5626 = vadd.f32 %v5590, %v5614
        %v5627 = vadd.f32 %v5591, %v5614
        %v5628 = vadd.f32 %v5592, %v5614
        %v5629 = vadd.f32 %v5593, %v5614
        %v5630 = vadd.f32 %v5594, %v5614
        %v5631 = vadd.f32 %v5595, %v5614
        %v5632 = vadd.f32 %v5596, %v5614
        %v5633 = vadd.f32 %v5597, %v5614
        %v5634 = vadd.f32 %v5598, %v5614
        %v5635 = vadd.f32 %v5599, %v5614
        %v5636 = vadd.f32 %v5600, %v5614
        %v5637 = vadd.f32 %v5601, %v5614
        %v5638 = vadd.f32 %v5602, %v5614
        %v5639 = vadd.f32 %v5603, %v5614
        %v5640 = vadd.f32 %v5604, %v5614
        %v5641 = vadd.f32 %v5605, %v5614
        %v5642 = vadd.f32 %v5606, %v5614
        %v5643 = vadd.f32 %v5607, %v5614
        %v5644 = vadd.f32 %v5608, %v5614
        %v5645 = vadd.f32 %v5609, %v5614
        %v5646 = vadd.f32 %v5610, %v5614
        %v5647 = vadd.f32 %v5611, %v5614
        %v5648 = vmax.f32 %v5616, 0.0
        %v5649 = vmax.f32 %v5617, 0.0
        %v5650 = vmax.f32 %v5618, 0.0
        %v5651 = vmax.f32 %v5619, 0.0
        %v5652 = vmax.f32 %v5620, 0.0
        %v5653 = vmax.f32 %v5621, 0.0
        %v5654 = vmax.f32 %v5622, 0.0
        %v5655 = vmax.f32 %v5623, 0.0
        %v5656 = vmax.f32 %v5624, 0.0
        %v5657 = vmax.f32 %v5625, 0.0
        %v5658 = vmax.f32 %v5626, 0.0
        %v5659 = vmax.f32 %v5627, 0.0
        %v5660 = vmax.f32 %v5628, 0.0
        %v5661 = vmax.f32 %v5629, 0.0
        %v5662 = vmax.f32 %v5630, 0.0
        %v5663 = vmax.f32 %v5631, 0.0
        %v5664 = vmax.f32 %v5632, 0.0
        %v5665 = vmax.f32 %v5633, 0.0
        %v5666 = vmax.f32 %v5634, 0.0
        %v5667 = vmax.f32 %v5635, 0.0
        %v5668 = vmax.f32 %v5636, 0.0
        %v5669 = vmax.f32 %v5637, 0.0
        %v5670 = vmax.f32 %v5638, 0.0
        %v5671 = vmax.f32 %v5639, 0.0
        %v5672 = vmax.f32 %v5640, 0.0
        %v5673 = vmax.f32 %v5641, 0.0
        %v5674 = vmax.f32 %v5642, 0.0
        %v5675 = vmax.f32 %v5643, 0.0
        %v5676 = vmax.f32 %v5644, 0.0
        %v5677 = vmax.f32 %v5645, 0.0
        %v5678 = vmax.f32 %v5646, 0.0
        %v5679 = vmax.f32 %v5647, 0.0
        %5680 = vst.msk [vmem:[#allocation4] sm:$0xff] %vm3076, %v5648
        %5681 = vst.msk [vmem:[#allocation4 + $0x8] sm:$0xff] %vm3076, %v5649
        %5682 = vst.msk [vmem:[#allocation4 + $0x10] sm:$0xff] %vm3076, %v5650
        %5683 = vst.msk [vmem:[#allocation4 + $0x18] sm:$0xff] %vm3076, %v5651
        %5684 = vst.msk [vmem:[#allocation4 + $0x20] sm:$0xff] %vm3076, %v5652
        %5685 = vst.msk [vmem:[#allocation4 + $0x28] sm:$0xff] %vm3076, %v5653
        %5686 = vst.msk [vmem:[#allocation4 + $0x30] sm:$0xff] %vm3076, %v5654
        %5687 = vst.msk [vmem:[#allocation4 + $0x38] sm:$0xff] %vm3076, %v5655
        %5688 = vst.msk [vmem:[#allocation4 + $0x40] sm:$0xff] %vm3076, %v5656
        %5689 = vst.msk [vmem:[#allocation4 + $0x48] sm:$0xff] %vm3076, %v5657
        %5690 = vst.msk [vmem:[#allocation4 + $0x50] sm:$0xff] %vm3076, %v5658
        %5691 = vst.msk [vmem:[#allocation4 + $0x58] sm:$0xff] %vm3076, %v5659
        %5692 = vst.msk [vmem:[#allocation4 + $0x60] sm:$0xff] %vm3076, %v5660
        %5693 = vst.msk [vmem:[#allocation4 + $0x68] sm:$0xff] %vm3076, %v5661
        %5694 = vst.msk [vmem:[#allocation4 + $0x70] sm:$0xff] %vm3076, %v5662
        %5695 = vst.msk [vmem:[#allocation4 + $0x78] sm:$0xff] %vm3076, %v5663
        %5696 = vst.msk [vmem:[#allocation4 + $0x80] sm:$0xff] %vm3076, %v5664
        %5697 = vst.msk [vmem:[#allocation4 + $0x88] sm:$0xff] %vm3076, %v5665
        %5698 = vst.msk [vmem:[#allocation4 + $0x90] sm:$0xff] %vm3076, %v5666
        %5699 = vst.msk [vmem:[#allocation4 + $0x98] sm:$0xff] %vm3076, %v5667
        %5700 = vst.msk [vmem:[#allocation4 + $0xa0] sm:$0xff] %vm3076, %v5668
        %5701 = vst.msk [vmem:[#allocation4 + $0xa8] sm:$0xff] %vm3076, %v5669
        %5702 = vst.msk [vmem:[#allocation4 + $0xb0] sm:$0xff] %vm3076, %v5670
        %5703 = vst.msk [vmem:[#allocation4 + $0xb8] sm:$0xff] %vm3076, %v5671
        %5704 = vst.msk [vmem:[#allocation4 + $0xc0] sm:$0xff] %vm3076, %v5672
        %5705 = vst.msk [vmem:[#allocation4 + $0xc8] sm:$0xff] %vm3076, %v5673
        %5706 = vst.msk [vmem:[#allocation4 + $0xd0] sm:$0xff] %vm3076, %v5674
        %5707 = vst.msk [vmem:[#allocation4 + $0xd8] sm:$0xff] %vm3076, %v5675
        %5708 = vst.msk [vmem:[#allocation4 + $0xe0] sm:$0xff] %vm3076, %v5676
        %5709 = vst.msk [vmem:[#allocation4 + $0xe8] sm:$0xff] %vm3076, %v5677
        %5710 = vst.msk [vmem:[#allocation4 + $0xf0] sm:$0xff] %vm3076, %v5678
        %5711 = vst.msk [vmem:[#allocation4 + $0xf8] sm:$0xff] %vm3076, %v5679
        %v5712 = vld [vmem:[#allocation4] ss:$2 sm:$0xff]
        %s5713 = scalar_lea.vmem [#allocation4], 32
        %v5714 = vld [vmem:[%s5713] ss:$2 sm:$0xff]
        %s5715 = scalar_lea.vmem [#allocation4], 64
        %v5716 = vld [vmem:[%s5715] ss:$2 sm:$0xff]
        %s5717 = scalar_lea.vmem [#allocation4], 96
        %v5718 = vld [vmem:[%s5717] ss:$2 sm:$0xff]
        %s5719 = scalar_lea.vmem [#allocation4], 128
        %v5720 = vld [vmem:[%s5719] ss:$2 sm:$0xff]
        %s5721 = scalar_lea.vmem [#allocation4], 160
        %v5722 = vld [vmem:[%s5721] ss:$2 sm:$0xff]
        %s5723 = scalar_lea.vmem [#allocation4], 192
        %v5724 = vld [vmem:[%s5723] ss:$2 sm:$0xff]
        %s5725 = scalar_lea.vmem [#allocation4], 224
        %v5726 = vld [vmem:[%s5725] ss:$2 sm:$0xff]
        %s5727 = scalar_lea.vmem [#allocation4], 1
        %v5728 = vld [vmem:[%s5727] ss:$2 sm:$0xff]
        %s5729 = scalar_lea.vmem [#allocation4], 33
        %v5730 = vld [vmem:[%s5729] ss:$2 sm:$0xff]
        %s5731 = scalar_lea.vmem [#allocation4], 65
        %v5732 = vld [vmem:[%s5731] ss:$2 sm:$0xff]
        %s5733 = scalar_lea.vmem [#allocation4], 97
        %v5734 = vld [vmem:[%s5733] ss:$2 sm:$0xff]
        %s5735 = scalar_lea.vmem [#allocation4], 129
        %v5736 = vld [vmem:[%s5735] ss:$2 sm:$0xff]
        %s5737 = scalar_lea.vmem [#allocation4], 161
        %v5738 = vld [vmem:[%s5737] ss:$2 sm:$0xff]
        %s5739 = scalar_lea.vmem [#allocation4], 193
        %v5740 = vld [vmem:[%s5739] ss:$2 sm:$0xff]
        %s5741 = scalar_lea.vmem [#allocation4], 225
        %v5742 = vld [vmem:[%s5741] ss:$2 sm:$0xff]
        %s5743 = scalar_lea.vmem [#allocation4], 16
        %v5744 = vld [vmem:[%s5743] ss:$2 sm:$0xff]
        %s5745 = scalar_lea.vmem %s5743, 32 [#allocation4]
        %v5746 = vld [vmem:[%s5745] ss:$2 sm:$0xff]
        %s5747 = scalar_lea.vmem %s5743, 64 [#allocation4]
        %v5748 = vld [vmem:[%s5747] ss:$2 sm:$0xff]
        %s5749 = scalar_lea.vmem %s5743, 96 [#allocation4]
        %v5750 = vld [vmem:[%s5749] ss:$2 sm:$0xff]
        %s5751 = scalar_lea.vmem %s5743, 128 [#allocation4]
        %v5752 = vld [vmem:[%s5751] ss:$2 sm:$0xff]
        %s5753 = scalar_lea.vmem %s5743, 160 [#allocation4]
        %v5754 = vld [vmem:[%s5753] ss:$2 sm:$0xff]
        %s5755 = scalar_lea.vmem %s5743, 192 [#allocation4]
        %v5756 = vld [vmem:[%s5755] ss:$2 sm:$0xff]
        %s5757 = scalar_lea.vmem %s5743, 224 [#allocation4]
        %v5758 = vld [vmem:[%s5757] ss:$2 sm:$0xff]
        %s5759 = scalar_lea.vmem %s5743, 1 [#allocation4]
        %v5760 = vld [vmem:[%s5759] ss:$2 sm:$0xff]
        %s5761 = scalar_lea.vmem %s5743, 33 [#allocation4]
        %v5762 = vld [vmem:[%s5761] ss:$2 sm:$0xff]
        %s5763 = scalar_lea.vmem %s5743, 65 [#allocation4]
        %v5764 = vld [vmem:[%s5763] ss:$2 sm:$0xff]
        %s5765 = scalar_lea.vmem %s5743, 97 [#allocation4]
        %v5766 = vld [vmem:[%s5765] ss:$2 sm:$0xff]
        %s5767 = scalar_lea.vmem %s5743, 129 [#allocation4]
        %v5768 = vld [vmem:[%s5767] ss:$2 sm:$0xff]
        %s5769 = scalar_lea.vmem %s5743, 161 [#allocation4]
        %v5770 = vld [vmem:[%s5769] ss:$2 sm:$0xff]
        %s5771 = scalar_lea.vmem %s5743, 193 [#allocation4]
        %v5772 = vld [vmem:[%s5771] ss:$2 sm:$0xff]
        %s5773 = scalar_lea.vmem %s5743, 225 [#allocation4]
        %v5774 = vld [vmem:[%s5773] ss:$2 sm:$0xff]
        %v5775 = vmax.f32 %v5712, %v5728
        %v5776 = vmax.f32 %v5714, %v5730
        %v5777 = vmax.f32 %v5716, %v5732
        %v5778 = vmax.f32 %v5718, %v5734
        %v5779 = vmax.f32 %v5720, %v5736
        %v5780 = vmax.f32 %v5722, %v5738
        %v5781 = vmax.f32 %v5724, %v5740
        %v5782 = vmax.f32 %v5726, %v5742
        %v5783 = vmax.f32 %v5744, %v5760
        %v5784 = vmax.f32 %v5746, %v5762
        %v5785 = vmax.f32 %v5748, %v5764
        %v5786 = vmax.f32 %v5750, %v5766
        %v5787 = vmax.f32 %v5752, %v5768
        %v5788 = vmax.f32 %v5754, %v5770
        %v5789 = vmax.f32 %v5756, %v5772
        %v5790 = vmax.f32 %v5758, %v5774
        %v5791 = vmax.f32 %v5775, %v5783
        %v5792 = vmax.f32 %v5776, %v5784
        %v5793 = vmax.f32 %v5777, %v5785
        %v5794 = vmax.f32 %v5778, %v5786
        %v5795 = vmax.f32 %v5779, %v5787
        %v5796 = vmax.f32 %v5780, %v5788
        %v5797 = vmax.f32 %v5781, %v5789
        %v5798 = vmax.f32 %v5782, %v5790
        %s5799 = scalar_lea.vmem [#allocation5], 16
        %5800 = vst.msk [vmem:[%s5799 + $0x1] sm:$0xff] %vm3076, %v5791
        %5801 = vst.msk [vmem:[%s5799 + $0x11] sm:$0xff] %vm3076, %v5792
        %5802 = vst.msk [vmem:[%s5799 + $0x21] sm:$0xff] %vm3076, %v5793
        %5803 = vst.msk [vmem:[%s5799 + $0x31] sm:$0xff] %vm3076, %v5794
        %5804 = vst.msk [vmem:[%s5799 + $0x41] sm:$0xff] %vm3076, %v5795
        %5805 = vst.msk [vmem:[%s5799 + $0x51] sm:$0xff] %vm3076, %v5796
        %5806 = vst.msk [vmem:[%s5799 + $0x61] sm:$0xff] %vm3076, %v5797
        %5807 = vst.msk [vmem:[%s5799 + $0x71] sm:$0xff] %vm3076, %v5798
        %s5808 = scalar_lea.vmem [#allocation5], 32
        %v5809 = vld [vmem:[%s5808 + $0x1] sm:$0xff]
        %5810 = vst.msk [vmem:[#allocation5 + $0x1] sm:$0xff] %vm3076, %v5809
        %s5811 = scalar_lea.vmem [#allocation5], 112
        %v5812 = vld [vmem:[%s5811 + $0x1] sm:$0xff]
        %s5813 = scalar_lea.vmem [#allocation5], 144
        %5814 = vst.msk [vmem:[%s5813 + $0x1] sm:$0xff] %vm3076, %v5812
        %v5815 = vld [vmem:[#allocation5 + $0x2] sm:$0x1]
        %v5816 = vld [vmem:[#allocation5 + $0x12] sm:$0x1]
        %v5817 = vld [vmem:[#allocation5 + $0x22] sm:$0x1]
        %v5818 = vld [vmem:[#allocation5 + $0x32] sm:$0x1]
        %v5819 = vld [vmem:[#allocation5 + $0x42] sm:$0x1]
        %v5820 = vld [vmem:[#allocation5 + $0x52] sm:$0x1]
        %v5821 = vld [vmem:[#allocation5 + $0x62] sm:$0x1]
        %v5822 = vld [vmem:[#allocation5 + $0x72] sm:$0x1]
        %v5823 = vld [vmem:[#allocation5 + $0x82] sm:$0x1]
        %v5824 = vld [vmem:[#allocation5 + $0x92] sm:$0x1]
        %5825 = vst.msk [vmem:[#allocation5] sm:$0x1] %vm3138, %v5815
        %5826 = vst.msk [vmem:[#allocation5 + $0x10] sm:$0x1] %vm3138, %v5816
        %5827 = vst.msk [vmem:[#allocation5 + $0x20] sm:$0x1] %vm3138, %v5817
        %5828 = vst.msk [vmem:[#allocation5 + $0x30] sm:$0x1] %vm3138, %v5818
        %5829 = vst.msk [vmem:[#allocation5 + $0x40] sm:$0x1] %vm3138, %v5819
        %5830 = vst.msk [vmem:[#allocation5 + $0x50] sm:$0x1] %vm3138, %v5820
        %5831 = vst.msk [vmem:[#allocation5 + $0x60] sm:$0x1] %vm3138, %v5821
        %5832 = vst.msk [vmem:[#allocation5 + $0x70] sm:$0x1] %vm3138, %v5822
        %5833 = vst.msk [vmem:[#allocation5 + $0x80] sm:$0x1] %vm3138, %v5823
        %5834 = vst.msk [vmem:[#allocation5 + $0x90] sm:$0x1] %vm3138, %v5824
        %v5835 = vld [vmem:[#allocation5 + $0x7] sm:$0x1]
        %v5836 = vld [vmem:[#allocation5 + $0x17] sm:$0x1]
        %v5837 = vld [vmem:[#allocation5 + $0x27] sm:$0x1]
        %v5838 = vld [vmem:[#allocation5 + $0x37] sm:$0x1]
        %v5839 = vld [vmem:[#allocation5 + $0x47] sm:$0x1]
        %v5840 = vld [vmem:[#allocation5 + $0x57] sm:$0x1]
        %v5841 = vld [vmem:[#allocation5 + $0x67] sm:$0x1]
        %v5842 = vld [vmem:[#allocation5 + $0x77] sm:$0x1]
        %v5843 = vld [vmem:[#allocation5 + $0x87] sm:$0x1]
        %v5844 = vld [vmem:[#allocation5 + $0x97] sm:$0x1]
        %5845 = vst.msk [vmem:[#allocation5 + $0x9] sm:$0x1] %vm3138, %v5835
        %5846 = vst.msk [vmem:[#allocation5 + $0x19] sm:$0x1] %vm3138, %v5836
        %5847 = vst.msk [vmem:[#allocation5 + $0x29] sm:$0x1] %vm3138, %v5837
        %5848 = vst.msk [vmem:[#allocation5 + $0x39] sm:$0x1] %vm3138, %v5838
        %5849 = vst.msk [vmem:[#allocation5 + $0x49] sm:$0x1] %vm3138, %v5839
        %5850 = vst.msk [vmem:[#allocation5 + $0x59] sm:$0x1] %vm3138, %v5840
        %5851 = vst.msk [vmem:[#allocation5 + $0x69] sm:$0x1] %vm3138, %v5841
        %5852 = vst.msk [vmem:[#allocation5 + $0x79] sm:$0x1] %vm3138, %v5842
        %5853 = vst.msk [vmem:[#allocation5 + $0x89] sm:$0x1] %vm3138, %v5843
        %5854 = vst.msk [vmem:[#allocation5 + $0x99] sm:$0x1] %vm3138, %v5844
        %v5855 = vld [vmem:[#allocation5] sm:$0xff]
        %v5856 = vld [vmem:[#allocation5 + $0x10] sm:$0xff]
        %v5857 = vld [vmem:[#allocation5 + $0x20] sm:$0xff]
        %v5858 = vld [vmem:[#allocation5 + $0x30] sm:$0xff]
        %v5859 = vld [vmem:[#allocation5 + $0x40] sm:$0xff]
        %v5860 = vld [vmem:[#allocation5 + $0x50] sm:$0xff]
        %v5861 = vld [vmem:[#allocation5 + $0x60] sm:$0xff]
        %v5862 = vld [vmem:[#allocation5 + $0x70] sm:$0xff]
        %v5863 = vld [vmem:[#allocation12] sm:$0xff]
        %v5864 = vld [vmem:[#allocation12 + $0x8] sm:$0xff]
        %v5865 = vld [vmem:[#allocation5 + $0x1] sm:$0xff]
        %v5866 = vld [vmem:[#allocation5 + $0x11] sm:$0xff]
        %v5867 = vld [vmem:[#allocation5 + $0x21] sm:$0xff]
        %v5868 = vld [vmem:[#allocation5 + $0x31] sm:$0xff]
        %v5869 = vld [vmem:[#allocation5 + $0x41] sm:$0xff]
        %v5870 = vld [vmem:[#allocation5 + $0x51] sm:$0xff]
        %v5871 = vld [vmem:[#allocation5 + $0x61] sm:$0xff]
        %v5872 = vld [vmem:[#allocation5 + $0x71] sm:$0xff]
        %s5873 = scalar_lea.vmem [#allocation12], 16
        %v5874 = vld [vmem:[%s5873] sm:$0xff]
        %v5875 = vld [vmem:[%s5873 + $0x8] sm:$0xff]
        %v5877 = vsel %vm3076, %v5865, 0
        %v5880 = vsel %vm3076, %v5866, 0
        %v5883 = vsel %vm3076, %v5867, 0
        %v5886 = vsel %vm3076, %v5868, 0
        %v5889 = vsel %vm3076, %v5869, 0
        %v5892 = vsel %vm3076, %v5870, 0
        %v5895 = vsel %vm3076, %v5871, 0
        %v5898 = vsel %vm3076, %v5872, 0
        %5900 = vmatpush.msra.mxu0 0.0
        %5901 = vmatpush.msra.mxu0 0.0
        %5902 = vmatpush.msra.mxu0 0.0
        %5903 = vmatpush.msra.mxu0 0.0
        %5904 = vmatpush.msra.mxu0 0.0
        %5905 = vmatpush.msra.mxu0 0.0
        %5906 = vmatpush.msra.mxu0 0.0
        %5907 = vmatpush.msra.mxu0 0.0
        %5908 = vmatpush.msra.mxu0 0.0
        %5909 = vmatpush.msra.mxu0 0.0
        %5910 = vmatpush.msra.mxu0 0.0
        %5911 = vmatpush.msra.mxu0 0.0
        %5912 = vmatpush.msra.mxu0 0.0
        %5913 = vmatpush.msra.mxu0 0.0
        %5914 = vmatpush.msra.mxu0 %v5875
        %5915 = vmatpush.msra.mxu0 %v5874
        %5916 = vmatmul.f32.gmra.mxu0 %v5877
        %v5917 = vpop.f32.mrf.mxu0
        %v5918 = vadd.f32 0.0, %v5917
        %5919 = vmatmul.f32.gmra.mxu0 %v5880
        %v5920 = vpop.f32.mrf.mxu0
        %v5921 = vadd.f32 0.0, %v5920
        %5922 = vmatmul.f32.gmra.mxu0 %v5883
        %v5923 = vpop.f32.mrf.mxu0
        %v5924 = vadd.f32 0.0, %v5923
        %5925 = vmatmul.f32.gmra.mxu0 %v5886
        %v5926 = vpop.f32.mrf.mxu0
        %v5927 = vadd.f32 0.0, %v5926
        %5928 = vmatmul.f32.gmra.mxu0 %v5889
        %v5929 = vpop.f32.mrf.mxu0
        %v5930 = vadd.f32 0.0, %v5929
        %5931 = vmatmul.f32.gmra.mxu0 %v5892
        %v5932 = vpop.f32.mrf.mxu0
        %v5933 = vadd.f32 0.0, %v5932
        %5934 = vmatmul.f32.gmra.mxu0 %v5895
        %v5935 = vpop.f32.mrf.mxu0
        %v5936 = vadd.f32 0.0, %v5935
        %5937 = vmatmul.f32.gmra.mxu0 %v5898
        %v5938 = vpop.f32.mrf.mxu0
        %v5939 = vadd.f32 0.0, %v5938
        %5940 = vdwg.mxu0
        %v5942 = vsel %vm3076, %v5855, 0
        %v5945 = vsel %vm3076, %v5856, 0
        %v5948 = vsel %vm3076, %v5857, 0
        %v5951 = vsel %vm3076, %v5858, 0
        %v5954 = vsel %vm3076, %v5859, 0
        %v5957 = vsel %vm3076, %v5860, 0
        %v5960 = vsel %vm3076, %v5861, 0
        %v5963 = vsel %vm3076, %v5862, 0
        %5965 = vmatpush.msra.mxu0 0.0
        %5966 = vmatpush.msra.mxu0 0.0
        %5967 = vmatpush.msra.mxu0 0.0
        %5968 = vmatpush.msra.mxu0 0.0
        %5969 = vmatpush.msra.mxu0 0.0
        %5970 = vmatpush.msra.mxu0 0.0
        %5971 = vmatpush.msra.mxu0 0.0
        %5972 = vmatpush.msra.mxu0 0.0
        %5973 = vmatpush.msra.mxu0 0.0
        %5974 = vmatpush.msra.mxu0 0.0
        %5975 = vmatpush.msra.mxu0 0.0
        %5976 = vmatpush.msra.mxu0 0.0
        %5977 = vmatpush.msra.mxu0 0.0
        %5978 = vmatpush.msra.mxu0 0.0
        %5979 = vmatpush.msra.mxu0 %v5864
        %5980 = vmatpush.msra.mxu0 %v5863
        %5981 = vmatmul.f32.gmra.mxu0 %v5942
        %v5982 = vpop.f32.mrf.mxu0
        %v5983 = vadd.f32 %v5918, %v5982
        %5984 = vmatmul.f32.gmra.mxu0 %v5945
        %v5985 = vpop.f32.mrf.mxu0
        %v5986 = vadd.f32 %v5921, %v5985
        %5987 = vmatmul.f32.gmra.mxu0 %v5948
        %v5988 = vpop.f32.mrf.mxu0
        %v5989 = vadd.f32 %v5924, %v5988
        %5990 = vmatmul.f32.gmra.mxu0 %v5951
        %v5991 = vpop.f32.mrf.mxu0
        %v5992 = vadd.f32 %v5927, %v5991
        %5993 = vmatmul.f32.gmra.mxu0 %v5954
        %v5994 = vpop.f32.mrf.mxu0
        %v5995 = vadd.f32 %v5930, %v5994
        %5996 = vmatmul.f32.gmra.mxu0 %v5957
        %v5997 = vpop.f32.mrf.mxu0
        %v5998 = vadd.f32 %v5933, %v5997
        %5999 = vmatmul.f32.gmra.mxu0 %v5960
        %v6000 = vpop.f32.mrf.mxu0
        %v6001 = vadd.f32 %v5936, %v6000
        %6002 = vmatmul.f32.gmra.mxu0 %v5963
        %v6003 = vpop.f32.mrf.mxu0
        %v6004 = vadd.f32 %v5939, %v6003
        %6005 = vdwg.mxu0
        %v6006 = vld [vmem:[#allocation5 + $0x2] sm:$0xff]
        %v6007 = vld [vmem:[#allocation5 + $0x12] sm:$0xff]
        %v6008 = vld [vmem:[#allocation5 + $0x22] sm:$0xff]
        %v6009 = vld [vmem:[#allocation5 + $0x32] sm:$0xff]
        %v6010 = vld [vmem:[#allocation5 + $0x42] sm:$0xff]
        %v6011 = vld [vmem:[#allocation5 + $0x52] sm:$0xff]
        %v6012 = vld [vmem:[#allocation5 + $0x62] sm:$0xff]
        %v6013 = vld [vmem:[#allocation5 + $0x72] sm:$0xff]
        %s6014 = scalar_lea.vmem [#allocation12], 32
        %v6015 = vld [vmem:[%s6014] sm:$0xff]
        %v6016 = vld [vmem:[%s6014 + $0x8] sm:$0xff]
        %v6018 = vsel %vm3076, %v6006, 0
        %v6021 = vsel %vm3076, %v6007, 0
        %v6024 = vsel %vm3076, %v6008, 0
        %v6027 = vsel %vm3076, %v6009, 0
        %v6030 = vsel %vm3076, %v6010, 0
        %v6033 = vsel %vm3076, %v6011, 0
        %v6036 = vsel %vm3076, %v6012, 0
        %v6039 = vsel %vm3076, %v6013, 0
        %6041 = vmatpush.msra.mxu0 0.0
        %6042 = vmatpush.msra.mxu0 0.0
        %6043 = vmatpush.msra.mxu0 0.0
        %6044 = vmatpush.msra.mxu0 0.0
        %6045 = vmatpush.msra.mxu0 0.0
        %6046 = vmatpush.msra.mxu0 0.0
        %6047 = vmatpush.msra.mxu0 0.0
        %6048 = vmatpush.msra.mxu0 0.0
        %6049 = vmatpush.msra.mxu0 0.0
        %6050 = vmatpush.msra.mxu0 0.0
        %6051 = vmatpush.msra.mxu0 0.0
        %6052 = vmatpush.msra.mxu0 0.0
        %6053 = vmatpush.msra.mxu0 0.0
        %6054 = vmatpush.msra.mxu0 0.0
        %6055 = vmatpush.msra.mxu0 %v6016
        %6056 = vmatpush.msra.mxu0 %v6015
        %6057 = vmatmul.f32.gmra.mxu0 %v6018
        %v6058 = vpop.f32.mrf.mxu0
        %v6059 = vadd.f32 0.0, %v6058
        %6060 = vmatmul.f32.gmra.mxu0 %v6021
        %v6061 = vpop.f32.mrf.mxu0
        %v6062 = vadd.f32 0.0, %v6061
        %6063 = vmatmul.f32.gmra.mxu0 %v6024
        %v6064 = vpop.f32.mrf.mxu0
        %v6065 = vadd.f32 0.0, %v6064
        %6066 = vmatmul.f32.gmra.mxu0 %v6027
        %v6067 = vpop.f32.mrf.mxu0
        %v6068 = vadd.f32 0.0, %v6067
        %6069 = vmatmul.f32.gmra.mxu0 %v6030
        %v6070 = vpop.f32.mrf.mxu0
        %v6071 = vadd.f32 0.0, %v6070
        %6072 = vmatmul.f32.gmra.mxu0 %v6033
        %v6073 = vpop.f32.mrf.mxu0
        %v6074 = vadd.f32 0.0, %v6073
        %6075 = vmatmul.f32.gmra.mxu0 %v6036
        %v6076 = vpop.f32.mrf.mxu0
        %v6077 = vadd.f32 0.0, %v6076
        %6078 = vmatmul.f32.gmra.mxu0 %v6039
        %v6079 = vpop.f32.mrf.mxu0
        %v6080 = vadd.f32 0.0, %v6079
        %6081 = vdwg.mxu0
        %v6082 = vadd.f32 %v5983, %v6059
        %v6083 = vadd.f32 %v5986, %v6062
        %v6084 = vadd.f32 %v5989, %v6065
        %v6085 = vadd.f32 %v5992, %v6068
        %v6086 = vadd.f32 %v5995, %v6071
        %v6087 = vadd.f32 %v5998, %v6074
        %v6088 = vadd.f32 %v6001, %v6077
        %v6089 = vadd.f32 %v6004, %v6080
        %v6090 = vld [vmem:[%s5799] sm:$0xff]
        %v6091 = vld [vmem:[%s5799 + $0x10] sm:$0xff]
        %v6092 = vld [vmem:[%s5799 + $0x20] sm:$0xff]
        %v6093 = vld [vmem:[%s5799 + $0x30] sm:$0xff]
        %v6094 = vld [vmem:[%s5799 + $0x40] sm:$0xff]
        %v6095 = vld [vmem:[%s5799 + $0x50] sm:$0xff]
        %v6096 = vld [vmem:[%s5799 + $0x60] sm:$0xff]
        %v6097 = vld [vmem:[%s5799 + $0x70] sm:$0xff]
        %s6098 = scalar_lea.vmem [#allocation12], 48
        %v6099 = vld [vmem:[%s6098] sm:$0xff]
        %v6100 = vld [vmem:[%s6098 + $0x8] sm:$0xff]
        %v6102 = vsel %vm3076, %v6090, 0
        %v6105 = vsel %vm3076, %v6091, 0
        %v6108 = vsel %vm3076, %v6092, 0
        %v6111 = vsel %vm3076, %v6093, 0
        %v6114 = vsel %vm3076, %v6094, 0
        %v6117 = vsel %vm3076, %v6095, 0
        %v6120 = vsel %vm3076, %v6096, 0
        %v6123 = vsel %vm3076, %v6097, 0
        %6125 = vmatpush.msra.mxu0 0.0
        %6126 = vmatpush.msra.mxu0 0.0
        %6127 = vmatpush.msra.mxu0 0.0
        %6128 = vmatpush.msra.mxu0 0.0
        %6129 = vmatpush.msra.mxu0 0.0
        %6130 = vmatpush.msra.mxu0 0.0
        %6131 = vmatpush.msra.mxu0 0.0
        %6132 = vmatpush.msra.mxu0 0.0
        %6133 = vmatpush.msra.mxu0 0.0
        %6134 = vmatpush.msra.mxu0 0.0
        %6135 = vmatpush.msra.mxu0 0.0
        %6136 = vmatpush.msra.mxu0 0.0
        %6137 = vmatpush.msra.mxu0 0.0
        %6138 = vmatpush.msra.mxu0 0.0
        %6139 = vmatpush.msra.mxu0 %v6100
        %6140 = vmatpush.msra.mxu0 %v6099
        %6141 = vmatmul.f32.gmra.mxu0 %v6102
        %v6142 = vpop.f32.mrf.mxu0
        %v6143 = vadd.f32 0.0, %v6142
        %6144 = vmatmul.f32.gmra.mxu0 %v6105
        %v6145 = vpop.f32.mrf.mxu0
        %v6146 = vadd.f32 0.0, %v6145
        %6147 = vmatmul.f32.gmra.mxu0 %v6108
        %v6148 = vpop.f32.mrf.mxu0
        %v6149 = vadd.f32 0.0, %v6148
        %6150 = vmatmul.f32.gmra.mxu0 %v6111
        %v6151 = vpop.f32.mrf.mxu0
        %v6152 = vadd.f32 0.0, %v6151
        %6153 = vmatmul.f32.gmra.mxu0 %v6114
        %v6154 = vpop.f32.mrf.mxu0
        %v6155 = vadd.f32 0.0, %v6154
        %6156 = vmatmul.f32.gmra.mxu0 %v6117
        %v6157 = vpop.f32.mrf.mxu0
        %v6158 = vadd.f32 0.0, %v6157
        %6159 = vmatmul.f32.gmra.mxu0 %v6120
        %v6160 = vpop.f32.mrf.mxu0
        %v6161 = vadd.f32 0.0, %v6160
        %6162 = vmatmul.f32.gmra.mxu0 %v6123
        %v6163 = vpop.f32.mrf.mxu0
        %v6164 = vadd.f32 0.0, %v6163
        %6165 = vdwg.mxu0
        %v6166 = vadd.f32 %v6082, %v6143
        %v6167 = vadd.f32 %v6083, %v6146
        %v6168 = vadd.f32 %v6084, %v6149
        %v6169 = vadd.f32 %v6085, %v6152
        %v6170 = vadd.f32 %v6086, %v6155
        %v6171 = vadd.f32 %v6087, %v6158
        %v6172 = vadd.f32 %v6088, %v6161
        %v6173 = vadd.f32 %v6089, %v6164
        %v6174 = vld [vmem:[%s5799 + $0x1] sm:$0xff]
        %v6175 = vld [vmem:[%s5799 + $0x11] sm:$0xff]
        %v6176 = vld [vmem:[%s5799 + $0x21] sm:$0xff]
        %v6177 = vld [vmem:[%s5799 + $0x31] sm:$0xff]
        %v6178 = vld [vmem:[%s5799 + $0x41] sm:$0xff]
        %v6179 = vld [vmem:[%s5799 + $0x51] sm:$0xff]
        %v6180 = vld [vmem:[%s5799 + $0x61] sm:$0xff]
        %v6181 = vld [vmem:[%s5799 + $0x71] sm:$0xff]
        %s6182 = scalar_lea.vmem [#allocation12], 64
        %v6183 = vld [vmem:[%s6182] sm:$0xff]
        %v6184 = vld [vmem:[%s6182 + $0x8] sm:$0xff]
        %v6186 = vsel %vm3076, %v6174, 0
        %v6189 = vsel %vm3076, %v6175, 0
        %v6192 = vsel %vm3076, %v6176, 0
        %v6195 = vsel %vm3076, %v6177, 0
        %v6198 = vsel %vm3076, %v6178, 0
        %v6201 = vsel %vm3076, %v6179, 0
        %v6204 = vsel %vm3076, %v6180, 0
        %v6207 = vsel %vm3076, %v6181, 0
        %6209 = vmatpush.msra.mxu0 0.0
        %6210 = vmatpush.msra.mxu0 0.0
        %6211 = vmatpush.msra.mxu0 0.0
        %6212 = vmatpush.msra.mxu0 0.0
        %6213 = vmatpush.msra.mxu0 0.0
        %6214 = vmatpush.msra.mxu0 0.0
        %6215 = vmatpush.msra.mxu0 0.0
        %6216 = vmatpush.msra.mxu0 0.0
        %6217 = vmatpush.msra.mxu0 0.0
        %6218 = vmatpush.msra.mxu0 0.0
        %6219 = vmatpush.msra.mxu0 0.0
        %6220 = vmatpush.msra.mxu0 0.0
        %6221 = vmatpush.msra.mxu0 0.0
        %6222 = vmatpush.msra.mxu0 0.0
        %6223 = vmatpush.msra.mxu0 %v6184
        %6224 = vmatpush.msra.mxu0 %v6183
        %6225 = vmatmul.f32.gmra.mxu0 %v6186
        %v6226 = vpop.f32.mrf.mxu0
        %v6227 = vadd.f32 0.0, %v6226
        %6228 = vmatmul.f32.gmra.mxu0 %v6189
        %v6229 = vpop.f32.mrf.mxu0
        %v6230 = vadd.f32 0.0, %v6229
        %6231 = vmatmul.f32.gmra.mxu0 %v6192
        %v6232 = vpop.f32.mrf.mxu0
        %v6233 = vadd.f32 0.0, %v6232
        %6234 = vmatmul.f32.gmra.mxu0 %v6195
        %v6235 = vpop.f32.mrf.mxu0
        %v6236 = vadd.f32 0.0, %v6235
        %6237 = vmatmul.f32.gmra.mxu0 %v6198
        %v6238 = vpop.f32.mrf.mxu0
        %v6239 = vadd.f32 0.0, %v6238
        %6240 = vmatmul.f32.gmra.mxu0 %v6201
        %v6241 = vpop.f32.mrf.mxu0
        %v6242 = vadd.f32 0.0, %v6241
        %6243 = vmatmul.f32.gmra.mxu0 %v6204
        %v6244 = vpop.f32.mrf.mxu0
        %v6245 = vadd.f32 0.0, %v6244
        %6246 = vmatmul.f32.gmra.mxu0 %v6207
        %v6247 = vpop.f32.mrf.mxu0
        %v6248 = vadd.f32 0.0, %v6247
        %6249 = vdwg.mxu0
        %v6250 = vadd.f32 %v6166, %v6227
        %v6251 = vadd.f32 %v6167, %v6230
        %v6252 = vadd.f32 %v6168, %v6233
        %v6253 = vadd.f32 %v6169, %v6236
        %v6254 = vadd.f32 %v6170, %v6239
        %v6255 = vadd.f32 %v6171, %v6242
        %v6256 = vadd.f32 %v6172, %v6245
        %v6257 = vadd.f32 %v6173, %v6248
        %v6258 = vld [vmem:[%s5799 + $0x2] sm:$0xff]
        %v6259 = vld [vmem:[%s5799 + $0x12] sm:$0xff]
        %v6260 = vld [vmem:[%s5799 + $0x22] sm:$0xff]
        %v6261 = vld [vmem:[%s5799 + $0x32] sm:$0xff]
        %v6262 = vld [vmem:[%s5799 + $0x42] sm:$0xff]
        %v6263 = vld [vmem:[%s5799 + $0x52] sm:$0xff]
        %v6264 = vld [vmem:[%s5799 + $0x62] sm:$0xff]
        %v6265 = vld [vmem:[%s5799 + $0x72] sm:$0xff]
        %s6266 = scalar_lea.vmem [#allocation12], 80
        %v6267 = vld [vmem:[%s6266] sm:$0xff]
        %v6268 = vld [vmem:[%s6266 + $0x8] sm:$0xff]
        %v6270 = vsel %vm3076, %v6258, 0
        %v6273 = vsel %vm3076, %v6259, 0
        %v6276 = vsel %vm3076, %v6260, 0
        %v6279 = vsel %vm3076, %v6261, 0
        %v6282 = vsel %vm3076, %v6262, 0
        %v6285 = vsel %vm3076, %v6263, 0
        %v6288 = vsel %vm3076, %v6264, 0
        %v6291 = vsel %vm3076, %v6265, 0
        %6293 = vmatpush.msra.mxu0 0.0
        %6294 = vmatpush.msra.mxu0 0.0
        %6295 = vmatpush.msra.mxu0 0.0
        %6296 = vmatpush.msra.mxu0 0.0
        %6297 = vmatpush.msra.mxu0 0.0
        %6298 = vmatpush.msra.mxu0 0.0
        %6299 = vmatpush.msra.mxu0 0.0
        %6300 = vmatpush.msra.mxu0 0.0
        %6301 = vmatpush.msra.mxu0 0.0
        %6302 = vmatpush.msra.mxu0 0.0
        %6303 = vmatpush.msra.mxu0 0.0
        %6304 = vmatpush.msra.mxu0 0.0
        %6305 = vmatpush.msra.mxu0 0.0
        %6306 = vmatpush.msra.mxu0 0.0
        %6307 = vmatpush.msra.mxu0 %v6268
        %6308 = vmatpush.msra.mxu0 %v6267
        %6309 = vmatmul.f32.gmra.mxu0 %v6270
        %v6310 = vpop.f32.mrf.mxu0
        %v6311 = vadd.f32 0.0, %v6310
        %6312 = vmatmul.f32.gmra.mxu0 %v6273
        %v6313 = vpop.f32.mrf.mxu0
        %v6314 = vadd.f32 0.0, %v6313
        %6315 = vmatmul.f32.gmra.mxu0 %v6276
        %v6316 = vpop.f32.mrf.mxu0
        %v6317 = vadd.f32 0.0, %v6316
        %6318 = vmatmul.f32.gmra.mxu0 %v6279
        %v6319 = vpop.f32.mrf.mxu0
        %v6320 = vadd.f32 0.0, %v6319
        %6321 = vmatmul.f32.gmra.mxu0 %v6282
        %v6322 = vpop.f32.mrf.mxu0
        %v6323 = vadd.f32 0.0, %v6322
        %6324 = vmatmul.f32.gmra.mxu0 %v6285
        %v6325 = vpop.f32.mrf.mxu0
        %v6326 = vadd.f32 0.0, %v6325
        %6327 = vmatmul.f32.gmra.mxu0 %v6288
        %v6328 = vpop.f32.mrf.mxu0
        %v6329 = vadd.f32 0.0, %v6328
        %6330 = vmatmul.f32.gmra.mxu0 %v6291
        %v6331 = vpop.f32.mrf.mxu0
        %v6332 = vadd.f32 0.0, %v6331
        %6333 = vdwg.mxu0
        %v6334 = vadd.f32 %v6250, %v6311
        %v6335 = vadd.f32 %v6251, %v6314
        %v6336 = vadd.f32 %v6252, %v6317
        %v6337 = vadd.f32 %v6253, %v6320
        %v6338 = vadd.f32 %v6254, %v6323
        %v6339 = vadd.f32 %v6255, %v6326
        %v6340 = vadd.f32 %v6256, %v6329
        %v6341 = vadd.f32 %v6257, %v6332
        %v6342 = vld [vmem:[%s5808] sm:$0xff]
        %v6343 = vld [vmem:[%s5808 + $0x10] sm:$0xff]
        %v6344 = vld [vmem:[%s5808 + $0x20] sm:$0xff]
        %v6345 = vld [vmem:[%s5808 + $0x30] sm:$0xff]
        %v6346 = vld [vmem:[%s5808 + $0x40] sm:$0xff]
        %v6347 = vld [vmem:[%s5808 + $0x50] sm:$0xff]
        %v6348 = vld [vmem:[%s5808 + $0x60] sm:$0xff]
        %v6349 = vld [vmem:[%s5808 + $0x70] sm:$0xff]
        %s6350 = scalar_lea.vmem [#allocation12], 96
        %v6351 = vld [vmem:[%s6350] sm:$0xff]
        %v6352 = vld [vmem:[%s6350 + $0x8] sm:$0xff]
        %v6354 = vsel %vm3076, %v6342, 0
        %v6357 = vsel %vm3076, %v6343, 0
        %v6360 = vsel %vm3076, %v6344, 0
        %v6363 = vsel %vm3076, %v6345, 0
        %v6366 = vsel %vm3076, %v6346, 0
        %v6369 = vsel %vm3076, %v6347, 0
        %v6372 = vsel %vm3076, %v6348, 0
        %v6375 = vsel %vm3076, %v6349, 0
        %6377 = vmatpush.msra.mxu0 0.0
        %6378 = vmatpush.msra.mxu0 0.0
        %6379 = vmatpush.msra.mxu0 0.0
        %6380 = vmatpush.msra.mxu0 0.0
        %6381 = vmatpush.msra.mxu0 0.0
        %6382 = vmatpush.msra.mxu0 0.0
        %6383 = vmatpush.msra.mxu0 0.0
        %6384 = vmatpush.msra.mxu0 0.0
        %6385 = vmatpush.msra.mxu0 0.0
        %6386 = vmatpush.msra.mxu0 0.0
        %6387 = vmatpush.msra.mxu0 0.0
        %6388 = vmatpush.msra.mxu0 0.0
        %6389 = vmatpush.msra.mxu0 0.0
        %6390 = vmatpush.msra.mxu0 0.0
        %6391 = vmatpush.msra.mxu0 %v6352
        %6392 = vmatpush.msra.mxu0 %v6351
        %6393 = vmatmul.f32.gmra.mxu0 %v6354
        %v6394 = vpop.f32.mrf.mxu0
        %v6395 = vadd.f32 0.0, %v6394
        %6396 = vmatmul.f32.gmra.mxu0 %v6357
        %v6397 = vpop.f32.mrf.mxu0
        %v6398 = vadd.f32 0.0, %v6397
        %6399 = vmatmul.f32.gmra.mxu0 %v6360
        %v6400 = vpop.f32.mrf.mxu0
        %v6401 = vadd.f32 0.0, %v6400
        %6402 = vmatmul.f32.gmra.mxu0 %v6363
        %v6403 = vpop.f32.mrf.mxu0
        %v6404 = vadd.f32 0.0, %v6403
        %6405 = vmatmul.f32.gmra.mxu0 %v6366
        %v6406 = vpop.f32.mrf.mxu0
        %v6407 = vadd.f32 0.0, %v6406
        %6408 = vmatmul.f32.gmra.mxu0 %v6369
        %v6409 = vpop.f32.mrf.mxu0
        %v6410 = vadd.f32 0.0, %v6409
        %6411 = vmatmul.f32.gmra.mxu0 %v6372
        %v6412 = vpop.f32.mrf.mxu0
        %v6413 = vadd.f32 0.0, %v6412
        %6414 = vmatmul.f32.gmra.mxu0 %v6375
        %v6415 = vpop.f32.mrf.mxu0
        %v6416 = vadd.f32 0.0, %v6415
        %6417 = vdwg.mxu0
        %v6418 = vadd.f32 %v6334, %v6395
        %v6419 = vadd.f32 %v6335, %v6398
        %v6420 = vadd.f32 %v6336, %v6401
        %v6421 = vadd.f32 %v6337, %v6404
        %v6422 = vadd.f32 %v6338, %v6407
        %v6423 = vadd.f32 %v6339, %v6410
        %v6424 = vadd.f32 %v6340, %v6413
        %v6425 = vadd.f32 %v6341, %v6416
        %v6426 = vld [vmem:[%s5808 + $0x1] sm:$0xff]
        %v6427 = vld [vmem:[%s5808 + $0x11] sm:$0xff]
        %v6428 = vld [vmem:[%s5808 + $0x21] sm:$0xff]
        %v6429 = vld [vmem:[%s5808 + $0x31] sm:$0xff]
        %v6430 = vld [vmem:[%s5808 + $0x41] sm:$0xff]
        %v6431 = vld [vmem:[%s5808 + $0x51] sm:$0xff]
        %v6432 = vld [vmem:[%s5808 + $0x61] sm:$0xff]
        %v6433 = vld [vmem:[%s5808 + $0x71] sm:$0xff]
        %s6434 = scalar_lea.vmem [#allocation12], 112
        %v6435 = vld [vmem:[%s6434] sm:$0xff]
        %v6436 = vld [vmem:[%s6434 + $0x8] sm:$0xff]
        %v6438 = vsel %vm3076, %v6426, 0
        %v6441 = vsel %vm3076, %v6427, 0
        %v6444 = vsel %vm3076, %v6428, 0
        %v6447 = vsel %vm3076, %v6429, 0
        %v6450 = vsel %vm3076, %v6430, 0
        %v6453 = vsel %vm3076, %v6431, 0
        %v6456 = vsel %vm3076, %v6432, 0
        %v6459 = vsel %vm3076, %v6433, 0
        %6461 = vmatpush.msra.mxu0 0.0
        %6462 = vmatpush.msra.mxu0 0.0
        %6463 = vmatpush.msra.mxu0 0.0
        %6464 = vmatpush.msra.mxu0 0.0
        %6465 = vmatpush.msra.mxu0 0.0
        %6466 = vmatpush.msra.mxu0 0.0
        %6467 = vmatpush.msra.mxu0 0.0
        %6468 = vmatpush.msra.mxu0 0.0
        %6469 = vmatpush.msra.mxu0 0.0
        %6470 = vmatpush.msra.mxu0 0.0
        %6471 = vmatpush.msra.mxu0 0.0
        %6472 = vmatpush.msra.mxu0 0.0
        %6473 = vmatpush.msra.mxu0 0.0
        %6474 = vmatpush.msra.mxu0 0.0
        %6475 = vmatpush.msra.mxu0 %v6436
        %6476 = vmatpush.msra.mxu0 %v6435
        %6477 = vmatmul.f32.gmra.mxu0 %v6438
        %v6478 = vpop.f32.mrf.mxu0
        %v6479 = vadd.f32 0.0, %v6478
        %6480 = vmatmul.f32.gmra.mxu0 %v6441
        %v6481 = vpop.f32.mrf.mxu0
        %v6482 = vadd.f32 0.0, %v6481
        %6483 = vmatmul.f32.gmra.mxu0 %v6444
        %v6484 = vpop.f32.mrf.mxu0
        %v6485 = vadd.f32 0.0, %v6484
        %6486 = vmatmul.f32.gmra.mxu0 %v6447
        %v6487 = vpop.f32.mrf.mxu0
        %v6488 = vadd.f32 0.0, %v6487
        %6489 = vmatmul.f32.gmra.mxu0 %v6450
        %v6490 = vpop.f32.mrf.mxu0
        %v6491 = vadd.f32 0.0, %v6490
        %6492 = vmatmul.f32.gmra.mxu0 %v6453
        %v6493 = vpop.f32.mrf.mxu0
        %v6494 = vadd.f32 0.0, %v6493
        %6495 = vmatmul.f32.gmra.mxu0 %v6456
        %v6496 = vpop.f32.mrf.mxu0
        %v6497 = vadd.f32 0.0, %v6496
        %6498 = vmatmul.f32.gmra.mxu0 %v6459
        %v6499 = vpop.f32.mrf.mxu0
        %v6500 = vadd.f32 0.0, %v6499
        %6501 = vdwg.mxu0
        %v6502 = vadd.f32 %v6418, %v6479
        %v6503 = vadd.f32 %v6419, %v6482
        %v6504 = vadd.f32 %v6420, %v6485
        %v6505 = vadd.f32 %v6421, %v6488
        %v6506 = vadd.f32 %v6422, %v6491
        %v6507 = vadd.f32 %v6423, %v6494
        %v6508 = vadd.f32 %v6424, %v6497
        %v6509 = vadd.f32 %v6425, %v6500
        %v6510 = vld [vmem:[%s5808 + $0x2] sm:$0xff]
        %v6511 = vld [vmem:[%s5808 + $0x12] sm:$0xff]
        %v6512 = vld [vmem:[%s5808 + $0x22] sm:$0xff]
        %v6513 = vld [vmem:[%s5808 + $0x32] sm:$0xff]
        %v6514 = vld [vmem:[%s5808 + $0x42] sm:$0xff]
        %v6515 = vld [vmem:[%s5808 + $0x52] sm:$0xff]
        %v6516 = vld [vmem:[%s5808 + $0x62] sm:$0xff]
        %v6517 = vld [vmem:[%s5808 + $0x72] sm:$0xff]
        %s6518 = scalar_lea.vmem [#allocation12], 128
        %v6519 = vld [vmem:[%s6518] sm:$0xff]
        %v6520 = vld [vmem:[%s6518 + $0x8] sm:$0xff]
        %v6522 = vsel %vm3076, %v6510, 0
        %v6525 = vsel %vm3076, %v6511, 0
        %v6528 = vsel %vm3076, %v6512, 0
        %v6531 = vsel %vm3076, %v6513, 0
        %v6534 = vsel %vm3076, %v6514, 0
        %v6537 = vsel %vm3076, %v6515, 0
        %v6540 = vsel %vm3076, %v6516, 0
        %v6543 = vsel %vm3076, %v6517, 0
        %6545 = vmatpush.msra.mxu0 0.0
        %6546 = vmatpush.msra.mxu0 0.0
        %6547 = vmatpush.msra.mxu0 0.0
        %6548 = vmatpush.msra.mxu0 0.0
        %6549 = vmatpush.msra.mxu0 0.0
        %6550 = vmatpush.msra.mxu0 0.0
        %6551 = vmatpush.msra.mxu0 0.0
        %6552 = vmatpush.msra.mxu0 0.0
        %6553 = vmatpush.msra.mxu0 0.0
        %6554 = vmatpush.msra.mxu0 0.0
        %6555 = vmatpush.msra.mxu0 0.0
        %6556 = vmatpush.msra.mxu0 0.0
        %6557 = vmatpush.msra.mxu0 0.0
        %6558 = vmatpush.msra.mxu0 0.0
        %6559 = vmatpush.msra.mxu0 %v6520
        %6560 = vmatpush.msra.mxu0 %v6519
        %6561 = vmatmul.f32.gmra.mxu0 %v6522
        %v6562 = vpop.f32.mrf.mxu0
        %v6563 = vadd.f32 0.0, %v6562
        %6564 = vmatmul.f32.gmra.mxu0 %v6525
        %v6565 = vpop.f32.mrf.mxu0
        %v6566 = vadd.f32 0.0, %v6565
        %6567 = vmatmul.f32.gmra.mxu0 %v6528
        %v6568 = vpop.f32.mrf.mxu0
        %v6569 = vadd.f32 0.0, %v6568
        %6570 = vmatmul.f32.gmra.mxu0 %v6531
        %v6571 = vpop.f32.mrf.mxu0
        %v6572 = vadd.f32 0.0, %v6571
        %6573 = vmatmul.f32.gmra.mxu0 %v6534
        %v6574 = vpop.f32.mrf.mxu0
        %v6575 = vadd.f32 0.0, %v6574
        %6576 = vmatmul.f32.gmra.mxu0 %v6537
        %v6577 = vpop.f32.mrf.mxu0
        %v6578 = vadd.f32 0.0, %v6577
        %6579 = vmatmul.f32.gmra.mxu0 %v6540
        %v6580 = vpop.f32.mrf.mxu0
        %v6581 = vadd.f32 0.0, %v6580
        %6582 = vmatmul.f32.gmra.mxu0 %v6543
        %v6583 = vpop.f32.mrf.mxu0
        %v6584 = vadd.f32 0.0, %v6583
        %6585 = vdwg.mxu0
        %v6586 = vadd.f32 %v6502, %v6563
        %v6587 = vadd.f32 %v6503, %v6566
        %v6588 = vadd.f32 %v6504, %v6569
        %v6589 = vadd.f32 %v6505, %v6572
        %v6590 = vadd.f32 %v6506, %v6575
        %v6591 = vadd.f32 %v6507, %v6578
        %v6592 = vadd.f32 %v6508, %v6581
        %v6593 = vadd.f32 %v6509, %v6584
        %v6594 = vld [vmem:[%s6] sm:$0x1]
        %v6596 = vperm.slane %v6594, 0
        %v6598 = vadd.f32 %v6586, %v6596
        %v6599 = vadd.f32 %v6587, %v6596
        %v6600 = vadd.f32 %v6588, %v6596
        %v6601 = vadd.f32 %v6589, %v6596
        %v6602 = vadd.f32 %v6590, %v6596
        %v6603 = vadd.f32 %v6591, %v6596
        %v6604 = vadd.f32 %v6592, %v6596
        %v6605 = vadd.f32 %v6593, %v6596
        %v6606 = vmax.f32 %v6598, 0.0
        %v6607 = vmax.f32 %v6599, 0.0
        %v6608 = vmax.f32 %v6600, 0.0
        %v6609 = vmax.f32 %v6601, 0.0
        %v6610 = vmax.f32 %v6602, 0.0
        %v6611 = vmax.f32 %v6603, 0.0
        %v6612 = vmax.f32 %v6604, 0.0
        %v6613 = vmax.f32 %v6605, 0.0
        %s6614 = scalar_lea.vmem [#allocation6], 16
        %vm6615 = vcmask 261120
        %6616 = vst.msk [vmem:[%s6614 + $0x1] sm:$0xff] %vm6615, %v6606
        %6617 = vst.msk [vmem:[%s6614 + $0x11] sm:$0xff] %vm6615, %v6607
        %6618 = vst.msk [vmem:[%s6614 + $0x21] sm:$0xff] %vm6615, %v6608
        %6619 = vst.msk [vmem:[%s6614 + $0x31] sm:$0xff] %vm6615, %v6609
        %6620 = vst.msk [vmem:[%s6614 + $0x41] sm:$0xff] %vm6615, %v6610
        %6621 = vst.msk [vmem:[%s6614 + $0x51] sm:$0xff] %vm6615, %v6611
        %6622 = vst.msk [vmem:[%s6614 + $0x61] sm:$0xff] %vm6615, %v6612
        %6623 = vst.msk [vmem:[%s6614 + $0x71] sm:$0xff] %vm6615, %v6613
        %s6624 = scalar_lea.vmem [#allocation6], 32
        %v6625 = vld [vmem:[%s6624 + $0x1] sm:$0xff]
        %6626 = vst.msk [vmem:[#allocation6 + $0x1] sm:$0xff] %vm6615, %v6625
        %s6627 = scalar_lea.vmem [#allocation6], 112
        %v6628 = vld [vmem:[%s6627 + $0x1] sm:$0xff]
        %s6629 = scalar_lea.vmem [#allocation6], 144
        %6630 = vst.msk [vmem:[%s6629 + $0x1] sm:$0xff] %vm6615, %v6628
        %v6631 = vld [vmem:[#allocation6 + $0x2] sm:$0x1]
        %v6632 = vld [vmem:[#allocation6 + $0x12] sm:$0x1]
        %v6633 = vld [vmem:[#allocation6 + $0x22] sm:$0x1]
        %v6634 = vld [vmem:[#allocation6 + $0x32] sm:$0x1]
        %v6635 = vld [vmem:[#allocation6 + $0x42] sm:$0x1]
        %v6636 = vld [vmem:[#allocation6 + $0x52] sm:$0x1]
        %v6637 = vld [vmem:[#allocation6 + $0x62] sm:$0x1]
        %v6638 = vld [vmem:[#allocation6 + $0x72] sm:$0x1]
        %v6639 = vld [vmem:[#allocation6 + $0x82] sm:$0x1]
        %v6640 = vld [vmem:[#allocation6 + $0x92] sm:$0x1]
        %vm6641 = vcmask 253952
        %6642 = vst.msk [vmem:[#allocation6] sm:$0x1] %vm6641, %v6631
        %6643 = vst.msk [vmem:[#allocation6 + $0x10] sm:$0x1] %vm6641, %v6632
        %6644 = vst.msk [vmem:[#allocation6 + $0x20] sm:$0x1] %vm6641, %v6633
        %6645 = vst.msk [vmem:[#allocation6 + $0x30] sm:$0x1] %vm6641, %v6634
        %6646 = vst.msk [vmem:[#allocation6 + $0x40] sm:$0x1] %vm6641, %v6635
        %6647 = vst.msk [vmem:[#allocation6 + $0x50] sm:$0x1] %vm6641, %v6636
        %6648 = vst.msk [vmem:[#allocation6 + $0x60] sm:$0x1] %vm6641, %v6637
        %6649 = vst.msk [vmem:[#allocation6 + $0x70] sm:$0x1] %vm6641, %v6638
        %6650 = vst.msk [vmem:[#allocation6 + $0x80] sm:$0x1] %vm6641, %v6639
        %6651 = vst.msk [vmem:[#allocation6 + $0x90] sm:$0x1] %vm6641, %v6640
        %v6652 = vld [vmem:[#allocation6 + $0x7] sm:$0x1]
        %v6653 = vld [vmem:[#allocation6 + $0x17] sm:$0x1]
        %v6654 = vld [vmem:[#allocation6 + $0x27] sm:$0x1]
        %v6655 = vld [vmem:[#allocation6 + $0x37] sm:$0x1]
        %v6656 = vld [vmem:[#allocation6 + $0x47] sm:$0x1]
        %v6657 = vld [vmem:[#allocation6 + $0x57] sm:$0x1]
        %v6658 = vld [vmem:[#allocation6 + $0x67] sm:$0x1]
        %v6659 = vld [vmem:[#allocation6 + $0x77] sm:$0x1]
        %v6660 = vld [vmem:[#allocation6 + $0x87] sm:$0x1]
        %v6661 = vld [vmem:[#allocation6 + $0x97] sm:$0x1]
        %6662 = vst.msk [vmem:[#allocation6 + $0x9] sm:$0x1] %vm6641, %v6652
        %6663 = vst.msk [vmem:[#allocation6 + $0x19] sm:$0x1] %vm6641, %v6653
        %6664 = vst.msk [vmem:[#allocation6 + $0x29] sm:$0x1] %vm6641, %v6654
        %6665 = vst.msk [vmem:[#allocation6 + $0x39] sm:$0x1] %vm6641, %v6655
        %6666 = vst.msk [vmem:[#allocation6 + $0x49] sm:$0x1] %vm6641, %v6656
        %6667 = vst.msk [vmem:[#allocation6 + $0x59] sm:$0x1] %vm6641, %v6657
        %6668 = vst.msk [vmem:[#allocation6 + $0x69] sm:$0x1] %vm6641, %v6658
        %6669 = vst.msk [vmem:[#allocation6 + $0x79] sm:$0x1] %vm6641, %v6659
        %6670 = vst.msk [vmem:[#allocation6 + $0x89] sm:$0x1] %vm6641, %v6660
        %6671 = vst.msk [vmem:[#allocation6 + $0x99] sm:$0x1] %vm6641, %v6661
        %v6672 = vld [vmem:[#allocation6] sm:$0xff]
        %v6673 = vld [vmem:[#allocation6 + $0x10] sm:$0xff]
        %v6674 = vld [vmem:[#allocation6 + $0x20] sm:$0xff]
        %v6675 = vld [vmem:[#allocation6 + $0x30] sm:$0xff]
        %v6676 = vld [vmem:[#allocation6 + $0x40] sm:$0xff]
        %v6677 = vld [vmem:[#allocation6 + $0x50] sm:$0xff]
        %v6678 = vld [vmem:[#allocation6 + $0x60] sm:$0xff]
        %v6679 = vld [vmem:[#allocation6 + $0x70] sm:$0xff]
        %v6680 = vld [vmem:[%s7] sm:$0xff]
        %v6681 = vld [vmem:[%s7 + $0x8] sm:$0xff]
        %v6682 = vld [vmem:[%s7 + $0x10] sm:$0xff]
        %v6683 = vld [vmem:[%s7 + $0x18] sm:$0xff]
        %v6684 = vld [vmem:[#allocation6 + $0x1] sm:$0xff]
        %v6685 = vld [vmem:[#allocation6 + $0x11] sm:$0xff]
        %v6686 = vld [vmem:[#allocation6 + $0x21] sm:$0xff]
        %v6687 = vld [vmem:[#allocation6 + $0x31] sm:$0xff]
        %v6688 = vld [vmem:[#allocation6 + $0x41] sm:$0xff]
        %v6689 = vld [vmem:[#allocation6 + $0x51] sm:$0xff]
        %v6690 = vld [vmem:[#allocation6 + $0x61] sm:$0xff]
        %v6691 = vld [vmem:[#allocation6 + $0x71] sm:$0xff]
        %s6692 = scalar_lea.vmem %s7, 32
        %v6693 = vld [vmem:[%s6692] sm:$0xff]
        %v6694 = vld [vmem:[%s6692 + $0x8] sm:$0xff]
        %v6695 = vld [vmem:[%s6692 + $0x10] sm:$0xff]
        %v6696 = vld [vmem:[%s6692 + $0x18] sm:$0xff]
        %v6698 = vsel %vm6615, %v6684, 0
        %v6701 = vsel %vm6615, %v6685, 0
        %v6704 = vsel %vm6615, %v6686, 0
        %v6707 = vsel %vm6615, %v6687, 0
        %v6710 = vsel %vm6615, %v6688, 0
        %v6713 = vsel %vm6615, %v6689, 0
        %v6716 = vsel %vm6615, %v6690, 0
        %v6719 = vsel %vm6615, %v6691, 0
        %6721 = vmatpush.msra.mxu0 0.0
        %6722 = vmatpush.msra.mxu0 0.0
        %6723 = vmatpush.msra.mxu0 0.0
        %6724 = vmatpush.msra.mxu0 0.0
        %6725 = vmatpush.msra.mxu0 0.0
        %6726 = vmatpush.msra.mxu0 0.0
        %6727 = vmatpush.msra.mxu0 0.0
        %6728 = vmatpush.msra.mxu0 0.0
        %6729 = vmatpush.msra.mxu0 0.0
        %6730 = vmatpush.msra.mxu0 0.0
        %6731 = vmatpush.msra.mxu0 0.0
        %6732 = vmatpush.msra.mxu0 0.0
        %6733 = vmatpush.msra.mxu0 %v6696
        %6734 = vmatpush.msra.mxu0 %v6695
        %6735 = vmatpush.msra.mxu0 %v6694
        %6736 = vmatpush.msra.mxu0 %v6693
        %6737 = vmatmul.f32.gmra.mxu0 %v6698
        %v6738 = vpop.f32.mrf.mxu0
        %v6739 = vadd.f32 0.0, %v6738
        %6740 = vmatmul.f32.gmra.mxu0 %v6701
        %v6741 = vpop.f32.mrf.mxu0
        %v6742 = vadd.f32 0.0, %v6741
        %6743 = vmatmul.f32.gmra.mxu0 %v6704
        %v6744 = vpop.f32.mrf.mxu0
        %v6745 = vadd.f32 0.0, %v6744
        %6746 = vmatmul.f32.gmra.mxu0 %v6707
        %v6747 = vpop.f32.mrf.mxu0
        %v6748 = vadd.f32 0.0, %v6747
        %6749 = vmatmul.f32.gmra.mxu0 %v6710
        %v6750 = vpop.f32.mrf.mxu0
        %v6751 = vadd.f32 0.0, %v6750
        %6752 = vmatmul.f32.gmra.mxu0 %v6713
        %v6753 = vpop.f32.mrf.mxu0
        %v6754 = vadd.f32 0.0, %v6753
        %6755 = vmatmul.f32.gmra.mxu0 %v6716
        %v6756 = vpop.f32.mrf.mxu0
        %v6757 = vadd.f32 0.0, %v6756
        %6758 = vmatmul.f32.gmra.mxu0 %v6719
        %v6759 = vpop.f32.mrf.mxu0
        %v6760 = vadd.f32 0.0, %v6759
        %6761 = vdwg.mxu0
        %v6763 = vsel %vm6615, %v6672, 0
        %v6766 = vsel %vm6615, %v6673, 0
        %v6769 = vsel %vm6615, %v6674, 0
        %v6772 = vsel %vm6615, %v6675, 0
        %v6775 = vsel %vm6615, %v6676, 0
        %v6778 = vsel %vm6615, %v6677, 0
        %v6781 = vsel %vm6615, %v6678, 0
        %v6784 = vsel %vm6615, %v6679, 0
        %6786 = vmatpush.msra.mxu0 0.0
        %6787 = vmatpush.msra.mxu0 0.0
        %6788 = vmatpush.msra.mxu0 0.0
        %6789 = vmatpush.msra.mxu0 0.0
        %6790 = vmatpush.msra.mxu0 0.0
        %6791 = vmatpush.msra.mxu0 0.0
        %6792 = vmatpush.msra.mxu0 0.0
        %6793 = vmatpush.msra.mxu0 0.0
        %6794 = vmatpush.msra.mxu0 0.0
        %6795 = vmatpush.msra.mxu0 0.0
        %6796 = vmatpush.msra.mxu0 0.0
        %6797 = vmatpush.msra.mxu0 0.0
        %6798 = vmatpush.msra.mxu0 %v6683
        %6799 = vmatpush.msra.mxu0 %v6682
        %6800 = vmatpush.msra.mxu0 %v6681
        %6801 = vmatpush.msra.mxu0 %v6680
        %6802 = vmatmul.f32.gmra.mxu0 %v6763
        %v6803 = vpop.f32.mrf.mxu0
        %v6804 = vadd.f32 %v6739, %v6803
        %6805 = vmatmul.f32.gmra.mxu0 %v6766
        %v6806 = vpop.f32.mrf.mxu0
        %v6807 = vadd.f32 %v6742, %v6806
        %6808 = vmatmul.f32.gmra.mxu0 %v6769
        %v6809 = vpop.f32.mrf.mxu0
        %v6810 = vadd.f32 %v6745, %v6809
        %6811 = vmatmul.f32.gmra.mxu0 %v6772
        %v6812 = vpop.f32.mrf.mxu0
        %v6813 = vadd.f32 %v6748, %v6812
        %6814 = vmatmul.f32.gmra.mxu0 %v6775
        %v6815 = vpop.f32.mrf.mxu0
        %v6816 = vadd.f32 %v6751, %v6815
        %6817 = vmatmul.f32.gmra.mxu0 %v6778
        %v6818 = vpop.f32.mrf.mxu0
        %v6819 = vadd.f32 %v6754, %v6818
        %6820 = vmatmul.f32.gmra.mxu0 %v6781
        %v6821 = vpop.f32.mrf.mxu0
        %v6822 = vadd.f32 %v6757, %v6821
        %6823 = vmatmul.f32.gmra.mxu0 %v6784
        %v6824 = vpop.f32.mrf.mxu0
        %v6825 = vadd.f32 %v6760, %v6824
        %6826 = vdwg.mxu0
        %v6827 = vld [vmem:[#allocation6 + $0x2] sm:$0xff]
        %v6828 = vld [vmem:[#allocation6 + $0x12] sm:$0xff]
        %v6829 = vld [vmem:[#allocation6 + $0x22] sm:$0xff]
        %v6830 = vld [vmem:[#allocation6 + $0x32] sm:$0xff]
        %v6831 = vld [vmem:[#allocation6 + $0x42] sm:$0xff]
        %v6832 = vld [vmem:[#allocation6 + $0x52] sm:$0xff]
        %v6833 = vld [vmem:[#allocation6 + $0x62] sm:$0xff]
        %v6834 = vld [vmem:[#allocation6 + $0x72] sm:$0xff]
        %s6835 = scalar_lea.vmem %s7, 64
        %v6836 = vld [vmem:[%s6835] sm:$0xff]
        %v6837 = vld [vmem:[%s6835 + $0x8] sm:$0xff]
        %v6838 = vld [vmem:[%s6835 + $0x10] sm:$0xff]
        %v6839 = vld [vmem:[%s6835 + $0x18] sm:$0xff]
        %v6841 = vsel %vm6615, %v6827, 0
        %v6844 = vsel %vm6615, %v6828, 0
        %v6847 = vsel %vm6615, %v6829, 0
        %v6850 = vsel %vm6615, %v6830, 0
        %v6853 = vsel %vm6615, %v6831, 0
        %v6856 = vsel %vm6615, %v6832, 0
        %v6859 = vsel %vm6615, %v6833, 0
        %v6862 = vsel %vm6615, %v6834, 0
        %6864 = vmatpush.msra.mxu0 0.0
        %6865 = vmatpush.msra.mxu0 0.0
        %6866 = vmatpush.msra.mxu0 0.0
        %6867 = vmatpush.msra.mxu0 0.0
        %6868 = vmatpush.msra.mxu0 0.0
        %6869 = vmatpush.msra.mxu0 0.0
        %6870 = vmatpush.msra.mxu0 0.0
        %6871 = vmatpush.msra.mxu0 0.0
        %6872 = vmatpush.msra.mxu0 0.0
        %6873 = vmatpush.msra.mxu0 0.0
        %6874 = vmatpush.msra.mxu0 0.0
        %6875 = vmatpush.msra.mxu0 0.0
        %6876 = vmatpush.msra.mxu0 %v6839
        %6877 = vmatpush.msra.mxu0 %v6838
        %6878 = vmatpush.msra.mxu0 %v6837
        %6879 = vmatpush.msra.mxu0 %v6836
        %6880 = vmatmul.f32.gmra.mxu0 %v6841
        %v6881 = vpop.f32.mrf.mxu0
        %v6882 = vadd.f32 0.0, %v6881
        %6883 = vmatmul.f32.gmra.mxu0 %v6844
        %v6884 = vpop.f32.mrf.mxu0
        %v6885 = vadd.f32 0.0, %v6884
        %6886 = vmatmul.f32.gmra.mxu0 %v6847
        %v6887 = vpop.f32.mrf.mxu0
        %v6888 = vadd.f32 0.0, %v6887
        %6889 = vmatmul.f32.gmra.mxu0 %v6850
        %v6890 = vpop.f32.mrf.mxu0
        %v6891 = vadd.f32 0.0, %v6890
        %6892 = vmatmul.f32.gmra.mxu0 %v6853
        %v6893 = vpop.f32.mrf.mxu0
        %v6894 = vadd.f32 0.0, %v6893
        %6895 = vmatmul.f32.gmra.mxu0 %v6856
        %v6896 = vpop.f32.mrf.mxu0
        %v6897 = vadd.f32 0.0, %v6896
        %6898 = vmatmul.f32.gmra.mxu0 %v6859
        %v6899 = vpop.f32.mrf.mxu0
        %v6900 = vadd.f32 0.0, %v6899
        %6901 = vmatmul.f32.gmra.mxu0 %v6862
        %v6902 = vpop.f32.mrf.mxu0
        %v6903 = vadd.f32 0.0, %v6902
        %6904 = vdwg.mxu0
        %v6905 = vadd.f32 %v6804, %v6882
        %v6906 = vadd.f32 %v6807, %v6885
        %v6907 = vadd.f32 %v6810, %v6888
        %v6908 = vadd.f32 %v6813, %v6891
        %v6909 = vadd.f32 %v6816, %v6894
        %v6910 = vadd.f32 %v6819, %v6897
        %v6911 = vadd.f32 %v6822, %v6900
        %v6912 = vadd.f32 %v6825, %v6903
        %v6913 = vld [vmem:[%s6614] sm:$0xff]
        %v6914 = vld [vmem:[%s6614 + $0x10] sm:$0xff]
        %v6915 = vld [vmem:[%s6614 + $0x20] sm:$0xff]
        %v6916 = vld [vmem:[%s6614 + $0x30] sm:$0xff]
        %v6917 = vld [vmem:[%s6614 + $0x40] sm:$0xff]
        %v6918 = vld [vmem:[%s6614 + $0x50] sm:$0xff]
        %v6919 = vld [vmem:[%s6614 + $0x60] sm:$0xff]
        %v6920 = vld [vmem:[%s6614 + $0x70] sm:$0xff]
        %s6921 = scalar_lea.vmem %s7, 96
        %v6922 = vld [vmem:[%s6921] sm:$0xff]
        %v6923 = vld [vmem:[%s6921 + $0x8] sm:$0xff]
        %v6924 = vld [vmem:[%s6921 + $0x10] sm:$0xff]
        %v6925 = vld [vmem:[%s6921 + $0x18] sm:$0xff]
        %v6927 = vsel %vm6615, %v6913, 0
        %v6930 = vsel %vm6615, %v6914, 0
        %v6933 = vsel %vm6615, %v6915, 0
        %v6936 = vsel %vm6615, %v6916, 0
        %v6939 = vsel %vm6615, %v6917, 0
        %v6942 = vsel %vm6615, %v6918, 0
        %v6945 = vsel %vm6615, %v6919, 0
        %v6948 = vsel %vm6615, %v6920, 0
        %6950 = vmatpush.msra.mxu0 0.0
        %6951 = vmatpush.msra.mxu0 0.0
        %6952 = vmatpush.msra.mxu0 0.0
        %6953 = vmatpush.msra.mxu0 0.0
        %6954 = vmatpush.msra.mxu0 0.0
        %6955 = vmatpush.msra.mxu0 0.0
        %6956 = vmatpush.msra.mxu0 0.0
        %6957 = vmatpush.msra.mxu0 0.0
        %6958 = vmatpush.msra.mxu0 0.0
        %6959 = vmatpush.msra.mxu0 0.0
        %6960 = vmatpush.msra.mxu0 0.0
        %6961 = vmatpush.msra.mxu0 0.0
        %6962 = vmatpush.msra.mxu0 %v6925
        %6963 = vmatpush.msra.mxu0 %v6924
        %6964 = vmatpush.msra.mxu0 %v6923
        %6965 = vmatpush.msra.mxu0 %v6922
        %6966 = vmatmul.f32.gmra.mxu0 %v6927
        %v6967 = vpop.f32.mrf.mxu0
        %v6968 = vadd.f32 0.0, %v6967
        %6969 = vmatmul.f32.gmra.mxu0 %v6930
        %v6970 = vpop.f32.mrf.mxu0
        %v6971 = vadd.f32 0.0, %v6970
        %6972 = vmatmul.f32.gmra.mxu0 %v6933
        %v6973 = vpop.f32.mrf.mxu0
        %v6974 = vadd.f32 0.0, %v6973
        %6975 = vmatmul.f32.gmra.mxu0 %v6936
        %v6976 = vpop.f32.mrf.mxu0
        %v6977 = vadd.f32 0.0, %v6976
        %6978 = vmatmul.f32.gmra.mxu0 %v6939
        %v6979 = vpop.f32.mrf.mxu0
        %v6980 = vadd.f32 0.0, %v6979
        %6981 = vmatmul.f32.gmra.mxu0 %v6942
        %v6982 = vpop.f32.mrf.mxu0
        %v6983 = vadd.f32 0.0, %v6982
        %6984 = vmatmul.f32.gmra.mxu0 %v6945
        %v6985 = vpop.f32.mrf.mxu0
        %v6986 = vadd.f32 0.0, %v6985
        %6987 = vmatmul.f32.gmra.mxu0 %v6948
        %v6988 = vpop.f32.mrf.mxu0
        %v6989 = vadd.f32 0.0, %v6988
        %6990 = vdwg.mxu0
        %v6991 = vadd.f32 %v6905, %v6968
        %v6992 = vadd.f32 %v6906, %v6971
        %v6993 = vadd.f32 %v6907, %v6974
        %v6994 = vadd.f32 %v6908, %v6977
        %v6995 = vadd.f32 %v6909, %v6980
        %v6996 = vadd.f32 %v6910, %v6983
        %v6997 = vadd.f32 %v6911, %v6986
        %v6998 = vadd.f32 %v6912, %v6989
        %v6999 = vld [vmem:[%s6614 + $0x1] sm:$0xff]
        %v7000 = vld [vmem:[%s6614 + $0x11] sm:$0xff]
        %v7001 = vld [vmem:[%s6614 + $0x21] sm:$0xff]
        %v7002 = vld [vmem:[%s6614 + $0x31] sm:$0xff]
        %v7003 = vld [vmem:[%s6614 + $0x41] sm:$0xff]
        %v7004 = vld [vmem:[%s6614 + $0x51] sm:$0xff]
        %v7005 = vld [vmem:[%s6614 + $0x61] sm:$0xff]
        %v7006 = vld [vmem:[%s6614 + $0x71] sm:$0xff]
        %s7007 = scalar_lea.vmem %s7, 128
        %v7008 = vld [vmem:[%s7007] sm:$0xff]
        %v7009 = vld [vmem:[%s7007 + $0x8] sm:$0xff]
        %v7010 = vld [vmem:[%s7007 + $0x10] sm:$0xff]
        %v7011 = vld [vmem:[%s7007 + $0x18] sm:$0xff]
        %v7013 = vsel %vm6615, %v6999, 0
        %v7016 = vsel %vm6615, %v7000, 0
        %v7019 = vsel %vm6615, %v7001, 0
        %v7022 = vsel %vm6615, %v7002, 0
        %v7025 = vsel %vm6615, %v7003, 0
        %v7028 = vsel %vm6615, %v7004, 0
        %v7031 = vsel %vm6615, %v7005, 0
        %v7034 = vsel %vm6615, %v7006, 0
        %7036 = vmatpush.msra.mxu0 0.0
        %7037 = vmatpush.msra.mxu0 0.0
        %7038 = vmatpush.msra.mxu0 0.0
        %7039 = vmatpush.msra.mxu0 0.0
        %7040 = vmatpush.msra.mxu0 0.0
        %7041 = vmatpush.msra.mxu0 0.0
        %7042 = vmatpush.msra.mxu0 0.0
        %7043 = vmatpush.msra.mxu0 0.0
        %7044 = vmatpush.msra.mxu0 0.0
        %7045 = vmatpush.msra.mxu0 0.0
        %7046 = vmatpush.msra.mxu0 0.0
        %7047 = vmatpush.msra.mxu0 0.0
        %7048 = vmatpush.msra.mxu0 %v7011
        %7049 = vmatpush.msra.mxu0 %v7010
        %7050 = vmatpush.msra.mxu0 %v7009
        %7051 = vmatpush.msra.mxu0 %v7008
        %7052 = vmatmul.f32.gmra.mxu0 %v7013
        %v7053 = vpop.f32.mrf.mxu0
        %v7054 = vadd.f32 0.0, %v7053
        %7055 = vmatmul.f32.gmra.mxu0 %v7016
        %v7056 = vpop.f32.mrf.mxu0
        %v7057 = vadd.f32 0.0, %v7056
        %7058 = vmatmul.f32.gmra.mxu0 %v7019
        %v7059 = vpop.f32.mrf.mxu0
        %v7060 = vadd.f32 0.0, %v7059
        %7061 = vmatmul.f32.gmra.mxu0 %v7022
        %v7062 = vpop.f32.mrf.mxu0
        %v7063 = vadd.f32 0.0, %v7062
        %7064 = vmatmul.f32.gmra.mxu0 %v7025
        %v7065 = vpop.f32.mrf.mxu0
        %v7066 = vadd.f32 0.0, %v7065
        %7067 = vmatmul.f32.gmra.mxu0 %v7028
        %v7068 = vpop.f32.mrf.mxu0
        %v7069 = vadd.f32 0.0, %v7068
        %7070 = vmatmul.f32.gmra.mxu0 %v7031
        %v7071 = vpop.f32.mrf.mxu0
        %v7072 = vadd.f32 0.0, %v7071
        %7073 = vmatmul.f32.gmra.mxu0 %v7034
        %v7074 = vpop.f32.mrf.mxu0
        %v7075 = vadd.f32 0.0, %v7074
        %7076 = vdwg.mxu0
        %v7077 = vadd.f32 %v6991, %v7054
        %v7078 = vadd.f32 %v6992, %v7057
        %v7079 = vadd.f32 %v6993, %v7060
        %v7080 = vadd.f32 %v6994, %v7063
        %v7081 = vadd.f32 %v6995, %v7066
        %v7082 = vadd.f32 %v6996, %v7069
        %v7083 = vadd.f32 %v6997, %v7072
        %v7084 = vadd.f32 %v6998, %v7075
        %v7085 = vld [vmem:[%s6614 + $0x2] sm:$0xff]
        %v7086 = vld [vmem:[%s6614 + $0x12] sm:$0xff]
        %v7087 = vld [vmem:[%s6614 + $0x22] sm:$0xff]
        %v7088 = vld [vmem:[%s6614 + $0x32] sm:$0xff]
        %v7089 = vld [vmem:[%s6614 + $0x42] sm:$0xff]
        %v7090 = vld [vmem:[%s6614 + $0x52] sm:$0xff]
        %v7091 = vld [vmem:[%s6614 + $0x62] sm:$0xff]
        %v7092 = vld [vmem:[%s6614 + $0x72] sm:$0xff]
        %s7093 = scalar_lea.vmem %s7, 160
        %v7094 = vld [vmem:[%s7093] sm:$0xff]
        %v7095 = vld [vmem:[%s7093 + $0x8] sm:$0xff]
        %v7096 = vld [vmem:[%s7093 + $0x10] sm:$0xff]
        %v7097 = vld [vmem:[%s7093 + $0x18] sm:$0xff]
        %v7099 = vsel %vm6615, %v7085, 0
        %v7102 = vsel %vm6615, %v7086, 0
        %v7105 = vsel %vm6615, %v7087, 0
        %v7108 = vsel %vm6615, %v7088, 0
        %v7111 = vsel %vm6615, %v7089, 0
        %v7114 = vsel %vm6615, %v7090, 0
        %v7117 = vsel %vm6615, %v7091, 0
        %v7120 = vsel %vm6615, %v7092, 0
        %7122 = vmatpush.msra.mxu0 0.0
        %7123 = vmatpush.msra.mxu0 0.0
        %7124 = vmatpush.msra.mxu0 0.0
        %7125 = vmatpush.msra.mxu0 0.0
        %7126 = vmatpush.msra.mxu0 0.0
        %7127 = vmatpush.msra.mxu0 0.0
        %7128 = vmatpush.msra.mxu0 0.0
        %7129 = vmatpush.msra.mxu0 0.0
        %7130 = vmatpush.msra.mxu0 0.0
        %7131 = vmatpush.msra.mxu0 0.0
        %7132 = vmatpush.msra.mxu0 0.0
        %7133 = vmatpush.msra.mxu0 0.0
        %7134 = vmatpush.msra.mxu0 %v7097
        %7135 = vmatpush.msra.mxu0 %v7096
        %7136 = vmatpush.msra.mxu0 %v7095
        %7137 = vmatpush.msra.mxu0 %v7094
        %7138 = vmatmul.f32.gmra.mxu0 %v7099
        %v7139 = vpop.f32.mrf.mxu0
        %v7140 = vadd.f32 0.0, %v7139
        %7141 = vmatmul.f32.gmra.mxu0 %v7102
        %v7142 = vpop.f32.mrf.mxu0
        %v7143 = vadd.f32 0.0, %v7142
        %7144 = vmatmul.f32.gmra.mxu0 %v7105
        %v7145 = vpop.f32.mrf.mxu0
        %v7146 = vadd.f32 0.0, %v7145
        %7147 = vmatmul.f32.gmra.mxu0 %v7108
        %v7148 = vpop.f32.mrf.mxu0
        %v7149 = vadd.f32 0.0, %v7148
        %7150 = vmatmul.f32.gmra.mxu0 %v7111
        %v7151 = vpop.f32.mrf.mxu0
        %v7152 = vadd.f32 0.0, %v7151
        %7153 = vmatmul.f32.gmra.mxu0 %v7114
        %v7154 = vpop.f32.mrf.mxu0
        %v7155 = vadd.f32 0.0, %v7154
        %7156 = vmatmul.f32.gmra.mxu0 %v7117
        %v7157 = vpop.f32.mrf.mxu0
        %v7158 = vadd.f32 0.0, %v7157
        %7159 = vmatmul.f32.gmra.mxu0 %v7120
        %v7160 = vpop.f32.mrf.mxu0
        %v7161 = vadd.f32 0.0, %v7160
        %7162 = vdwg.mxu0
        %v7163 = vadd.f32 %v7077, %v7140
        %v7164 = vadd.f32 %v7078, %v7143
        %v7165 = vadd.f32 %v7079, %v7146
        %v7166 = vadd.f32 %v7080, %v7149
        %v7167 = vadd.f32 %v7081, %v7152
        %v7168 = vadd.f32 %v7082, %v7155
        %v7169 = vadd.f32 %v7083, %v7158
        %v7170 = vadd.f32 %v7084, %v7161
        %v7171 = vld [vmem:[%s6624] sm:$0xff]
        %v7172 = vld [vmem:[%s6624 + $0x10] sm:$0xff]
        %v7173 = vld [vmem:[%s6624 + $0x20] sm:$0xff]
        %v7174 = vld [vmem:[%s6624 + $0x30] sm:$0xff]
        %v7175 = vld [vmem:[%s6624 + $0x40] sm:$0xff]
        %v7176 = vld [vmem:[%s6624 + $0x50] sm:$0xff]
        %v7177 = vld [vmem:[%s6624 + $0x60] sm:$0xff]
        %v7178 = vld [vmem:[%s6624 + $0x70] sm:$0xff]
        %s7179 = scalar_lea.vmem %s7, 192
        %v7180 = vld [vmem:[%s7179] sm:$0xff]
        %v7181 = vld [vmem:[%s7179 + $0x8] sm:$0xff]
        %v7182 = vld [vmem:[%s7179 + $0x10] sm:$0xff]
        %v7183 = vld [vmem:[%s7179 + $0x18] sm:$0xff]
        %v7185 = vsel %vm6615, %v7171, 0
        %v7188 = vsel %vm6615, %v7172, 0
        %v7191 = vsel %vm6615, %v7173, 0
        %v7194 = vsel %vm6615, %v7174, 0
        %v7197 = vsel %vm6615, %v7175, 0
        %v7200 = vsel %vm6615, %v7176, 0
        %v7203 = vsel %vm6615, %v7177, 0
        %v7206 = vsel %vm6615, %v7178, 0
        %7208 = vmatpush.msra.mxu0 0.0
        %7209 = vmatpush.msra.mxu0 0.0
        %7210 = vmatpush.msra.mxu0 0.0
        %7211 = vmatpush.msra.mxu0 0.0
        %7212 = vmatpush.msra.mxu0 0.0
        %7213 = vmatpush.msra.mxu0 0.0
        %7214 = vmatpush.msra.mxu0 0.0
        %7215 = vmatpush.msra.mxu0 0.0
        %7216 = vmatpush.msra.mxu0 0.0
        %7217 = vmatpush.msra.mxu0 0.0
        %7218 = vmatpush.msra.mxu0 0.0
        %7219 = vmatpush.msra.mxu0 0.0
        %7220 = vmatpush.msra.mxu0 %v7183
        %7221 = vmatpush.msra.mxu0 %v7182
        %7222 = vmatpush.msra.mxu0 %v7181
        %7223 = vmatpush.msra.mxu0 %v7180
        %7224 = vmatmul.f32.gmra.mxu0 %v7185
        %v7225 = vpop.f32.mrf.mxu0
        %v7226 = vadd.f32 0.0, %v7225
        %7227 = vmatmul.f32.gmra.mxu0 %v7188
        %v7228 = vpop.f32.mrf.mxu0
        %v7229 = vadd.f32 0.0, %v7228
        %7230 = vmatmul.f32.gmra.mxu0 %v7191
        %v7231 = vpop.f32.mrf.mxu0
        %v7232 = vadd.f32 0.0, %v7231
        %7233 = vmatmul.f32.gmra.mxu0 %v7194
        %v7234 = vpop.f32.mrf.mxu0
        %v7235 = vadd.f32 0.0, %v7234
        %7236 = vmatmul.f32.gmra.mxu0 %v7197
        %v7237 = vpop.f32.mrf.mxu0
        %v7238 = vadd.f32 0.0, %v7237
        %7239 = vmatmul.f32.gmra.mxu0 %v7200
        %v7240 = vpop.f32.mrf.mxu0
        %v7241 = vadd.f32 0.0, %v7240
        %7242 = vmatmul.f32.gmra.mxu0 %v7203
        %v7243 = vpop.f32.mrf.mxu0
        %v7244 = vadd.f32 0.0, %v7243
        %7245 = vmatmul.f32.gmra.mxu0 %v7206
        %v7246 = vpop.f32.mrf.mxu0
        %v7247 = vadd.f32 0.0, %v7246
        %7248 = vdwg.mxu0
        %v7249 = vadd.f32 %v7163, %v7226
        %v7250 = vadd.f32 %v7164, %v7229
        %v7251 = vadd.f32 %v7165, %v7232
        %v7252 = vadd.f32 %v7166, %v7235
        %v7253 = vadd.f32 %v7167, %v7238
        %v7254 = vadd.f32 %v7168, %v7241
        %v7255 = vadd.f32 %v7169, %v7244
        %v7256 = vadd.f32 %v7170, %v7247
        %v7257 = vld [vmem:[%s6624 + $0x1] sm:$0xff]
        %v7258 = vld [vmem:[%s6624 + $0x11] sm:$0xff]
        %v7259 = vld [vmem:[%s6624 + $0x21] sm:$0xff]
        %v7260 = vld [vmem:[%s6624 + $0x31] sm:$0xff]
        %v7261 = vld [vmem:[%s6624 + $0x41] sm:$0xff]
        %v7262 = vld [vmem:[%s6624 + $0x51] sm:$0xff]
        %v7263 = vld [vmem:[%s6624 + $0x61] sm:$0xff]
        %v7264 = vld [vmem:[%s6624 + $0x71] sm:$0xff]
        %s7265 = scalar_lea.vmem %s7, 224
        %v7266 = vld [vmem:[%s7265] sm:$0xff]
        %v7267 = vld [vmem:[%s7265 + $0x8] sm:$0xff]
        %v7268 = vld [vmem:[%s7265 + $0x10] sm:$0xff]
        %v7269 = vld [vmem:[%s7265 + $0x18] sm:$0xff]
        %v7271 = vsel %vm6615, %v7257, 0
        %v7274 = vsel %vm6615, %v7258, 0
        %v7277 = vsel %vm6615, %v7259, 0
        %v7280 = vsel %vm6615, %v7260, 0
        %v7283 = vsel %vm6615, %v7261, 0
        %v7286 = vsel %vm6615, %v7262, 0
        %v7289 = vsel %vm6615, %v7263, 0
        %v7292 = vsel %vm6615, %v7264, 0
        %7294 = vmatpush.msra.mxu0 0.0
        %7295 = vmatpush.msra.mxu0 0.0
        %7296 = vmatpush.msra.mxu0 0.0
        %7297 = vmatpush.msra.mxu0 0.0
        %7298 = vmatpush.msra.mxu0 0.0
        %7299 = vmatpush.msra.mxu0 0.0
        %7300 = vmatpush.msra.mxu0 0.0
        %7301 = vmatpush.msra.mxu0 0.0
        %7302 = vmatpush.msra.mxu0 0.0
        %7303 = vmatpush.msra.mxu0 0.0
        %7304 = vmatpush.msra.mxu0 0.0
        %7305 = vmatpush.msra.mxu0 0.0
        %7306 = vmatpush.msra.mxu0 %v7269
        %7307 = vmatpush.msra.mxu0 %v7268
        %7308 = vmatpush.msra.mxu0 %v7267
        %7309 = vmatpush.msra.mxu0 %v7266
        %7310 = vmatmul.f32.gmra.mxu0 %v7271
        %v7311 = vpop.f32.mrf.mxu0
        %v7312 = vadd.f32 0.0, %v7311
        %7313 = vmatmul.f32.gmra.mxu0 %v7274
        %v7314 = vpop.f32.mrf.mxu0
        %v7315 = vadd.f32 0.0, %v7314
        %7316 = vmatmul.f32.gmra.mxu0 %v7277
        %v7317 = vpop.f32.mrf.mxu0
        %v7318 = vadd.f32 0.0, %v7317
        %7319 = vmatmul.f32.gmra.mxu0 %v7280
        %v7320 = vpop.f32.mrf.mxu0
        %v7321 = vadd.f32 0.0, %v7320
        %7322 = vmatmul.f32.gmra.mxu0 %v7283
        %v7323 = vpop.f32.mrf.mxu0
        %v7324 = vadd.f32 0.0, %v7323
        %7325 = vmatmul.f32.gmra.mxu0 %v7286
        %v7326 = vpop.f32.mrf.mxu0
        %v7327 = vadd.f32 0.0, %v7326
        %7328 = vmatmul.f32.gmra.mxu0 %v7289
        %v7329 = vpop.f32.mrf.mxu0
        %v7330 = vadd.f32 0.0, %v7329
        %7331 = vmatmul.f32.gmra.mxu0 %v7292
        %v7332 = vpop.f32.mrf.mxu0
        %v7333 = vadd.f32 0.0, %v7332
        %7334 = vdwg.mxu0
        %v7335 = vadd.f32 %v7249, %v7312
        %v7336 = vadd.f32 %v7250, %v7315
        %v7337 = vadd.f32 %v7251, %v7318
        %v7338 = vadd.f32 %v7252, %v7321
        %v7339 = vadd.f32 %v7253, %v7324
        %v7340 = vadd.f32 %v7254, %v7327
        %v7341 = vadd.f32 %v7255, %v7330
        %v7342 = vadd.f32 %v7256, %v7333
        %v7343 = vld [vmem:[%s6624 + $0x2] sm:$0xff]
        %v7344 = vld [vmem:[%s6624 + $0x12] sm:$0xff]
        %v7345 = vld [vmem:[%s6624 + $0x22] sm:$0xff]
        %v7346 = vld [vmem:[%s6624 + $0x32] sm:$0xff]
        %v7347 = vld [vmem:[%s6624 + $0x42] sm:$0xff]
        %v7348 = vld [vmem:[%s6624 + $0x52] sm:$0xff]
        %v7349 = vld [vmem:[%s6624 + $0x62] sm:$0xff]
        %v7350 = vld [vmem:[%s6624 + $0x72] sm:$0xff]
        %s7351 = scalar_lea.vmem %s7, 256
        %v7352 = vld [vmem:[%s7351] sm:$0xff]
        %v7353 = vld [vmem:[%s7351 + $0x8] sm:$0xff]
        %v7354 = vld [vmem:[%s7351 + $0x10] sm:$0xff]
        %v7355 = vld [vmem:[%s7351 + $0x18] sm:$0xff]
        %v7357 = vsel %vm6615, %v7343, 0
        %v7360 = vsel %vm6615, %v7344, 0
        %v7363 = vsel %vm6615, %v7345, 0
        %v7366 = vsel %vm6615, %v7346, 0
        %v7369 = vsel %vm6615, %v7347, 0
        %v7372 = vsel %vm6615, %v7348, 0
        %v7375 = vsel %vm6615, %v7349, 0
        %v7378 = vsel %vm6615, %v7350, 0
        %7380 = vmatpush.msra.mxu0 0.0
        %7381 = vmatpush.msra.mxu0 0.0
        %7382 = vmatpush.msra.mxu0 0.0
        %7383 = vmatpush.msra.mxu0 0.0
        %7384 = vmatpush.msra.mxu0 0.0
        %7385 = vmatpush.msra.mxu0 0.0
        %7386 = vmatpush.msra.mxu0 0.0
        %7387 = vmatpush.msra.mxu0 0.0
        %7388 = vmatpush.msra.mxu0 0.0
        %7389 = vmatpush.msra.mxu0 0.0
        %7390 = vmatpush.msra.mxu0 0.0
        %7391 = vmatpush.msra.mxu0 0.0
        %7392 = vmatpush.msra.mxu0 %v7355
        %7393 = vmatpush.msra.mxu0 %v7354
        %7394 = vmatpush.msra.mxu0 %v7353
        %7395 = vmatpush.msra.mxu0 %v7352
        %7396 = vmatmul.f32.gmra.mxu0 %v7357
        %v7397 = vpop.f32.mrf.mxu0
        %v7398 = vadd.f32 0.0, %v7397
        %7399 = vmatmul.f32.gmra.mxu0 %v7360
        %v7400 = vpop.f32.mrf.mxu0
        %v7401 = vadd.f32 0.0, %v7400
        %7402 = vmatmul.f32.gmra.mxu0 %v7363
        %v7403 = vpop.f32.mrf.mxu0
        %v7404 = vadd.f32 0.0, %v7403
        %7405 = vmatmul.f32.gmra.mxu0 %v7366
        %v7406 = vpop.f32.mrf.mxu0
        %v7407 = vadd.f32 0.0, %v7406
        %7408 = vmatmul.f32.gmra.mxu0 %v7369
        %v7409 = vpop.f32.mrf.mxu0
        %v7410 = vadd.f32 0.0, %v7409
        %7411 = vmatmul.f32.gmra.mxu0 %v7372
        %v7412 = vpop.f32.mrf.mxu0
        %v7413 = vadd.f32 0.0, %v7412
        %7414 = vmatmul.f32.gmra.mxu0 %v7375
        %v7415 = vpop.f32.mrf.mxu0
        %v7416 = vadd.f32 0.0, %v7415
        %7417 = vmatmul.f32.gmra.mxu0 %v7378
        %v7418 = vpop.f32.mrf.mxu0
        %v7419 = vadd.f32 0.0, %v7418
        %7420 = vdwg.mxu0
        %v7421 = vadd.f32 %v7335, %v7398
        %v7422 = vadd.f32 %v7336, %v7401
        %v7423 = vadd.f32 %v7337, %v7404
        %v7424 = vadd.f32 %v7338, %v7407
        %v7425 = vadd.f32 %v7339, %v7410
        %v7426 = vadd.f32 %v7340, %v7413
        %v7427 = vadd.f32 %v7341, %v7416
        %v7428 = vadd.f32 %v7342, %v7419
        %v7429 = vld [vmem:[%s8] sm:$0x1]
        %v7431 = vperm.slane %v7429, 0
        %v7433 = vadd.f32 %v7421, %v7431
        %v7434 = vadd.f32 %v7422, %v7431
        %v7435 = vadd.f32 %v7423, %v7431
        %v7436 = vadd.f32 %v7424, %v7431
        %v7437 = vadd.f32 %v7425, %v7431
        %v7438 = vadd.f32 %v7426, %v7431
        %v7439 = vadd.f32 %v7427, %v7431
        %v7440 = vadd.f32 %v7428, %v7431
        %v7441 = vmax.f32 %v7433, 0.0
        %v7442 = vmax.f32 %v7434, 0.0
        %v7443 = vmax.f32 %v7435, 0.0
        %v7444 = vmax.f32 %v7436, 0.0
        %v7445 = vmax.f32 %v7437, 0.0
        %v7446 = vmax.f32 %v7438, 0.0
        %v7447 = vmax.f32 %v7439, 0.0
        %v7448 = vmax.f32 %v7440, 0.0
        %7449 = vst.msk [vmem:[#allocation7] sm:$0xff] %vm6615, %v7441
        %7450 = vst.msk [vmem:[#allocation7 + $0x8] sm:$0xff] %vm6615, %v7442
        %7451 = vst.msk [vmem:[#allocation7 + $0x10] sm:$0xff] %vm6615, %v7443
        %7452 = vst.msk [vmem:[#allocation7 + $0x18] sm:$0xff] %vm6615, %v7444
        %7453 = vst.msk [vmem:[#allocation7 + $0x20] sm:$0xff] %vm6615, %v7445
        %7454 = vst.msk [vmem:[#allocation7 + $0x28] sm:$0xff] %vm6615, %v7446
        %7455 = vst.msk [vmem:[#allocation7 + $0x30] sm:$0xff] %vm6615, %v7447
        %7456 = vst.msk [vmem:[#allocation7 + $0x38] sm:$0xff] %vm6615, %v7448
        %v7457 = vld [vmem:[#allocation7] ss:$2 sm:$0xf]
        %s7458 = scalar_lea.vmem [#allocation7], 16
        %v7459 = vld [vmem:[%s7458] ss:$2 sm:$0xf]
        %s7460 = scalar_lea.vmem [#allocation7], 32
        %v7461 = vld [vmem:[%s7460] ss:$2 sm:$0xf]
        %s7462 = scalar_lea.vmem [#allocation7], 48
        %v7463 = vld [vmem:[%s7462] ss:$2 sm:$0xf]
        %s7464 = scalar_lea.vmem [#allocation7], 1
        %v7465 = vld [vmem:[%s7464] ss:$2 sm:$0xf]
        %s7466 = scalar_lea.vmem [#allocation7], 17
        %v7467 = vld [vmem:[%s7466] ss:$2 sm:$0xf]
        %s7468 = scalar_lea.vmem [#allocation7], 33
        %v7469 = vld [vmem:[%s7468] ss:$2 sm:$0xf]
        %s7470 = scalar_lea.vmem [#allocation7], 49
        %v7471 = vld [vmem:[%s7470] ss:$2 sm:$0xf]
        %s7472 = scalar_lea.vmem [#allocation7], 8
        %v7473 = vld [vmem:[%s7472] ss:$2 sm:$0xf]
        %s7474 = scalar_lea.vmem %s7472, 16 [#allocation7]
        %v7475 = vld [vmem:[%s7474] ss:$2 sm:$0xf]
        %s7476 = scalar_lea.vmem %s7472, 32 [#allocation7]
        %v7477 = vld [vmem:[%s7476] ss:$2 sm:$0xf]
        %s7478 = scalar_lea.vmem %s7472, 48 [#allocation7]
        %v7479 = vld [vmem:[%s7478] ss:$2 sm:$0xf]
        %s7480 = scalar_lea.vmem %s7472, 1 [#allocation7]
        %v7481 = vld [vmem:[%s7480] ss:$2 sm:$0xf]
        %s7482 = scalar_lea.vmem %s7472, 17 [#allocation7]
        %v7483 = vld [vmem:[%s7482] ss:$2 sm:$0xf]
        %s7484 = scalar_lea.vmem %s7472, 33 [#allocation7]
        %v7485 = vld [vmem:[%s7484] ss:$2 sm:$0xf]
        %s7486 = scalar_lea.vmem %s7472, 49 [#allocation7]
        %v7487 = vld [vmem:[%s7486] ss:$2 sm:$0xf]
        %v7488 = vmax.f32 %v7457, %v7465
        %v7489 = vmax.f32 %v7459, %v7467
        %v7490 = vmax.f32 %v7461, %v7469
        %v7491 = vmax.f32 %v7463, %v7471
        %v7492 = vmax.f32 %v7473, %v7481
        %v7493 = vmax.f32 %v7475, %v7483
        %v7494 = vmax.f32 %v7477, %v7485
        %v7495 = vmax.f32 %v7479, %v7487
        %v7496 = vmax.f32 %v7488, %v7492
        %v7497 = vmax.f32 %v7489, %v7493
        %v7498 = vmax.f32 %v7490, %v7494
        %v7499 = vmax.f32 %v7491, %v7495
        %s7500 = scalar_lea.vmem [#allocation8], 8
        %vm7501 = vcmask 257024
        %7502 = vst.msk [vmem:[%s7500 + $0x1] sm:$0xf] %vm7501, %v7496
        %7503 = vst.msk [vmem:[%s7500 + $0x9] sm:$0xf] %vm7501, %v7497
        %7504 = vst.msk [vmem:[%s7500 + $0x11] sm:$0xf] %vm7501, %v7498
        %7505 = vst.msk [vmem:[%s7500 + $0x19] sm:$0xf] %vm7501, %v7499
        %s7506 = scalar_lea.vmem [#allocation8], 16
        %v7507 = vld [vmem:[%s7506 + $0x1] sm:$0xf]
        %7508 = vst.msk [vmem:[#allocation8 + $0x1] sm:$0xf] %vm7501, %v7507
        %s7509 = scalar_lea.vmem [#allocation8], 24
        %v7510 = vld [vmem:[%s7509 + $0x1] sm:$0xf]
        %s7511 = scalar_lea.vmem [#allocation8], 40
        %7512 = vst.msk [vmem:[%s7511 + $0x1] sm:$0xf] %vm7501, %v7510
        %v7513 = vld [vmem:[#allocation8 + $0x2] sm:$0x1]
        %v7514 = vld [vmem:[#allocation8 + $0xa] sm:$0x1]
        %v7515 = vld [vmem:[#allocation8 + $0x12] sm:$0x1]
        %v7516 = vld [vmem:[#allocation8 + $0x1a] sm:$0x1]
        %v7517 = vld [vmem:[#allocation8 + $0x22] sm:$0x1]
        %v7518 = vld [vmem:[#allocation8 + $0x2a] sm:$0x1]
        %7519 = vst.msk [vmem:[#allocation8] sm:$0x1] %vm6641, %v7513
        %7520 = vst.msk [vmem:[#allocation8 + $0x8] sm:$0x1] %vm6641, %v7514
        %7521 = vst.msk [vmem:[#allocation8 + $0x10] sm:$0x1] %vm6641, %v7515
        %7522 = vst.msk [vmem:[#allocation8 + $0x18] sm:$0x1] %vm6641, %v7516
        %7523 = vst.msk [vmem:[#allocation8 + $0x20] sm:$0x1] %vm6641, %v7517
        %7524 = vst.msk [vmem:[#allocation8 + $0x28] sm:$0x1] %vm6641, %v7518
        %v7525 = vld [vmem:[#allocation8 + $0x3] sm:$0x1]
        %v7526 = vld [vmem:[#allocation8 + $0xb] sm:$0x1]
        %v7527 = vld [vmem:[#allocation8 + $0x13] sm:$0x1]
        %v7528 = vld [vmem:[#allocation8 + $0x1b] sm:$0x1]
        %v7529 = vld [vmem:[#allocation8 + $0x23] sm:$0x1]
        %v7530 = vld [vmem:[#allocation8 + $0x2b] sm:$0x1]
        %7531 = vst.msk [vmem:[#allocation8 + $0x5] sm:$0x1] %vm6641, %v7525
        %7532 = vst.msk [vmem:[#allocation8 + $0xd] sm:$0x1] %vm6641, %v7526
        %7533 = vst.msk [vmem:[#allocation8 + $0x15] sm:$0x1] %vm6641, %v7527
        %7534 = vst.msk [vmem:[#allocation8 + $0x1d] sm:$0x1] %vm6641, %v7528
        %7535 = vst.msk [vmem:[#allocation8 + $0x25] sm:$0x1] %vm6641, %v7529
        %7536 = vst.msk [vmem:[#allocation8 + $0x2d] sm:$0x1] %vm6641, %v7530
        %v7537 = vld [vmem:[%s10] sm:$0x1]
        %v7538 = vld [vmem:[#allocation8] sm:$0xf]
        %v7539 = vld [vmem:[%s9] sm:$0xff]
        %v7540 = vld [vmem:[%s9 + $0x8] sm:$0xff]
        %v7541 = vld [vmem:[%s9 + $0x10] sm:$0xff]
        %v7542 = vld [vmem:[%s9 + $0x18] sm:$0xff]
        %v7543 = vld [vmem:[#allocation8 + $0x1] sm:$0xf]
        %s7544 = scalar_lea.vmem %s9, 32
        %v7545 = vld [vmem:[%s7544] sm:$0xff]
        %v7546 = vld [vmem:[%s7544 + $0x8] sm:$0xff]
        %v7547 = vld [vmem:[%s7544 + $0x10] sm:$0xff]
        %v7548 = vld [vmem:[%s7544 + $0x18] sm:$0xff]
        %v7550 = vsel %vm6615, %v7543, 0
        %7552 = vmatpush.msra.mxu0 0.0
        %7553 = vmatpush.msra.mxu0 0.0
        %7554 = vmatpush.msra.mxu0 0.0
        %7555 = vmatpush.msra.mxu0 0.0
        %7556 = vmatpush.msra.mxu0 0.0
        %7557 = vmatpush.msra.mxu0 0.0
        %7558 = vmatpush.msra.mxu0 0.0
        %7559 = vmatpush.msra.mxu0 0.0
        %7560 = vmatpush.msra.mxu0 0.0
        %7561 = vmatpush.msra.mxu0 0.0
        %7562 = vmatpush.msra.mxu0 0.0
        %7563 = vmatpush.msra.mxu0 0.0
        %7564 = vmatpush.msra.mxu0 %v7548
        %7565 = vmatpush.msra.mxu0 %v7547
        %7566 = vmatpush.msra.mxu0 %v7546
        %7567 = vmatpush.msra.mxu0 %v7545
        %7568 = vmatmul.f32.gmra.mxu0 %v7550
        %v7569 = vpop.f32.mrf.mxu0
        %v7570 = vadd.f32 0.0, %v7569
        %7571 = vdwg.mxu0
        %v7573 = vsel %vm6615, %v7538, 0
        %7575 = vmatpush.msra.mxu0 0.0
        %7576 = vmatpush.msra.mxu0 0.0
        %7577 = vmatpush.msra.mxu0 0.0
        %7578 = vmatpush.msra.mxu0 0.0
        %7579 = vmatpush.msra.mxu0 0.0
        %7580 = vmatpush.msra.mxu0 0.0
        %7581 = vmatpush.msra.mxu0 0.0
        %7582 = vmatpush.msra.mxu0 0.0
        %7583 = vmatpush.msra.mxu0 0.0
        %7584 = vmatpush.msra.mxu0 0.0
        %7585 = vmatpush.msra.mxu0 0.0
        %7586 = vmatpush.msra.mxu0 0.0
        %7587 = vmatpush.msra.mxu0 %v7542
        %7588 = vmatpush.msra.mxu0 %v7541
        %7589 = vmatpush.msra.mxu0 %v7540
        %7590 = vmatpush.msra.mxu0 %v7539
        %7591 = vmatmul.f32.gmra.mxu0 %v7573
        %v7592 = vpop.f32.mrf.mxu0
        %v7593 = vadd.f32 %v7570, %v7592
        %7594 = vdwg.mxu0
        %v7595 = vld [vmem:[#allocation8 + $0x2] sm:$0xf]
        %s7596 = scalar_lea.vmem %s9, 64
        %v7597 = vld [vmem:[%s7596] sm:$0xff]
        %v7598 = vld [vmem:[%s7596 + $0x8] sm:$0xff]
        %v7599 = vld [vmem:[%s7596 + $0x10] sm:$0xff]
        %v7600 = vld [vmem:[%s7596 + $0x18] sm:$0xff]
        %v7602 = vsel %vm6615, %v7595, 0
        %7604 = vmatpush.msra.mxu0 0.0
        %7605 = vmatpush.msra.mxu0 0.0
        %7606 = vmatpush.msra.mxu0 0.0
        %7607 = vmatpush.msra.mxu0 0.0
        %7608 = vmatpush.msra.mxu0 0.0
        %7609 = vmatpush.msra.mxu0 0.0
        %7610 = vmatpush.msra.mxu0 0.0
        %7611 = vmatpush.msra.mxu0 0.0
        %7612 = vmatpush.msra.mxu0 0.0
        %7613 = vmatpush.msra.mxu0 0.0
        %7614 = vmatpush.msra.mxu0 0.0
        %7615 = vmatpush.msra.mxu0 0.0
        %7616 = vmatpush.msra.mxu0 %v7600
        %7617 = vmatpush.msra.mxu0 %v7599
        %7618 = vmatpush.msra.mxu0 %v7598
        %7619 = vmatpush.msra.mxu0 %v7597
        %7620 = vmatmul.f32.gmra.mxu0 %v7602
        %v7621 = vpop.f32.mrf.mxu0
        %v7622 = vadd.f32 0.0, %v7621
        %7623 = vdwg.mxu0
        %v7624 = vadd.f32 %v7593, %v7622
        %v7625 = vld [vmem:[%s7500] sm:$0xf]
        %s7626 = scalar_lea.vmem %s9, 96
        %v7627 = vld [vmem:[%s7626] sm:$0xff]
        %v7628 = vld [vmem:[%s7626 + $0x8] sm:$0xff]
        %v7629 = vld [vmem:[%s7626 + $0x10] sm:$0xff]
        %v7630 = vld [vmem:[%s7626 + $0x18] sm:$0xff]
        %v7632 = vsel %vm6615, %v7625, 0
        %7634 = vmatpush.msra.mxu0 0.0
        %7635 = vmatpush.msra.mxu0 0.0
        %7636 = vmatpush.msra.mxu0 0.0
        %7637 = vmatpush.msra.mxu0 0.0
        %7638 = vmatpush.msra.mxu0 0.0
        %7639 = vmatpush.msra.mxu0 0.0
        %7640 = vmatpush.msra.mxu0 0.0
        %7641 = vmatpush.msra.mxu0 0.0
        %7642 = vmatpush.msra.mxu0 0.0
        %7643 = vmatpush.msra.mxu0 0.0
        %7644 = vmatpush.msra.mxu0 0.0
        %7645 = vmatpush.msra.mxu0 0.0
        %7646 = vmatpush.msra.mxu0 %v7630
        %7647 = vmatpush.msra.mxu0 %v7629
        %7648 = vmatpush.msra.mxu0 %v7628
        %7649 = vmatpush.msra.mxu0 %v7627
        %7650 = vmatmul.f32.gmra.mxu0 %v7632
        %v7651 = vpop.f32.mrf.mxu0
        %v7652 = vadd.f32 0.0, %v7651
        %7653 = vdwg.mxu0
        %v7654 = vadd.f32 %v7624, %v7652
        %v7655 = vld [vmem:[%s7500 + $0x1] sm:$0xf]
        %s7656 = scalar_lea.vmem %s9, 128
        %v7657 = vld [vmem:[%s7656] sm:$0xff]
        %v7658 = vld [vmem:[%s7656 + $0x8] sm:$0xff]
        %v7659 = vld [vmem:[%s7656 + $0x10] sm:$0xff]
        %v7660 = vld [vmem:[%s7656 + $0x18] sm:$0xff]
        %v7662 = vsel %vm6615, %v7655, 0
        %7664 = vmatpush.msra.mxu0 0.0
        %7665 = vmatpush.msra.mxu0 0.0
        %7666 = vmatpush.msra.mxu0 0.0
        %7667 = vmatpush.msra.mxu0 0.0
        %7668 = vmatpush.msra.mxu0 0.0
        %7669 = vmatpush.msra.mxu0 0.0
        %7670 = vmatpush.msra.mxu0 0.0
        %7671 = vmatpush.msra.mxu0 0.0
        %7672 = vmatpush.msra.mxu0 0.0
        %7673 = vmatpush.msra.mxu0 0.0
        %7674 = vmatpush.msra.mxu0 0.0
        %7675 = vmatpush.msra.mxu0 0.0
        %7676 = vmatpush.msra.mxu0 %v7660
        %7677 = vmatpush.msra.mxu0 %v7659
        %7678 = vmatpush.msra.mxu0 %v7658
        %7679 = vmatpush.msra.mxu0 %v7657
        %7680 = vmatmul.f32.gmra.mxu0 %v7662
        %v7681 = vpop.f32.mrf.mxu0
        %v7682 = vadd.f32 0.0, %v7681
        %7683 = vdwg.mxu0
        %v7684 = vadd.f32 %v7654, %v7682
        %v7685 = vld [vmem:[%s7500 + $0x2] sm:$0xf]
        %s7686 = scalar_lea.vmem %s9, 160
        %v7687 = vld [vmem:[%s7686] sm:$0xff]
        %v7688 = vld [vmem:[%s7686 + $0x8] sm:$0xff]
        %v7689 = vld [vmem:[%s7686 + $0x10] sm:$0xff]
        %v7690 = vld [vmem:[%s7686 + $0x18] sm:$0xff]
        %v7692 = vsel %vm6615, %v7685, 0
        %7694 = vmatpush.msra.mxu0 0.0
        %7695 = vmatpush.msra.mxu0 0.0
        %7696 = vmatpush.msra.mxu0 0.0
        %7697 = vmatpush.msra.mxu0 0.0
        %7698 = vmatpush.msra.mxu0 0.0
        %7699 = vmatpush.msra.mxu0 0.0
        %7700 = vmatpush.msra.mxu0 0.0
        %7701 = vmatpush.msra.mxu0 0.0
        %7702 = vmatpush.msra.mxu0 0.0
        %7703 = vmatpush.msra.mxu0 0.0
        %7704 = vmatpush.msra.mxu0 0.0
        %7705 = vmatpush.msra.mxu0 0.0
        %7706 = vmatpush.msra.mxu0 %v7690
        %7707 = vmatpush.msra.mxu0 %v7689
        %7708 = vmatpush.msra.mxu0 %v7688
        %7709 = vmatpush.msra.mxu0 %v7687
        %7710 = vmatmul.f32.gmra.mxu0 %v7692
        %v7711 = vpop.f32.mrf.mxu0
        %v7712 = vadd.f32 0.0, %v7711
        %7713 = vdwg.mxu0
        %v7714 = vadd.f32 %v7684, %v7712
        %v7715 = vld [vmem:[%s7506] sm:$0xf]
        %s7716 = scalar_lea.vmem %s9, 192
        %v7717 = vld [vmem:[%s7716] sm:$0xff]
        %v7718 = vld [vmem:[%s7716 + $0x8] sm:$0xff]
        %v7719 = vld [vmem:[%s7716 + $0x10] sm:$0xff]
        %v7720 = vld [vmem:[%s7716 + $0x18] sm:$0xff]
        %v7722 = vsel %vm6615, %v7715, 0
        %7724 = vmatpush.msra.mxu0 0.0
        %7725 = vmatpush.msra.mxu0 0.0
        %7726 = vmatpush.msra.mxu0 0.0
        %7727 = vmatpush.msra.mxu0 0.0
        %7728 = vmatpush.msra.mxu0 0.0
        %7729 = vmatpush.msra.mxu0 0.0
        %7730 = vmatpush.msra.mxu0 0.0
        %7731 = vmatpush.msra.mxu0 0.0
        %7732 = vmatpush.msra.mxu0 0.0
        %7733 = vmatpush.msra.mxu0 0.0
        %7734 = vmatpush.msra.mxu0 0.0
        %7735 = vmatpush.msra.mxu0 0.0
        %7736 = vmatpush.msra.mxu0 %v7720
        %7737 = vmatpush.msra.mxu0 %v7719
        %7738 = vmatpush.msra.mxu0 %v7718
        %7739 = vmatpush.msra.mxu0 %v7717
        %7740 = vmatmul.f32.gmra.mxu0 %v7722
        %v7741 = vpop.f32.mrf.mxu0
        %v7742 = vadd.f32 0.0, %v7741
        %7743 = vdwg.mxu0
        %v7744 = vadd.f32 %v7714, %v7742
        %v7745 = vld [vmem:[%s7506 + $0x1] sm:$0xf]
        %s7746 = scalar_lea.vmem %s9, 224
        %v7747 = vld [vmem:[%s7746] sm:$0xff]
        %v7748 = vld [vmem:[%s7746 + $0x8] sm:$0xff]
        %v7749 = vld [vmem:[%s7746 + $0x10] sm:$0xff]
        %v7750 = vld [vmem:[%s7746 + $0x18] sm:$0xff]
        %v7752 = vsel %vm6615, %v7745, 0
        %7754 = vmatpush.msra.mxu0 0.0
        %7755 = vmatpush.msra.mxu0 0.0
        %7756 = vmatpush.msra.mxu0 0.0
        %7757 = vmatpush.msra.mxu0 0.0
        %7758 = vmatpush.msra.mxu0 0.0
        %7759 = vmatpush.msra.mxu0 0.0
        %7760 = vmatpush.msra.mxu0 0.0
        %7761 = vmatpush.msra.mxu0 0.0
        %7762 = vmatpush.msra.mxu0 0.0
        %7763 = vmatpush.msra.mxu0 0.0
        %7764 = vmatpush.msra.mxu0 0.0
        %7765 = vmatpush.msra.mxu0 0.0
        %7766 = vmatpush.msra.mxu0 %v7750
        %7767 = vmatpush.msra.mxu0 %v7749
        %7768 = vmatpush.msra.mxu0 %v7748
        %7769 = vmatpush.msra.mxu0 %v7747
        %7770 = vmatmul.f32.gmra.mxu0 %v7752
        %v7771 = vpop.f32.mrf.mxu0
        %v7772 = vadd.f32 0.0, %v7771
        %7773 = vdwg.mxu0
        %v7774 = vadd.f32 %v7744, %v7772
        %v7775 = vld [vmem:[%s7506 + $0x2] sm:$0xf]
        %s7776 = scalar_lea.vmem %s9, 256
        %v7777 = vld [vmem:[%s7776] sm:$0xff]
        %v7778 = vld [vmem:[%s7776 + $0x8] sm:$0xff]
        %v7779 = vld [vmem:[%s7776 + $0x10] sm:$0xff]
        %v7780 = vld [vmem:[%s7776 + $0x18] sm:$0xff]
        %v7782 = vsel %vm6615, %v7775, 0
        %7784 = vmatpush.msra.mxu0 0.0
        %7785 = vmatpush.msra.mxu0 0.0
        %7786 = vmatpush.msra.mxu0 0.0
        %7787 = vmatpush.msra.mxu0 0.0
        %7788 = vmatpush.msra.mxu0 0.0
        %7789 = vmatpush.msra.mxu0 0.0
        %7790 = vmatpush.msra.mxu0 0.0
        %7791 = vmatpush.msra.mxu0 0.0
        %7792 = vmatpush.msra.mxu0 0.0
        %7793 = vmatpush.msra.mxu0 0.0
        %7794 = vmatpush.msra.mxu0 0.0
        %7795 = vmatpush.msra.mxu0 0.0
        %7796 = vmatpush.msra.mxu0 %v7780
        %7797 = vmatpush.msra.mxu0 %v7779
        %7798 = vmatpush.msra.mxu0 %v7778
        %7799 = vmatpush.msra.mxu0 %v7777
        %7800 = vmatmul.f32.gmra.mxu0 %v7782
        %v7801 = vpop.f32.mrf.mxu0
        %v7802 = vadd.f32 0.0, %v7801
        %7803 = vdwg.mxu0
        %v7804 = vadd.f32 %v7774, %v7802
        %v7806 = vperm.slane %v7537, 0
        %v7808 = vadd.f32 %v7804, %v7806
        %v7809 = vmax.f32 %v7808, 0.0
        %vm7810 = vcmask 519168
        %7811 = vst.msk [vmem:[%s413] sm:$0xf] %vm7810, %v7809
        %v7812 = vld [vmem:[%s7500] sm:$0xf]
        %v7813 = vld [vmem:[%s9] sm:$0xff]
        %v7814 = vld [vmem:[%s9 + $0x8] sm:$0xff]
        %v7815 = vld [vmem:[%s9 + $0x10] sm:$0xff]
        %v7816 = vld [vmem:[%s9 + $0x18] sm:$0xff]
        %v7817 = vld [vmem:[%s7500 + $0x1] sm:$0xf]
        %v7818 = vld [vmem:[%s7544] sm:$0xff]
        %v7819 = vld [vmem:[%s7544 + $0x8] sm:$0xff]
        %v7820 = vld [vmem:[%s7544 + $0x10] sm:$0xff]
        %v7821 = vld [vmem:[%s7544 + $0x18] sm:$0xff]
        %v7823 = vsel %vm6615, %v7817, 0
        %7825 = vmatpush.msra.mxu0 0.0
        %7826 = vmatpush.msra.mxu0 0.0
        %7827 = vmatpush.msra.mxu0 0.0
        %7828 = vmatpush.msra.mxu0 0.0
        %7829 = vmatpush.msra.mxu0 0.0
        %7830 = vmatpush.msra.mxu0 0.0
        %7831 = vmatpush.msra.mxu0 0.0
        %7832 = vmatpush.msra.mxu0 0.0
        %7833 = vmatpush.msra.mxu0 0.0
        %7834 = vmatpush.msra.mxu0 0.0
        %7835 = vmatpush.msra.mxu0 0.0
        %7836 = vmatpush.msra.mxu0 0.0
        %7837 = vmatpush.msra.mxu0 %v7821
        %7838 = vmatpush.msra.mxu0 %v7820
        %7839 = vmatpush.msra.mxu0 %v7819
        %7840 = vmatpush.msra.mxu0 %v7818
        %7841 = vmatmul.f32.gmra.mxu0 %v7823
        %v7842 = vpop.f32.mrf.mxu0
        %v7843 = vadd.f32 0.0, %v7842
        %7844 = vdwg.mxu0
        %v7846 = vsel %vm6615, %v7812, 0
        %7848 = vmatpush.msra.mxu0 0.0
        %7849 = vmatpush.msra.mxu0 0.0
        %7850 = vmatpush.msra.mxu0 0.0
        %7851 = vmatpush.msra.mxu0 0.0
        %7852 = vmatpush.msra.mxu0 0.0
        %7853 = vmatpush.msra.mxu0 0.0
        %7854 = vmatpush.msra.mxu0 0.0
        %7855 = vmatpush.msra.mxu0 0.0
        %7856 = vmatpush.msra.mxu0 0.0
        %7857 = vmatpush.msra.mxu0 0.0
        %7858 = vmatpush.msra.mxu0 0.0
        %7859 = vmatpush.msra.mxu0 0.0
        %7860 = vmatpush.msra.mxu0 %v7816
        %7861 = vmatpush.msra.mxu0 %v7815
        %7862 = vmatpush.msra.mxu0 %v7814
        %7863 = vmatpush.msra.mxu0 %v7813
        %7864 = vmatmul.f32.gmra.mxu0 %v7846
        %v7865 = vpop.f32.mrf.mxu0
        %v7866 = vadd.f32 %v7843, %v7865
        %7867 = vdwg.mxu0
        %v7868 = vld [vmem:[%s7500 + $0x2] sm:$0xf]
        %v7869 = vld [vmem:[%s7596] sm:$0xff]
        %v7870 = vld [vmem:[%s7596 + $0x8] sm:$0xff]
        %v7871 = vld [vmem:[%s7596 + $0x10] sm:$0xff]
        %v7872 = vld [vmem:[%s7596 + $0x18] sm:$0xff]
        %v7874 = vsel %vm6615, %v7868, 0
        %7876 = vmatpush.msra.mxu0 0.0
        %7877 = vmatpush.msra.mxu0 0.0
        %7878 = vmatpush.msra.mxu0 0.0
        %7879 = vmatpush.msra.mxu0 0.0
        %7880 = vmatpush.msra.mxu0 0.0
        %7881 = vmatpush.msra.mxu0 0.0
        %7882 = vmatpush.msra.mxu0 0.0
        %7883 = vmatpush.msra.mxu0 0.0
        %7884 = vmatpush.msra.mxu0 0.0
        %7885 = vmatpush.msra.mxu0 0.0
        %7886 = vmatpush.msra.mxu0 0.0
        %7887 = vmatpush.msra.mxu0 0.0
        %7888 = vmatpush.msra.mxu0 %v7872
        %7889 = vmatpush.msra.mxu0 %v7871
        %7890 = vmatpush.msra.mxu0 %v7870
        %7891 = vmatpush.msra.mxu0 %v7869
        %7892 = vmatmul.f32.gmra.mxu0 %v7874
        %v7893 = vpop.f32.mrf.mxu0
        %v7894 = vadd.f32 0.0, %v7893
        %7895 = vdwg.mxu0
        %v7896 = vadd.f32 %v7866, %v7894
        %v7897 = vld [vmem:[%s7506] sm:$0xf]
        %v7898 = vld [vmem:[%s7626] sm:$0xff]
        %v7899 = vld [vmem:[%s7626 + $0x8] sm:$0xff]
        %v7900 = vld [vmem:[%s7626 + $0x10] sm:$0xff]
        %v7901 = vld [vmem:[%s7626 + $0x18] sm:$0xff]
        %v7903 = vsel %vm6615, %v7897, 0
        %7905 = vmatpush.msra.mxu0 0.0
        %7906 = vmatpush.msra.mxu0 0.0
        %7907 = vmatpush.msra.mxu0 0.0
        %7908 = vmatpush.msra.mxu0 0.0
        %7909 = vmatpush.msra.mxu0 0.0
        %7910 = vmatpush.msra.mxu0 0.0
        %7911 = vmatpush.msra.mxu0 0.0
        %7912 = vmatpush.msra.mxu0 0.0
        %7913 = vmatpush.msra.mxu0 0.0
        %7914 = vmatpush.msra.mxu0 0.0
        %7915 = vmatpush.msra.mxu0 0.0
        %7916 = vmatpush.msra.mxu0 0.0
        %7917 = vmatpush.msra.mxu0 %v7901
        %7918 = vmatpush.msra.mxu0 %v7900
        %7919 = vmatpush.msra.mxu0 %v7899
        %7920 = vmatpush.msra.mxu0 %v7898
        %7921 = vmatmul.f32.gmra.mxu0 %v7903
        %v7922 = vpop.f32.mrf.mxu0
        %v7923 = vadd.f32 0.0, %v7922
        %7924 = vdwg.mxu0
        %v7925 = vadd.f32 %v7896, %v7923
        %v7926 = vld [vmem:[%s7506 + $0x1] sm:$0xf]
        %v7927 = vld [vmem:[%s7656] sm:$0xff]
        %v7928 = vld [vmem:[%s7656 + $0x8] sm:$0xff]
        %v7929 = vld [vmem:[%s7656 + $0x10] sm:$0xff]
        %v7930 = vld [vmem:[%s7656 + $0x18] sm:$0xff]
        %v7932 = vsel %vm6615, %v7926, 0
        %7934 = vmatpush.msra.mxu0 0.0
        %7935 = vmatpush.msra.mxu0 0.0
        %7936 = vmatpush.msra.mxu0 0.0
        %7937 = vmatpush.msra.mxu0 0.0
        %7938 = vmatpush.msra.mxu0 0.0
        %7939 = vmatpush.msra.mxu0 0.0
        %7940 = vmatpush.msra.mxu0 0.0
        %7941 = vmatpush.msra.mxu0 0.0
        %7942 = vmatpush.msra.mxu0 0.0
        %7943 = vmatpush.msra.mxu0 0.0
        %7944 = vmatpush.msra.mxu0 0.0
        %7945 = vmatpush.msra.mxu0 0.0
        %7946 = vmatpush.msra.mxu0 %v7930
        %7947 = vmatpush.msra.mxu0 %v7929
        %7948 = vmatpush.msra.mxu0 %v7928
        %7949 = vmatpush.msra.mxu0 %v7927
        %7950 = vmatmul.f32.gmra.mxu0 %v7932
        %v7951 = vpop.f32.mrf.mxu0
        %v7952 = vadd.f32 0.0, %v7951
        %7953 = vdwg.mxu0
        %v7954 = vadd.f32 %v7925, %v7952
        %v7955 = vld [vmem:[%s7506 + $0x2] sm:$0xf]
        %v7956 = vld [vmem:[%s7686] sm:$0xff]
        %v7957 = vld [vmem:[%s7686 + $0x8] sm:$0xff]
        %v7958 = vld [vmem:[%s7686 + $0x10] sm:$0xff]
        %v7959 = vld [vmem:[%s7686 + $0x18] sm:$0xff]
        %v7961 = vsel %vm6615, %v7955, 0
        %7963 = vmatpush.msra.mxu0 0.0
        %7964 = vmatpush.msra.mxu0 0.0
        %7965 = vmatpush.msra.mxu0 0.0
        %7966 = vmatpush.msra.mxu0 0.0
        %7967 = vmatpush.msra.mxu0 0.0
        %7968 = vmatpush.msra.mxu0 0.0
        %7969 = vmatpush.msra.mxu0 0.0
        %7970 = vmatpush.msra.mxu0 0.0
        %7971 = vmatpush.msra.mxu0 0.0
        %7972 = vmatpush.msra.mxu0 0.0
        %7973 = vmatpush.msra.mxu0 0.0
        %7974 = vmatpush.msra.mxu0 0.0
        %7975 = vmatpush.msra.mxu0 %v7959
        %7976 = vmatpush.msra.mxu0 %v7958
        %7977 = vmatpush.msra.mxu0 %v7957
        %7978 = vmatpush.msra.mxu0 %v7956
        %7979 = vmatmul.f32.gmra.mxu0 %v7961
        %v7980 = vpop.f32.mrf.mxu0
        %v7981 = vadd.f32 0.0, %v7980
        %7982 = vdwg.mxu0
        %v7983 = vadd.f32 %v7954, %v7981
        %v7984 = vld [vmem:[%s7509] sm:$0xf]
        %v7985 = vld [vmem:[%s7716] sm:$0xff]
        %v7986 = vld [vmem:[%s7716 + $0x8] sm:$0xff]
        %v7987 = vld [vmem:[%s7716 + $0x10] sm:$0xff]
        %v7988 = vld [vmem:[%s7716 + $0x18] sm:$0xff]
        %v7990 = vsel %vm6615, %v7984, 0
        %7992 = vmatpush.msra.mxu0 0.0
        %7993 = vmatpush.msra.mxu0 0.0
        %7994 = vmatpush.msra.mxu0 0.0
        %7995 = vmatpush.msra.mxu0 0.0
        %7996 = vmatpush.msra.mxu0 0.0
        %7997 = vmatpush.msra.mxu0 0.0
        %7998 = vmatpush.msra.mxu0 0.0
        %7999 = vmatpush.msra.mxu0 0.0
        %8000 = vmatpush.msra.mxu0 0.0
        %8001 = vmatpush.msra.mxu0 0.0
        %8002 = vmatpush.msra.mxu0 0.0
        %8003 = vmatpush.msra.mxu0 0.0
        %8004 = vmatpush.msra.mxu0 %v7988
        %8005 = vmatpush.msra.mxu0 %v7987
        %8006 = vmatpush.msra.mxu0 %v7986
        %8007 = vmatpush.msra.mxu0 %v7985
        %8008 = vmatmul.f32.gmra.mxu0 %v7990
        %v8009 = vpop.f32.mrf.mxu0
        %v8010 = vadd.f32 0.0, %v8009
        %8011 = vdwg.mxu0
        %v8012 = vadd.f32 %v7983, %v8010
        %v8013 = vld [vmem:[%s7509 + $0x1] sm:$0xf]
        %v8014 = vld [vmem:[%s7746] sm:$0xff]
        %v8015 = vld [vmem:[%s7746 + $0x8] sm:$0xff]
        %v8016 = vld [vmem:[%s7746 + $0x10] sm:$0xff]
        %v8017 = vld [vmem:[%s7746 + $0x18] sm:$0xff]
        %v8019 = vsel %vm6615, %v8013, 0
        %8021 = vmatpush.msra.mxu0 0.0
        %8022 = vmatpush.msra.mxu0 0.0
        %8023 = vmatpush.msra.mxu0 0.0
        %8024 = vmatpush.msra.mxu0 0.0
        %8025 = vmatpush.msra.mxu0 0.0
        %8026 = vmatpush.msra.mxu0 0.0
        %8027 = vmatpush.msra.mxu0 0.0
        %8028 = vmatpush.msra.mxu0 0.0
        %8029 = vmatpush.msra.mxu0 0.0
        %8030 = vmatpush.msra.mxu0 0.0
        %8031 = vmatpush.msra.mxu0 0.0
        %8032 = vmatpush.msra.mxu0 0.0
        %8033 = vmatpush.msra.mxu0 %v8017
        %8034 = vmatpush.msra.mxu0 %v8016
        %8035 = vmatpush.msra.mxu0 %v8015
        %8036 = vmatpush.msra.mxu0 %v8014
        %8037 = vmatmul.f32.gmra.mxu0 %v8019
        %v8038 = vpop.f32.mrf.mxu0
        %v8039 = vadd.f32 0.0, %v8038
        %8040 = vdwg.mxu0
        %v8041 = vadd.f32 %v8012, %v8039
        %v8042 = vld [vmem:[%s7509 + $0x2] sm:$0xf]
        %v8043 = vld [vmem:[%s7776] sm:$0xff]
        %v8044 = vld [vmem:[%s7776 + $0x8] sm:$0xff]
        %v8045 = vld [vmem:[%s7776 + $0x10] sm:$0xff]
        %v8046 = vld [vmem:[%s7776 + $0x18] sm:$0xff]
        %v8048 = vsel %vm6615, %v8042, 0
        %8050 = vmatpush.msra.mxu0 0.0
        %8051 = vmatpush.msra.mxu0 0.0
        %8052 = vmatpush.msra.mxu0 0.0
        %8053 = vmatpush.msra.mxu0 0.0
        %8054 = vmatpush.msra.mxu0 0.0
        %8055 = vmatpush.msra.mxu0 0.0
        %8056 = vmatpush.msra.mxu0 0.0
        %8057 = vmatpush.msra.mxu0 0.0
        %8058 = vmatpush.msra.mxu0 0.0
        %8059 = vmatpush.msra.mxu0 0.0
        %8060 = vmatpush.msra.mxu0 0.0
        %8061 = vmatpush.msra.mxu0 0.0
        %8062 = vmatpush.msra.mxu0 %v8046
        %8063 = vmatpush.msra.mxu0 %v8045
        %8064 = vmatpush.msra.mxu0 %v8044
        %8065 = vmatpush.msra.mxu0 %v8043
        %8066 = vmatmul.f32.gmra.mxu0 %v8048
        %v8067 = vpop.f32.mrf.mxu0
        %v8068 = vadd.f32 0.0, %v8067
        %8069 = vdwg.mxu0
        %v8070 = vadd.f32 %v8041, %v8068
        %v8071 = vadd.f32 %v8070, %v7806
        %v8072 = vmax.f32 %v8071, 0.0
        %8073 = vst.msk [vmem:[%s413 + $0x4] sm:$0xf] %vm7810, %v8072
        %v8074 = vld [vmem:[%s7506] sm:$0xf]
        %v8075 = vld [vmem:[%s9] sm:$0xff]
        %v8076 = vld [vmem:[%s9 + $0x8] sm:$0xff]
        %v8077 = vld [vmem:[%s9 + $0x10] sm:$0xff]
        %v8078 = vld [vmem:[%s9 + $0x18] sm:$0xff]
        %v8079 = vld [vmem:[%s7506 + $0x1] sm:$0xf]
        %v8080 = vld [vmem:[%s7544] sm:$0xff]
        %v8081 = vld [vmem:[%s7544 + $0x8] sm:$0xff]
        %v8082 = vld [vmem:[%s7544 + $0x10] sm:$0xff]
        %v8083 = vld [vmem:[%s7544 + $0x18] sm:$0xff]
        %v8085 = vsel %vm6615, %v8079, 0
        %8087 = vmatpush.msra.mxu0 0.0
        %8088 = vmatpush.msra.mxu0 0.0
        %8089 = vmatpush.msra.mxu0 0.0
        %8090 = vmatpush.msra.mxu0 0.0
        %8091 = vmatpush.msra.mxu0 0.0
        %8092 = vmatpush.msra.mxu0 0.0
        %8093 = vmatpush.msra.mxu0 0.0
        %8094 = vmatpush.msra.mxu0 0.0
        %8095 = vmatpush.msra.mxu0 0.0
        %8096 = vmatpush.msra.mxu0 0.0
        %8097 = vmatpush.msra.mxu0 0.0
        %8098 = vmatpush.msra.mxu0 0.0
        %8099 = vmatpush.msra.mxu0 %v8083
        %8100 = vmatpush.msra.mxu0 %v8082
        %8101 = vmatpush.msra.mxu0 %v8081
        %8102 = vmatpush.msra.mxu0 %v8080
        %8103 = vmatmul.f32.gmra.mxu0 %v8085
        %v8104 = vpop.f32.mrf.mxu0
        %v8105 = vadd.f32 0.0, %v8104
        %8106 = vdwg.mxu0
        %v8108 = vsel %vm6615, %v8074, 0
        %8110 = vmatpush.msra.mxu0 0.0
        %8111 = vmatpush.msra.mxu0 0.0
        %8112 = vmatpush.msra.mxu0 0.0
        %8113 = vmatpush.msra.mxu0 0.0
        %8114 = vmatpush.msra.mxu0 0.0
        %8115 = vmatpush.msra.mxu0 0.0
        %8116 = vmatpush.msra.mxu0 0.0
        %8117 = vmatpush.msra.mxu0 0.0
        %8118 = vmatpush.msra.mxu0 0.0
        %8119 = vmatpush.msra.mxu0 0.0
        %8120 = vmatpush.msra.mxu0 0.0
        %8121 = vmatpush.msra.mxu0 0.0
        %8122 = vmatpush.msra.mxu0 %v8078
        %8123 = vmatpush.msra.mxu0 %v8077
        %8124 = vmatpush.msra.mxu0 %v8076
        %8125 = vmatpush.msra.mxu0 %v8075
        %8126 = vmatmul.f32.gmra.mxu0 %v8108
        %v8127 = vpop.f32.mrf.mxu0
        %v8128 = vadd.f32 %v8105, %v8127
        %8129 = vdwg.mxu0
        %v8130 = vld [vmem:[%s7506 + $0x2] sm:$0xf]
        %v8131 = vld [vmem:[%s7596] sm:$0xff]
        %v8132 = vld [vmem:[%s7596 + $0x8] sm:$0xff]
        %v8133 = vld [vmem:[%s7596 + $0x10] sm:$0xff]
        %v8134 = vld [vmem:[%s7596 + $0x18] sm:$0xff]
        %v8136 = vsel %vm6615, %v8130, 0
        %8138 = vmatpush.msra.mxu0 0.0
        %8139 = vmatpush.msra.mxu0 0.0
        %8140 = vmatpush.msra.mxu0 0.0
        %8141 = vmatpush.msra.mxu0 0.0
        %8142 = vmatpush.msra.mxu0 0.0
        %8143 = vmatpush.msra.mxu0 0.0
        %8144 = vmatpush.msra.mxu0 0.0
        %8145 = vmatpush.msra.mxu0 0.0
        %8146 = vmatpush.msra.mxu0 0.0
        %8147 = vmatpush.msra.mxu0 0.0
        %8148 = vmatpush.msra.mxu0 0.0
        %8149 = vmatpush.msra.mxu0 0.0
        %8150 = vmatpush.msra.mxu0 %v8134
        %8151 = vmatpush.msra.mxu0 %v8133
        %8152 = vmatpush.msra.mxu0 %v8132
        %8153 = vmatpush.msra.mxu0 %v8131
        %8154 = vmatmul.f32.gmra.mxu0 %v8136
        %v8155 = vpop.f32.mrf.mxu0
        %v8156 = vadd.f32 0.0, %v8155
        %8157 = vdwg.mxu0
        %v8158 = vadd.f32 %v8128, %v8156
        %v8159 = vld [vmem:[%s7509] sm:$0xf]
        %v8160 = vld [vmem:[%s7626] sm:$0xff]
        %v8161 = vld [vmem:[%s7626 + $0x8] sm:$0xff]
        %v8162 = vld [vmem:[%s7626 + $0x10] sm:$0xff]
        %v8163 = vld [vmem:[%s7626 + $0x18] sm:$0xff]
        %v8165 = vsel %vm6615, %v8159, 0
        %8167 = vmatpush.msra.mxu0 0.0
        %8168 = vmatpush.msra.mxu0 0.0
        %8169 = vmatpush.msra.mxu0 0.0
        %8170 = vmatpush.msra.mxu0 0.0
        %8171 = vmatpush.msra.mxu0 0.0
        %8172 = vmatpush.msra.mxu0 0.0
        %8173 = vmatpush.msra.mxu0 0.0
        %8174 = vmatpush.msra.mxu0 0.0
        %8175 = vmatpush.msra.mxu0 0.0
        %8176 = vmatpush.msra.mxu0 0.0
        %8177 = vmatpush.msra.mxu0 0.0
        %8178 = vmatpush.msra.mxu0 0.0
        %8179 = vmatpush.msra.mxu0 %v8163
        %8180 = vmatpush.msra.mxu0 %v8162
        %8181 = vmatpush.msra.mxu0 %v8161
        %8182 = vmatpush.msra.mxu0 %v8160
        %8183 = vmatmul.f32.gmra.mxu0 %v8165
        %v8184 = vpop.f32.mrf.mxu0
        %v8185 = vadd.f32 0.0, %v8184
        %8186 = vdwg.mxu0
        %v8187 = vadd.f32 %v8158, %v8185
        %v8188 = vld [vmem:[%s7509 + $0x1] sm:$0xf]
        %v8189 = vld [vmem:[%s7656] sm:$0xff]
        %v8190 = vld [vmem:[%s7656 + $0x8] sm:$0xff]
        %v8191 = vld [vmem:[%s7656 + $0x10] sm:$0xff]
        %v8192 = vld [vmem:[%s7656 + $0x18] sm:$0xff]
        %v8194 = vsel %vm6615, %v8188, 0
        %8196 = vmatpush.msra.mxu0 0.0
        %8197 = vmatpush.msra.mxu0 0.0
        %8198 = vmatpush.msra.mxu0 0.0
        %8199 = vmatpush.msra.mxu0 0.0
        %8200 = vmatpush.msra.mxu0 0.0
        %8201 = vmatpush.msra.mxu0 0.0
        %8202 = vmatpush.msra.mxu0 0.0
        %8203 = vmatpush.msra.mxu0 0.0
        %8204 = vmatpush.msra.mxu0 0.0
        %8205 = vmatpush.msra.mxu0 0.0
        %8206 = vmatpush.msra.mxu0 0.0
        %8207 = vmatpush.msra.mxu0 0.0
        %8208 = vmatpush.msra.mxu0 %v8192
        %8209 = vmatpush.msra.mxu0 %v8191
        %8210 = vmatpush.msra.mxu0 %v8190
        %8211 = vmatpush.msra.mxu0 %v8189
        %8212 = vmatmul.f32.gmra.mxu0 %v8194
        %v8213 = vpop.f32.mrf.mxu0
        %v8214 = vadd.f32 0.0, %v8213
        %8215 = vdwg.mxu0
        %v8216 = vadd.f32 %v8187, %v8214
        %v8217 = vld [vmem:[%s7509 + $0x2] sm:$0xf]
        %v8218 = vld [vmem:[%s7686] sm:$0xff]
        %v8219 = vld [vmem:[%s7686 + $0x8] sm:$0xff]
        %v8220 = vld [vmem:[%s7686 + $0x10] sm:$0xff]
        %v8221 = vld [vmem:[%s7686 + $0x18] sm:$0xff]
        %v8223 = vsel %vm6615, %v8217, 0
        %8225 = vmatpush.msra.mxu0 0.0
        %8226 = vmatpush.msra.mxu0 0.0
        %8227 = vmatpush.msra.mxu0 0.0
        %8228 = vmatpush.msra.mxu0 0.0
        %8229 = vmatpush.msra.mxu0 0.0
        %8230 = vmatpush.msra.mxu0 0.0
        %8231 = vmatpush.msra.mxu0 0.0
        %8232 = vmatpush.msra.mxu0 0.0
        %8233 = vmatpush.msra.mxu0 0.0
        %8234 = vmatpush.msra.mxu0 0.0
        %8235 = vmatpush.msra.mxu0 0.0
        %8236 = vmatpush.msra.mxu0 0.0
        %8237 = vmatpush.msra.mxu0 %v8221
        %8238 = vmatpush.msra.mxu0 %v8220
        %8239 = vmatpush.msra.mxu0 %v8219
        %8240 = vmatpush.msra.mxu0 %v8218
        %8241 = vmatmul.f32.gmra.mxu0 %v8223
        %v8242 = vpop.f32.mrf.mxu0
        %v8243 = vadd.f32 0.0, %v8242
        %8244 = vdwg.mxu0
        %v8245 = vadd.f32 %v8216, %v8243
        %s8246 = scalar_lea.vmem [#allocation8], 32
        %v8247 = vld [vmem:[%s8246] sm:$0xf]
        %v8248 = vld [vmem:[%s7716] sm:$0xff]
        %v8249 = vld [vmem:[%s7716 + $0x8] sm:$0xff]
        %v8250 = vld [vmem:[%s7716 + $0x10] sm:$0xff]
        %v8251 = vld [vmem:[%s7716 + $0x18] sm:$0xff]
        %v8253 = vsel %vm6615, %v8247, 0
        %8255 = vmatpush.msra.mxu0 0.0
        %8256 = vmatpush.msra.mxu0 0.0
        %8257 = vmatpush.msra.mxu0 0.0
        %8258 = vmatpush.msra.mxu0 0.0
        %8259 = vmatpush.msra.mxu0 0.0
        %8260 = vmatpush.msra.mxu0 0.0
        %8261 = vmatpush.msra.mxu0 0.0
        %8262 = vmatpush.msra.mxu0 0.0
        %8263 = vmatpush.msra.mxu0 0.0
        %8264 = vmatpush.msra.mxu0 0.0
        %8265 = vmatpush.msra.mxu0 0.0
        %8266 = vmatpush.msra.mxu0 0.0
        %8267 = vmatpush.msra.mxu0 %v8251
        %8268 = vmatpush.msra.mxu0 %v8250
        %8269 = vmatpush.msra.mxu0 %v8249
        %8270 = vmatpush.msra.mxu0 %v8248
        %8271 = vmatmul.f32.gmra.mxu0 %v8253
        %v8272 = vpop.f32.mrf.mxu0
        %v8273 = vadd.f32 0.0, %v8272
        %8274 = vdwg.mxu0
        %v8275 = vadd.f32 %v8245, %v8273
        %v8276 = vld [vmem:[%s8246 + $0x1] sm:$0xf]
        %v8277 = vld [vmem:[%s7746] sm:$0xff]
        %v8278 = vld [vmem:[%s7746 + $0x8] sm:$0xff]
        %v8279 = vld [vmem:[%s7746 + $0x10] sm:$0xff]
        %v8280 = vld [vmem:[%s7746 + $0x18] sm:$0xff]
        %v8282 = vsel %vm6615, %v8276, 0
        %8284 = vmatpush.msra.mxu0 0.0
        %8285 = vmatpush.msra.mxu0 0.0
        %8286 = vmatpush.msra.mxu0 0.0
        %8287 = vmatpush.msra.mxu0 0.0
        %8288 = vmatpush.msra.mxu0 0.0
        %8289 = vmatpush.msra.mxu0 0.0
        %8290 = vmatpush.msra.mxu0 0.0
        %8291 = vmatpush.msra.mxu0 0.0
        %8292 = vmatpush.msra.mxu0 0.0
        %8293 = vmatpush.msra.mxu0 0.0
        %8294 = vmatpush.msra.mxu0 0.0
        %8295 = vmatpush.msra.mxu0 0.0
        %8296 = vmatpush.msra.mxu0 %v8280
        %8297 = vmatpush.msra.mxu0 %v8279
        %8298 = vmatpush.msra.mxu0 %v8278
        %8299 = vmatpush.msra.mxu0 %v8277
        %8300 = vmatmul.f32.gmra.mxu0 %v8282
        %v8301 = vpop.f32.mrf.mxu0
        %v8302 = vadd.f32 0.0, %v8301
        %8303 = vdwg.mxu0
        %v8304 = vadd.f32 %v8275, %v8302
        %v8305 = vld [vmem:[%s8246 + $0x2] sm:$0xf]
        %v8306 = vld [vmem:[%s7776] sm:$0xff]
        %v8307 = vld [vmem:[%s7776 + $0x8] sm:$0xff]
        %v8308 = vld [vmem:[%s7776 + $0x10] sm:$0xff]
        %v8309 = vld [vmem:[%s7776 + $0x18] sm:$0xff]
        %v8311 = vsel %vm6615, %v8305, 0
        %8313 = vmatpush.msra.mxu0 0.0
        %8314 = vmatpush.msra.mxu0 0.0
        %8315 = vmatpush.msra.mxu0 0.0
        %8316 = vmatpush.msra.mxu0 0.0
        %8317 = vmatpush.msra.mxu0 0.0
        %8318 = vmatpush.msra.mxu0 0.0
        %8319 = vmatpush.msra.mxu0 0.0
        %8320 = vmatpush.msra.mxu0 0.0
        %8321 = vmatpush.msra.mxu0 0.0
        %8322 = vmatpush.msra.mxu0 0.0
        %8323 = vmatpush.msra.mxu0 0.0
        %8324 = vmatpush.msra.mxu0 0.0
        %8325 = vmatpush.msra.mxu0 %v8309
        %8326 = vmatpush.msra.mxu0 %v8308
        %8327 = vmatpush.msra.mxu0 %v8307
        %8328 = vmatpush.msra.mxu0 %v8306
        %8329 = vmatmul.f32.gmra.mxu0 %v8311
        %v8330 = vpop.f32.mrf.mxu0
        %v8331 = vadd.f32 0.0, %v8330
        %8332 = vdwg.mxu0
        %v8333 = vadd.f32 %v8304, %v8331
        %v8334 = vadd.f32 %v8333, %v7806
        %v8335 = vmax.f32 %v8334, 0.0
        %8336 = vst.msk [vmem:[%s413 + $0x8] sm:$0xf] %vm7810, %v8335
        %v8337 = vld [vmem:[%s7509] sm:$0xf]
        %v8338 = vld [vmem:[%s9] sm:$0xff]
        %v8339 = vld [vmem:[%s9 + $0x8] sm:$0xff]
        %v8340 = vld [vmem:[%s9 + $0x10] sm:$0xff]
        %v8341 = vld [vmem:[%s9 + $0x18] sm:$0xff]
        %v8342 = vld [vmem:[%s7509 + $0x1] sm:$0xf]
        %v8343 = vld [vmem:[%s7544] sm:$0xff]
        %v8344 = vld [vmem:[%s7544 + $0x8] sm:$0xff]
        %v8345 = vld [vmem:[%s7544 + $0x10] sm:$0xff]
        %v8346 = vld [vmem:[%s7544 + $0x18] sm:$0xff]
        %v8348 = vsel %vm6615, %v8342, 0
        %8350 = vmatpush.msra.mxu0 0.0
        %8351 = vmatpush.msra.mxu0 0.0
        %8352 = vmatpush.msra.mxu0 0.0
        %8353 = vmatpush.msra.mxu0 0.0
        %8354 = vmatpush.msra.mxu0 0.0
        %8355 = vmatpush.msra.mxu0 0.0
        %8356 = vmatpush.msra.mxu0 0.0
        %8357 = vmatpush.msra.mxu0 0.0
        %8358 = vmatpush.msra.mxu0 0.0
        %8359 = vmatpush.msra.mxu0 0.0
        %8360 = vmatpush.msra.mxu0 0.0
        %8361 = vmatpush.msra.mxu0 0.0
        %8362 = vmatpush.msra.mxu0 %v8346
        %8363 = vmatpush.msra.mxu0 %v8345
        %8364 = vmatpush.msra.mxu0 %v8344
        %8365 = vmatpush.msra.mxu0 %v8343
        %8366 = vmatmul.f32.gmra.mxu0 %v8348
        %v8367 = vpop.f32.mrf.mxu0
        %v8368 = vadd.f32 0.0, %v8367
        %8369 = vdwg.mxu0
        %v8371 = vsel %vm6615, %v8337, 0
        %8373 = vmatpush.msra.mxu0 0.0
        %8374 = vmatpush.msra.mxu0 0.0
        %8375 = vmatpush.msra.mxu0 0.0
        %8376 = vmatpush.msra.mxu0 0.0
        %8377 = vmatpush.msra.mxu0 0.0
        %8378 = vmatpush.msra.mxu0 0.0
        %8379 = vmatpush.msra.mxu0 0.0
        %8380 = vmatpush.msra.mxu0 0.0
        %8381 = vmatpush.msra.mxu0 0.0
        %8382 = vmatpush.msra.mxu0 0.0
        %8383 = vmatpush.msra.mxu0 0.0
        %8384 = vmatpush.msra.mxu0 0.0
        %8385 = vmatpush.msra.mxu0 %v8341
        %8386 = vmatpush.msra.mxu0 %v8340
        %8387 = vmatpush.msra.mxu0 %v8339
        %8388 = vmatpush.msra.mxu0 %v8338
        %8389 = vmatmul.f32.gmra.mxu0 %v8371
        %v8390 = vpop.f32.mrf.mxu0
        %v8391 = vadd.f32 %v8368, %v8390
        %8392 = vdwg.mxu0
        %v8393 = vld [vmem:[%s7509 + $0x2] sm:$0xf]
        %v8394 = vld [vmem:[%s7596] sm:$0xff]
        %v8395 = vld [vmem:[%s7596 + $0x8] sm:$0xff]
        %v8396 = vld [vmem:[%s7596 + $0x10] sm:$0xff]
        %v8397 = vld [vmem:[%s7596 + $0x18] sm:$0xff]
        %v8399 = vsel %vm6615, %v8393, 0
        %8401 = vmatpush.msra.mxu0 0.0
        %8402 = vmatpush.msra.mxu0 0.0
        %8403 = vmatpush.msra.mxu0 0.0
        %8404 = vmatpush.msra.mxu0 0.0
        %8405 = vmatpush.msra.mxu0 0.0
        %8406 = vmatpush.msra.mxu0 0.0
        %8407 = vmatpush.msra.mxu0 0.0
        %8408 = vmatpush.msra.mxu0 0.0
        %8409 = vmatpush.msra.mxu0 0.0
        %8410 = vmatpush.msra.mxu0 0.0
        %8411 = vmatpush.msra.mxu0 0.0
        %8412 = vmatpush.msra.mxu0 0.0
        %8413 = vmatpush.msra.mxu0 %v8397
        %8414 = vmatpush.msra.mxu0 %v8396
        %8415 = vmatpush.msra.mxu0 %v8395
        %8416 = vmatpush.msra.mxu0 %v8394
        %8417 = vmatmul.f32.gmra.mxu0 %v8399
        %v8418 = vpop.f32.mrf.mxu0
        %v8419 = vadd.f32 0.0, %v8418
        %8420 = vdwg.mxu0
        %v8421 = vadd.f32 %v8391, %v8419
        %v8422 = vld [vmem:[%s8246] sm:$0xf]
        %v8423 = vld [vmem:[%s7626] sm:$0xff]
        %v8424 = vld [vmem:[%s7626 + $0x8] sm:$0xff]
        %v8425 = vld [vmem:[%s7626 + $0x10] sm:$0xff]
        %v8426 = vld [vmem:[%s7626 + $0x18] sm:$0xff]
        %v8428 = vsel %vm6615, %v8422, 0
        %8430 = vmatpush.msra.mxu0 0.0
        %8431 = vmatpush.msra.mxu0 0.0
        %8432 = vmatpush.msra.mxu0 0.0
        %8433 = vmatpush.msra.mxu0 0.0
        %8434 = vmatpush.msra.mxu0 0.0
        %8435 = vmatpush.msra.mxu0 0.0
        %8436 = vmatpush.msra.mxu0 0.0
        %8437 = vmatpush.msra.mxu0 0.0
        %8438 = vmatpush.msra.mxu0 0.0
        %8439 = vmatpush.msra.mxu0 0.0
        %8440 = vmatpush.msra.mxu0 0.0
        %8441 = vmatpush.msra.mxu0 0.0
        %8442 = vmatpush.msra.mxu0 %v8426
        %8443 = vmatpush.msra.mxu0 %v8425
        %8444 = vmatpush.msra.mxu0 %v8424
        %8445 = vmatpush.msra.mxu0 %v8423
        %8446 = vmatmul.f32.gmra.mxu0 %v8428
        %v8447 = vpop.f32.mrf.mxu0
        %v8448 = vadd.f32 0.0, %v8447
        %8449 = vdwg.mxu0
        %v8450 = vadd.f32 %v8421, %v8448
        %v8451 = vld [vmem:[%s8246 + $0x1] sm:$0xf]
        %v8452 = vld [vmem:[%s7656] sm:$0xff]
        %v8453 = vld [vmem:[%s7656 + $0x8] sm:$0xff]
        %v8454 = vld [vmem:[%s7656 + $0x10] sm:$0xff]
        %v8455 = vld [vmem:[%s7656 + $0x18] sm:$0xff]
        %v8457 = vsel %vm6615, %v8451, 0
        %8459 = vmatpush.msra.mxu0 0.0
        %8460 = vmatpush.msra.mxu0 0.0
        %8461 = vmatpush.msra.mxu0 0.0
        %8462 = vmatpush.msra.mxu0 0.0
        %8463 = vmatpush.msra.mxu0 0.0
        %8464 = vmatpush.msra.mxu0 0.0
        %8465 = vmatpush.msra.mxu0 0.0
        %8466 = vmatpush.msra.mxu0 0.0
        %8467 = vmatpush.msra.mxu0 0.0
        %8468 = vmatpush.msra.mxu0 0.0
        %8469 = vmatpush.msra.mxu0 0.0
        %8470 = vmatpush.msra.mxu0 0.0
        %8471 = vmatpush.msra.mxu0 %v8455
        %8472 = vmatpush.msra.mxu0 %v8454
        %8473 = vmatpush.msra.mxu0 %v8453
        %8474 = vmatpush.msra.mxu0 %v8452
        %8475 = vmatmul.f32.gmra.mxu0 %v8457
        %v8476 = vpop.f32.mrf.mxu0
        %v8477 = vadd.f32 0.0, %v8476
        %8478 = vdwg.mxu0
        %v8479 = vadd.f32 %v8450, %v8477
        %v8480 = vld [vmem:[%s8246 + $0x2] sm:$0xf]
        %v8481 = vld [vmem:[%s7686] sm:$0xff]
        %v8482 = vld [vmem:[%s7686 + $0x8] sm:$0xff]
        %v8483 = vld [vmem:[%s7686 + $0x10] sm:$0xff]
        %v8484 = vld [vmem:[%s7686 + $0x18] sm:$0xff]
        %v8486 = vsel %vm6615, %v8480, 0
        %8488 = vmatpush.msra.mxu0 0.0
        %8489 = vmatpush.msra.mxu0 0.0
        %8490 = vmatpush.msra.mxu0 0.0
        %8491 = vmatpush.msra.mxu0 0.0
        %8492 = vmatpush.msra.mxu0 0.0
        %8493 = vmatpush.msra.mxu0 0.0
        %8494 = vmatpush.msra.mxu0 0.0
        %8495 = vmatpush.msra.mxu0 0.0
        %8496 = vmatpush.msra.mxu0 0.0
        %8497 = vmatpush.msra.mxu0 0.0
        %8498 = vmatpush.msra.mxu0 0.0
        %8499 = vmatpush.msra.mxu0 0.0
        %8500 = vmatpush.msra.mxu0 %v8484
        %8501 = vmatpush.msra.mxu0 %v8483
        %8502 = vmatpush.msra.mxu0 %v8482
        %8503 = vmatpush.msra.mxu0 %v8481
        %8504 = vmatmul.f32.gmra.mxu0 %v8486
        %v8505 = vpop.f32.mrf.mxu0
        %v8506 = vadd.f32 0.0, %v8505
        %8507 = vdwg.mxu0
        %v8508 = vadd.f32 %v8479, %v8506
        %v8509 = vld [vmem:[%s7511] sm:$0xf]
        %v8510 = vld [vmem:[%s7716] sm:$0xff]
        %v8511 = vld [vmem:[%s7716 + $0x8] sm:$0xff]
        %v8512 = vld [vmem:[%s7716 + $0x10] sm:$0xff]
        %v8513 = vld [vmem:[%s7716 + $0x18] sm:$0xff]
        %v8515 = vsel %vm6615, %v8509, 0
        %8517 = vmatpush.msra.mxu0 0.0
        %8518 = vmatpush.msra.mxu0 0.0
        %8519 = vmatpush.msra.mxu0 0.0
        %8520 = vmatpush.msra.mxu0 0.0
        %8521 = vmatpush.msra.mxu0 0.0
        %8522 = vmatpush.msra.mxu0 0.0
        %8523 = vmatpush.msra.mxu0 0.0
        %8524 = vmatpush.msra.mxu0 0.0
        %8525 = vmatpush.msra.mxu0 0.0
        %8526 = vmatpush.msra.mxu0 0.0
        %8527 = vmatpush.msra.mxu0 0.0
        %8528 = vmatpush.msra.mxu0 0.0
        %8529 = vmatpush.msra.mxu0 %v8513
        %8530 = vmatpush.msra.mxu0 %v8512
        %8531 = vmatpush.msra.mxu0 %v8511
        %8532 = vmatpush.msra.mxu0 %v8510
        %8533 = vmatmul.f32.gmra.mxu0 %v8515
        %v8534 = vpop.f32.mrf.mxu0
        %v8535 = vadd.f32 0.0, %v8534
        %8536 = vdwg.mxu0
        %v8537 = vadd.f32 %v8508, %v8535
        %v8538 = vld [vmem:[%s7511 + $0x1] sm:$0xf]
        %v8539 = vld [vmem:[%s7746] sm:$0xff]
        %v8540 = vld [vmem:[%s7746 + $0x8] sm:$0xff]
        %v8541 = vld [vmem:[%s7746 + $0x10] sm:$0xff]
        %v8542 = vld [vmem:[%s7746 + $0x18] sm:$0xff]
        %v8544 = vsel %vm6615, %v8538, 0
        %8546 = vmatpush.msra.mxu0 0.0
        %8547 = vmatpush.msra.mxu0 0.0
        %8548 = vmatpush.msra.mxu0 0.0
        %8549 = vmatpush.msra.mxu0 0.0
        %8550 = vmatpush.msra.mxu0 0.0
        %8551 = vmatpush.msra.mxu0 0.0
        %8552 = vmatpush.msra.mxu0 0.0
        %8553 = vmatpush.msra.mxu0 0.0
        %8554 = vmatpush.msra.mxu0 0.0
        %8555 = vmatpush.msra.mxu0 0.0
        %8556 = vmatpush.msra.mxu0 0.0
        %8557 = vmatpush.msra.mxu0 0.0
        %8558 = vmatpush.msra.mxu0 %v8542
        %8559 = vmatpush.msra.mxu0 %v8541
        %8560 = vmatpush.msra.mxu0 %v8540
        %8561 = vmatpush.msra.mxu0 %v8539
        %8562 = vmatmul.f32.gmra.mxu0 %v8544
        %v8563 = vpop.f32.mrf.mxu0
        %v8564 = vadd.f32 0.0, %v8563
        %8565 = vdwg.mxu0
        %v8566 = vadd.f32 %v8537, %v8564
        %v8567 = vld [vmem:[%s7511 + $0x2] sm:$0xf]
        %v8568 = vld [vmem:[%s7776] sm:$0xff]
        %v8569 = vld [vmem:[%s7776 + $0x8] sm:$0xff]
        %v8570 = vld [vmem:[%s7776 + $0x10] sm:$0xff]
        %v8571 = vld [vmem:[%s7776 + $0x18] sm:$0xff]
        %v8573 = vsel %vm6615, %v8567, 0
        %8575 = vmatpush.msra.mxu0 0.0
        %8576 = vmatpush.msra.mxu0 0.0
        %8577 = vmatpush.msra.mxu0 0.0
        %8578 = vmatpush.msra.mxu0 0.0
        %8579 = vmatpush.msra.mxu0 0.0
        %8580 = vmatpush.msra.mxu0 0.0
        %8581 = vmatpush.msra.mxu0 0.0
        %8582 = vmatpush.msra.mxu0 0.0
        %8583 = vmatpush.msra.mxu0 0.0
        %8584 = vmatpush.msra.mxu0 0.0
        %8585 = vmatpush.msra.mxu0 0.0
        %8586 = vmatpush.msra.mxu0 0.0
        %8587 = vmatpush.msra.mxu0 %v8571
        %8588 = vmatpush.msra.mxu0 %v8570
        %8589 = vmatpush.msra.mxu0 %v8569
        %8590 = vmatpush.msra.mxu0 %v8568
        %8591 = vmatmul.f32.gmra.mxu0 %v8573
        %v8592 = vpop.f32.mrf.mxu0
        %v8593 = vadd.f32 0.0, %v8592
        %8594 = vdwg.mxu0
        %v8595 = vadd.f32 %v8566, %v8593
        %v8596 = vadd.f32 %v8595, %v7806
        %v8597 = vmax.f32 %v8596, 0.0
        %8598 = vst.msk [vmem:[%s413 + $0xc] sm:$0xf] %vm7810, %v8597
        %s8599 = sand.u32 %s271, 1
        %s8600 = scalar_lea.sflag [#allocation11], %s8599
        %s8601 = sand.u32 %s271, 1
        %s8602 = smul.addr %s8601, 16
        %s8603 = scalar_lea.vmem [#allocation14], %s8602
        // Predicated region
        $region73: #{small_encoder_forward.1} parent=63 // pred_check
          %p8604 = pneg %p281
        $region74: #{small_encoder_forward.1} parent=63 // pred_check_branch
          %8606 = sbr.rel (%p8604) target = $region76
        $region75: #{small_encoder_forward.1} parent=63 // pred_region
          %8608 = vsyncadd %s8600, 0
          %s8609 = smul.addr %s27, 2
          %s8610 = smul.addr %s8609, 8
          %s8611 = scalar_lea.hbm %s11, %s8610
          %s8612 = sshll.u32 %s8603, 4
          %s8613 = int_to_ptr.vmem [resolvable:$true] %s8612
          %s8614 = sshll.u32 %s8611, 4
          %s8615 = int_to_ptr.hbm [resolvable:$true] %s8614
          %8620 = dma.vmem_to_hbm [thread:$0]  %s8613, 256, %s8615, %s8600, 128, 128, 8
        $region76: #{small_encoder_forward.1} parent=63 // pred_fallthru
          _
      $region64: #{small_encoder_forward.1} parent=5 // pred_fallthru
        _
      %p8621 = scmp.le.s32.totalorder 2, %s22
      // Predicated region
      $region77: #{small_encoder_forward.1} parent=5 // pred_check
        %p8622 = pneg %p8621
      $region78: #{small_encoder_forward.1} parent=5 // pred_check_branch
        %8624 = sbr.rel (%p8622) target = $region80
      $region79: #{small_encoder_forward.1} parent=5 // pred_region
        %s8625 = ssub.s32 %s22, 2
        // Predicated region
        $region81: #{small_encoder_forward.1} parent=79 // pred_check
          %p8626 = pneg %p287
        $region82: #{small_encoder_forward.1} parent=79 // pred_check_branch
          %8628 = sbr.rel (%p8626) target = $region84
        $region83: #{small_encoder_forward.1} parent=79 // pred_region
          %s8629 = sand.u32 %s272, 1
          %s8630 = scalar_lea.sflag [#allocation11], %s8629
          %s8631 = sand.u32 %s272, 1
          %s8632 = smul.addr %s8631, 16
          %s8633 = scalar_lea.vmem [#allocation14], %s8632
          %8635 = dma.done %s8630, 256
        $region84: #{small_encoder_forward.1} parent=79 // pred_fallthru
          _
      $region80: #{small_encoder_forward.1} parent=5 // pred_fallthru
        _
    $region6: #{small_encoder_forward.1} parent=1 // loop_footer
      %s26 = sadd.s32 1, %s22
    $region7: #{small_encoder_forward.1} parent=1 // loop_footer_branch
      %21 = sbr.rel target = $region3
    $region8: #{small_encoder_forward.1} parent=1 // loop_exit
      _
    %8636 = vsyncpa [#allocation10], 1
    %s8637 = scalar_lea.sflag [#allocation10], 1
    %8638 = vsyncpa %s8637, 1
    %8639 = vsyncpa [#allocation13], 1
    %8640 = vsyncpa [#allocation11], 1
    %s8641 = scalar_lea.sflag [#allocation11], 1
    %8642 = vsyncpa %s8641, 1

</llo_original>
